<compile_context>
chip_gen: v5e
topology: v5e:2x2
jax: 0.10.0
libtpu: 0.0.40
codegen_flags: <defaults>
</compile_context>

<pallas_src>
import functools

import jax
import jax.numpy as jnp
from jax.experimental import pallas as pl
from jax.experimental.pallas import tpu as pltpu


# --------------------------------------------------------------------------
# Fused Conv3x3+ReLU x3 -> MaxPool(2,2) kernel (VGG16 SecondBlock)
# --------------------------------------------------------------------------
def _fused_block_kernel(x_ref, w1_ref, b1_ref, w2_ref, b2_ref, w3_ref, b3_ref,
                        o_ref, pad1_ref, pad2_ref, *, H, W, flatten_out):
    # x_ref   : (1, (H+3)*(W+2), Cin)  bf16, pre-padded + W-flattened input
    # wN_ref  : (9, C_in_layer, Cout)  bf16, taps ordered t = 3*ky + kx
    # bN_ref  : (1, Cout)              f32
    # o_ref   : (1, Ho, Wo, Cout) or (1, Ho, Wo*Cout)  f32
    # padN_ref: ((H+3)*(W+2), Cout)    bf16 zero-bordered flat activation scratch
    Wp = W + 2
    M = H * Wp                       # conv rows computed (incl. fold-over cols)
    Ho, Wo = H // 2, W // 2
    NPAD = pad1_ref.shape[0]
    Cout = pad1_ref.shape[1]
    top = Wp + 1                     # flat offset of pixel (0, 0) in a padded buffer

    # Re-assert the never-otherwise-written zero border of the intermediate
    # scratch buffers: two contiguous band stores per buffer (cheap).  Done
    # every grid step rather than under pl.when(program_id(0)==0) because with
    # "parallel" batch semantics each TensorCore owns its own scratch on v7x.
    bot = NPAD - (top + M)
    for p in (pad1_ref, pad2_ref):
        p[pl.ds(0, top), :] = jnp.zeros((top, Cout), p.dtype)
        p[pl.ds(top + M, bot), :] = jnp.zeros((bot, Cout), p.dtype)

    # Flat output row q maps to (h, w) = (q // Wp, q % Wp); columns w >= W are
    # the computed fold-over of the W halo.  They are masked to zero so that a
    # single contiguous store of the whole (M, Cout) band also rewrites the
    # next layer's interleaved left/right zero padding.
    col = jax.lax.broadcasted_iota(jnp.int32, (M, 1), 0) % Wp
    valid = col < W                                      # (M, 1) bool, hoisted

    def conv9(load_patch, w_ref):
        """9 flat-offset tap matmuls accumulated as an f32 value chain."""
        acc = None
        for ky in range(3):
            for kx in range(3):
                off = ky * Wp + kx                       # static flat tap offset
                d = jnp.dot(load_patch(off), w_ref[3 * ky + kx],
                            preferred_element_type=jnp.float32)
                acc = d if acc is None else acc + d
        return acc                                       # (M, Cout) f32

    # conv1: LHS tap slices come straight from the pre-padded input block.
    acc = conv9(lambda off: x_ref[0, pl.ds(off, M), :], w1_ref)
    y = jnp.where(valid, jnp.maximum(acc + b1_ref[...], 0.0), 0.0)
    pad1_ref[pl.ds(top, M), :] = y.astype(pad1_ref.dtype)

    # conv2
    acc = conv9(lambda off: pad1_ref[pl.ds(off, M), :], w2_ref)
    y = jnp.where(valid, jnp.maximum(acc + b2_ref[...], 0.0), 0.0)
    pad2_ref[pl.ds(top, M), :] = y.astype(pad2_ref.dtype)

    # conv3 + 2x2 maxpool.  The pool runs on the raw f32 accumulator (max
    # commutes exactly with the per-channel bias add and with ReLU), so
    # bias/ReLU touch only the 4x smaller pooled tile; the fold-over window
    # (index Wo, covering columns W and W+1) is dropped.
    acc = conv9(lambda off: pad2_ref[pl.ds(off, M), :], w3_ref)
    acc = acc.reshape(Ho, 2, Wo + 1, 2, Cout)
    pooled = jnp.max(jnp.max(acc, axis=3), axis=1)[:, :Wo, :]
    pooled = jnp.maximum(pooled + b3_ref[...], 0.0)          # (Ho, Wo, Cout) f32
    if flatten_out:
        o_ref[...] = pooled.reshape(1, Ho, Wo * Cout).astype(o_ref.dtype)
    else:
        o_ref[...] = pooled.reshape(1, Ho, Wo, Cout).astype(o_ref.dtype)


def _vmem_limit_bytes():
    """Generation-dependent scoped-VMEM budget (review #5)."""
    cap = None
    try:
        info_fn = getattr(pltpu, "get_tpu_info", None)
        if info_fn is not None:
            cap = getattr(info_fn(), "vmem_capacity_bytes", None)
    except Exception:
        cap = None
    if not cap:
        return 48 * 1024 * 1024          # safe fallback (fits v7x's 64 MiB)
    # ~100 MiB on v5e/v6e (128 MiB physical), ~48 MiB on v7x (64 MiB physical).
    return int(min(cap - 16 * 1024 * 1024, 100 * 1024 * 1024))


def _second_block_nhwc(x_nhwc, w1, b1, w2, b2, w3, b3):
    """x_nhwc: (B, H, W, Cin); weights HWIO f32; returns (B, H/2, W/2, Cout) f32."""
    B, H, W, Cin = x_nhwc.shape
    Cout = w1.shape[-1]
    assert w1.shape == (3, 3, Cin, Cout)
    # The fused kernel shares the activation scratch across the three convs:
    # equal Cout per layer is required (true for every VGG block).
    assert w2.shape == (3, 3, Cout, Cout) and w3.shape == (3, 3, Cout, Cout)
    assert H % 2 == 0 and W % 2 == 0, "MaxPool2d(2,2) needs even H, W"
    Ho, Wo = H // 2, W // 2
    Wp = W + 2
    NPAD = (H + 3) * Wp
    M = H * Wp

    vmem_limit = _vmem_limit_bytes()
    est = (2 * NPAD * Cin * 2                              # dbl-buffered bf16 input block
           + 2 * NPAD * Cout * 2                           # two bf16 activation pads
           + 2 * (9 * Cin * Cout + 18 * Cout * Cout) * 2   # dbl-buffered bf16 weights
           + 4 * M * Cout * 4)                             # f32 dot-chain / epilogue temps
    if est > vmem_limit:
        # TODO(synk): switch to banded-row tiling (overlapping halo) when the
        # whole-image fused tile does not fit the scoped VMEM budget.
        raise ValueError(f"fused block tile (~{est / 2**20:.1f} MiB) exceeds the "
                         f"VMEM budget ({vmem_limit / 2**20:.1f} MiB)")

    # Wrapper-side layout glue (one fused XLA op): bf16 cast, 1-px spatial pad
    # (plus 2 extra bottom rows so every flat tap slice stays in bounds) and
    # W-flattening to ((H+3)*(W+2), Cin).
    xp = jnp.pad(x_nhwc.astype(jnp.bfloat16), ((0, 0), (1, 2), (1, 1), (0, 0)))
    xp = xp.reshape(B, NPAD, Cin)

    # Weights: HWIO (3,3,Ci,Co) -> (9, Ci, Co) bf16, taps ordered t = 3*ky + kx.
    w1r = w1.reshape(9, Cin, Cout).astype(jnp.bfloat16)
    w2r = w2.reshape(9, Cout, Cout).astype(jnp.bfloat16)
    w3r = w3.reshape(9, Cout, Cout).astype(jnp.bfloat16)
    b1r = b1.reshape(1, Cout).astype(jnp.float32)
    b2r = b2.reshape(1, Cout).astype(jnp.float32)
    b3r = b3.reshape(1, Cout).astype(jnp.float32)

    # Lane-dense flatten only for small test Cout; real VGG Cout (256/512) is
    # already an unmasked-vst multiple of 128 and is stored 4D directly.
    flatten_out = (Cout % 128 != 0)
    if flatten_out:
        out_shape = jax.ShapeDtypeStruct((B, Ho, Wo * Cout), jnp.float32)
        out_spec = pl.BlockSpec((1, Ho, Wo * Cout), lambda b: (b, 0, 0))
    else:
        out_shape = jax.ShapeDtypeStruct((B, Ho, Wo, Cout), jnp.float32)
        out_spec = pl.BlockSpec((1, Ho, Wo, Cout), lambda b: (b, 0, 0, 0))

    kernel = functools.partial(_fused_block_kernel, H=H, W=W,
                               flatten_out=flatten_out)

    out = pl.pallas_call(
        kernel,
        out_shape=out_shape,
        grid_spec=pltpu.PrefetchScalarGridSpec(
            num_scalar_prefetch=0,
            grid=(B,),
            in_specs=[
                pl.BlockSpec((1, NPAD, Cin), lambda b: (b, 0, 0)),
                pl.BlockSpec((9, Cin, Cout), lambda b: (0, 0, 0)),
                pl.BlockSpec((1, Cout), lambda b: (0, 0)),
                pl.BlockSpec((9, Cout, Cout), lambda b: (0, 0, 0)),
                pl.BlockSpec((1, Cout), lambda b: (0, 0)),
                pl.BlockSpec((9, Cout, Cout), lambda b: (0, 0, 0)),
                pl.BlockSpec((1, Cout), lambda b: (0, 0)),
            ],
            out_specs=out_spec,
            scratch_shapes=[
                pltpu.VMEM((NPAD, Cout), jnp.bfloat16),   # padded act1, flat
                pltpu.VMEM((NPAD, Cout), jnp.bfloat16),   # padded act2, flat
            ],
        ),
        compiler_params=pltpu.CompilerParams(
            dimension_semantics=("parallel",),
            vmem_limit_bytes=vmem_limit,
        ),
    )(xp, w1r, b1r, w2r, b2r, w3r, b3r)

    if flatten_out:
        out = out.reshape(B, Ho, Wo, Cout)
    return out


# --------------------------- Parameters & forward ---------------------------
def init_params(key, cin, cout):
    """Deterministic PyTorch-style (kaiming-uniform-ish) init, HWIO layout."""
    ks = jax.random.split(key, 6)

    def conv_init(kw, kb, ci, co):
        fan_in = ci * 9
        bound = 1.0 / (fan_in ** 0.5)
        w = jax.random.uniform(kw, (3, 3, ci, co), jnp.float32, -bound, bound)
        b = jax.random.uniform(kb, (co,), jnp.float32, -bound, bound)
        return w, b

    w1, b1 = conv_init(ks[0], ks[1], cin, cout)
    w2, b2 = conv_init(ks[2], ks[3], cout, cout)
    w3, b3 = conv_init(ks[4], ks[5], cout, cout)
    return (w1, b1, w2, b2, w3, b3)


@jax.jit
def second_block_forward(x_nchw, params):
    w1, b1, w2, b2, w3, b3 = params
    x = jnp.transpose(x_nchw, (0, 2, 3, 1))  # NCHW -> NHWC (layout glue)
    y = _second_block_nhwc(x, w1, b1, w2, b2, w3, b3)
    return jnp.transpose(y, (0, 3, 1, 2))    # NHWC -> NCHW


# ------------------------------ JAX reference --------------------------------
def reference_forward(x_nchw, params):
    """Mirrors the kernel's precision: bf16 conv inputs, f32 accumulate/epilogue."""
    w1, b1, w2, b2, w3, b3 = params
    x = x_nchw
    for w, b in ((w1, b1), (w2, b2), (w3, b3)):
        y = jax.lax.conv_general_dilated(
            x.astype(jnp.bfloat16), w.astype(jnp.bfloat16),
            window_strides=(1, 1), padding=((1, 1), (1, 1)),
            dimension_numbers=("NCHW", "HWIO", "NCHW"),
            preferred_element_type=jnp.float32)
        x = jnp.maximum(y + b[None, :, None, None], 0.0)
    x = jax.lax.reduce_window(x, -jnp.inf, jax.lax.max,
                              (1, 1, 2, 2), (1, 1, 2, 2), "VALID")
    return x


if __name__ == "__main__":
    key = jax.random.PRNGKey(0)
    kx1, kp1, kx2, kp2 = jax.random.split(key, 4)

    # Config 1: small smoke test (flattened lane-dense output path).
    B, Cin, Cout, H, W = 2, 4, 8, 16, 16
    x = jax.random.normal(kx1, (B, Cin, H, W), jnp.float32)   # NCHW like PyTorch
    params = init_params(kp1, Cin, Cout)
    out = jax.block_until_ready(second_block_forward(x, params))
    ref = reference_forward(x, params)
    assert out.shape == (B, Cout, H // 2, W // 2), out.shape
    err = float(jnp.max(jnp.abs(out - ref)))
    assert err < 5e-3, err

    # Config 2: VGG-like lane-aligned channels (SecondBlock(128, 256)) at
    # reduced spatial extent; exercises the direct 4D output path and the
    # Cin=128 / Cout=256 contractions.
    B2, Cin2, Cout2, H2, W2 = 1, 128, 256, 16, 16
    x2 = jax.random.normal(kx2, (B2, Cin2, H2, W2), jnp.float32)
    params2 = init_params(kp2, Cin2, Cout2)
    out2 = jax.block_until_ready(second_block_forward(x2, params2))
    ref2 = reference_forward(x2, params2)
    assert out2.shape == (B2, Cout2, H2 // 2, W2 // 2), out2.shape
    err2 = float(jnp.max(jnp.abs(out2 - ref2)))
    assert err2 < 1e-2, err2

    print("KERNEL_OK")
</pallas_src>

<mosaic_0001>
module attributes {stable_mosaic.version = 11 : i64} {
  func.func @_fused_block_kernel(%arg0: i32, %arg1: memref<1x342x4xbf16, #tpu.memory_space<vmem>>, %arg2: memref<9x4x8xbf16, #tpu.memory_space<vmem>>, %arg3: memref<1x8xf32, #tpu.memory_space<vmem>>, %arg4: memref<9x8x8xbf16, #tpu.memory_space<vmem>>, %arg5: memref<1x8xf32, #tpu.memory_space<vmem>>, %arg6: memref<9x8x8xbf16, #tpu.memory_space<vmem>>, %arg7: memref<1x8xf32, #tpu.memory_space<vmem>>, %arg8: memref<1x8x64xf32, #tpu.memory_space<vmem>>, %arg9: memref<342x8xbf16, #tpu.memory_space<vmem>>, %arg10: memref<342x8xbf16, #tpu.memory_space<vmem>>) attributes {dimension_semantics = [#tpu.dimension_semantics<parallel>], iteration_bounds = array<i64: 2>, scalar_prefetch = 0 : i64, scratch_operands = 2 : i64, tpu.core_type = #tpu.core_type<tc>, window_params = [{transform_indices = @transform_0, window_bounds = array<i64: 1, 342, 4>}, {pipeline_mode = #tpu.pipeline_mode<synchronous>, transform_indices = @transform_1, window_bounds = array<i64: 9, 4, 8>}, {pipeline_mode = #tpu.pipeline_mode<synchronous>, transform_indices = @transform_2, window_bounds = array<i64: 1, 8>}, {pipeline_mode = #tpu.pipeline_mode<synchronous>, transform_indices = @transform_3, window_bounds = array<i64: 9, 8, 8>}, {pipeline_mode = #tpu.pipeline_mode<synchronous>, transform_indices = @transform_4, window_bounds = array<i64: 1, 8>}, {pipeline_mode = #tpu.pipeline_mode<synchronous>, transform_indices = @transform_5, window_bounds = array<i64: 9, 8, 8>}, {pipeline_mode = #tpu.pipeline_mode<synchronous>, transform_indices = @transform_6, window_bounds = array<i64: 1, 8>}, {transform_indices = @transform_7, window_bounds = array<i64: 1, 8, 64>}]} {
    %cst = arith.constant 0.000000e+00 : bf16
    %0 = vector.broadcast %cst : bf16 to vector<19x8xbf16>
    %c0 = arith.constant 0 : index
    %c0_0 = arith.constant 0 : index
    %1 = vector.load %arg9[%c0, %c0_0] : memref<342x8xbf16, #tpu.memory_space<vmem>>, vector<19x8xbf16>
    tpu.vector_store %arg9[%c0, %c0_0], %0 {strides = array<i32>} : memref<342x8xbf16, #tpu.memory_space<vmem>>, vector<19x8xbf16>,
    %cst_1 = arith.constant 0.000000e+00 : bf16
    %2 = vector.broadcast %cst_1 : bf16 to vector<35x8xbf16>
    %c307 = arith.constant 307 : index
    %c0_2 = arith.constant 0 : index
    %3 = vector.load %arg9[%c307, %c0_2] : memref<342x8xbf16, #tpu.memory_space<vmem>>, vector<35x8xbf16>
    tpu.vector_store %arg9[%c307, %c0_2], %2 {strides = array<i32>} : memref<342x8xbf16, #tpu.memory_space<vmem>>, vector<35x8xbf16>,
    %cst_3 = arith.constant 0.000000e+00 : bf16
    %4 = vector.broadcast %cst_3 : bf16 to vector<19x8xbf16>
    %c0_4 = arith.constant 0 : index
    %c0_5 = arith.constant 0 : index
    %5 = vector.load %arg10[%c0_4, %c0_5] : memref<342x8xbf16, #tpu.memory_space<vmem>>, vector<19x8xbf16>
    tpu.vector_store %arg10[%c0_4, %c0_5], %4 {strides = array<i32>} : memref<342x8xbf16, #tpu.memory_space<vmem>>, vector<19x8xbf16>,
    %cst_6 = arith.constant 0.000000e+00 : bf16
    %6 = vector.broadcast %cst_6 : bf16 to vector<35x8xbf16>
    %c307_7 = arith.constant 307 : index
    %c0_8 = arith.constant 0 : index
    %7 = vector.load %arg10[%c307_7, %c0_8] : memref<342x8xbf16, #tpu.memory_space<vmem>>, vector<35x8xbf16>
    tpu.vector_store %arg10[%c307_7, %c0_8], %6 {strides = array<i32>} : memref<342x8xbf16, #tpu.memory_space<vmem>>, vector<35x8xbf16>,
    %8 = tpu.iota {dimensions = array<i32: 0>} : vector<288x1xi32>
    %c18_i32 = arith.constant 18 : i32
    %c0_i32 = arith.constant 0 : i32
    %9 = arith.cmpi eq, %c18_i32, %c0_i32 : i32
    %c1_i32 = arith.constant 1 : i32
    %10 = arith.select %9, %c1_i32, %c18_i32 : i32
    %11 = vector.broadcast %10 : i32 to vector<288x1xi32>
    %12 = arith.remsi %8, %11 : vector<288x1xi32>
    %c0_i32_9 = arith.constant 0 : i32
    %13 = vector.broadcast %c0_i32_9 : i32 to vector<288x1xi32>
    %14 = arith.cmpi ne, %12, %13 : vector<288x1xi32>
    %c0_i32_10 = arith.constant 0 : i32
    %15 = vector.broadcast %c0_i32_10 : i32 to vector<288x1xi32>
    %16 = arith.cmpi slt, %12, %15 : vector<288x1xi32>
    %c0_i32_11 = arith.constant 0 : i32
    %17 = arith.cmpi slt, %10, %c0_i32_11 : i32
    %18 = vector.broadcast %17 : i1 to vector<288x1xi1>
    %19 = vector.broadcast %18 : vector<288x1xi1> to vector<288x1xi1>
    %20 = arith.xori %16, %19 : vector<288x1xi1>
    %21 = arith.andi %20, %14 : vector<288x1xi1>
    %22 = vector.broadcast %10 : i32 to vector<288x1xi32>
    %23 = arith.addi %12, %22 : vector<288x1xi32>
    %24 = arith.select %21, %23, %12 : vector<288x1xi1>, vector<288x1xi32>
    %c16_i32 = arith.constant 16 : i32
    %25 = vector.broadcast %c16_i32 : i32 to vector<288x1xi32>
    %26 = arith.cmpi slt, %24, %25 : vector<288x1xi32>
    %c0_12 = arith.constant 0 : index
    %c0_13 = arith.constant 0 : index
    %c0_14 = arith.constant 0 : index
    %27 = vector.load %arg1[%c0_12, %c0_13, %c0_14] : memref<1x342x4xbf16, #tpu.memory_space<vmem>>, vector<1x288x4xbf16>
    %28 = vector.shape_cast %27 : vector<1x288x4xbf16> to vector<288x4xbf16>
    %c0_15 = arith.constant 0 : index
    %c0_16 = arith.constant 0 : index
    %c0_17 = arith.constant 0 : index
    %29 = vector.load %arg2[%c0_15, %c0_16, %c0_17] : memref<9x4x8xbf16, #tpu.memory_space<vmem>>, vector<1x4x8xbf16>
    %30 = vector.shape_cast %29 : vector<1x4x8xbf16> to vector<4x8xbf16>
    %cst_18 = arith.constant dense<0.000000e+00> : vector<288x8xf32>
    %31 = tpu.matmul %28, %30, %cst_18 {dimension_numbers = #tpu.dot_dimension_numbers<[1], [0], [0], [1], [0, 0, 1, 1], [], []>} : vector<288x4xbf16>, vector<4x8xbf16>, vector<288x8xf32> -> vector<288x8xf32>
    %c0_19 = arith.constant 0 : index
    %c1 = arith.constant 1 : index
    %c0_20 = arith.constant 0 : index
    %32 = vector.load %arg1[%c0_19, %c1, %c0_20] : memref<1x342x4xbf16, #tpu.memory_space<vmem>>, vector<1x288x4xbf16>
    %33 = vector.shape_cast %32 : vector<1x288x4xbf16> to vector<288x4xbf16>
    %c1_21 = arith.constant 1 : index
    %c0_22 = arith.constant 0 : index
    %c0_23 = arith.constant 0 : index
    %34 = vector.load %arg2[%c1_21, %c0_22, %c0_23] : memref<9x4x8xbf16, #tpu.memory_space<vmem>>, vector<1x4x8xbf16>
    %35 = vector.shape_cast %34 : vector<1x4x8xbf16> to vector<4x8xbf16>
    %cst_24 = arith.constant dense<0.000000e+00> : vector<288x8xf32>
    %36 = tpu.matmul %33, %35, %cst_24 {dimension_numbers = #tpu.dot_dimension_numbers<[1], [0], [0], [1], [0, 0, 1, 1], [], []>} : vector<288x4xbf16>, vector<4x8xbf16>, vector<288x8xf32> -> vector<288x8xf32>
    %37 = arith.addf %31, %36 : vector<288x8xf32>
    %c0_25 = arith.constant 0 : index
    %c2 = arith.constant 2 : index
    %c0_26 = arith.constant 0 : index
    %38 = vector.load %arg1[%c0_25, %c2, %c0_26] : memref<1x342x4xbf16, #tpu.memory_space<vmem>>, vector<1x288x4xbf16>
    %39 = vector.shape_cast %38 : vector<1x288x4xbf16> to vector<288x4xbf16>
    %c2_27 = arith.constant 2 : index
    %c0_28 = arith.constant 0 : index
    %c0_29 = arith.constant 0 : index
    %40 = vector.load %arg2[%c2_27, %c0_28, %c0_29] : memref<9x4x8xbf16, #tpu.memory_space<vmem>>, vector<1x4x8xbf16>
    %41 = vector.shape_cast %40 : vector<1x4x8xbf16> to vector<4x8xbf16>
    %cst_30 = arith.constant dense<0.000000e+00> : vector<288x8xf32>
    %42 = tpu.matmul %39, %41, %cst_30 {dimension_numbers = #tpu.dot_dimension_numbers<[1], [0], [0], [1], [0, 0, 1, 1], [], []>} : vector<288x4xbf16>, vector<4x8xbf16>, vector<288x8xf32> -> vector<288x8xf32>
    %43 = arith.addf %37, %42 : vector<288x8xf32>
    %c0_31 = arith.constant 0 : index
    %c18 = arith.constant 18 : index
    %c0_32 = arith.constant 0 : index
    %44 = vector.load %arg1[%c0_31, %c18, %c0_32] : memref<1x342x4xbf16, #tpu.memory_space<vmem>>, vector<1x288x4xbf16>
    %45 = vector.shape_cast %44 : vector<1x288x4xbf16> to vector<288x4xbf16>
    %c3 = arith.constant 3 : index
    %c0_33 = arith.constant 0 : index
    %c0_34 = arith.constant 0 : index
    %46 = vector.load %arg2[%c3, %c0_33, %c0_34] : memref<9x4x8xbf16, #tpu.memory_space<vmem>>, vector<1x4x8xbf16>
    %47 = vector.shape_cast %46 : vector<1x4x8xbf16> to vector<4x8xbf16>
    %cst_35 = arith.constant dense<0.000000e+00> : vector<288x8xf32>
    %48 = tpu.matmul %45, %47, %cst_35 {dimension_numbers = #tpu.dot_dimension_numbers<[1], [0], [0], [1], [0, 0, 1, 1], [], []>} : vector<288x4xbf16>, vector<4x8xbf16>, vector<288x8xf32> -> vector<288x8xf32>
    %49 = arith.addf %43, %48 : vector<288x8xf32>
    %c0_36 = arith.constant 0 : index
    %c19 = arith.constant 19 : index
    %c0_37 = arith.constant 0 : index
    %50 = vector.load %arg1[%c0_36, %c19, %c0_37] : memref<1x342x4xbf16, #tpu.memory_space<vmem>>, vector<1x288x4xbf16>
    %51 = vector.shape_cast %50 : vector<1x288x4xbf16> to vector<288x4xbf16>
    %c4 = arith.constant 4 : index
    %c0_38 = arith.constant 0 : index
    %c0_39 = arith.constant 0 : index
    %52 = vector.load %arg2[%c4, %c0_38, %c0_39] : memref<9x4x8xbf16, #tpu.memory_space<vmem>>, vector<1x4x8xbf16>
    %53 = vector.shape_cast %52 : vector<1x4x8xbf16> to vector<4x8xbf16>
    %cst_40 = arith.constant dense<0.000000e+00> : vector<288x8xf32>
    %54 = tpu.matmul %51, %53, %cst_40 {dimension_numbers = #tpu.dot_dimension_numbers<[1], [0], [0], [1], [0, 0, 1, 1], [], []>} : vector<288x4xbf16>, vector<4x8xbf16>, vector<288x8xf32> -> vector<288x8xf32>
    %55 = arith.addf %49, %54 : vector<288x8xf32>
    %c0_41 = arith.constant 0 : index
    %c20 = arith.constant 20 : index
    %c0_42 = arith.constant 0 : index
    %56 = vector.load %arg1[%c0_41, %c20, %c0_42] : memref<1x342x4xbf16, #tpu.memory_space<vmem>>, vector<1x288x4xbf16>
    %57 = vector.shape_cast %56 : vector<1x288x4xbf16> to vector<288x4xbf16>
    %c5 = arith.constant 5 : index
    %c0_43 = arith.constant 0 : index
    %c0_44 = arith.constant 0 : index
    %58 = vector.load %arg2[%c5, %c0_43, %c0_44] : memref<9x4x8xbf16, #tpu.memory_space<vmem>>, vector<1x4x8xbf16>
    %59 = vector.shape_cast %58 : vector<1x4x8xbf16> to vector<4x8xbf16>
    %cst_45 = arith.constant dense<0.000000e+00> : vector<288x8xf32>
    %60 = tpu.matmul %57, %59, %cst_45 {dimension_numbers = #tpu.dot_dimension_numbers<[1], [0], [0], [1], [0, 0, 1, 1], [], []>} : vector<288x4xbf16>, vector<4x8xbf16>, vector<288x8xf32> -> vector<288x8xf32>
    %61 = arith.addf %55, %60 : vector<288x8xf32>
    %c0_46 = arith.constant 0 : index
    %c36 = arith.constant 36 : index
    %c0_47 = arith.constant 0 : index
    %62 = vector.load %arg1[%c0_46, %c36, %c0_47] : memref<1x342x4xbf16, #tpu.memory_space<vmem>>, vector<1x288x4xbf16>
    %63 = vector.shape_cast %62 : vector<1x288x4xbf16> to vector<288x4xbf16>
    %c6 = arith.constant 6 : index
    %c0_48 = arith.constant 0 : index
    %c0_49 = arith.constant 0 : index
    %64 = vector.load %arg2[%c6, %c0_48, %c0_49] : memref<9x4x8xbf16, #tpu.memory_space<vmem>>, vector<1x4x8xbf16>
    %65 = vector.shape_cast %64 : vector<1x4x8xbf16> to vector<4x8xbf16>
    %cst_50 = arith.constant dense<0.000000e+00> : vector<288x8xf32>
    %66 = tpu.matmul %63, %65, %cst_50 {dimension_numbers = #tpu.dot_dimension_numbers<[1], [0], [0], [1], [0, 0, 1, 1], [], []>} : vector<288x4xbf16>, vector<4x8xbf16>, vector<288x8xf32> -> vector<288x8xf32>
    %67 = arith.addf %61, %66 : vector<288x8xf32>
    %c0_51 = arith.constant 0 : index
    %c37 = arith.constant 37 : index
    %c0_52 = arith.constant 0 : index
    %68 = vector.load %arg1[%c0_51, %c37, %c0_52] : memref<1x342x4xbf16, #tpu.memory_space<vmem>>, vector<1x288x4xbf16>
    %69 = vector.shape_cast %68 : vector<1x288x4xbf16> to vector<288x4xbf16>
    %c7 = arith.constant 7 : index
    %c0_53 = arith.constant 0 : index
    %c0_54 = arith.constant 0 : index
    %70 = vector.load %arg2[%c7, %c0_53, %c0_54] : memref<9x4x8xbf16, #tpu.memory_space<vmem>>, vector<1x4x8xbf16>
    %71 = vector.shape_cast %70 : vector<1x4x8xbf16> to vector<4x8xbf16>
    %cst_55 = arith.constant dense<0.000000e+00> : vector<288x8xf32>
    %72 = tpu.matmul %69, %71, %cst_55 {dimension_numbers = #tpu.dot_dimension_numbers<[1], [0], [0], [1], [0, 0, 1, 1], [], []>} : vector<288x4xbf16>, vector<4x8xbf16>, vector<288x8xf32> -> vector<288x8xf32>
    %73 = arith.addf %67, %72 : vector<288x8xf32>
    %c0_56 = arith.constant 0 : index
    %c38 = arith.constant 38 : index
    %c0_57 = arith.constant 0 : index
    %74 = vector.load %arg1[%c0_56, %c38, %c0_57] : memref<1x342x4xbf16, #tpu.memory_space<vmem>>, vector<1x288x4xbf16>
    %75 = vector.shape_cast %74 : vector<1x288x4xbf16> to vector<288x4xbf16>
    %c8 = arith.constant 8 : index
    %c0_58 = arith.constant 0 : index
    %c0_59 = arith.constant 0 : index
    %76 = vector.load %arg2[%c8, %c0_58, %c0_59] : memref<9x4x8xbf16, #tpu.memory_space<vmem>>, vector<1x4x8xbf16>
    %77 = vector.shape_cast %76 : vector<1x4x8xbf16> to vector<4x8xbf16>
    %cst_60 = arith.constant dense<0.000000e+00> : vector<288x8xf32>
    %78 = tpu.matmul %75, %77, %cst_60 {dimension_numbers = #tpu.dot_dimension_numbers<[1], [0], [0], [1], [0, 0, 1, 1], [], []>} : vector<288x4xbf16>, vector<4x8xbf16>, vector<288x8xf32> -> vector<288x8xf32>
    %79 = arith.addf %73, %78 : vector<288x8xf32>
    %c0_61 = arith.constant 0 : index
    %c0_62 = arith.constant 0 : index
    %80 = vector.load %arg3[%c0_61, %c0_62] : memref<1x8xf32, #tpu.memory_space<vmem>>, vector<1x8xf32>
    %81 = vector.broadcast %80 : vector<1x8xf32> to vector<288x8xf32>
    %82 = arith.addf %79, %81 : vector<288x8xf32>
    %cst_63 = arith.constant 0.000000e+00 : f32
    %83 = vector.broadcast %cst_63 : f32 to vector<288x8xf32>
    %84 = arith.maximumf %82, %83 : vector<288x8xf32>
    %cst_64 = arith.constant 0.000000e+00 : f32
    %85 = vector.shape_cast %26 : vector<288x1xi1> to vector<288x1xi1>
    %86 = vector.broadcast %85 : vector<288x1xi1> to vector<288x8xi1>
    %87 = vector.broadcast %cst_64 : f32 to vector<288x8xf32>
    %88 = arith.select %86, %84, %87 : vector<288x8xi1>, vector<288x8xf32>
    %89 = arith.truncf %88 : vector<288x8xf32> to vector<288x8xbf16>
    %c19_65 = arith.constant 19 : index
    %c0_66 = arith.constant 0 : index
    %90 = vector.load %arg9[%c19_65, %c0_66] : memref<342x8xbf16, #tpu.memory_space<vmem>>, vector<288x8xbf16>
    tpu.vector_store %arg9[%c19_65, %c0_66], %89 {strides = array<i32>} : memref<342x8xbf16, #tpu.memory_space<vmem>>, vector<288x8xbf16>,
    %c0_67 = arith.constant 0 : index
    %c0_68 = arith.constant 0 : index
    %91 = vector.load %arg9[%c0_67, %c0_68] : memref<342x8xbf16, #tpu.memory_space<vmem>>, vector<288x8xbf16>
    %c0_69 = arith.constant 0 : index
    %c0_70 = arith.constant 0 : index
    %c0_71 = arith.constant 0 : index
    %92 = vector.load %arg4[%c0_69, %c0_70, %c0_71] : memref<9x8x8xbf16, #tpu.memory_space<vmem>>, vector<1x8x8xbf16>
    %93 = vector.shape_cast %92 : vector<1x8x8xbf16> to vector<8x8xbf16>
    %cst_72 = arith.constant dense<0.000000e+00> : vector<288x8xf32>
    %94 = tpu.matmul %91, %93, %cst_72 {dimension_numbers = #tpu.dot_dimension_numbers<[1], [0], [0], [1], [0, 0, 1, 1], [], []>} : vector<288x8xbf16>, vector<8x8xbf16>, vector<288x8xf32> -> vector<288x8xf32>
    %c1_73 = arith.constant 1 : index
    %c0_74 = arith.constant 0 : index
    %95 = vector.load %arg9[%c1_73, %c0_74] : memref<342x8xbf16, #tpu.memory_space<vmem>>, vector<288x8xbf16>
    %c1_75 = arith.constant 1 : index
    %c0_76 = arith.constant 0 : index
    %c0_77 = arith.constant 0 : index
    %96 = vector.load %arg4[%c1_75, %c0_76, %c0_77] : memref<9x8x8xbf16, #tpu.memory_space<vmem>>, vector<1x8x8xbf16>
    %97 = vector.shape_cast %96 : vector<1x8x8xbf16> to vector<8x8xbf16>
    %cst_78 = arith.constant dense<0.000000e+00> : vector<288x8xf32>
    %98 = tpu.matmul %95, %97, %cst_78 {dimension_numbers = #tpu.dot_dimension_numbers<[1], [0], [0], [1], [0, 0, 1, 1], [], []>} : vector<288x8xbf16>, vector<8x8xbf16>, vector<288x8xf32> -> vector<288x8xf32>
    %99 = arith.addf %94, %98 : vector<288x8xf32>
    %c2_79 = arith.constant 2 : index
    %c0_80 = arith.constant 0 : index
    %100 = vector.load %arg9[%c2_79, %c0_80] : memref<342x8xbf16, #tpu.memory_space<vmem>>, vector<288x8xbf16>
    %c2_81 = arith.constant 2 : index
    %c0_82 = arith.constant 0 : index
    %c0_83 = arith.constant 0 : index
    %101 = vector.load %arg4[%c2_81, %c0_82, %c0_83] : memref<9x8x8xbf16, #tpu.memory_space<vmem>>, vector<1x8x8xbf16>
    %102 = vector.shape_cast %101 : vector<1x8x8xbf16> to vector<8x8xbf16>
    %cst_84 = arith.constant dense<0.000000e+00> : vector<288x8xf32>
    %103 = tpu.matmul %100, %102, %cst_84 {dimension_numbers = #tpu.dot_dimension_numbers<[1], [0], [0], [1], [0, 0, 1, 1], [], []>} : vector<288x8xbf16>, vector<8x8xbf16>, vector<288x8xf32> -> vector<288x8xf32>
    %104 = arith.addf %99, %103 : vector<288x8xf32>
    %c18_85 = arith.constant 18 : index
    %c0_86 = arith.constant 0 : index
    %105 = vector.load %arg9[%c18_85, %c0_86] : memref<342x8xbf16, #tpu.memory_space<vmem>>, vector<288x8xbf16>
    %c3_87 = arith.constant 3 : index
    %c0_88 = arith.constant 0 : index
    %c0_89 = arith.constant 0 : index
    %106 = vector.load %arg4[%c3_87, %c0_88, %c0_89] : memref<9x8x8xbf16, #tpu.memory_space<vmem>>, vector<1x8x8xbf16>
    %107 = vector.shape_cast %106 : vector<1x8x8xbf16> to vector<8x8xbf16>
    %cst_90 = arith.constant dense<0.000000e+00> : vector<288x8xf32>
    %108 = tpu.matmul %105, %107, %cst_90 {dimension_numbers = #tpu.dot_dimension_numbers<[1], [0], [0], [1], [0, 0, 1, 1], [], []>} : vector<288x8xbf16>, vector<8x8xbf16>, vector<288x8xf32> -> vector<288x8xf32>
    %109 = arith.addf %104, %108 : vector<288x8xf32>
    %c19_91 = arith.constant 19 : index
    %c0_92 = arith.constant 0 : index
    %110 = vector.load %arg9[%c19_91, %c0_92] : memref<342x8xbf16, #tpu.memory_space<vmem>>, vector<288x8xbf16>
    %c4_93 = arith.constant 4 : index
    %c0_94 = arith.constant 0 : index
    %c0_95 = arith.constant 0 : index
    %111 = vector.load %arg4[%c4_93, %c0_94, %c0_95] : memref<9x8x8xbf16, #tpu.memory_space<vmem>>, vector<1x8x8xbf16>
    %112 = vector.shape_cast %111 : vector<1x8x8xbf16> to vector<8x8xbf16>
    %cst_96 = arith.constant dense<0.000000e+00> : vector<288x8xf32>
    %113 = tpu.matmul %110, %112, %cst_96 {dimension_numbers = #tpu.dot_dimension_numbers<[1], [0], [0], [1], [0, 0, 1, 1], [], []>} : vector<288x8xbf16>, vector<8x8xbf16>, vector<288x8xf32> -> vector<288x8xf32>
    %114 = arith.addf %109, %113 : vector<288x8xf32>
    %c20_97 = arith.constant 20 : index
    %c0_98 = arith.constant 0 : index
    %115 = vector.load %arg9[%c20_97, %c0_98] : memref<342x8xbf16, #tpu.memory_space<vmem>>, vector<288x8xbf16>
    %c5_99 = arith.constant 5 : index
    %c0_100 = arith.constant 0 : index
    %c0_101 = arith.constant 0 : index
    %116 = vector.load %arg4[%c5_99, %c0_100, %c0_101] : memref<9x8x8xbf16, #tpu.memory_space<vmem>>, vector<1x8x8xbf16>
    %117 = vector.shape_cast %116 : vector<1x8x8xbf16> to vector<8x8xbf16>
    %cst_102 = arith.constant dense<0.000000e+00> : vector<288x8xf32>
    %118 = tpu.matmul %115, %117, %cst_102 {dimension_numbers = #tpu.dot_dimension_numbers<[1], [0], [0], [1], [0, 0, 1, 1], [], []>} : vector<288x8xbf16>, vector<8x8xbf16>, vector<288x8xf32> -> vector<288x8xf32>
    %119 = arith.addf %114, %118 : vector<288x8xf32>
    %c36_103 = arith.constant 36 : index
    %c0_104 = arith.constant 0 : index
    %120 = vector.load %arg9[%c36_103, %c0_104] : memref<342x8xbf16, #tpu.memory_space<vmem>>, vector<288x8xbf16>
    %c6_105 = arith.constant 6 : index
    %c0_106 = arith.constant 0 : index
    %c0_107 = arith.constant 0 : index
    %121 = vector.load %arg4[%c6_105, %c0_106, %c0_107] : memref<9x8x8xbf16, #tpu.memory_space<vmem>>, vector<1x8x8xbf16>
    %122 = vector.shape_cast %121 : vector<1x8x8xbf16> to vector<8x8xbf16>
    %cst_108 = arith.constant dense<0.000000e+00> : vector<288x8xf32>
    %123 = tpu.matmul %120, %122, %cst_108 {dimension_numbers = #tpu.dot_dimension_numbers<[1], [0], [0], [1], [0, 0, 1, 1], [], []>} : vector<288x8xbf16>, vector<8x8xbf16>, vector<288x8xf32> -> vector<288x8xf32>
    %124 = arith.addf %119, %123 : vector<288x8xf32>
    %c37_109 = arith.constant 37 : index
    %c0_110 = arith.constant 0 : index
    %125 = vector.load %arg9[%c37_109, %c0_110] : memref<342x8xbf16, #tpu.memory_space<vmem>>, vector<288x8xbf16>
    %c7_111 = arith.constant 7 : index
    %c0_112 = arith.constant 0 : index
    %c0_113 = arith.constant 0 : index
    %126 = vector.load %arg4[%c7_111, %c0_112, %c0_113] : memref<9x8x8xbf16, #tpu.memory_space<vmem>>, vector<1x8x8xbf16>
    %127 = vector.shape_cast %126 : vector<1x8x8xbf16> to vector<8x8xbf16>
    %cst_114 = arith.constant dense<0.000000e+00> : vector<288x8xf32>
    %128 = tpu.matmul %125, %127, %cst_114 {dimension_numbers = #tpu.dot_dimension_numbers<[1], [0], [0], [1], [0, 0, 1, 1], [], []>} : vector<288x8xbf16>, vector<8x8xbf16>, vector<288x8xf32> -> vector<288x8xf32>
    %129 = arith.addf %124, %128 : vector<288x8xf32>
    %c38_115 = arith.constant 38 : index
    %c0_116 = arith.constant 0 : index
    %130 = vector.load %arg9[%c38_115, %c0_116] : memref<342x8xbf16, #tpu.memory_space<vmem>>, vector<288x8xbf16>
    %c8_117 = arith.constant 8 : index
    %c0_118 = arith.constant 0 : index
    %c0_119 = arith.constant 0 : index
    %131 = vector.load %arg4[%c8_117, %c0_118, %c0_119] : memref<9x8x8xbf16, #tpu.memory_space<vmem>>, vector<1x8x8xbf16>
    %132 = vector.shape_cast %131 : vector<1x8x8xbf16> to vector<8x8xbf16>
    %cst_120 = arith.constant dense<0.000000e+00> : vector<288x8xf32>
    %133 = tpu.matmul %130, %132, %cst_120 {dimension_numbers = #tpu.dot_dimension_numbers<[1], [0], [0], [1], [0, 0, 1, 1], [], []>} : vector<288x8xbf16>, vector<8x8xbf16>, vector<288x8xf32> -> vector<288x8xf32>
    %134 = arith.addf %129, %133 : vector<288x8xf32>
    %c0_121 = arith.constant 0 : index
    %c0_122 = arith.constant 0 : index
    %135 = vector.load %arg5[%c0_121, %c0_122] : memref<1x8xf32, #tpu.memory_space<vmem>>, vector<1x8xf32>
    %136 = vector.broadcast %135 : vector<1x8xf32> to vector<288x8xf32>
    %137 = arith.addf %134, %136 : vector<288x8xf32>
    %cst_123 = arith.constant 0.000000e+00 : f32
    %138 = vector.broadcast %cst_123 : f32 to vector<288x8xf32>
    %139 = arith.maximumf %137, %138 : vector<288x8xf32>
    %cst_124 = arith.constant 0.000000e+00 : f32
    %140 = vector.shape_cast %26 : vector<288x1xi1> to vector<288x1xi1>
    %141 = vector.broadcast %140 : vector<288x1xi1> to vector<288x8xi1>
    %142 = vector.broadcast %cst_124 : f32 to vector<288x8xf32>
    %143 = arith.select %141, %139, %142 : vector<288x8xi1>, vector<288x8xf32>
    %144 = arith.truncf %143 : vector<288x8xf32> to vector<288x8xbf16>
    %c19_125 = arith.constant 19 : index
    %c0_126 = arith.constant 0 : index
    %145 = vector.load %arg10[%c19_125, %c0_126] : memref<342x8xbf16, #tpu.memory_space<vmem>>, vector<288x8xbf16>
    tpu.vector_store %arg10[%c19_125, %c0_126], %144 {strides = array<i32>} : memref<342x8xbf16, #tpu.memory_space<vmem>>, vector<288x8xbf16>,
    %c0_127 = arith.constant 0 : index
    %c0_128 = arith.constant 0 : index
    %146 = vector.load %arg10[%c0_127, %c0_128] : memref<342x8xbf16, #tpu.memory_space<vmem>>, vector<288x8xbf16>
    %c0_129 = arith.constant 0 : index
    %c0_130 = arith.constant 0 : index
    %c0_131 = arith.constant 0 : index
    %147 = vector.load %arg6[%c0_129, %c0_130, %c0_131] : memref<9x8x8xbf16, #tpu.memory_space<vmem>>, vector<1x8x8xbf16>
    %148 = vector.shape_cast %147 : vector<1x8x8xbf16> to vector<8x8xbf16>
    %cst_132 = arith.constant dense<0.000000e+00> : vector<288x8xf32>
    %149 = tpu.matmul %146, %148, %cst_132 {dimension_numbers = #tpu.dot_dimension_numbers<[1], [0], [0], [1], [0, 0, 1, 1], [], []>} : vector<288x8xbf16>, vector<8x8xbf16>, vector<288x8xf32> -> vector<288x8xf32>
    %c1_133 = arith.constant 1 : index
    %c0_134 = arith.constant 0 : index
    %150 = vector.load %arg10[%c1_133, %c0_134] : memref<342x8xbf16, #tpu.memory_space<vmem>>, vector<288x8xbf16>
    %c1_135 = arith.constant 1 : index
    %c0_136 = arith.constant 0 : index
    %c0_137 = arith.constant 0 : index
    %151 = vector.load %arg6[%c1_135, %c0_136, %c0_137] : memref<9x8x8xbf16, #tpu.memory_space<vmem>>, vector<1x8x8xbf16>
    %152 = vector.shape_cast %151 : vector<1x8x8xbf16> to vector<8x8xbf16>
    %cst_138 = arith.constant dense<0.000000e+00> : vector<288x8xf32>
    %153 = tpu.matmul %150, %152, %cst_138 {dimension_numbers = #tpu.dot_dimension_numbers<[1], [0], [0], [1], [0, 0, 1, 1], [], []>} : vector<288x8xbf16>, vector<8x8xbf16>, vector<288x8xf32> -> vector<288x8xf32>
    %154 = arith.addf %149, %153 : vector<288x8xf32>
    %c2_139 = arith.constant 2 : index
    %c0_140 = arith.constant 0 : index
    %155 = vector.load %arg10[%c2_139, %c0_140] : memref<342x8xbf16, #tpu.memory_space<vmem>>, vector<288x8xbf16>
    %c2_141 = arith.constant 2 : index
    %c0_142 = arith.constant 0 : index
    %c0_143 = arith.constant 0 : index
    %156 = vector.load %arg6[%c2_141, %c0_142, %c0_143] : memref<9x8x8xbf16, #tpu.memory_space<vmem>>, vector<1x8x8xbf16>
    %157 = vector.shape_cast %156 : vector<1x8x8xbf16> to vector<8x8xbf16>
    %cst_144 = arith.constant dense<0.000000e+00> : vector<288x8xf32>
    %158 = tpu.matmul %155, %157, %cst_144 {dimension_numbers = #tpu.dot_dimension_numbers<[1], [0], [0], [1], [0, 0, 1, 1], [], []>} : vector<288x8xbf16>, vector<8x8xbf16>, vector<288x8xf32> -> vector<288x8xf32>
    %159 = arith.addf %154, %158 : vector<288x8xf32>
    %c18_145 = arith.constant 18 : index
    %c0_146 = arith.constant 0 : index
    %160 = vector.load %arg10[%c18_145, %c0_146] : memref<342x8xbf16, #tpu.memory_space<vmem>>, vector<288x8xbf16>
    %c3_147 = arith.constant 3 : index
    %c0_148 = arith.constant 0 : index
    %c0_149 = arith.constant 0 : index
    %161 = vector.load %arg6[%c3_147, %c0_148, %c0_149] : memref<9x8x8xbf16, #tpu.memory_space<vmem>>, vector<1x8x8xbf16>
    %162 = vector.shape_cast %161 : vector<1x8x8xbf16> to vector<8x8xbf16>
    %cst_150 = arith.constant dense<0.000000e+00> : vector<288x8xf32>
    %163 = tpu.matmul %160, %162, %cst_150 {dimension_numbers = #tpu.dot_dimension_numbers<[1], [0], [0], [1], [0, 0, 1, 1], [], []>} : vector<288x8xbf16>, vector<8x8xbf16>, vector<288x8xf32> -> vector<288x8xf32>
    %164 = arith.addf %159, %163 : vector<288x8xf32>
    %c19_151 = arith.constant 19 : index
    %c0_152 = arith.constant 0 : index
    %165 = vector.load %arg10[%c19_151, %c0_152] : memref<342x8xbf16, #tpu.memory_space<vmem>>, vector<288x8xbf16>
    %c4_153 = arith.constant 4 : index
    %c0_154 = arith.constant 0 : index
    %c0_155 = arith.constant 0 : index
    %166 = vector.load %arg6[%c4_153, %c0_154, %c0_155] : memref<9x8x8xbf16, #tpu.memory_space<vmem>>, vector<1x8x8xbf16>
    %167 = vector.shape_cast %166 : vector<1x8x8xbf16> to vector<8x8xbf16>
    %cst_156 = arith.constant dense<0.000000e+00> : vector<288x8xf32>
    %168 = tpu.matmul %165, %167, %cst_156 {dimension_numbers = #tpu.dot_dimension_numbers<[1], [0], [0], [1], [0, 0, 1, 1], [], []>} : vector<288x8xbf16>, vector<8x8xbf16>, vector<288x8xf32> -> vector<288x8xf32>
    %169 = arith.addf %164, %168 : vector<288x8xf32>
    %c20_157 = arith.constant 20 : index
    %c0_158 = arith.constant 0 : index
    %170 = vector.load %arg10[%c20_157, %c0_158] : memref<342x8xbf16, #tpu.memory_space<vmem>>, vector<288x8xbf16>
    %c5_159 = arith.constant 5 : index
    %c0_160 = arith.constant 0 : index
    %c0_161 = arith.constant 0 : index
    %171 = vector.load %arg6[%c5_159, %c0_160, %c0_161] : memref<9x8x8xbf16, #tpu.memory_space<vmem>>, vector<1x8x8xbf16>
    %172 = vector.shape_cast %171 : vector<1x8x8xbf16> to vector<8x8xbf16>
    %cst_162 = arith.constant dense<0.000000e+00> : vector<288x8xf32>
    %173 = tpu.matmul %170, %172, %cst_162 {dimension_numbers = #tpu.dot_dimension_numbers<[1], [0], [0], [1], [0, 0, 1, 1], [], []>} : vector<288x8xbf16>, vector<8x8xbf16>, vector<288x8xf32> -> vector<288x8xf32>
    %174 = arith.addf %169, %173 : vector<288x8xf32>
    %c36_163 = arith.constant 36 : index
    %c0_164 = arith.constant 0 : index
    %175 = vector.load %arg10[%c36_163, %c0_164] : memref<342x8xbf16, #tpu.memory_space<vmem>>, vector<288x8xbf16>
    %c6_165 = arith.constant 6 : index
    %c0_166 = arith.constant 0 : index
    %c0_167 = arith.constant 0 : index
    %176 = vector.load %arg6[%c6_165, %c0_166, %c0_167] : memref<9x8x8xbf16, #tpu.memory_space<vmem>>, vector<1x8x8xbf16>
    %177 = vector.shape_cast %176 : vector<1x8x8xbf16> to vector<8x8xbf16>
    %cst_168 = arith.constant dense<0.000000e+00> : vector<288x8xf32>
    %178 = tpu.matmul %175, %177, %cst_168 {dimension_numbers = #tpu.dot_dimension_numbers<[1], [0], [0], [1], [0, 0, 1, 1], [], []>} : vector<288x8xbf16>, vector<8x8xbf16>, vector<288x8xf32> -> vector<288x8xf32>
    %179 = arith.addf %174, %178 : vector<288x8xf32>
    %c37_169 = arith.constant 37 : index
    %c0_170 = arith.constant 0 : index
    %180 = vector.load %arg10[%c37_169, %c0_170] : memref<342x8xbf16, #tpu.memory_space<vmem>>, vector<288x8xbf16>
    %c7_171 = arith.constant 7 : index
    %c0_172 = arith.constant 0 : index
    %c0_173 = arith.constant 0 : index
    %181 = vector.load %arg6[%c7_171, %c0_172, %c0_173] : memref<9x8x8xbf16, #tpu.memory_space<vmem>>, vector<1x8x8xbf16>
    %182 = vector.shape_cast %181 : vector<1x8x8xbf16> to vector<8x8xbf16>
    %cst_174 = arith.constant dense<0.000000e+00> : vector<288x8xf32>
    %183 = tpu.matmul %180, %182, %cst_174 {dimension_numbers = #tpu.dot_dimension_numbers<[1], [0], [0], [1], [0, 0, 1, 1], [], []>} : vector<288x8xbf16>, vector<8x8xbf16>, vector<288x8xf32> -> vector<288x8xf32>
    %184 = arith.addf %179, %183 : vector<288x8xf32>
    %c38_175 = arith.constant 38 : index
    %c0_176 = arith.constant 0 : index
    %185 = vector.load %arg10[%c38_175, %c0_176] : memref<342x8xbf16, #tpu.memory_space<vmem>>, vector<288x8xbf16>
    %c8_177 = arith.constant 8 : index
    %c0_178 = arith.constant 0 : index
    %c0_179 = arith.constant 0 : index
    %186 = vector.load %arg6[%c8_177, %c0_178, %c0_179] : memref<9x8x8xbf16, #tpu.memory_space<vmem>>, vector<1x8x8xbf16>
    %187 = vector.shape_cast %186 : vector<1x8x8xbf16> to vector<8x8xbf16>
    %cst_180 = arith.constant dense<0.000000e+00> : vector<288x8xf32>
    %188 = tpu.matmul %185, %187, %cst_180 {dimension_numbers = #tpu.dot_dimension_numbers<[1], [0], [0], [1], [0, 0, 1, 1], [], []>} : vector<288x8xbf16>, vector<8x8xbf16>, vector<288x8xf32> -> vector<288x8xf32>
    %189 = arith.addf %184, %188 : vector<288x8xf32>
    %190 = vector.shape_cast %189 : vector<288x8xf32> to vector<8x2x9x2x8xf32>
    %cst_181 = arith.constant dense<0xFF800000> : vector<8x2x9x8xf32>
    %191 = vector.multi_reduction <maximumf>, %190, %cst_181 [3] : vector<8x2x9x2x8xf32> to vector<8x2x9x8xf32>
    %cst_182 = arith.constant dense<0xFF800000> : vector<8x9x8xf32>
    %192 = vector.multi_reduction <maximumf>, %191, %cst_182 [1] : vector<8x2x9x8xf32> to vector<8x9x8xf32>
    %193 = vector.extract_strided_slice %192 {offsets = [0, 0, 0], sizes = [8, 8, 8], strides = [1, 1, 1]} : vector<8x9x8xf32> to vector<8x8x8xf32>
    %c0_183 = arith.constant 0 : index
    %c0_184 = arith.constant 0 : index
    %194 = vector.load %arg7[%c0_183, %c0_184] : memref<1x8xf32, #tpu.memory_space<vmem>>, vector<1x8xf32>
    %195 = vector.shape_cast %194 : vector<1x8xf32> to vector<1x1x8xf32>
    %196 = vector.broadcast %195 : vector<1x1x8xf32> to vector<8x8x8xf32>
    %197 = arith.addf %193, %196 : vector<8x8x8xf32>
    %cst_185 = arith.constant 0.000000e+00 : f32
    %198 = vector.broadcast %cst_185 : f32 to vector<8x8x8xf32>
    %199 = arith.maximumf %197, %198 : vector<8x8x8xf32>
    %200 = vector.shape_cast %199 : vector<8x8x8xf32> to vector<1x8x64xf32>
    %c0_186 = arith.constant 0 : index
    %c0_187 = arith.constant 0 : index
    %c0_188 = arith.constant 0 : index
    %201 = vector.load %arg8[%c0_186, %c0_187, %c0_188] : memref<1x8x64xf32, #tpu.memory_space<vmem>>, vector<1x8x64xf32>
    tpu.vector_store %arg8[%c0_186, %c0_187, %c0_188], %200 {strides = array<i32>} : memref<1x8x64xf32, #tpu.memory_space<vmem>>, vector<1x8x64xf32>,
    return
  }
  func.func @transform_0(%arg0: i32) -> (i32, i32, i32) {
    %c0_i32 = arith.constant 0 : i32
    %c0_i32_0 = arith.constant 0 : i32
    %c0_i32_1 = arith.constant 0 : i32
    return %arg0, %c0_i32, %c0_i32_0 : i32, i32, i32
  }
  func.func @transform_1(%arg0: i32) -> (i32, i32, i32) {
    %c0_i32 = arith.constant 0 : i32
    %c0_i32_0 = arith.constant 0 : i32
    %c0_i32_1 = arith.constant 0 : i32
    %c0_i32_2 = arith.constant 0 : i32
    return %c0_i32, %c0_i32_0, %c0_i32_1 : i32, i32, i32
  }
  func.func @transform_2(%arg0: i32) -> (i32, i32) {
    %c0_i32 = arith.constant 0 : i32
    %c0_i32_0 = arith.constant 0 : i32
    %c0_i32_1 = arith.constant 0 : i32
    return %c0_i32, %c0_i32_0 : i32, i32
  }
  func.func @transform_3(%arg0: i32) -> (i32, i32, i32) {
    %c0_i32 = arith.constant 0 : i32
    %c0_i32_0 = arith.constant 0 : i32
    %c0_i32_1 = arith.constant 0 : i32
    %c0_i32_2 = arith.constant 0 : i32
    return %c0_i32, %c0_i32_0, %c0_i32_1 : i32, i32, i32
  }
  func.func @transform_4(%arg0: i32) -> (i32, i32) {
    %c0_i32 = arith.constant 0 : i32
    %c0_i32_0 = arith.constant 0 : i32
    %c0_i32_1 = arith.constant 0 : i32
    return %c0_i32, %c0_i32_0 : i32, i32
  }
  func.func @transform_5(%arg0: i32) -> (i32, i32, i32) {
    %c0_i32 = arith.constant 0 : i32
    %c0_i32_0 = arith.constant 0 : i32
    %c0_i32_1 = arith.constant 0 : i32
    %c0_i32_2 = arith.constant 0 : i32
    return %c0_i32, %c0_i32_0, %c0_i32_1 : i32, i32, i32
  }
  func.func @transform_6(%arg0: i32) -> (i32, i32) {
    %c0_i32 = arith.constant 0 : i32
    %c0_i32_0 = arith.constant 0 : i32
    %c0_i32_1 = arith.constant 0 : i32
    return %c0_i32, %c0_i32_0 : i32, i32
  }
  func.func @transform_7(%arg0: i32) -> (i32, i32, i32) {
    %c0_i32 = arith.constant 0 : i32
    %c0_i32_0 = arith.constant 0 : i32
    %c0_i32_1 = arith.constant 0 : i32
    return %arg0, %c0_i32, %c0_i32_0 : i32, i32, i32
  }
}

</mosaic_0001>

<llo_original>
// kernel: second_block_forward.1
$region0: #{second_block_forward.1}
  #allocation0 [shape = 'u32[]', space=smem, size = 0x4, offset = 0x4, fixed_abs, tag = 'smem constant byte address 0x4 - core index']
  #allocation1 [shape = 'u32[72,128]{1,0:T(1,128)}', space=vmem, size = 0x9000, scoped, tag = 'internal scratch']
  #allocation2 [shape = 'bf16[342,8]{1,0:T(8,128)(2,1)}', space=vmem, size = 0x15800, scoped, tag = 'scratch operand']
  #allocation3 [shape = 'bf16[342,8]{1,0:T(8,128)(2,1)}', space=vmem, size = 0x15800, scoped, tag = 'scratch operand']
  %s0 = inlined_call_operand.vmem [shape: bf16[2,342,4], index: 0, kind: input, shape index: {}]
  %s1 = inlined_call_operand.vmem [shape: bf16[9,4,8], index: 1, kind: input, shape index: {}]
  %s2 = inlined_call_operand.vmem [shape: f32[1,8], index: 2, kind: input, shape index: {}]
  %s3 = inlined_call_operand.vmem [shape: bf16[9,8,8], index: 3, kind: input, shape index: {}]
  %s4 = inlined_call_operand.vmem [shape: f32[1,8], index: 4, kind: input, shape index: {}]
  %s5 = inlined_call_operand.vmem [shape: bf16[9,8,8], index: 5, kind: input, shape index: {}]
  %s6 = inlined_call_operand.vmem [shape: f32[1,8], index: 6, kind: input, shape index: {}]
  %s7 = inlined_call_operand.vmem [shape: f32[2,8,64], index: 7, kind: output, shape index: {}]
  %s8 = sld [smem:[#allocation0]]
  $region61: #{second_block_forward.1} parent=0
    _
  %s10 = ssub.s32 1, %s8
  %s11 = scalar_select 0, %s10, %s8
  loop: start=0, step=1, limit=4
  $region2: #{second_block_forward.1} parent=0 // loop_pre_header
    _
  $region3: #{second_block_forward.1} parent=0 // loop_header
    %s13 = sphi 0, %s17
    %p14 = scmp.ge.s32.totalorder %s13, 4
    %s23 = sphi 0, %s25
    %s26 = sphi 0, %s23
    %s27 = sphi 0, %s26
    %s43 = sphi 0, %s27
    %s47 = sphi 0, %s47
    %s49 = sphi 0, %s47
    %s50 = sphi 0, %s49
    %s64 = sphi 0, %s50
    %s68 = sphi 0, %s68
    %s70 = sphi 0, %s68
    %s71 = sphi 0, %s70
    %s85 = sphi 0, %s71
    %s89 = sphi 0, %s89
    %s91 = sphi 0, %s89
    %s92 = sphi 0, %s91
    %s106 = sphi 0, %s92
    %s110 = sphi 0, %s110
    %s112 = sphi 0, %s110
    %s113 = sphi 0, %s112
    %s127 = sphi 0, %s113
    %s131 = sphi 0, %s131
    %s133 = sphi 0, %s131
    %s134 = sphi 0, %s133
    %s148 = sphi 0, %s134
    %s152 = sphi 0, %s152
    %s154 = sphi 0, %s152
    %s155 = sphi 0, %s154
    %s169 = sphi 0, %s155
    %s175 = sphi 0, %s177
    %s178 = sphi 0, %s175
    %s179 = sphi 0, %s178
    %s195 = sphi 0, %s179
  $region4: #{second_block_forward.1} parent=0 // loop_header_branch
    %16 = sbr.rel (%p14) target = $region8
  $region5: #{second_block_forward.1} parent=0 // loop_body
    %s18 = ssub.s32 %s13, 1
    %s19 = ssub.s32 %s13, 2
    %s20 = sadd.s32 %s13, 1
    %s21 = ssub.s32 %s13, %s20
    %p22 = scmp.eq.s32.totalorder %s21, 0
    %s24 = sadd.s32 %s23, 1
    %s25 = scalar_select %p22, %s23, %s24
    %p28 = pneg %p22
    %p29 = scmp.eq.s32.totalorder %s13, 1
    %p30 = por %p28, %p29
    %p31 = scmp.ne.s32.totalorder %s23, %s26
    %p32 = scmp.eq.s32.totalorder %s13, 0
    %p33 = por %p31, %p32
    %p34 = scmp.ne.s32.totalorder %s23, %s26
    %p35 = scmp.eq.s32.totalorder %s18, 1
    %p36 = por %p34, %p35
    %p37 = scmp.ne.s32.totalorder %s26, %s27
    %p38 = scmp.eq.s32.totalorder %s18, 0
    %p39 = por %p37, %p38
    %p40 = scmp.ne.s32.totalorder %s26, %s27
    %p41 = scmp.eq.s32.totalorder %s19, 1
    %p42 = por %p40, %p41
    %p44 = scmp.ne.s32.totalorder %s27, %s43
    %p45 = scmp.eq.s32.totalorder %s19, 0
    %p46 = por %p44, %p45
    %s48 = sadd.s32 %s47, 1
    %p51 = scmp.eq.s32.totalorder %s13, 1
    %p52 = scmp.ne.s32.totalorder %s47, %s49
    %p53 = scmp.eq.s32.totalorder %s13, 0
    %p54 = por %p52, %p53
    %p55 = scmp.ne.s32.totalorder %s47, %s49
    %p56 = scmp.eq.s32.totalorder %s18, 1
    %p57 = por %p55, %p56
    %p58 = scmp.ne.s32.totalorder %s49, %s50
    %p59 = scmp.eq.s32.totalorder %s18, 0
    %p60 = por %p58, %p59
    %p61 = scmp.ne.s32.totalorder %s49, %s50
    %p62 = scmp.eq.s32.totalorder %s19, 1
    %p63 = por %p61, %p62
    %p65 = scmp.ne.s32.totalorder %s50, %s64
    %p66 = scmp.eq.s32.totalorder %s19, 0
    %p67 = por %p65, %p66
    %s69 = sadd.s32 %s68, 1
    %p72 = scmp.eq.s32.totalorder %s13, 1
    %p73 = scmp.ne.s32.totalorder %s68, %s70
    %p74 = scmp.eq.s32.totalorder %s13, 0
    %p75 = por %p73, %p74
    %p76 = scmp.ne.s32.totalorder %s68, %s70
    %p77 = scmp.eq.s32.totalorder %s18, 1
    %p78 = por %p76, %p77
    %p79 = scmp.ne.s32.totalorder %s70, %s71
    %p80 = scmp.eq.s32.totalorder %s18, 0
    %p81 = por %p79, %p80
    %p82 = scmp.ne.s32.totalorder %s70, %s71
    %p83 = scmp.eq.s32.totalorder %s19, 1
    %p84 = por %p82, %p83
    %p86 = scmp.ne.s32.totalorder %s71, %s85
    %p87 = scmp.eq.s32.totalorder %s19, 0
    %p88 = por %p86, %p87
    %s90 = sadd.s32 %s89, 1
    %p93 = scmp.eq.s32.totalorder %s13, 1
    %p94 = scmp.ne.s32.totalorder %s89, %s91
    %p95 = scmp.eq.s32.totalorder %s13, 0
    %p96 = por %p94, %p95
    %p97 = scmp.ne.s32.totalorder %s89, %s91
    %p98 = scmp.eq.s32.totalorder %s18, 1
    %p99 = por %p97, %p98
    %p100 = scmp.ne.s32.totalorder %s91, %s92
    %p101 = scmp.eq.s32.totalorder %s18, 0
    %p102 = por %p100, %p101
    %p103 = scmp.ne.s32.totalorder %s91, %s92
    %p104 = scmp.eq.s32.totalorder %s19, 1
    %p105 = por %p103, %p104
    %p107 = scmp.ne.s32.totalorder %s92, %s106
    %p108 = scmp.eq.s32.totalorder %s19, 0
    %p109 = por %p107, %p108
    %s111 = sadd.s32 %s110, 1
    %p114 = scmp.eq.s32.totalorder %s13, 1
    %p115 = scmp.ne.s32.totalorder %s110, %s112
    %p116 = scmp.eq.s32.totalorder %s13, 0
    %p117 = por %p115, %p116
    %p118 = scmp.ne.s32.totalorder %s110, %s112
    %p119 = scmp.eq.s32.totalorder %s18, 1
    %p120 = por %p118, %p119
    %p121 = scmp.ne.s32.totalorder %s112, %s113
    %p122 = scmp.eq.s32.totalorder %s18, 0
    %p123 = por %p121, %p122
    %p124 = scmp.ne.s32.totalorder %s112, %s113
    %p125 = scmp.eq.s32.totalorder %s19, 1
    %p126 = por %p124, %p125
    %p128 = scmp.ne.s32.totalorder %s113, %s127
    %p129 = scmp.eq.s32.totalorder %s19, 0
    %p130 = por %p128, %p129
    %s132 = sadd.s32 %s131, 1
    %p135 = scmp.eq.s32.totalorder %s13, 1
    %p136 = scmp.ne.s32.totalorder %s131, %s133
    %p137 = scmp.eq.s32.totalorder %s13, 0
    %p138 = por %p136, %p137
    %p139 = scmp.ne.s32.totalorder %s131, %s133
    %p140 = scmp.eq.s32.totalorder %s18, 1
    %p141 = por %p139, %p140
    %p142 = scmp.ne.s32.totalorder %s133, %s134
    %p143 = scmp.eq.s32.totalorder %s18, 0
    %p144 = por %p142, %p143
    %p145 = scmp.ne.s32.totalorder %s133, %s134
    %p146 = scmp.eq.s32.totalorder %s19, 1
    %p147 = por %p145, %p146
    %p149 = scmp.ne.s32.totalorder %s134, %s148
    %p150 = scmp.eq.s32.totalorder %s19, 0
    %p151 = por %p149, %p150
    %s153 = sadd.s32 %s152, 1
    %p156 = scmp.eq.s32.totalorder %s13, 1
    %p157 = scmp.ne.s32.totalorder %s152, %s154
    %p158 = scmp.eq.s32.totalorder %s13, 0
    %p159 = por %p157, %p158
    %p160 = scmp.ne.s32.totalorder %s152, %s154
    %p161 = scmp.eq.s32.totalorder %s18, 1
    %p162 = por %p160, %p161
    %p163 = scmp.ne.s32.totalorder %s154, %s155
    %p164 = scmp.eq.s32.totalorder %s18, 0
    %p165 = por %p163, %p164
    %p166 = scmp.ne.s32.totalorder %s154, %s155
    %p167 = scmp.eq.s32.totalorder %s19, 1
    %p168 = por %p166, %p167
    %p170 = scmp.ne.s32.totalorder %s155, %s169
    %p171 = scmp.eq.s32.totalorder %s19, 0
    %p172 = por %p170, %p171
    %s173 = ssub.s32 %s13, %s20
    %p174 = scmp.eq.s32.totalorder %s173, 0
    %s176 = sadd.s32 %s175, 1
    %s177 = scalar_select %p174, %s175, %s176
    %p180 = pneg %p174
    %p181 = scmp.eq.s32.totalorder %s13, 1
    %p182 = por %p180, %p181
    %p183 = scmp.ne.s32.totalorder %s175, %s178
    %p184 = scmp.eq.s32.totalorder %s13, 0
    %p185 = por %p183, %p184
    %p186 = scmp.ne.s32.totalorder %s175, %s178
    %p187 = scmp.eq.s32.totalorder %s18, 1
    %p188 = por %p186, %p187
    %p189 = scmp.ne.s32.totalorder %s178, %s179
    %p190 = scmp.eq.s32.totalorder %s18, 0
    %p191 = por %p189, %p190
    %p192 = scmp.ne.s32.totalorder %s178, %s179
    %p193 = scmp.eq.s32.totalorder %s19, 1
    %p194 = por %p192, %p193
    %p196 = scmp.ne.s32.totalorder %s179, %s195
    %p197 = scmp.eq.s32.totalorder %s19, 0
    %p198 = por %p196, %p197
    %p199 = scmp.le.s32.totalorder 1, %s13
    %p200 = scmp.lt.s32.totalorder %s13, 3
    %p201 = pnand %p199, %p200
    %p202 = pneg %p201
    // Predicated region
    $region9: #{second_block_forward.1} parent=5 // pred_check
      _
    $region10: #{second_block_forward.1} parent=5 // pred_check_branch
      %204 = sbr.rel (%p201) target = $region12
    $region11: #{second_block_forward.1} parent=5 // pred_region
      %s205 = ssub.s32 %s13, 1
      // Predicated region
      $region13: #{second_block_forward.1} parent=11 // pred_check
        %p206 = pneg %p60
      $region14: #{second_block_forward.1} parent=11 // pred_check_branch
        %208 = sbr.rel (%p206) target = $region16
      $region15: #{second_block_forward.1} parent=11 // pred_region
        _
      $region16: #{second_block_forward.1} parent=11 // pred_fallthru
        _
      // Predicated region
      $region17: #{second_block_forward.1} parent=11 // pred_check
        %p209 = pneg %p81
      $region18: #{second_block_forward.1} parent=11 // pred_check_branch
        %211 = sbr.rel (%p209) target = $region20
      $region19: #{second_block_forward.1} parent=11 // pred_region
        _
      $region20: #{second_block_forward.1} parent=11 // pred_fallthru
        _
      // Predicated region
      $region21: #{second_block_forward.1} parent=11 // pred_check
        %p212 = pneg %p102
      $region22: #{second_block_forward.1} parent=11 // pred_check_branch
        %214 = sbr.rel (%p212) target = $region24
      $region23: #{second_block_forward.1} parent=11 // pred_region
        _
      $region24: #{second_block_forward.1} parent=11 // pred_fallthru
        _
      // Predicated region
      $region25: #{second_block_forward.1} parent=11 // pred_check
        %p215 = pneg %p123
      $region26: #{second_block_forward.1} parent=11 // pred_check_branch
        %217 = sbr.rel (%p215) target = $region28
      $region27: #{second_block_forward.1} parent=11 // pred_region
        _
      $region28: #{second_block_forward.1} parent=11 // pred_fallthru
        _
      // Predicated region
      $region29: #{second_block_forward.1} parent=11 // pred_check
        %p218 = pneg %p144
      $region30: #{second_block_forward.1} parent=11 // pred_check_branch
        %220 = sbr.rel (%p218) target = $region32
      $region31: #{second_block_forward.1} parent=11 // pred_region
        _
      $region32: #{second_block_forward.1} parent=11 // pred_fallthru
        _
      // Predicated region
      $region33: #{second_block_forward.1} parent=11 // pred_check
        %p221 = pneg %p165
      $region34: #{second_block_forward.1} parent=11 // pred_check_branch
        %223 = sbr.rel (%p221) target = $region36
      $region35: #{second_block_forward.1} parent=11 // pred_region
        _
      $region36: #{second_block_forward.1} parent=11 // pred_fallthru
        _
    $region12: #{second_block_forward.1} parent=5 // pred_fallthru
      _
    %p224 = scmp.lt.s32.totalorder %s13, 2
    // Predicated region
    $region37: #{second_block_forward.1} parent=5 // pred_check
      %p225 = pneg %p224
    $region38: #{second_block_forward.1} parent=5 // pred_check_branch
      %227 = sbr.rel (%p225) target = $region40
    $region39: #{second_block_forward.1} parent=5 // pred_region
      // Predicated region
      $region41: #{second_block_forward.1} parent=39 // pred_check
        %p228 = pneg %p33
      $region42: #{second_block_forward.1} parent=39 // pred_check_branch
        %230 = sbr.rel (%p228) target = $region44
      $region43: #{second_block_forward.1} parent=39 // pred_region
        %p231 = scmp.lt.s32.totalorder %s13, 1
        %s232 = scalar_select %p231, %s13, 1
        %s233 = smul.addr %s232, 43
        %s234 = smul.addr %s233, 4
        %s235 = scalar_lea.vmem %s0, %s234
      $region44: #{second_block_forward.1} parent=39 // pred_fallthru
        _
    $region40: #{second_block_forward.1} parent=5 // pred_fallthru
      _
    %p236 = scmp.le.s32.totalorder 1, %s13
    %p237 = scmp.lt.s32.totalorder %s13, 3
    %p238 = pnand %p236, %p237
    %p239 = pneg %p238
    // Predicated region
    $region45: #{second_block_forward.1} parent=5 // pred_check
      _
    $region46: #{second_block_forward.1} parent=5 // pred_check_branch
      %241 = sbr.rel (%p238) target = $region48
    $region47: #{second_block_forward.1} parent=5 // pred_region
      %s242 = ssub.s32 %s13, 1
      %p243 = scmp.lt.s32.totalorder %s18, 1
      %s244 = scalar_select %p243, %s18, 1
      %s245 = smul.addr %s244, 43
      %s246 = smul.addr %s245, 4
      %s247 = scalar_lea.vmem %s0, %s246
      %p248 = pneg %p39
      %p249 = pneg %p36
      %p250 = pneg %p60
      %p251 = pneg %p57
      %p252 = pneg %p81
      %p253 = pneg %p78
      %p254 = pneg %p102
      %p255 = pneg %p99
      %p256 = pneg %p123
      %p257 = pneg %p120
      %p258 = pneg %p144
      %p259 = pneg %p141
      %p260 = pneg %p165
      %p261 = pneg %p162
      %p262 = pneg %p191
      %p263 = pneg %p188
      %p264 = scmp.lt.s32.totalorder %s18, 1
      %s265 = scalar_select %p264, %s18, 1
      %s266 = smul.addr %s265, 8
      %s267 = scalar_lea.vmem %s7, %s266
      %p268 = scmp.lt.s32.totalorder %s18, 1
      %s269 = scalar_select %p268, %s18, 1
      %s270 = smul.addr %s269, 43
      %s271 = smul.addr %s270, 4
      %s272 = scalar_lea.vmem %s0, %s271
      %p273 = scmp.lt.s32.totalorder %s18, 1
      %s274 = scalar_select %p273, %s18, 1
      %s275 = smul.addr %s274, 8
      %s276 = scalar_lea.vmem %s7, %s275
      %vm278 = vcmask 60416
      %279 = vst.msk [vmem:[#allocation2] sm:$0xf] %vm278, 0
      %280 = vst.msk [vmem:[#allocation2 + $0x4] sm:$0xf] %vm278, 0
      %vm281 = vcmask 58368
      %vm282 = vsmask.f32 1280
      %vm283 = vmand %vm281, %vm282
      %v284 = vld [vmem:[#allocation2 + $0x8] sm:$0x3]
      %v285 = vsel %vm283, 0, %v284
      %286 = vst [vmem:[#allocation2 + $0x8] sm:$0x3] %v285
      %vm287 = vcmask 60417
      %vm288 = vsmask.f32 7942
      %vm289 = vmand %vm287, %vm288
      %v290 = vld [vmem:[#allocation2 + $0x98] sm:$0xe]
      %v291 = vsel %vm289, 0, %v290
      %292 = vst [vmem:[#allocation2 + $0x98] sm:$0xe] %v291
      %293 = vst.msk [vmem:[#allocation2 + $0x9c] sm:$0xf] %vm278, 0
      %294 = vst.msk [vmem:[#allocation2 + $0xa0] sm:$0xf] %vm278, 0
      %295 = vst.msk [vmem:[#allocation2 + $0xa4] sm:$0xf] %vm278, 0
      %vm296 = vcmask 59392
      %297 = vst.msk [vmem:[#allocation2 + $0xa8] sm:$0x7] %vm296, 0
      %298 = vst.msk [vmem:[#allocation3] sm:$0xf] %vm278, 0
      %299 = vst.msk [vmem:[#allocation3 + $0x4] sm:$0xf] %vm278, 0
      %v300 = vld [vmem:[#allocation3 + $0x8] sm:$0x3]
      %v301 = vsel %vm283, 0, %v300
      %302 = vst [vmem:[#allocation3 + $0x8] sm:$0x3] %v301
      %v303 = vld [vmem:[#allocation3 + $0x98] sm:$0xe]
      %v304 = vsel %vm289, 0, %v303
      %305 = vst [vmem:[#allocation3 + $0x98] sm:$0xe] %v304
      %306 = vst.msk [vmem:[#allocation3 + $0x9c] sm:$0xf] %vm278, 0
      %307 = vst.msk [vmem:[#allocation3 + $0xa0] sm:$0xf] %vm278, 0
      %308 = vst.msk [vmem:[#allocation3 + $0xa4] sm:$0xf] %vm278, 0
      %309 = vst.msk [vmem:[#allocation3 + $0xa8] sm:$0x7] %vm296, 0
      %v310 = vlaneseq
      %v311 = vshrl.u32 %v310, 7
      %v312 = vadd.s32 %v311, 8
      %v313 = vadd.s32 %v311, 16
      %v314 = vadd.s32 %v311, 24
      %v315 = vadd.s32 %v311, 32
      %v316 = vadd.s32 %v311, 40
      %v317 = vadd.s32 %v311, 48
      %v318 = vadd.s32 %v311, 56
      %v319 = vadd.s32 %v311, 64
      %v320 = vadd.s32 %v311, 72
      %v321 = vadd.s32 %v311, 80
      %v322 = vadd.s32 %v311, 88
      %v323 = vadd.s32 %v311, 96
      %v324 = vadd.s32 %v311, 104
      %v325 = vadd.s32 %v311, 112
      %v326 = vadd.s32 %v311, 120
      %v327 = vadd.s32 %v311, 128
      %v328 = vadd.s32 %v311, 136
      %v329 = vadd.s32 %v311, 144
      %v330 = vadd.s32 %v311, 152
      %v331 = vadd.s32 %v311, 160
      %v332 = vadd.s32 %v311, 168
      %v333 = vadd.s32 %v311, 176
      %v334 = vadd.s32 %v311, 184
      %v335 = vadd.s32 %v311, 192
      %v336 = vadd.s32 %v311, 200
      %v337 = vadd.s32 %v311, 208
      %v338 = vadd.s32 %v311, 216
      %v339 = vadd.s32 %v311, 224
      %v340 = vadd.s32 %v311, 232
      %v341 = vadd.s32 %v311, 240
      %v342 = vadd.s32 %v311, 248
      %v343 = vadd.s32 %v311, 256
      %v344 = vadd.s32 %v311, 264
      %v345 = vadd.s32 %v311, 272
      %v346 = vadd.s32 %v311, 280
      %vm347 = vcmp.lt.s32.totalorder %v311, 0
      %v348 = vsub.s32 0, %v311
      %v349 = vsel %vm347, %v348, %v311
      %v350 = vand.u32 %v349, 65535
      %v351 = vshrl.u32 %v349, 16
      %v353 = vmul.u32 %v350, 14564
      %v354 = vmul.u32 %v350, 58254
      %v355 = vmul.u32 %v351, 14564
      %v356 = vmul.u32 %v351, 58254
      %v357 = vshll.u32 %v354, 16
      %v358 = vshrl.u32 %v354, 16
      %v359 = vshll.u32 %v355, 16
      %v360 = vshrl.u32 %v355, 16
      %vm361 = vc.u32 %v353, %v357
      %v362 = vsel %vm361, 1, 0
      %v363 = vadd.s32 %v353, %v357
      %v364 = vadd.s32 %v356, %v362
      %vm365 = vc.u32 %v363, %v359
      %v366 = vsel %vm365, 1, 0
      %v367 = vadd.s32 %v363, %v359
      %v368 = vadd.s32 %v364, %v366
      %v369 = vadd.s32 %v368, %v358
      %v370 = vadd.s32 %v369, %v360
      %v371 = vshrl.u32 %v370, 4
      %v372 = vmul.u32 %v371, 18
      %v373 = vsub.s32 %v349, %v372
      %v374 = vsub.s32 0, %v373
      %v375 = vsel %vm347, %v374, %v373
      %vm376 = vcmp.lt.s32.totalorder %v312, 0
      %v377 = vsub.s32 0, %v312
      %v378 = vsel %vm376, %v377, %v312
      %v379 = vand.u32 %v378, 65535
      %v380 = vshrl.u32 %v378, 16
      %v382 = vmul.u32 %v379, 14564
      %v383 = vmul.u32 %v379, 58254
      %v384 = vmul.u32 %v380, 14564
      %v385 = vmul.u32 %v380, 58254
      %v386 = vshll.u32 %v383, 16
      %v387 = vshrl.u32 %v383, 16
      %v388 = vshll.u32 %v384, 16
      %v389 = vshrl.u32 %v384, 16
      %vm390 = vc.u32 %v382, %v386
      %v391 = vsel %vm390, 1, 0
      %v392 = vadd.s32 %v382, %v386
      %v393 = vadd.s32 %v385, %v391
      %vm394 = vc.u32 %v392, %v388
      %v395 = vsel %vm394, 1, 0
      %v396 = vadd.s32 %v392, %v388
      %v397 = vadd.s32 %v393, %v395
      %v398 = vadd.s32 %v397, %v387
      %v399 = vadd.s32 %v398, %v389
      %v400 = vshrl.u32 %v399, 4
      %v401 = vmul.u32 %v400, 18
      %v402 = vsub.s32 %v378, %v401
      %v403 = vsub.s32 0, %v402
      %v404 = vsel %vm376, %v403, %v402
      %vm405 = vcmp.lt.s32.totalorder %v313, 0
      %v406 = vsub.s32 0, %v313
      %v407 = vsel %vm405, %v406, %v313
      %v408 = vand.u32 %v407, 65535
      %v409 = vshrl.u32 %v407, 16
      %v411 = vmul.u32 %v408, 14564
      %v412 = vmul.u32 %v408, 58254
      %v413 = vmul.u32 %v409, 14564
      %v414 = vmul.u32 %v409, 58254
      %v415 = vshll.u32 %v412, 16
      %v416 = vshrl.u32 %v412, 16
      %v417 = vshll.u32 %v413, 16
      %v418 = vshrl.u32 %v413, 16
      %vm419 = vc.u32 %v411, %v415
      %v420 = vsel %vm419, 1, 0
      %v421 = vadd.s32 %v411, %v415
      %v422 = vadd.s32 %v414, %v420
      %vm423 = vc.u32 %v421, %v417
      %v424 = vsel %vm423, 1, 0
      %v425 = vadd.s32 %v421, %v417
      %v426 = vadd.s32 %v422, %v424
      %v427 = vadd.s32 %v426, %v416
      %v428 = vadd.s32 %v427, %v418
      %v429 = vshrl.u32 %v428, 4
      %v430 = vmul.u32 %v429, 18
      %v431 = vsub.s32 %v407, %v430
      %v432 = vsub.s32 0, %v431
      %v433 = vsel %vm405, %v432, %v431
      %vm434 = vcmp.lt.s32.totalorder %v314, 0
      %v435 = vsub.s32 0, %v314
      %v436 = vsel %vm434, %v435, %v314
      %v437 = vand.u32 %v436, 65535
      %v438 = vshrl.u32 %v436, 16
      %v440 = vmul.u32 %v437, 14564
      %v441 = vmul.u32 %v437, 58254
      %v442 = vmul.u32 %v438, 14564
      %v443 = vmul.u32 %v438, 58254
      %v444 = vshll.u32 %v441, 16
      %v445 = vshrl.u32 %v441, 16
      %v446 = vshll.u32 %v442, 16
      %v447 = vshrl.u32 %v442, 16
      %vm448 = vc.u32 %v440, %v444
      %v449 = vsel %vm448, 1, 0
      %v450 = vadd.s32 %v440, %v444
      %v451 = vadd.s32 %v443, %v449
      %vm452 = vc.u32 %v450, %v446
      %v453 = vsel %vm452, 1, 0
      %v454 = vadd.s32 %v450, %v446
      %v455 = vadd.s32 %v451, %v453
      %v456 = vadd.s32 %v455, %v445
      %v457 = vadd.s32 %v456, %v447
      %v458 = vshrl.u32 %v457, 4
      %v459 = vmul.u32 %v458, 18
      %v460 = vsub.s32 %v436, %v459
      %v461 = vsub.s32 0, %v460
      %v462 = vsel %vm434, %v461, %v460
      %vm463 = vcmp.lt.s32.totalorder %v315, 0
      %v464 = vsub.s32 0, %v315
      %v465 = vsel %vm463, %v464, %v315
      %v466 = vand.u32 %v465, 65535
      %v467 = vshrl.u32 %v465, 16
      %v469 = vmul.u32 %v466, 14564
      %v470 = vmul.u32 %v466, 58254
      %v471 = vmul.u32 %v467, 14564
      %v472 = vmul.u32 %v467, 58254
      %v473 = vshll.u32 %v470, 16
      %v474 = vshrl.u32 %v470, 16
      %v475 = vshll.u32 %v471, 16
      %v476 = vshrl.u32 %v471, 16
      %vm477 = vc.u32 %v469, %v473
      %v478 = vsel %vm477, 1, 0
      %v479 = vadd.s32 %v469, %v473
      %v480 = vadd.s32 %v472, %v478
      %vm481 = vc.u32 %v479, %v475
      %v482 = vsel %vm481, 1, 0
      %v483 = vadd.s32 %v479, %v475
      %v484 = vadd.s32 %v480, %v482
      %v485 = vadd.s32 %v484, %v474
      %v486 = vadd.s32 %v485, %v476
      %v487 = vshrl.u32 %v486, 4
      %v488 = vmul.u32 %v487, 18
      %v489 = vsub.s32 %v465, %v488
      %v490 = vsub.s32 0, %v489
      %v491 = vsel %vm463, %v490, %v489
      %vm492 = vcmp.lt.s32.totalorder %v316, 0
      %v493 = vsub.s32 0, %v316
      %v494 = vsel %vm492, %v493, %v316
      %v495 = vand.u32 %v494, 65535
      %v496 = vshrl.u32 %v494, 16
      %v498 = vmul.u32 %v495, 14564
      %v499 = vmul.u32 %v495, 58254
      %v500 = vmul.u32 %v496, 14564
      %v501 = vmul.u32 %v496, 58254
      %v502 = vshll.u32 %v499, 16
      %v503 = vshrl.u32 %v499, 16
      %v504 = vshll.u32 %v500, 16
      %v505 = vshrl.u32 %v500, 16
      %vm506 = vc.u32 %v498, %v502
      %v507 = vsel %vm506, 1, 0
      %v508 = vadd.s32 %v498, %v502
      %v509 = vadd.s32 %v501, %v507
      %vm510 = vc.u32 %v508, %v504
      %v511 = vsel %vm510, 1, 0
      %v512 = vadd.s32 %v508, %v504
      %v513 = vadd.s32 %v509, %v511
      %v514 = vadd.s32 %v513, %v503
      %v515 = vadd.s32 %v514, %v505
      %v516 = vshrl.u32 %v515, 4
      %v517 = vmul.u32 %v516, 18
      %v518 = vsub.s32 %v494, %v517
      %v519 = vsub.s32 0, %v518
      %v520 = vsel %vm492, %v519, %v518
      %vm521 = vcmp.lt.s32.totalorder %v317, 0
      %v522 = vsub.s32 0, %v317
      %v523 = vsel %vm521, %v522, %v317
      %v524 = vand.u32 %v523, 65535
      %v525 = vshrl.u32 %v523, 16
      %v527 = vmul.u32 %v524, 14564
      %v528 = vmul.u32 %v524, 58254
      %v529 = vmul.u32 %v525, 14564
      %v530 = vmul.u32 %v525, 58254
      %v531 = vshll.u32 %v528, 16
      %v532 = vshrl.u32 %v528, 16
      %v533 = vshll.u32 %v529, 16
      %v534 = vshrl.u32 %v529, 16
      %vm535 = vc.u32 %v527, %v531
      %v536 = vsel %vm535, 1, 0
      %v537 = vadd.s32 %v527, %v531
      %v538 = vadd.s32 %v530, %v536
      %vm539 = vc.u32 %v537, %v533
      %v540 = vsel %vm539, 1, 0
      %v541 = vadd.s32 %v537, %v533
      %v542 = vadd.s32 %v538, %v540
      %v543 = vadd.s32 %v542, %v532
      %v544 = vadd.s32 %v543, %v534
      %v545 = vshrl.u32 %v544, 4
      %v546 = vmul.u32 %v545, 18
      %v547 = vsub.s32 %v523, %v546
      %v548 = vsub.s32 0, %v547
      %v549 = vsel %vm521, %v548, %v547
      %vm550 = vcmp.lt.s32.totalorder %v318, 0
      %v551 = vsub.s32 0, %v318
      %v552 = vsel %vm550, %v551, %v318
      %v553 = vand.u32 %v552, 65535
      %v554 = vshrl.u32 %v552, 16
      %v556 = vmul.u32 %v553, 14564
      %v557 = vmul.u32 %v553, 58254
      %v558 = vmul.u32 %v554, 14564
      %v559 = vmul.u32 %v554, 58254
      %v560 = vshll.u32 %v557, 16
      %v561 = vshrl.u32 %v557, 16
      %v562 = vshll.u32 %v558, 16
      %v563 = vshrl.u32 %v558, 16
      %vm564 = vc.u32 %v556, %v560
      %v565 = vsel %vm564, 1, 0
      %v566 = vadd.s32 %v556, %v560
      %v567 = vadd.s32 %v559, %v565
      %vm568 = vc.u32 %v566, %v562
      %v569 = vsel %vm568, 1, 0
      %v570 = vadd.s32 %v566, %v562
      %v571 = vadd.s32 %v567, %v569
      %v572 = vadd.s32 %v571, %v561
      %v573 = vadd.s32 %v572, %v563
      %v574 = vshrl.u32 %v573, 4
      %v575 = vmul.u32 %v574, 18
      %v576 = vsub.s32 %v552, %v575
      %v577 = vsub.s32 0, %v576
      %v578 = vsel %vm550, %v577, %v576
      %vm579 = vcmp.lt.s32.totalorder %v319, 0
      %v580 = vsub.s32 0, %v319
      %v581 = vsel %vm579, %v580, %v319
      %v582 = vand.u32 %v581, 65535
      %v583 = vshrl.u32 %v581, 16
      %v585 = vmul.u32 %v582, 14564
      %v586 = vmul.u32 %v582, 58254
      %v587 = vmul.u32 %v583, 14564
      %v588 = vmul.u32 %v583, 58254
      %v589 = vshll.u32 %v586, 16
      %v590 = vshrl.u32 %v586, 16
      %v591 = vshll.u32 %v587, 16
      %v592 = vshrl.u32 %v587, 16
      %vm593 = vc.u32 %v585, %v589
      %v594 = vsel %vm593, 1, 0
      %v595 = vadd.s32 %v585, %v589
      %v596 = vadd.s32 %v588, %v594
      %vm597 = vc.u32 %v595, %v591
      %v598 = vsel %vm597, 1, 0
      %v599 = vadd.s32 %v595, %v591
      %v600 = vadd.s32 %v596, %v598
      %v601 = vadd.s32 %v600, %v590
      %v602 = vadd.s32 %v601, %v592
      %v603 = vshrl.u32 %v602, 4
      %v604 = vmul.u32 %v603, 18
      %v605 = vsub.s32 %v581, %v604
      %v606 = vsub.s32 0, %v605
      %v607 = vsel %vm579, %v606, %v605
      %vm608 = vcmp.lt.s32.totalorder %v320, 0
      %v609 = vsub.s32 0, %v320
      %v610 = vsel %vm608, %v609, %v320
      %v611 = vand.u32 %v610, 65535
      %v612 = vshrl.u32 %v610, 16
      %v614 = vmul.u32 %v611, 14564
      %v615 = vmul.u32 %v611, 58254
      %v616 = vmul.u32 %v612, 14564
      %v617 = vmul.u32 %v612, 58254
      %v618 = vshll.u32 %v615, 16
      %v619 = vshrl.u32 %v615, 16
      %v620 = vshll.u32 %v616, 16
      %v621 = vshrl.u32 %v616, 16
      %vm622 = vc.u32 %v614, %v618
      %v623 = vsel %vm622, 1, 0
      %v624 = vadd.s32 %v614, %v618
      %v625 = vadd.s32 %v617, %v623
      %vm626 = vc.u32 %v624, %v620
      %v627 = vsel %vm626, 1, 0
      %v628 = vadd.s32 %v624, %v620
      %v629 = vadd.s32 %v625, %v627
      %v630 = vadd.s32 %v629, %v619
      %v631 = vadd.s32 %v630, %v621
      %v632 = vshrl.u32 %v631, 4
      %v633 = vmul.u32 %v632, 18
      %v634 = vsub.s32 %v610, %v633
      %v635 = vsub.s32 0, %v634
      %v636 = vsel %vm608, %v635, %v634
      %vm637 = vcmp.lt.s32.totalorder %v321, 0
      %v638 = vsub.s32 0, %v321
      %v639 = vsel %vm637, %v638, %v321
      %v640 = vand.u32 %v639, 65535
      %v641 = vshrl.u32 %v639, 16
      %v643 = vmul.u32 %v640, 14564
      %v644 = vmul.u32 %v640, 58254
      %v645 = vmul.u32 %v641, 14564
      %v646 = vmul.u32 %v641, 58254
      %v647 = vshll.u32 %v644, 16
      %v648 = vshrl.u32 %v644, 16
      %v649 = vshll.u32 %v645, 16
      %v650 = vshrl.u32 %v645, 16
      %vm651 = vc.u32 %v643, %v647
      %v652 = vsel %vm651, 1, 0
      %v653 = vadd.s32 %v643, %v647
      %v654 = vadd.s32 %v646, %v652
      %vm655 = vc.u32 %v653, %v649
      %v656 = vsel %vm655, 1, 0
      %v657 = vadd.s32 %v653, %v649
      %v658 = vadd.s32 %v654, %v656
      %v659 = vadd.s32 %v658, %v648
      %v660 = vadd.s32 %v659, %v650
      %v661 = vshrl.u32 %v660, 4
      %v662 = vmul.u32 %v661, 18
      %v663 = vsub.s32 %v639, %v662
      %v664 = vsub.s32 0, %v663
      %v665 = vsel %vm637, %v664, %v663
      %vm666 = vcmp.lt.s32.totalorder %v322, 0
      %v667 = vsub.s32 0, %v322
      %v668 = vsel %vm666, %v667, %v322
      %v669 = vand.u32 %v668, 65535
      %v670 = vshrl.u32 %v668, 16
      %v672 = vmul.u32 %v669, 14564
      %v673 = vmul.u32 %v669, 58254
      %v674 = vmul.u32 %v670, 14564
      %v675 = vmul.u32 %v670, 58254
      %v676 = vshll.u32 %v673, 16
      %v677 = vshrl.u32 %v673, 16
      %v678 = vshll.u32 %v674, 16
      %v679 = vshrl.u32 %v674, 16
      %vm680 = vc.u32 %v672, %v676
      %v681 = vsel %vm680, 1, 0
      %v682 = vadd.s32 %v672, %v676
      %v683 = vadd.s32 %v675, %v681
      %vm684 = vc.u32 %v682, %v678
      %v685 = vsel %vm684, 1, 0
      %v686 = vadd.s32 %v682, %v678
      %v687 = vadd.s32 %v683, %v685
      %v688 = vadd.s32 %v687, %v677
      %v689 = vadd.s32 %v688, %v679
      %v690 = vshrl.u32 %v689, 4
      %v691 = vmul.u32 %v690, 18
      %v692 = vsub.s32 %v668, %v691
      %v693 = vsub.s32 0, %v692
      %v694 = vsel %vm666, %v693, %v692
      %vm695 = vcmp.lt.s32.totalorder %v323, 0
      %v696 = vsub.s32 0, %v323
      %v697 = vsel %vm695, %v696, %v323
      %v698 = vand.u32 %v697, 65535
      %v699 = vshrl.u32 %v697, 16
      %v701 = vmul.u32 %v698, 14564
      %v702 = vmul.u32 %v698, 58254
      %v703 = vmul.u32 %v699, 14564
      %v704 = vmul.u32 %v699, 58254
      %v705 = vshll.u32 %v702, 16
      %v706 = vshrl.u32 %v702, 16
      %v707 = vshll.u32 %v703, 16
      %v708 = vshrl.u32 %v703, 16
      %vm709 = vc.u32 %v701, %v705
      %v710 = vsel %vm709, 1, 0
      %v711 = vadd.s32 %v701, %v705
      %v712 = vadd.s32 %v704, %v710
      %vm713 = vc.u32 %v711, %v707
      %v714 = vsel %vm713, 1, 0
      %v715 = vadd.s32 %v711, %v707
      %v716 = vadd.s32 %v712, %v714
      %v717 = vadd.s32 %v716, %v706
      %v718 = vadd.s32 %v717, %v708
      %v719 = vshrl.u32 %v718, 4
      %v720 = vmul.u32 %v719, 18
      %v721 = vsub.s32 %v697, %v720
      %v722 = vsub.s32 0, %v721
      %v723 = vsel %vm695, %v722, %v721
      %vm724 = vcmp.lt.s32.totalorder %v324, 0
      %v725 = vsub.s32 0, %v324
      %v726 = vsel %vm724, %v725, %v324
      %v727 = vand.u32 %v726, 65535
      %v728 = vshrl.u32 %v726, 16
      %v730 = vmul.u32 %v727, 14564
      %v731 = vmul.u32 %v727, 58254
      %v732 = vmul.u32 %v728, 14564
      %v733 = vmul.u32 %v728, 58254
      %v734 = vshll.u32 %v731, 16
      %v735 = vshrl.u32 %v731, 16
      %v736 = vshll.u32 %v732, 16
      %v737 = vshrl.u32 %v732, 16
      %vm738 = vc.u32 %v730, %v734
      %v739 = vsel %vm738, 1, 0
      %v740 = vadd.s32 %v730, %v734
      %v741 = vadd.s32 %v733, %v739
      %vm742 = vc.u32 %v740, %v736
      %v743 = vsel %vm742, 1, 0
      %v744 = vadd.s32 %v740, %v736
      %v745 = vadd.s32 %v741, %v743
      %v746 = vadd.s32 %v745, %v735
      %v747 = vadd.s32 %v746, %v737
      %v748 = vshrl.u32 %v747, 4
      %v749 = vmul.u32 %v748, 18
      %v750 = vsub.s32 %v726, %v749
      %v751 = vsub.s32 0, %v750
      %v752 = vsel %vm724, %v751, %v750
      %vm753 = vcmp.lt.s32.totalorder %v325, 0
      %v754 = vsub.s32 0, %v325
      %v755 = vsel %vm753, %v754, %v325
      %v756 = vand.u32 %v755, 65535
      %v757 = vshrl.u32 %v755, 16
      %v759 = vmul.u32 %v756, 14564
      %v760 = vmul.u32 %v756, 58254
      %v761 = vmul.u32 %v757, 14564
      %v762 = vmul.u32 %v757, 58254
      %v763 = vshll.u32 %v760, 16
      %v764 = vshrl.u32 %v760, 16
      %v765 = vshll.u32 %v761, 16
      %v766 = vshrl.u32 %v761, 16
      %vm767 = vc.u32 %v759, %v763
      %v768 = vsel %vm767, 1, 0
      %v769 = vadd.s32 %v759, %v763
      %v770 = vadd.s32 %v762, %v768
      %vm771 = vc.u32 %v769, %v765
      %v772 = vsel %vm771, 1, 0
      %v773 = vadd.s32 %v769, %v765
      %v774 = vadd.s32 %v770, %v772
      %v775 = vadd.s32 %v774, %v764
      %v776 = vadd.s32 %v775, %v766
      %v777 = vshrl.u32 %v776, 4
      %v778 = vmul.u32 %v777, 18
      %v779 = vsub.s32 %v755, %v778
      %v780 = vsub.s32 0, %v779
      %v781 = vsel %vm753, %v780, %v779
      %vm782 = vcmp.lt.s32.totalorder %v326, 0
      %v783 = vsub.s32 0, %v326
      %v784 = vsel %vm782, %v783, %v326
      %v785 = vand.u32 %v784, 65535
      %v786 = vshrl.u32 %v784, 16
      %v788 = vmul.u32 %v785, 14564
      %v789 = vmul.u32 %v785, 58254
      %v790 = vmul.u32 %v786, 14564
      %v791 = vmul.u32 %v786, 58254
      %v792 = vshll.u32 %v789, 16
      %v793 = vshrl.u32 %v789, 16
      %v794 = vshll.u32 %v790, 16
      %v795 = vshrl.u32 %v790, 16
      %vm796 = vc.u32 %v788, %v792
      %v797 = vsel %vm796, 1, 0
      %v798 = vadd.s32 %v788, %v792
      %v799 = vadd.s32 %v791, %v797
      %vm800 = vc.u32 %v798, %v794
      %v801 = vsel %vm800, 1, 0
      %v802 = vadd.s32 %v798, %v794
      %v803 = vadd.s32 %v799, %v801
      %v804 = vadd.s32 %v803, %v793
      %v805 = vadd.s32 %v804, %v795
      %v806 = vshrl.u32 %v805, 4
      %v807 = vmul.u32 %v806, 18
      %v808 = vsub.s32 %v784, %v807
      %v809 = vsub.s32 0, %v808
      %v810 = vsel %vm782, %v809, %v808
      %vm811 = vcmp.lt.s32.totalorder %v327, 0
      %v812 = vsub.s32 0, %v327
      %v813 = vsel %vm811, %v812, %v327
      %v814 = vand.u32 %v813, 65535
      %v815 = vshrl.u32 %v813, 16
      %v817 = vmul.u32 %v814, 14564
      %v818 = vmul.u32 %v814, 58254
      %v819 = vmul.u32 %v815, 14564
      %v820 = vmul.u32 %v815, 58254
      %v821 = vshll.u32 %v818, 16
      %v822 = vshrl.u32 %v818, 16
      %v823 = vshll.u32 %v819, 16
      %v824 = vshrl.u32 %v819, 16
      %vm825 = vc.u32 %v817, %v821
      %v826 = vsel %vm825, 1, 0
      %v827 = vadd.s32 %v817, %v821
      %v828 = vadd.s32 %v820, %v826
      %vm829 = vc.u32 %v827, %v823
      %v830 = vsel %vm829, 1, 0
      %v831 = vadd.s32 %v827, %v823
      %v832 = vadd.s32 %v828, %v830
      %v833 = vadd.s32 %v832, %v822
      %v834 = vadd.s32 %v833, %v824
      %v835 = vshrl.u32 %v834, 4
      %v836 = vmul.u32 %v835, 18
      %v837 = vsub.s32 %v813, %v836
      %v838 = vsub.s32 0, %v837
      %v839 = vsel %vm811, %v838, %v837
      %vm840 = vcmp.lt.s32.totalorder %v328, 0
      %v841 = vsub.s32 0, %v328
      %v842 = vsel %vm840, %v841, %v328
      %v843 = vand.u32 %v842, 65535
      %v844 = vshrl.u32 %v842, 16
      %v846 = vmul.u32 %v843, 14564
      %v847 = vmul.u32 %v843, 58254
      %v848 = vmul.u32 %v844, 14564
      %v849 = vmul.u32 %v844, 58254
      %v850 = vshll.u32 %v847, 16
      %v851 = vshrl.u32 %v847, 16
      %v852 = vshll.u32 %v848, 16
      %v853 = vshrl.u32 %v848, 16
      %vm854 = vc.u32 %v846, %v850
      %v855 = vsel %vm854, 1, 0
      %v856 = vadd.s32 %v846, %v850
      %v857 = vadd.s32 %v849, %v855
      %vm858 = vc.u32 %v856, %v852
      %v859 = vsel %vm858, 1, 0
      %v860 = vadd.s32 %v856, %v852
      %v861 = vadd.s32 %v857, %v859
      %v862 = vadd.s32 %v861, %v851
      %v863 = vadd.s32 %v862, %v853
      %v864 = vshrl.u32 %v863, 4
      %v865 = vmul.u32 %v864, 18
      %v866 = vsub.s32 %v842, %v865
      %v867 = vsub.s32 0, %v866
      %v868 = vsel %vm840, %v867, %v866
      %vm869 = vcmp.lt.s32.totalorder %v329, 0
      %v870 = vsub.s32 0, %v329
      %v871 = vsel %vm869, %v870, %v329
      %v872 = vand.u32 %v871, 65535
      %v873 = vshrl.u32 %v871, 16
      %v875 = vmul.u32 %v872, 14564
      %v876 = vmul.u32 %v872, 58254
      %v877 = vmul.u32 %v873, 14564
      %v878 = vmul.u32 %v873, 58254
      %v879 = vshll.u32 %v876, 16
      %v880 = vshrl.u32 %v876, 16
      %v881 = vshll.u32 %v877, 16
      %v882 = vshrl.u32 %v877, 16
      %vm883 = vc.u32 %v875, %v879
      %v884 = vsel %vm883, 1, 0
      %v885 = vadd.s32 %v875, %v879
      %v886 = vadd.s32 %v878, %v884
      %vm887 = vc.u32 %v885, %v881
      %v888 = vsel %vm887, 1, 0
      %v889 = vadd.s32 %v885, %v881
      %v890 = vadd.s32 %v886, %v888
      %v891 = vadd.s32 %v890, %v880
      %v892 = vadd.s32 %v891, %v882
      %v893 = vshrl.u32 %v892, 4
      %v894 = vmul.u32 %v893, 18
      %v895 = vsub.s32 %v871, %v894
      %v896 = vsub.s32 0, %v895
      %v897 = vsel %vm869, %v896, %v895
      %vm898 = vcmp.lt.s32.totalorder %v330, 0
      %v899 = vsub.s32 0, %v330
      %v900 = vsel %vm898, %v899, %v330
      %v901 = vand.u32 %v900, 65535
      %v902 = vshrl.u32 %v900, 16
      %v904 = vmul.u32 %v901, 14564
      %v905 = vmul.u32 %v901, 58254
      %v906 = vmul.u32 %v902, 14564
      %v907 = vmul.u32 %v902, 58254
      %v908 = vshll.u32 %v905, 16
      %v909 = vshrl.u32 %v905, 16
      %v910 = vshll.u32 %v906, 16
      %v911 = vshrl.u32 %v906, 16
      %vm912 = vc.u32 %v904, %v908
      %v913 = vsel %vm912, 1, 0
      %v914 = vadd.s32 %v904, %v908
      %v915 = vadd.s32 %v907, %v913
      %vm916 = vc.u32 %v914, %v910
      %v917 = vsel %vm916, 1, 0
      %v918 = vadd.s32 %v914, %v910
      %v919 = vadd.s32 %v915, %v917
      %v920 = vadd.s32 %v919, %v909
      %v921 = vadd.s32 %v920, %v911
      %v922 = vshrl.u32 %v921, 4
      %v923 = vmul.u32 %v922, 18
      %v924 = vsub.s32 %v900, %v923
      %v925 = vsub.s32 0, %v924
      %v926 = vsel %vm898, %v925, %v924
      %vm927 = vcmp.lt.s32.totalorder %v331, 0
      %v928 = vsub.s32 0, %v331
      %v929 = vsel %vm927, %v928, %v331
      %v930 = vand.u32 %v929, 65535
      %v931 = vshrl.u32 %v929, 16
      %v933 = vmul.u32 %v930, 14564
      %v934 = vmul.u32 %v930, 58254
      %v935 = vmul.u32 %v931, 14564
      %v936 = vmul.u32 %v931, 58254
      %v937 = vshll.u32 %v934, 16
      %v938 = vshrl.u32 %v934, 16
      %v939 = vshll.u32 %v935, 16
      %v940 = vshrl.u32 %v935, 16
      %vm941 = vc.u32 %v933, %v937
      %v942 = vsel %vm941, 1, 0
      %v943 = vadd.s32 %v933, %v937
      %v944 = vadd.s32 %v936, %v942
      %vm945 = vc.u32 %v943, %v939
      %v946 = vsel %vm945, 1, 0
      %v947 = vadd.s32 %v943, %v939
      %v948 = vadd.s32 %v944, %v946
      %v949 = vadd.s32 %v948, %v938
      %v950 = vadd.s32 %v949, %v940
      %v951 = vshrl.u32 %v950, 4
      %v952 = vmul.u32 %v951, 18
      %v953 = vsub.s32 %v929, %v952
      %v954 = vsub.s32 0, %v953
      %v955 = vsel %vm927, %v954, %v953
      %vm956 = vcmp.lt.s32.totalorder %v332, 0
      %v957 = vsub.s32 0, %v332
      %v958 = vsel %vm956, %v957, %v332
      %v959 = vand.u32 %v958, 65535
      %v960 = vshrl.u32 %v958, 16
      %v962 = vmul.u32 %v959, 14564
      %v963 = vmul.u32 %v959, 58254
      %v964 = vmul.u32 %v960, 14564
      %v965 = vmul.u32 %v960, 58254
      %v966 = vshll.u32 %v963, 16
      %v967 = vshrl.u32 %v963, 16
      %v968 = vshll.u32 %v964, 16
      %v969 = vshrl.u32 %v964, 16
      %vm970 = vc.u32 %v962, %v966
      %v971 = vsel %vm970, 1, 0
      %v972 = vadd.s32 %v962, %v966
      %v973 = vadd.s32 %v965, %v971
      %vm974 = vc.u32 %v972, %v968
      %v975 = vsel %vm974, 1, 0
      %v976 = vadd.s32 %v972, %v968
      %v977 = vadd.s32 %v973, %v975
      %v978 = vadd.s32 %v977, %v967
      %v979 = vadd.s32 %v978, %v969
      %v980 = vshrl.u32 %v979, 4
      %v981 = vmul.u32 %v980, 18
      %v982 = vsub.s32 %v958, %v981
      %v983 = vsub.s32 0, %v982
      %v984 = vsel %vm956, %v983, %v982
      %vm985 = vcmp.lt.s32.totalorder %v333, 0
      %v986 = vsub.s32 0, %v333
      %v987 = vsel %vm985, %v986, %v333
      %v988 = vand.u32 %v987, 65535
      %v989 = vshrl.u32 %v987, 16
      %v991 = vmul.u32 %v988, 14564
      %v992 = vmul.u32 %v988, 58254
      %v993 = vmul.u32 %v989, 14564
      %v994 = vmul.u32 %v989, 58254
      %v995 = vshll.u32 %v992, 16
      %v996 = vshrl.u32 %v992, 16
      %v997 = vshll.u32 %v993, 16
      %v998 = vshrl.u32 %v993, 16
      %vm999 = vc.u32 %v991, %v995
      %v1000 = vsel %vm999, 1, 0
      %v1001 = vadd.s32 %v991, %v995
      %v1002 = vadd.s32 %v994, %v1000
      %vm1003 = vc.u32 %v1001, %v997
      %v1004 = vsel %vm1003, 1, 0
      %v1005 = vadd.s32 %v1001, %v997
      %v1006 = vadd.s32 %v1002, %v1004
      %v1007 = vadd.s32 %v1006, %v996
      %v1008 = vadd.s32 %v1007, %v998
      %v1009 = vshrl.u32 %v1008, 4
      %v1010 = vmul.u32 %v1009, 18
      %v1011 = vsub.s32 %v987, %v1010
      %v1012 = vsub.s32 0, %v1011
      %v1013 = vsel %vm985, %v1012, %v1011
      %vm1014 = vcmp.lt.s32.totalorder %v334, 0
      %v1015 = vsub.s32 0, %v334
      %v1016 = vsel %vm1014, %v1015, %v334
      %v1017 = vand.u32 %v1016, 65535
      %v1018 = vshrl.u32 %v1016, 16
      %v1020 = vmul.u32 %v1017, 14564
      %v1021 = vmul.u32 %v1017, 58254
      %v1022 = vmul.u32 %v1018, 14564
      %v1023 = vmul.u32 %v1018, 58254
      %v1024 = vshll.u32 %v1021, 16
      %v1025 = vshrl.u32 %v1021, 16
      %v1026 = vshll.u32 %v1022, 16
      %v1027 = vshrl.u32 %v1022, 16
      %vm1028 = vc.u32 %v1020, %v1024
      %v1029 = vsel %vm1028, 1, 0
      %v1030 = vadd.s32 %v1020, %v1024
      %v1031 = vadd.s32 %v1023, %v1029
      %vm1032 = vc.u32 %v1030, %v1026
      %v1033 = vsel %vm1032, 1, 0
      %v1034 = vadd.s32 %v1030, %v1026
      %v1035 = vadd.s32 %v1031, %v1033
      %v1036 = vadd.s32 %v1035, %v1025
      %v1037 = vadd.s32 %v1036, %v1027
      %v1038 = vshrl.u32 %v1037, 4
      %v1039 = vmul.u32 %v1038, 18
      %v1040 = vsub.s32 %v1016, %v1039
      %v1041 = vsub.s32 0, %v1040
      %v1042 = vsel %vm1014, %v1041, %v1040
      %vm1043 = vcmp.lt.s32.totalorder %v335, 0
      %v1044 = vsub.s32 0, %v335
      %v1045 = vsel %vm1043, %v1044, %v335
      %v1046 = vand.u32 %v1045, 65535
      %v1047 = vshrl.u32 %v1045, 16
      %v1049 = vmul.u32 %v1046, 14564
      %v1050 = vmul.u32 %v1046, 58254
      %v1051 = vmul.u32 %v1047, 14564
      %v1052 = vmul.u32 %v1047, 58254
      %v1053 = vshll.u32 %v1050, 16
      %v1054 = vshrl.u32 %v1050, 16
      %v1055 = vshll.u32 %v1051, 16
      %v1056 = vshrl.u32 %v1051, 16
      %vm1057 = vc.u32 %v1049, %v1053
      %v1058 = vsel %vm1057, 1, 0
      %v1059 = vadd.s32 %v1049, %v1053
      %v1060 = vadd.s32 %v1052, %v1058
      %vm1061 = vc.u32 %v1059, %v1055
      %v1062 = vsel %vm1061, 1, 0
      %v1063 = vadd.s32 %v1059, %v1055
      %v1064 = vadd.s32 %v1060, %v1062
      %v1065 = vadd.s32 %v1064, %v1054
      %v1066 = vadd.s32 %v1065, %v1056
      %v1067 = vshrl.u32 %v1066, 4
      %v1068 = vmul.u32 %v1067, 18
      %v1069 = vsub.s32 %v1045, %v1068
      %v1070 = vsub.s32 0, %v1069
      %v1071 = vsel %vm1043, %v1070, %v1069
      %vm1072 = vcmp.lt.s32.totalorder %v336, 0
      %v1073 = vsub.s32 0, %v336
      %v1074 = vsel %vm1072, %v1073, %v336
      %v1075 = vand.u32 %v1074, 65535
      %v1076 = vshrl.u32 %v1074, 16
      %v1078 = vmul.u32 %v1075, 14564
      %v1079 = vmul.u32 %v1075, 58254
      %v1080 = vmul.u32 %v1076, 14564
      %v1081 = vmul.u32 %v1076, 58254
      %v1082 = vshll.u32 %v1079, 16
      %v1083 = vshrl.u32 %v1079, 16
      %v1084 = vshll.u32 %v1080, 16
      %v1085 = vshrl.u32 %v1080, 16
      %vm1086 = vc.u32 %v1078, %v1082
      %v1087 = vsel %vm1086, 1, 0
      %v1088 = vadd.s32 %v1078, %v1082
      %v1089 = vadd.s32 %v1081, %v1087
      %vm1090 = vc.u32 %v1088, %v1084
      %v1091 = vsel %vm1090, 1, 0
      %v1092 = vadd.s32 %v1088, %v1084
      %v1093 = vadd.s32 %v1089, %v1091
      %v1094 = vadd.s32 %v1093, %v1083
      %v1095 = vadd.s32 %v1094, %v1085
      %v1096 = vshrl.u32 %v1095, 4
      %v1097 = vmul.u32 %v1096, 18
      %v1098 = vsub.s32 %v1074, %v1097
      %v1099 = vsub.s32 0, %v1098
      %v1100 = vsel %vm1072, %v1099, %v1098
      %vm1101 = vcmp.lt.s32.totalorder %v337, 0
      %v1102 = vsub.s32 0, %v337
      %v1103 = vsel %vm1101, %v1102, %v337
      %v1104 = vand.u32 %v1103, 65535
      %v1105 = vshrl.u32 %v1103, 16
      %v1107 = vmul.u32 %v1104, 14564
      %v1108 = vmul.u32 %v1104, 58254
      %v1109 = vmul.u32 %v1105, 14564
      %v1110 = vmul.u32 %v1105, 58254
      %v1111 = vshll.u32 %v1108, 16
      %v1112 = vshrl.u32 %v1108, 16
      %v1113 = vshll.u32 %v1109, 16
      %v1114 = vshrl.u32 %v1109, 16
      %vm1115 = vc.u32 %v1107, %v1111
      %v1116 = vsel %vm1115, 1, 0
      %v1117 = vadd.s32 %v1107, %v1111
      %v1118 = vadd.s32 %v1110, %v1116
      %vm1119 = vc.u32 %v1117, %v1113
      %v1120 = vsel %vm1119, 1, 0
      %v1121 = vadd.s32 %v1117, %v1113
      %v1122 = vadd.s32 %v1118, %v1120
      %v1123 = vadd.s32 %v1122, %v1112
      %v1124 = vadd.s32 %v1123, %v1114
      %v1125 = vshrl.u32 %v1124, 4
      %v1126 = vmul.u32 %v1125, 18
      %v1127 = vsub.s32 %v1103, %v1126
      %v1128 = vsub.s32 0, %v1127
      %v1129 = vsel %vm1101, %v1128, %v1127
      %vm1130 = vcmp.lt.s32.totalorder %v338, 0
      %v1131 = vsub.s32 0, %v338
      %v1132 = vsel %vm1130, %v1131, %v338
      %v1133 = vand.u32 %v1132, 65535
      %v1134 = vshrl.u32 %v1132, 16
      %v1136 = vmul.u32 %v1133, 14564
      %v1137 = vmul.u32 %v1133, 58254
      %v1138 = vmul.u32 %v1134, 14564
      %v1139 = vmul.u32 %v1134, 58254
      %v1140 = vshll.u32 %v1137, 16
      %v1141 = vshrl.u32 %v1137, 16
      %v1142 = vshll.u32 %v1138, 16
      %v1143 = vshrl.u32 %v1138, 16
      %vm1144 = vc.u32 %v1136, %v1140
      %v1145 = vsel %vm1144, 1, 0
      %v1146 = vadd.s32 %v1136, %v1140
      %v1147 = vadd.s32 %v1139, %v1145
      %vm1148 = vc.u32 %v1146, %v1142
      %v1149 = vsel %vm1148, 1, 0
      %v1150 = vadd.s32 %v1146, %v1142
      %v1151 = vadd.s32 %v1147, %v1149
      %v1152 = vadd.s32 %v1151, %v1141
      %v1153 = vadd.s32 %v1152, %v1143
      %v1154 = vshrl.u32 %v1153, 4
      %v1155 = vmul.u32 %v1154, 18
      %v1156 = vsub.s32 %v1132, %v1155
      %v1157 = vsub.s32 0, %v1156
      %v1158 = vsel %vm1130, %v1157, %v1156
      %vm1159 = vcmp.lt.s32.totalorder %v339, 0
      %v1160 = vsub.s32 0, %v339
      %v1161 = vsel %vm1159, %v1160, %v339
      %v1162 = vand.u32 %v1161, 65535
      %v1163 = vshrl.u32 %v1161, 16
      %v1165 = vmul.u32 %v1162, 14564
      %v1166 = vmul.u32 %v1162, 58254
      %v1167 = vmul.u32 %v1163, 14564
      %v1168 = vmul.u32 %v1163, 58254
      %v1169 = vshll.u32 %v1166, 16
      %v1170 = vshrl.u32 %v1166, 16
      %v1171 = vshll.u32 %v1167, 16
      %v1172 = vshrl.u32 %v1167, 16
      %vm1173 = vc.u32 %v1165, %v1169
      %v1174 = vsel %vm1173, 1, 0
      %v1175 = vadd.s32 %v1165, %v1169
      %v1176 = vadd.s32 %v1168, %v1174
      %vm1177 = vc.u32 %v1175, %v1171
      %v1178 = vsel %vm1177, 1, 0
      %v1179 = vadd.s32 %v1175, %v1171
      %v1180 = vadd.s32 %v1176, %v1178
      %v1181 = vadd.s32 %v1180, %v1170
      %v1182 = vadd.s32 %v1181, %v1172
      %v1183 = vshrl.u32 %v1182, 4
      %v1184 = vmul.u32 %v1183, 18
      %v1185 = vsub.s32 %v1161, %v1184
      %v1186 = vsub.s32 0, %v1185
      %v1187 = vsel %vm1159, %v1186, %v1185
      %vm1188 = vcmp.lt.s32.totalorder %v340, 0
      %v1189 = vsub.s32 0, %v340
      %v1190 = vsel %vm1188, %v1189, %v340
      %v1191 = vand.u32 %v1190, 65535
      %v1192 = vshrl.u32 %v1190, 16
      %v1194 = vmul.u32 %v1191, 14564
      %v1195 = vmul.u32 %v1191, 58254
      %v1196 = vmul.u32 %v1192, 14564
      %v1197 = vmul.u32 %v1192, 58254
      %v1198 = vshll.u32 %v1195, 16
      %v1199 = vshrl.u32 %v1195, 16
      %v1200 = vshll.u32 %v1196, 16
      %v1201 = vshrl.u32 %v1196, 16
      %vm1202 = vc.u32 %v1194, %v1198
      %v1203 = vsel %vm1202, 1, 0
      %v1204 = vadd.s32 %v1194, %v1198
      %v1205 = vadd.s32 %v1197, %v1203
      %vm1206 = vc.u32 %v1204, %v1200
      %v1207 = vsel %vm1206, 1, 0
      %v1208 = vadd.s32 %v1204, %v1200
      %v1209 = vadd.s32 %v1205, %v1207
      %v1210 = vadd.s32 %v1209, %v1199
      %v1211 = vadd.s32 %v1210, %v1201
      %v1212 = vshrl.u32 %v1211, 4
      %v1213 = vmul.u32 %v1212, 18
      %v1214 = vsub.s32 %v1190, %v1213
      %v1215 = vsub.s32 0, %v1214
      %v1216 = vsel %vm1188, %v1215, %v1214
      %vm1217 = vcmp.lt.s32.totalorder %v341, 0
      %v1218 = vsub.s32 0, %v341
      %v1219 = vsel %vm1217, %v1218, %v341
      %v1220 = vand.u32 %v1219, 65535
      %v1221 = vshrl.u32 %v1219, 16
      %v1223 = vmul.u32 %v1220, 14564
      %v1224 = vmul.u32 %v1220, 58254
      %v1225 = vmul.u32 %v1221, 14564
      %v1226 = vmul.u32 %v1221, 58254
      %v1227 = vshll.u32 %v1224, 16
      %v1228 = vshrl.u32 %v1224, 16
      %v1229 = vshll.u32 %v1225, 16
      %v1230 = vshrl.u32 %v1225, 16
      %vm1231 = vc.u32 %v1223, %v1227
      %v1232 = vsel %vm1231, 1, 0
      %v1233 = vadd.s32 %v1223, %v1227
      %v1234 = vadd.s32 %v1226, %v1232
      %vm1235 = vc.u32 %v1233, %v1229
      %v1236 = vsel %vm1235, 1, 0
      %v1237 = vadd.s32 %v1233, %v1229
      %v1238 = vadd.s32 %v1234, %v1236
      %v1239 = vadd.s32 %v1238, %v1228
      %v1240 = vadd.s32 %v1239, %v1230
      %v1241 = vshrl.u32 %v1240, 4
      %v1242 = vmul.u32 %v1241, 18
      %v1243 = vsub.s32 %v1219, %v1242
      %v1244 = vsub.s32 0, %v1243
      %v1245 = vsel %vm1217, %v1244, %v1243
      %vm1246 = vcmp.lt.s32.totalorder %v342, 0
      %v1247 = vsub.s32 0, %v342
      %v1248 = vsel %vm1246, %v1247, %v342
      %v1249 = vand.u32 %v1248, 65535
      %v1250 = vshrl.u32 %v1248, 16
      %v1252 = vmul.u32 %v1249, 14564
      %v1253 = vmul.u32 %v1249, 58254
      %v1254 = vmul.u32 %v1250, 14564
      %v1255 = vmul.u32 %v1250, 58254
      %v1256 = vshll.u32 %v1253, 16
      %v1257 = vshrl.u32 %v1253, 16
      %v1258 = vshll.u32 %v1254, 16
      %v1259 = vshrl.u32 %v1254, 16
      %vm1260 = vc.u32 %v1252, %v1256
      %v1261 = vsel %vm1260, 1, 0
      %v1262 = vadd.s32 %v1252, %v1256
      %v1263 = vadd.s32 %v1255, %v1261
      %vm1264 = vc.u32 %v1262, %v1258
      %v1265 = vsel %vm1264, 1, 0
      %v1266 = vadd.s32 %v1262, %v1258
      %v1267 = vadd.s32 %v1263, %v1265
      %v1268 = vadd.s32 %v1267, %v1257
      %v1269 = vadd.s32 %v1268, %v1259
      %v1270 = vshrl.u32 %v1269, 4
      %v1271 = vmul.u32 %v1270, 18
      %v1272 = vsub.s32 %v1248, %v1271
      %v1273 = vsub.s32 0, %v1272
      %v1274 = vsel %vm1246, %v1273, %v1272
      %vm1275 = vcmp.lt.s32.totalorder %v343, 0
      %v1276 = vsub.s32 0, %v343
      %v1277 = vsel %vm1275, %v1276, %v343
      %v1278 = vand.u32 %v1277, 65535
      %v1279 = vshrl.u32 %v1277, 16
      %v1281 = vmul.u32 %v1278, 14564
      %v1282 = vmul.u32 %v1278, 58254
      %v1283 = vmul.u32 %v1279, 14564
      %v1284 = vmul.u32 %v1279, 58254
      %v1285 = vshll.u32 %v1282, 16
      %v1286 = vshrl.u32 %v1282, 16
      %v1287 = vshll.u32 %v1283, 16
      %v1288 = vshrl.u32 %v1283, 16
      %vm1289 = vc.u32 %v1281, %v1285
      %v1290 = vsel %vm1289, 1, 0
      %v1291 = vadd.s32 %v1281, %v1285
      %v1292 = vadd.s32 %v1284, %v1290
      %vm1293 = vc.u32 %v1291, %v1287
      %v1294 = vsel %vm1293, 1, 0
      %v1295 = vadd.s32 %v1291, %v1287
      %v1296 = vadd.s32 %v1292, %v1294
      %v1297 = vadd.s32 %v1296, %v1286
      %v1298 = vadd.s32 %v1297, %v1288
      %v1299 = vshrl.u32 %v1298, 4
      %v1300 = vmul.u32 %v1299, 18
      %v1301 = vsub.s32 %v1277, %v1300
      %v1302 = vsub.s32 0, %v1301
      %v1303 = vsel %vm1275, %v1302, %v1301
      %vm1304 = vcmp.lt.s32.totalorder %v344, 0
      %v1305 = vsub.s32 0, %v344
      %v1306 = vsel %vm1304, %v1305, %v344
      %v1307 = vand.u32 %v1306, 65535
      %v1308 = vshrl.u32 %v1306, 16
      %v1310 = vmul.u32 %v1307, 14564
      %v1311 = vmul.u32 %v1307, 58254
      %v1312 = vmul.u32 %v1308, 14564
      %v1313 = vmul.u32 %v1308, 58254
      %v1314 = vshll.u32 %v1311, 16
      %v1315 = vshrl.u32 %v1311, 16
      %v1316 = vshll.u32 %v1312, 16
      %v1317 = vshrl.u32 %v1312, 16
      %vm1318 = vc.u32 %v1310, %v1314
      %v1319 = vsel %vm1318, 1, 0
      %v1320 = vadd.s32 %v1310, %v1314
      %v1321 = vadd.s32 %v1313, %v1319
      %vm1322 = vc.u32 %v1320, %v1316
      %v1323 = vsel %vm1322, 1, 0
      %v1324 = vadd.s32 %v1320, %v1316
      %v1325 = vadd.s32 %v1321, %v1323
      %v1326 = vadd.s32 %v1325, %v1315
      %v1327 = vadd.s32 %v1326, %v1317
      %v1328 = vshrl.u32 %v1327, 4
      %v1329 = vmul.u32 %v1328, 18
      %v1330 = vsub.s32 %v1306, %v1329
      %v1331 = vsub.s32 0, %v1330
      %v1332 = vsel %vm1304, %v1331, %v1330
      %vm1333 = vcmp.lt.s32.totalorder %v345, 0
      %v1334 = vsub.s32 0, %v345
      %v1335 = vsel %vm1333, %v1334, %v345
      %v1336 = vand.u32 %v1335, 65535
      %v1337 = vshrl.u32 %v1335, 16
      %v1339 = vmul.u32 %v1336, 14564
      %v1340 = vmul.u32 %v1336, 58254
      %v1341 = vmul.u32 %v1337, 14564
      %v1342 = vmul.u32 %v1337, 58254
      %v1343 = vshll.u32 %v1340, 16
      %v1344 = vshrl.u32 %v1340, 16
      %v1345 = vshll.u32 %v1341, 16
      %v1346 = vshrl.u32 %v1341, 16
      %vm1347 = vc.u32 %v1339, %v1343
      %v1348 = vsel %vm1347, 1, 0
      %v1349 = vadd.s32 %v1339, %v1343
      %v1350 = vadd.s32 %v1342, %v1348
      %vm1351 = vc.u32 %v1349, %v1345
      %v1352 = vsel %vm1351, 1, 0
      %v1353 = vadd.s32 %v1349, %v1345
      %v1354 = vadd.s32 %v1350, %v1352
      %v1355 = vadd.s32 %v1354, %v1344
      %v1356 = vadd.s32 %v1355, %v1346
      %v1357 = vshrl.u32 %v1356, 4
      %v1358 = vmul.u32 %v1357, 18
      %v1359 = vsub.s32 %v1335, %v1358
      %v1360 = vsub.s32 0, %v1359
      %v1361 = vsel %vm1333, %v1360, %v1359
      %vm1362 = vcmp.lt.s32.totalorder %v346, 0
      %v1363 = vsub.s32 0, %v346
      %v1364 = vsel %vm1362, %v1363, %v346
      %v1365 = vand.u32 %v1364, 65535
      %v1366 = vshrl.u32 %v1364, 16
      %v1368 = vmul.u32 %v1365, 14564
      %v1369 = vmul.u32 %v1365, 58254
      %v1370 = vmul.u32 %v1366, 14564
      %v1371 = vmul.u32 %v1366, 58254
      %v1372 = vshll.u32 %v1369, 16
      %v1373 = vshrl.u32 %v1369, 16
      %v1374 = vshll.u32 %v1370, 16
      %v1375 = vshrl.u32 %v1370, 16
      %vm1376 = vc.u32 %v1368, %v1372
      %v1377 = vsel %vm1376, 1, 0
      %v1378 = vadd.s32 %v1368, %v1372
      %v1379 = vadd.s32 %v1371, %v1377
      %vm1380 = vc.u32 %v1378, %v1374
      %v1381 = vsel %vm1380, 1, 0
      %v1382 = vadd.s32 %v1378, %v1374
      %v1383 = vadd.s32 %v1379, %v1381
      %v1384 = vadd.s32 %v1383, %v1373
      %v1385 = vadd.s32 %v1384, %v1375
      %v1386 = vshrl.u32 %v1385, 4
      %v1387 = vmul.u32 %v1386, 18
      %v1388 = vsub.s32 %v1364, %v1387
      %v1389 = vsub.s32 0, %v1388
      %v1390 = vsel %vm1362, %v1389, %v1388
      %vm1391 = vcmp.ne.s32.totalorder %v375, 0
      %vm1392 = vcmp.ne.s32.totalorder %v404, 0
      %vm1393 = vcmp.ne.s32.totalorder %v433, 0
      %vm1394 = vcmp.ne.s32.totalorder %v462, 0
      %vm1395 = vcmp.ne.s32.totalorder %v491, 0
      %vm1396 = vcmp.ne.s32.totalorder %v520, 0
      %vm1397 = vcmp.ne.s32.totalorder %v549, 0
      %vm1398 = vcmp.ne.s32.totalorder %v578, 0
      %vm1399 = vcmp.ne.s32.totalorder %v607, 0
      %vm1400 = vcmp.ne.s32.totalorder %v636, 0
      %vm1401 = vcmp.ne.s32.totalorder %v665, 0
      %vm1402 = vcmp.ne.s32.totalorder %v694, 0
      %vm1403 = vcmp.ne.s32.totalorder %v723, 0
      %vm1404 = vcmp.ne.s32.totalorder %v752, 0
      %vm1405 = vcmp.ne.s32.totalorder %v781, 0
      %vm1406 = vcmp.ne.s32.totalorder %v810, 0
      %vm1407 = vcmp.ne.s32.totalorder %v839, 0
      %vm1408 = vcmp.ne.s32.totalorder %v868, 0
      %vm1409 = vcmp.ne.s32.totalorder %v897, 0
      %vm1410 = vcmp.ne.s32.totalorder %v926, 0
      %vm1411 = vcmp.ne.s32.totalorder %v955, 0
      %vm1412 = vcmp.ne.s32.totalorder %v984, 0
      %vm1413 = vcmp.ne.s32.totalorder %v1013, 0
      %vm1414 = vcmp.ne.s32.totalorder %v1042, 0
      %vm1415 = vcmp.ne.s32.totalorder %v1071, 0
      %vm1416 = vcmp.ne.s32.totalorder %v1100, 0
      %vm1417 = vcmp.ne.s32.totalorder %v1129, 0
      %vm1418 = vcmp.ne.s32.totalorder %v1158, 0
      %vm1419 = vcmp.ne.s32.totalorder %v1187, 0
      %vm1420 = vcmp.ne.s32.totalorder %v1216, 0
      %vm1421 = vcmp.ne.s32.totalorder %v1245, 0
      %vm1422 = vcmp.ne.s32.totalorder %v1274, 0
      %vm1423 = vcmp.ne.s32.totalorder %v1303, 0
      %vm1424 = vcmp.ne.s32.totalorder %v1332, 0
      %vm1425 = vcmp.ne.s32.totalorder %v1361, 0
      %vm1426 = vcmp.ne.s32.totalorder %v1390, 0
      %vm1427 = vcmp.lt.s32.totalorder %v375, 0
      %vm1428 = vcmp.lt.s32.totalorder %v404, 0
      %vm1429 = vcmp.lt.s32.totalorder %v433, 0
      %vm1430 = vcmp.lt.s32.totalorder %v462, 0
      %vm1431 = vcmp.lt.s32.totalorder %v491, 0
      %vm1432 = vcmp.lt.s32.totalorder %v520, 0
      %vm1433 = vcmp.lt.s32.totalorder %v549, 0
      %vm1434 = vcmp.lt.s32.totalorder %v578, 0
      %vm1435 = vcmp.lt.s32.totalorder %v607, 0
      %vm1436 = vcmp.lt.s32.totalorder %v636, 0
      %vm1437 = vcmp.lt.s32.totalorder %v665, 0
      %vm1438 = vcmp.lt.s32.totalorder %v694, 0
      %vm1439 = vcmp.lt.s32.totalorder %v723, 0
      %vm1440 = vcmp.lt.s32.totalorder %v752, 0
      %vm1441 = vcmp.lt.s32.totalorder %v781, 0
      %vm1442 = vcmp.lt.s32.totalorder %v810, 0
      %vm1443 = vcmp.lt.s32.totalorder %v839, 0
      %vm1444 = vcmp.lt.s32.totalorder %v868, 0
      %vm1445 = vcmp.lt.s32.totalorder %v897, 0
      %vm1446 = vcmp.lt.s32.totalorder %v926, 0
      %vm1447 = vcmp.lt.s32.totalorder %v955, 0
      %vm1448 = vcmp.lt.s32.totalorder %v984, 0
      %vm1449 = vcmp.lt.s32.totalorder %v1013, 0
      %vm1450 = vcmp.lt.s32.totalorder %v1042, 0
      %vm1451 = vcmp.lt.s32.totalorder %v1071, 0
      %vm1452 = vcmp.lt.s32.totalorder %v1100, 0
      %vm1453 = vcmp.lt.s32.totalorder %v1129, 0
      %vm1454 = vcmp.lt.s32.totalorder %v1158, 0
      %vm1455 = vcmp.lt.s32.totalorder %v1187, 0
      %vm1456 = vcmp.lt.s32.totalorder %v1216, 0
      %vm1457 = vcmp.lt.s32.totalorder %v1245, 0
      %vm1458 = vcmp.lt.s32.totalorder %v1274, 0
      %vm1459 = vcmp.lt.s32.totalorder %v1303, 0
      %vm1460 = vcmp.lt.s32.totalorder %v1332, 0
      %vm1461 = vcmp.lt.s32.totalorder %v1361, 0
      %vm1462 = vcmp.lt.s32.totalorder %v1390, 0
      %vm1463 = vmand %vm1427, %vm1391
      %vm1464 = vmand %vm1428, %vm1392
      %vm1465 = vmand %vm1429, %vm1393
      %vm1466 = vmand %vm1430, %vm1394
      %vm1467 = vmand %vm1431, %vm1395
      %vm1468 = vmand %vm1432, %vm1396
      %vm1469 = vmand %vm1433, %vm1397
      %vm1470 = vmand %vm1434, %vm1398
      %vm1471 = vmand %vm1435, %vm1399
      %vm1472 = vmand %vm1436, %vm1400
      %vm1473 = vmand %vm1437, %vm1401
      %vm1474 = vmand %vm1438, %vm1402
      %vm1475 = vmand %vm1439, %vm1403
      %vm1476 = vmand %vm1440, %vm1404
      %vm1477 = vmand %vm1441, %vm1405
      %vm1478 = vmand %vm1442, %vm1406
      %vm1479 = vmand %vm1443, %vm1407
      %vm1480 = vmand %vm1444, %vm1408
      %vm1481 = vmand %vm1445, %vm1409
      %vm1482 = vmand %vm1446, %vm1410
      %vm1483 = vmand %vm1447, %vm1411
      %vm1484 = vmand %vm1448, %vm1412
      %vm1485 = vmand %vm1449, %vm1413
      %vm1486 = vmand %vm1450, %vm1414
      %vm1487 = vmand %vm1451, %vm1415
      %vm1488 = vmand %vm1452, %vm1416
      %vm1489 = vmand %vm1453, %vm1417
      %vm1490 = vmand %vm1454, %vm1418
      %vm1491 = vmand %vm1455, %vm1419
      %vm1492 = vmand %vm1456, %vm1420
      %vm1493 = vmand %vm1457, %vm1421
      %vm1494 = vmand %vm1458, %vm1422
      %vm1495 = vmand %vm1459, %vm1423
      %vm1496 = vmand %vm1460, %vm1424
      %vm1497 = vmand %vm1461, %vm1425
      %vm1498 = vmand %vm1462, %vm1426
      %v1499 = vadd.s32 %v375, 18
      %v1500 = vadd.s32 %v404, 18
      %v1501 = vadd.s32 %v433, 18
      %v1502 = vadd.s32 %v462, 18
      %v1503 = vadd.s32 %v491, 18
      %v1504 = vadd.s32 %v520, 18
      %v1505 = vadd.s32 %v549, 18
      %v1506 = vadd.s32 %v578, 18
      %v1507 = vadd.s32 %v607, 18
      %v1508 = vadd.s32 %v636, 18
      %v1509 = vadd.s32 %v665, 18
      %v1510 = vadd.s32 %v694, 18
      %v1511 = vadd.s32 %v723, 18
      %v1512 = vadd.s32 %v752, 18
      %v1513 = vadd.s32 %v781, 18
      %v1514 = vadd.s32 %v810, 18
      %v1515 = vadd.s32 %v839, 18
      %v1516 = vadd.s32 %v868, 18
      %v1517 = vadd.s32 %v897, 18
      %v1518 = vadd.s32 %v926, 18
      %v1519 = vadd.s32 %v955, 18
      %v1520 = vadd.s32 %v984, 18
      %v1521 = vadd.s32 %v1013, 18
      %v1522 = vadd.s32 %v1042, 18
      %v1523 = vadd.s32 %v1071, 18
      %v1524 = vadd.s32 %v1100, 18
      %v1525 = vadd.s32 %v1129, 18
      %v1526 = vadd.s32 %v1158, 18
      %v1527 = vadd.s32 %v1187, 18
      %v1528 = vadd.s32 %v1216, 18
      %v1529 = vadd.s32 %v1245, 18
      %v1530 = vadd.s32 %v1274, 18
      %v1531 = vadd.s32 %v1303, 18
      %v1532 = vadd.s32 %v1332, 18
      %v1533 = vadd.s32 %v1361, 18
      %v1534 = vadd.s32 %v1390, 18
      %v1535 = vsel %vm1463, %v1499, %v375
      %v1536 = vsel %vm1464, %v1500, %v404
      %v1537 = vsel %vm1465, %v1501, %v433
      %v1538 = vsel %vm1466, %v1502, %v462
      %v1539 = vsel %vm1467, %v1503, %v491
      %v1540 = vsel %vm1468, %v1504, %v520
      %v1541 = vsel %vm1469, %v1505, %v549
      %v1542 = vsel %vm1470, %v1506, %v578
      %v1543 = vsel %vm1471, %v1507, %v607
      %v1544 = vsel %vm1472, %v1508, %v636
      %v1545 = vsel %vm1473, %v1509, %v665
      %v1546 = vsel %vm1474, %v1510, %v694
      %v1547 = vsel %vm1475, %v1511, %v723
      %v1548 = vsel %vm1476, %v1512, %v752
      %v1549 = vsel %vm1477, %v1513, %v781
      %v1550 = vsel %vm1478, %v1514, %v810
      %v1551 = vsel %vm1479, %v1515, %v839
      %v1552 = vsel %vm1480, %v1516, %v868
      %v1553 = vsel %vm1481, %v1517, %v897
      %v1554 = vsel %vm1482, %v1518, %v926
      %v1555 = vsel %vm1483, %v1519, %v955
      %v1556 = vsel %vm1484, %v1520, %v984
      %v1557 = vsel %vm1485, %v1521, %v1013
      %v1558 = vsel %vm1486, %v1522, %v1042
      %v1559 = vsel %vm1487, %v1523, %v1071
      %v1560 = vsel %vm1488, %v1524, %v1100
      %v1561 = vsel %vm1489, %v1525, %v1129
      %v1562 = vsel %vm1490, %v1526, %v1158
      %v1563 = vsel %vm1491, %v1527, %v1187
      %v1564 = vsel %vm1492, %v1528, %v1216
      %v1565 = vsel %vm1493, %v1529, %v1245
      %v1566 = vsel %vm1494, %v1530, %v1274
      %v1567 = vsel %vm1495, %v1531, %v1303
      %v1568 = vsel %vm1496, %v1532, %v1332
      %v1569 = vsel %vm1497, %v1533, %v1361
      %v1570 = vsel %vm1498, %v1534, %v1390
      %vm1571 = vcmp.lt.s32.totalorder %v1535, 16
      %vm1572 = vcmp.lt.s32.totalorder %v1536, 16
      %vm1573 = vcmp.lt.s32.totalorder %v1537, 16
      %vm1574 = vcmp.lt.s32.totalorder %v1538, 16
      %vm1575 = vcmp.lt.s32.totalorder %v1539, 16
      %vm1576 = vcmp.lt.s32.totalorder %v1540, 16
      %vm1577 = vcmp.lt.s32.totalorder %v1541, 16
      %vm1578 = vcmp.lt.s32.totalorder %v1542, 16
      %vm1579 = vcmp.lt.s32.totalorder %v1543, 16
      %vm1580 = vcmp.lt.s32.totalorder %v1544, 16
      %vm1581 = vcmp.lt.s32.totalorder %v1545, 16
      %vm1582 = vcmp.lt.s32.totalorder %v1546, 16
      %vm1583 = vcmp.lt.s32.totalorder %v1547, 16
      %vm1584 = vcmp.lt.s32.totalorder %v1548, 16
      %vm1585 = vcmp.lt.s32.totalorder %v1549, 16
      %vm1586 = vcmp.lt.s32.totalorder %v1550, 16
      %vm1587 = vcmp.lt.s32.totalorder %v1551, 16
      %vm1588 = vcmp.lt.s32.totalorder %v1552, 16
      %vm1589 = vcmp.lt.s32.totalorder %v1553, 16
      %vm1590 = vcmp.lt.s32.totalorder %v1554, 16
      %vm1591 = vcmp.lt.s32.totalorder %v1555, 16
      %vm1592 = vcmp.lt.s32.totalorder %v1556, 16
      %vm1593 = vcmp.lt.s32.totalorder %v1557, 16
      %vm1594 = vcmp.lt.s32.totalorder %v1558, 16
      %vm1595 = vcmp.lt.s32.totalorder %v1559, 16
      %vm1596 = vcmp.lt.s32.totalorder %v1560, 16
      %vm1597 = vcmp.lt.s32.totalorder %v1561, 16
      %vm1598 = vcmp.lt.s32.totalorder %v1562, 16
      %vm1599 = vcmp.lt.s32.totalorder %v1563, 16
      %vm1600 = vcmp.lt.s32.totalorder %v1564, 16
      %vm1601 = vcmp.lt.s32.totalorder %v1565, 16
      %vm1602 = vcmp.lt.s32.totalorder %v1566, 16
      %vm1603 = vcmp.lt.s32.totalorder %v1567, 16
      %vm1604 = vcmp.lt.s32.totalorder %v1568, 16
      %vm1605 = vcmp.lt.s32.totalorder %v1569, 16
      %vm1606 = vcmp.lt.s32.totalorder %v1570, 16
      %v1607 = vld [vmem:[%s272] sm:$0xf]
      %v1608 = vld [vmem:[%s272 + $0x4] sm:$0xf]
      %v1609 = vld [vmem:[%s272 + $0x8] sm:$0xf]
      %v1610 = vld [vmem:[%s272 + $0xc] sm:$0xf]
      %v1611 = vld [vmem:[%s272 + $0x10] sm:$0xf]
      %v1612 = vld [vmem:[%s272 + $0x14] sm:$0xf]
      %v1613 = vld [vmem:[%s272 + $0x18] sm:$0xf]
      %v1614 = vld [vmem:[%s272 + $0x1c] sm:$0xf]
      %v1615 = vld [vmem:[%s272 + $0x20] sm:$0xf]
      %v1616 = vld [vmem:[%s272 + $0x24] sm:$0xf]
      %v1617 = vld [vmem:[%s272 + $0x28] sm:$0xf]
      %v1618 = vld [vmem:[%s272 + $0x2c] sm:$0xf]
      %v1619 = vld [vmem:[%s272 + $0x30] sm:$0xf]
      %v1620 = vld [vmem:[%s272 + $0x34] sm:$0xf]
      %v1621 = vld [vmem:[%s272 + $0x38] sm:$0xf]
      %v1622 = vld [vmem:[%s272 + $0x3c] sm:$0xf]
      %v1623 = vld [vmem:[%s272 + $0x40] sm:$0xf]
      %v1624 = vld [vmem:[%s272 + $0x44] sm:$0xf]
      %v1625 = vld [vmem:[%s272 + $0x48] sm:$0xf]
      %v1626 = vld [vmem:[%s272 + $0x4c] sm:$0xf]
      %v1627 = vld [vmem:[%s272 + $0x50] sm:$0xf]
      %v1628 = vld [vmem:[%s272 + $0x54] sm:$0xf]
      %v1629 = vld [vmem:[%s272 + $0x58] sm:$0xf]
      %v1630 = vld [vmem:[%s272 + $0x5c] sm:$0xf]
      %v1631 = vld [vmem:[%s272 + $0x60] sm:$0xf]
      %v1632 = vld [vmem:[%s272 + $0x64] sm:$0xf]
      %v1633 = vld [vmem:[%s272 + $0x68] sm:$0xf]
      %v1634 = vld [vmem:[%s272 + $0x6c] sm:$0xf]
      %v1635 = vld [vmem:[%s272 + $0x70] sm:$0xf]
      %v1636 = vld [vmem:[%s272 + $0x74] sm:$0xf]
      %v1637 = vld [vmem:[%s272 + $0x78] sm:$0xf]
      %v1638 = vld [vmem:[%s272 + $0x7c] sm:$0xf]
      %v1639 = vld [vmem:[%s272 + $0x80] sm:$0xf]
      %v1640 = vld [vmem:[%s272 + $0x84] sm:$0xf]
      %v1641 = vld [vmem:[%s272 + $0x88] sm:$0xf]
      %v1642 = vld [vmem:[%s272 + $0x8c] sm:$0xf]
      %v1643 = vld [vmem:[%s1] sm:$0x3]
      %v1644 = vld [vmem:[%s272 + $0x90] sm:$0x1]
      %s1645 = scalar_lea.vmem %s1, 2
      %v1646 = vld [vmem:[%s1645] sm:$0x3]
      %v1684 = vunpack.c.l.b16 %v1607
      %v1685 = vunpack.c.l.b16 %v1608
      %v1686 = vunpack.c.l.b16 %v1609
      %v1687 = vunpack.c.l.b16 %v1610
      %v1688 = vunpack.c.l.b16 %v1611
      %v1689 = vunpack.c.l.b16 %v1612
      %v1690 = vunpack.c.l.b16 %v1613
      %v1691 = vunpack.c.l.b16 %v1614
      %v1692 = vunpack.c.l.b16 %v1615
      %v1693 = vunpack.c.l.b16 %v1616
      %v1694 = vunpack.c.l.b16 %v1617
      %v1695 = vunpack.c.l.b16 %v1618
      %v1696 = vunpack.c.l.b16 %v1619
      %v1697 = vunpack.c.l.b16 %v1620
      %v1698 = vunpack.c.l.b16 %v1621
      %v1699 = vunpack.c.l.b16 %v1622
      %v1700 = vunpack.c.l.b16 %v1623
      %v1701 = vunpack.c.l.b16 %v1624
      %v1702 = vunpack.c.l.b16 %v1625
      %v1703 = vunpack.c.l.b16 %v1626
      %v1704 = vunpack.c.l.b16 %v1627
      %v1705 = vunpack.c.l.b16 %v1628
      %v1706 = vunpack.c.l.b16 %v1629
      %v1707 = vunpack.c.l.b16 %v1630
      %v1708 = vunpack.c.l.b16 %v1631
      %v1709 = vunpack.c.l.b16 %v1632
      %v1710 = vunpack.c.l.b16 %v1633
      %v1711 = vunpack.c.l.b16 %v1634
      %v1712 = vunpack.c.l.b16 %v1635
      %v1713 = vunpack.c.l.b16 %v1636
      %v1714 = vunpack.c.l.b16 %v1637
      %v1715 = vunpack.c.l.b16 %v1638
      %v1716 = vunpack.c.l.b16 %v1639
      %v1717 = vunpack.c.l.b16 %v1640
      %v1718 = vunpack.c.l.b16 %v1641
      %v1719 = vunpack.c.l.b16 %v1642
      %v1720 = vunpack.c.l.b16 %v1644
      %v1721 = vpack.c.b16 %v1685, %v1684
      %v1722 = vpack.c.b16 %v1687, %v1686
      %v1723 = vpack.c.b16 %v1689, %v1688
      %v1724 = vpack.c.b16 %v1691, %v1690
      %v1725 = vpack.c.b16 %v1693, %v1692
      %v1726 = vpack.c.b16 %v1695, %v1694
      %v1727 = vpack.c.b16 %v1697, %v1696
      %v1728 = vpack.c.b16 %v1699, %v1698
      %v1729 = vpack.c.b16 %v1701, %v1700
      %v1730 = vpack.c.b16 %v1703, %v1702
      %v1731 = vpack.c.b16 %v1705, %v1704
      %v1732 = vpack.c.b16 %v1707, %v1706
      %v1733 = vpack.c.b16 %v1709, %v1708
      %v1734 = vpack.c.b16 %v1711, %v1710
      %v1735 = vpack.c.b16 %v1713, %v1712
      %v1736 = vpack.c.b16 %v1715, %v1714
      %v1737 = vpack.c.b16 %v1717, %v1716
      %v1738 = vpack.c.b16 %v1719, %v1718
      %v1739 = vpack.c.b16 %v1720, %v1720
      %vm1740 = vsmask.f32 7424
      %v1742 = vshrl.u32 %v1721, 16
      %v1744 = vshll.u32 %v1721, 16
      %v1746 = vrot.slane %v1744, 1
      %v1747 = vor.u32 %v1742, %v1746
      %v1749 = vshll.u32 %v1722, 16
      %v1751 = vrot.slane %v1749, 1
      %v1752 = vsel %vm1740, %v1747, %v1751
      %v1753 = vshrl.u32 %v1722, 16
      %v1755 = vor.u32 %v1753, %v1751
      %v1757 = vshll.u32 %v1723, 16
      %v1759 = vrot.slane %v1757, 1
      %v1760 = vsel %vm1740, %v1755, %v1759
      %v1761 = vshrl.u32 %v1723, 16
      %v1763 = vor.u32 %v1761, %v1759
      %v1765 = vshll.u32 %v1724, 16
      %v1767 = vrot.slane %v1765, 1
      %v1768 = vsel %vm1740, %v1763, %v1767
      %v1769 = vshrl.u32 %v1724, 16
      %v1771 = vor.u32 %v1769, %v1767
      %v1773 = vshll.u32 %v1725, 16
      %v1775 = vrot.slane %v1773, 1
      %v1776 = vsel %vm1740, %v1771, %v1775
      %v1777 = vshrl.u32 %v1725, 16
      %v1779 = vor.u32 %v1777, %v1775
      %v1781 = vshll.u32 %v1726, 16
      %v1783 = vrot.slane %v1781, 1
      %v1784 = vsel %vm1740, %v1779, %v1783
      %v1785 = vshrl.u32 %v1726, 16
      %v1787 = vor.u32 %v1785, %v1783
      %v1789 = vshll.u32 %v1727, 16
      %v1791 = vrot.slane %v1789, 1
      %v1792 = vsel %vm1740, %v1787, %v1791
      %v1793 = vshrl.u32 %v1727, 16
      %v1795 = vor.u32 %v1793, %v1791
      %v1797 = vshll.u32 %v1728, 16
      %v1799 = vrot.slane %v1797, 1
      %v1800 = vsel %vm1740, %v1795, %v1799
      %v1801 = vshrl.u32 %v1728, 16
      %v1803 = vor.u32 %v1801, %v1799
      %v1805 = vshll.u32 %v1729, 16
      %v1807 = vrot.slane %v1805, 1
      %v1808 = vsel %vm1740, %v1803, %v1807
      %v1809 = vshrl.u32 %v1729, 16
      %v1811 = vor.u32 %v1809, %v1807
      %v1813 = vshll.u32 %v1730, 16
      %v1815 = vrot.slane %v1813, 1
      %v1816 = vsel %vm1740, %v1811, %v1815
      %v1817 = vshrl.u32 %v1730, 16
      %v1819 = vor.u32 %v1817, %v1815
      %v1821 = vshll.u32 %v1731, 16
      %v1823 = vrot.slane %v1821, 1
      %v1824 = vsel %vm1740, %v1819, %v1823
      %v1825 = vshrl.u32 %v1731, 16
      %v1827 = vor.u32 %v1825, %v1823
      %v1829 = vshll.u32 %v1732, 16
      %v1831 = vrot.slane %v1829, 1
      %v1832 = vsel %vm1740, %v1827, %v1831
      %v1833 = vshrl.u32 %v1732, 16
      %v1835 = vor.u32 %v1833, %v1831
      %v1837 = vshll.u32 %v1733, 16
      %v1839 = vrot.slane %v1837, 1
      %v1840 = vsel %vm1740, %v1835, %v1839
      %v1841 = vshrl.u32 %v1733, 16
      %v1843 = vor.u32 %v1841, %v1839
      %v1845 = vshll.u32 %v1734, 16
      %v1847 = vrot.slane %v1845, 1
      %v1848 = vsel %vm1740, %v1843, %v1847
      %v1849 = vshrl.u32 %v1734, 16
      %v1851 = vor.u32 %v1849, %v1847
      %v1853 = vshll.u32 %v1735, 16
      %v1855 = vrot.slane %v1853, 1
      %v1856 = vsel %vm1740, %v1851, %v1855
      %v1857 = vshrl.u32 %v1735, 16
      %v1859 = vor.u32 %v1857, %v1855
      %v1861 = vshll.u32 %v1736, 16
      %v1863 = vrot.slane %v1861, 1
      %v1864 = vsel %vm1740, %v1859, %v1863
      %v1865 = vshrl.u32 %v1736, 16
      %v1867 = vor.u32 %v1865, %v1863
      %v1869 = vshll.u32 %v1737, 16
      %v1871 = vrot.slane %v1869, 1
      %v1872 = vsel %vm1740, %v1867, %v1871
      %v1873 = vshrl.u32 %v1737, 16
      %v1875 = vor.u32 %v1873, %v1871
      %v1877 = vshll.u32 %v1738, 16
      %v1879 = vrot.slane %v1877, 1
      %v1880 = vsel %vm1740, %v1875, %v1879
      %v1881 = vshrl.u32 %v1738, 16
      %v1883 = vor.u32 %v1881, %v1879
      %v1885 = vshll.u32 %v1739, 16
      %v1887 = vrot.slane %v1885, 1
      %v1888 = vsel %vm1740, %v1883, %v1887
      %vm1889 = vcmask 31744
      %v1891 = vsel %vm1889, %v1752, 0
      %v1894 = vsel %vm1889, %v1760, 0
      %v1897 = vsel %vm1889, %v1768, 0
      %v1900 = vsel %vm1889, %v1776, 0
      %v1903 = vsel %vm1889, %v1784, 0
      %v1906 = vsel %vm1889, %v1792, 0
      %v1909 = vsel %vm1889, %v1800, 0
      %v1912 = vsel %vm1889, %v1808, 0
      %v1915 = vsel %vm1889, %v1816, 0
      %v1918 = vsel %vm1889, %v1824, 0
      %v1921 = vsel %vm1889, %v1832, 0
      %v1924 = vsel %vm1889, %v1840, 0
      %v1927 = vsel %vm1889, %v1848, 0
      %v1930 = vsel %vm1889, %v1856, 0
      %v1933 = vsel %vm1889, %v1864, 0
      %v1936 = vsel %vm1889, %v1872, 0
      %v1939 = vsel %vm1889, %v1880, 0
      %v1942 = vsel %vm1889, %v1888, 0
      %vm1944 = vcmask 1041408
      %v1946 = vsel %vm1944, %v1646, 0
      %1948 = vmatpush.bf16.msra.mxu0 0
      %1949 = vmatpush.bf16.msra.mxu0 0
      %1950 = vmatpush.bf16.msra.mxu0 0
      %1951 = vmatpush.bf16.msra.mxu0 0
      %1952 = vmatpush.bf16.msra.mxu0 0
      %1953 = vmatpush.bf16.msra.mxu0 0
      %1954 = vmatpush.bf16.msra.mxu0 0
      %1955 = vmatpush.bf16.msra.mxu0 %v1946
      %1956 = vmatmul.bf16.gmra.mxu0 %v1891
      %v1957 = vpop.f32.mrf.mxu0
      %v1958 = vadd.f32 0.0, %v1957
      %v1959 = vpop.f32.mrf.mxu0
      %v1960 = vadd.f32 0.0, %v1959
      %1961 = vmatmul.bf16.gmra.mxu0 %v1894
      %v1962 = vpop.f32.mrf.mxu0
      %v1963 = vadd.f32 0.0, %v1962
      %v1964 = vpop.f32.mrf.mxu0
      %v1965 = vadd.f32 0.0, %v1964
      %1966 = vmatmul.bf16.gmra.mxu0 %v1897
      %v1967 = vpop.f32.mrf.mxu0
      %v1968 = vadd.f32 0.0, %v1967
      %v1969 = vpop.f32.mrf.mxu0
      %v1970 = vadd.f32 0.0, %v1969
      %1971 = vmatmul.bf16.gmra.mxu0 %v1900
      %v1972 = vpop.f32.mrf.mxu0
      %v1973 = vadd.f32 0.0, %v1972
      %v1974 = vpop.f32.mrf.mxu0
      %v1975 = vadd.f32 0.0, %v1974
      %1976 = vmatmul.bf16.gmra.mxu0 %v1903
      %v1977 = vpop.f32.mrf.mxu0
      %v1978 = vadd.f32 0.0, %v1977
      %v1979 = vpop.f32.mrf.mxu0
      %v1980 = vadd.f32 0.0, %v1979
      %1981 = vmatmul.bf16.gmra.mxu0 %v1906
      %v1982 = vpop.f32.mrf.mxu0
      %v1983 = vadd.f32 0.0, %v1982
      %v1984 = vpop.f32.mrf.mxu0
      %v1985 = vadd.f32 0.0, %v1984
      %1986 = vmatmul.bf16.gmra.mxu0 %v1909
      %v1987 = vpop.f32.mrf.mxu0
      %v1988 = vadd.f32 0.0, %v1987
      %v1989 = vpop.f32.mrf.mxu0
      %v1990 = vadd.f32 0.0, %v1989
      %1991 = vmatmul.bf16.gmra.mxu0 %v1912
      %v1992 = vpop.f32.mrf.mxu0
      %v1993 = vadd.f32 0.0, %v1992
      %v1994 = vpop.f32.mrf.mxu0
      %v1995 = vadd.f32 0.0, %v1994
      %1996 = vmatmul.bf16.gmra.mxu0 %v1915
      %v1997 = vpop.f32.mrf.mxu0
      %v1998 = vadd.f32 0.0, %v1997
      %v1999 = vpop.f32.mrf.mxu0
      %v2000 = vadd.f32 0.0, %v1999
      %2001 = vmatmul.bf16.gmra.mxu0 %v1918
      %v2002 = vpop.f32.mrf.mxu0
      %v2003 = vadd.f32 0.0, %v2002
      %v2004 = vpop.f32.mrf.mxu0
      %v2005 = vadd.f32 0.0, %v2004
      %2006 = vmatmul.bf16.gmra.mxu0 %v1921
      %v2007 = vpop.f32.mrf.mxu0
      %v2008 = vadd.f32 0.0, %v2007
      %v2009 = vpop.f32.mrf.mxu0
      %v2010 = vadd.f32 0.0, %v2009
      %2011 = vmatmul.bf16.gmra.mxu0 %v1924
      %v2012 = vpop.f32.mrf.mxu0
      %v2013 = vadd.f32 0.0, %v2012
      %v2014 = vpop.f32.mrf.mxu0
      %v2015 = vadd.f32 0.0, %v2014
      %2016 = vmatmul.bf16.gmra.mxu0 %v1927
      %v2017 = vpop.f32.mrf.mxu0
      %v2018 = vadd.f32 0.0, %v2017
      %v2019 = vpop.f32.mrf.mxu0
      %v2020 = vadd.f32 0.0, %v2019
      %2021 = vmatmul.bf16.gmra.mxu0 %v1930
      %v2022 = vpop.f32.mrf.mxu0
      %v2023 = vadd.f32 0.0, %v2022
      %v2024 = vpop.f32.mrf.mxu0
      %v2025 = vadd.f32 0.0, %v2024
      %2026 = vmatmul.bf16.gmra.mxu0 %v1933
      %v2027 = vpop.f32.mrf.mxu0
      %v2028 = vadd.f32 0.0, %v2027
      %v2029 = vpop.f32.mrf.mxu0
      %v2030 = vadd.f32 0.0, %v2029
      %2031 = vmatmul.bf16.gmra.mxu0 %v1936
      %v2032 = vpop.f32.mrf.mxu0
      %v2033 = vadd.f32 0.0, %v2032
      %v2034 = vpop.f32.mrf.mxu0
      %v2035 = vadd.f32 0.0, %v2034
      %2036 = vmatmul.bf16.gmra.mxu0 %v1939
      %v2037 = vpop.f32.mrf.mxu0
      %v2038 = vadd.f32 0.0, %v2037
      %v2039 = vpop.f32.mrf.mxu0
      %v2040 = vadd.f32 0.0, %v2039
      %2041 = vmatmul.bf16.gmra.mxu0 %v1942
      %v2042 = vpop.f32.mrf.mxu0
      %v2043 = vadd.f32 0.0, %v2042
      %v2044 = vpop.f32.mrf.mxu0
      %v2045 = vadd.f32 0.0, %v2044
      %2046 = vdwg.mxu0
      %v2047 = vsel %vm1889, %v1721, 0
      %v2049 = vsel %vm1889, %v1722, 0
      %v2051 = vsel %vm1889, %v1723, 0
      %v2053 = vsel %vm1889, %v1724, 0
      %v2055 = vsel %vm1889, %v1725, 0
      %v2057 = vsel %vm1889, %v1726, 0
      %v2059 = vsel %vm1889, %v1727, 0
      %v2061 = vsel %vm1889, %v1728, 0
      %v2063 = vsel %vm1889, %v1729, 0
      %v2065 = vsel %vm1889, %v1730, 0
      %v2067 = vsel %vm1889, %v1731, 0
      %v2069 = vsel %vm1889, %v1732, 0
      %v2071 = vsel %vm1889, %v1733, 0
      %v2073 = vsel %vm1889, %v1734, 0
      %v2075 = vsel %vm1889, %v1735, 0
      %v2077 = vsel %vm1889, %v1736, 0
      %v2079 = vsel %vm1889, %v1737, 0
      %v2081 = vsel %vm1889, %v1738, 0
      %v2084 = vsel %vm1944, %v1643, 0
      %2086 = vmatpush.bf16.msra.mxu0 0
      %2087 = vmatpush.bf16.msra.mxu0 0
      %2088 = vmatpush.bf16.msra.mxu0 0
      %2089 = vmatpush.bf16.msra.mxu0 0
      %2090 = vmatpush.bf16.msra.mxu0 0
      %2091 = vmatpush.bf16.msra.mxu0 0
      %2092 = vmatpush.bf16.msra.mxu0 0
      %2093 = vmatpush.bf16.msra.mxu0 %v2084
      %2094 = vmatmul.bf16.gmra.mxu0 %v2047
      %v2095 = vpop.f32.mrf.mxu0
      %v2096 = vadd.f32 %v1958, %v2095
      %v2097 = vpop.f32.mrf.mxu0
      %v2098 = vadd.f32 %v1960, %v2097
      %2099 = vmatmul.bf16.gmra.mxu0 %v2049
      %v2100 = vpop.f32.mrf.mxu0
      %v2101 = vadd.f32 %v1963, %v2100
      %v2102 = vpop.f32.mrf.mxu0
      %v2103 = vadd.f32 %v1965, %v2102
      %2104 = vmatmul.bf16.gmra.mxu0 %v2051
      %v2105 = vpop.f32.mrf.mxu0
      %v2106 = vadd.f32 %v1968, %v2105
      %v2107 = vpop.f32.mrf.mxu0
      %v2108 = vadd.f32 %v1970, %v2107
      %2109 = vmatmul.bf16.gmra.mxu0 %v2053
      %v2110 = vpop.f32.mrf.mxu0
      %v2111 = vadd.f32 %v1973, %v2110
      %v2112 = vpop.f32.mrf.mxu0
      %v2113 = vadd.f32 %v1975, %v2112
      %2114 = vmatmul.bf16.gmra.mxu0 %v2055
      %v2115 = vpop.f32.mrf.mxu0
      %v2116 = vadd.f32 %v1978, %v2115
      %v2117 = vpop.f32.mrf.mxu0
      %v2118 = vadd.f32 %v1980, %v2117
      %2119 = vmatmul.bf16.gmra.mxu0 %v2057
      %v2120 = vpop.f32.mrf.mxu0
      %v2121 = vadd.f32 %v1983, %v2120
      %v2122 = vpop.f32.mrf.mxu0
      %v2123 = vadd.f32 %v1985, %v2122
      %2124 = vmatmul.bf16.gmra.mxu0 %v2059
      %v2125 = vpop.f32.mrf.mxu0
      %v2126 = vadd.f32 %v1988, %v2125
      %v2127 = vpop.f32.mrf.mxu0
      %v2128 = vadd.f32 %v1990, %v2127
      %2129 = vmatmul.bf16.gmra.mxu0 %v2061
      %v2130 = vpop.f32.mrf.mxu0
      %v2131 = vadd.f32 %v1993, %v2130
      %v2132 = vpop.f32.mrf.mxu0
      %v2133 = vadd.f32 %v1995, %v2132
      %2134 = vmatmul.bf16.gmra.mxu0 %v2063
      %v2135 = vpop.f32.mrf.mxu0
      %v2136 = vadd.f32 %v1998, %v2135
      %v2137 = vpop.f32.mrf.mxu0
      %v2138 = vadd.f32 %v2000, %v2137
      %2139 = vmatmul.bf16.gmra.mxu0 %v2065
      %v2140 = vpop.f32.mrf.mxu0
      %v2141 = vadd.f32 %v2003, %v2140
      %v2142 = vpop.f32.mrf.mxu0
      %v2143 = vadd.f32 %v2005, %v2142
      %2144 = vmatmul.bf16.gmra.mxu0 %v2067
      %v2145 = vpop.f32.mrf.mxu0
      %v2146 = vadd.f32 %v2008, %v2145
      %v2147 = vpop.f32.mrf.mxu0
      %v2148 = vadd.f32 %v2010, %v2147
      %2149 = vmatmul.bf16.gmra.mxu0 %v2069
      %v2150 = vpop.f32.mrf.mxu0
      %v2151 = vadd.f32 %v2013, %v2150
      %v2152 = vpop.f32.mrf.mxu0
      %v2153 = vadd.f32 %v2015, %v2152
      %2154 = vmatmul.bf16.gmra.mxu0 %v2071
      %v2155 = vpop.f32.mrf.mxu0
      %v2156 = vadd.f32 %v2018, %v2155
      %v2157 = vpop.f32.mrf.mxu0
      %v2158 = vadd.f32 %v2020, %v2157
      %2159 = vmatmul.bf16.gmra.mxu0 %v2073
      %v2160 = vpop.f32.mrf.mxu0
      %v2161 = vadd.f32 %v2023, %v2160
      %v2162 = vpop.f32.mrf.mxu0
      %v2163 = vadd.f32 %v2025, %v2162
      %2164 = vmatmul.bf16.gmra.mxu0 %v2075
      %v2165 = vpop.f32.mrf.mxu0
      %v2166 = vadd.f32 %v2028, %v2165
      %v2167 = vpop.f32.mrf.mxu0
      %v2168 = vadd.f32 %v2030, %v2167
      %2169 = vmatmul.bf16.gmra.mxu0 %v2077
      %v2170 = vpop.f32.mrf.mxu0
      %v2171 = vadd.f32 %v2033, %v2170
      %v2172 = vpop.f32.mrf.mxu0
      %v2173 = vadd.f32 %v2035, %v2172
      %2174 = vmatmul.bf16.gmra.mxu0 %v2079
      %v2175 = vpop.f32.mrf.mxu0
      %v2176 = vadd.f32 %v2038, %v2175
      %v2177 = vpop.f32.mrf.mxu0
      %v2178 = vadd.f32 %v2040, %v2177
      %2179 = vmatmul.bf16.gmra.mxu0 %v2081
      %v2180 = vpop.f32.mrf.mxu0
      %v2181 = vadd.f32 %v2043, %v2180
      %v2182 = vpop.f32.mrf.mxu0
      %v2183 = vadd.f32 %v2045, %v2182
      %2184 = vdwg.mxu0
      %v2185 = vld [vmem:[%s272] sm:$0xe]
      %s2186 = scalar_lea.vmem %s1, 4
      %v2187 = vld [vmem:[%s2186] sm:$0x3]
      %v2189 = vunpack.c.l.b16 %v2185
      %v2190 = vpack.c.b16 %v1685, %v2189
      %vm2191 = vcmask 1046528
      %v2192 = vrot.slane %v2190, 1
      %v2193 = vrot.slane %v1722, 1
      %v2194 = vsel %vm2191, %v2192, %v2193
      %v2195 = vrot.slane %v1723, 1
      %v2196 = vsel %vm2191, %v2193, %v2195
      %v2197 = vrot.slane %v1724, 1
      %v2198 = vsel %vm2191, %v2195, %v2197
      %v2199 = vrot.slane %v1725, 1
      %v2200 = vsel %vm2191, %v2197, %v2199
      %v2201 = vrot.slane %v1726, 1
      %v2202 = vsel %vm2191, %v2199, %v2201
      %v2203 = vrot.slane %v1727, 1
      %v2204 = vsel %vm2191, %v2201, %v2203
      %v2205 = vrot.slane %v1728, 1
      %v2206 = vsel %vm2191, %v2203, %v2205
      %v2207 = vrot.slane %v1729, 1
      %v2208 = vsel %vm2191, %v2205, %v2207
      %v2209 = vrot.slane %v1730, 1
      %v2210 = vsel %vm2191, %v2207, %v2209
      %v2211 = vrot.slane %v1731, 1
      %v2212 = vsel %vm2191, %v2209, %v2211
      %v2213 = vrot.slane %v1732, 1
      %v2214 = vsel %vm2191, %v2211, %v2213
      %v2215 = vrot.slane %v1733, 1
      %v2216 = vsel %vm2191, %v2213, %v2215
      %v2217 = vrot.slane %v1734, 1
      %v2218 = vsel %vm2191, %v2215, %v2217
      %v2219 = vrot.slane %v1735, 1
      %v2220 = vsel %vm2191, %v2217, %v2219
      %v2221 = vrot.slane %v1736, 1
      %v2222 = vsel %vm2191, %v2219, %v2221
      %v2223 = vrot.slane %v1737, 1
      %v2224 = vsel %vm2191, %v2221, %v2223
      %v2225 = vrot.slane %v1738, 1
      %v2226 = vsel %vm2191, %v2223, %v2225
      %v2227 = vrot.slane %v1739, 1
      %v2228 = vsel %vm2191, %v2225, %v2227
      %v2230 = vsel %vm1889, %v2194, 0
      %v2233 = vsel %vm1889, %v2196, 0
      %v2236 = vsel %vm1889, %v2198, 0
      %v2239 = vsel %vm1889, %v2200, 0
      %v2242 = vsel %vm1889, %v2202, 0
      %v2245 = vsel %vm1889, %v2204, 0
      %v2248 = vsel %vm1889, %v2206, 0
      %v2251 = vsel %vm1889, %v2208, 0
      %v2254 = vsel %vm1889, %v2210, 0
      %v2257 = vsel %vm1889, %v2212, 0
      %v2260 = vsel %vm1889, %v2214, 0
      %v2263 = vsel %vm1889, %v2216, 0
      %v2266 = vsel %vm1889, %v2218, 0
      %v2269 = vsel %vm1889, %v2220, 0
      %v2272 = vsel %vm1889, %v2222, 0
      %v2275 = vsel %vm1889, %v2224, 0
      %v2278 = vsel %vm1889, %v2226, 0
      %v2281 = vsel %vm1889, %v2228, 0
      %v2284 = vsel %vm1944, %v2187, 0
      %2286 = vmatpush.bf16.msra.mxu0 0
      %2287 = vmatpush.bf16.msra.mxu0 0
      %2288 = vmatpush.bf16.msra.mxu0 0
      %2289 = vmatpush.bf16.msra.mxu0 0
      %2290 = vmatpush.bf16.msra.mxu0 0
      %2291 = vmatpush.bf16.msra.mxu0 0
      %2292 = vmatpush.bf16.msra.mxu0 0
      %2293 = vmatpush.bf16.msra.mxu0 %v2284
      %2294 = vmatmul.bf16.gmra.mxu0 %v2230
      %v2295 = vpop.f32.mrf.mxu0
      %v2296 = vadd.f32 0.0, %v2295
      %v2297 = vpop.f32.mrf.mxu0
      %v2298 = vadd.f32 0.0, %v2297
      %2299 = vmatmul.bf16.gmra.mxu0 %v2233
      %v2300 = vpop.f32.mrf.mxu0
      %v2301 = vadd.f32 0.0, %v2300
      %v2302 = vpop.f32.mrf.mxu0
      %v2303 = vadd.f32 0.0, %v2302
      %2304 = vmatmul.bf16.gmra.mxu0 %v2236
      %v2305 = vpop.f32.mrf.mxu0
      %v2306 = vadd.f32 0.0, %v2305
      %v2307 = vpop.f32.mrf.mxu0
      %v2308 = vadd.f32 0.0, %v2307
      %2309 = vmatmul.bf16.gmra.mxu0 %v2239
      %v2310 = vpop.f32.mrf.mxu0
      %v2311 = vadd.f32 0.0, %v2310
      %v2312 = vpop.f32.mrf.mxu0
      %v2313 = vadd.f32 0.0, %v2312
      %2314 = vmatmul.bf16.gmra.mxu0 %v2242
      %v2315 = vpop.f32.mrf.mxu0
      %v2316 = vadd.f32 0.0, %v2315
      %v2317 = vpop.f32.mrf.mxu0
      %v2318 = vadd.f32 0.0, %v2317
      %2319 = vmatmul.bf16.gmra.mxu0 %v2245
      %v2320 = vpop.f32.mrf.mxu0
      %v2321 = vadd.f32 0.0, %v2320
      %v2322 = vpop.f32.mrf.mxu0
      %v2323 = vadd.f32 0.0, %v2322
      %2324 = vmatmul.bf16.gmra.mxu0 %v2248
      %v2325 = vpop.f32.mrf.mxu0
      %v2326 = vadd.f32 0.0, %v2325
      %v2327 = vpop.f32.mrf.mxu0
      %v2328 = vadd.f32 0.0, %v2327
      %2329 = vmatmul.bf16.gmra.mxu0 %v2251
      %v2330 = vpop.f32.mrf.mxu0
      %v2331 = vadd.f32 0.0, %v2330
      %v2332 = vpop.f32.mrf.mxu0
      %v2333 = vadd.f32 0.0, %v2332
      %2334 = vmatmul.bf16.gmra.mxu0 %v2254
      %v2335 = vpop.f32.mrf.mxu0
      %v2336 = vadd.f32 0.0, %v2335
      %v2337 = vpop.f32.mrf.mxu0
      %v2338 = vadd.f32 0.0, %v2337
      %2339 = vmatmul.bf16.gmra.mxu0 %v2257
      %v2340 = vpop.f32.mrf.mxu0
      %v2341 = vadd.f32 0.0, %v2340
      %v2342 = vpop.f32.mrf.mxu0
      %v2343 = vadd.f32 0.0, %v2342
      %2344 = vmatmul.bf16.gmra.mxu0 %v2260
      %v2345 = vpop.f32.mrf.mxu0
      %v2346 = vadd.f32 0.0, %v2345
      %v2347 = vpop.f32.mrf.mxu0
      %v2348 = vadd.f32 0.0, %v2347
      %2349 = vmatmul.bf16.gmra.mxu0 %v2263
      %v2350 = vpop.f32.mrf.mxu0
      %v2351 = vadd.f32 0.0, %v2350
      %v2352 = vpop.f32.mrf.mxu0
      %v2353 = vadd.f32 0.0, %v2352
      %2354 = vmatmul.bf16.gmra.mxu0 %v2266
      %v2355 = vpop.f32.mrf.mxu0
      %v2356 = vadd.f32 0.0, %v2355
      %v2357 = vpop.f32.mrf.mxu0
      %v2358 = vadd.f32 0.0, %v2357
      %2359 = vmatmul.bf16.gmra.mxu0 %v2269
      %v2360 = vpop.f32.mrf.mxu0
      %v2361 = vadd.f32 0.0, %v2360
      %v2362 = vpop.f32.mrf.mxu0
      %v2363 = vadd.f32 0.0, %v2362
      %2364 = vmatmul.bf16.gmra.mxu0 %v2272
      %v2365 = vpop.f32.mrf.mxu0
      %v2366 = vadd.f32 0.0, %v2365
      %v2367 = vpop.f32.mrf.mxu0
      %v2368 = vadd.f32 0.0, %v2367
      %2369 = vmatmul.bf16.gmra.mxu0 %v2275
      %v2370 = vpop.f32.mrf.mxu0
      %v2371 = vadd.f32 0.0, %v2370
      %v2372 = vpop.f32.mrf.mxu0
      %v2373 = vadd.f32 0.0, %v2372
      %2374 = vmatmul.bf16.gmra.mxu0 %v2278
      %v2375 = vpop.f32.mrf.mxu0
      %v2376 = vadd.f32 0.0, %v2375
      %v2377 = vpop.f32.mrf.mxu0
      %v2378 = vadd.f32 0.0, %v2377
      %2379 = vmatmul.bf16.gmra.mxu0 %v2281
      %v2380 = vpop.f32.mrf.mxu0
      %v2381 = vadd.f32 0.0, %v2380
      %v2382 = vpop.f32.mrf.mxu0
      %v2383 = vadd.f32 0.0, %v2382
      %2384 = vdwg.mxu0
      %v2385 = vadd.f32 %v2096, %v2296
      %v2386 = vadd.f32 %v2098, %v2298
      %v2387 = vadd.f32 %v2101, %v2301
      %v2388 = vadd.f32 %v2103, %v2303
      %v2389 = vadd.f32 %v2106, %v2306
      %v2390 = vadd.f32 %v2108, %v2308
      %v2391 = vadd.f32 %v2111, %v2311
      %v2392 = vadd.f32 %v2113, %v2313
      %v2393 = vadd.f32 %v2116, %v2316
      %v2394 = vadd.f32 %v2118, %v2318
      %v2395 = vadd.f32 %v2121, %v2321
      %v2396 = vadd.f32 %v2123, %v2323
      %v2397 = vadd.f32 %v2126, %v2326
      %v2398 = vadd.f32 %v2128, %v2328
      %v2399 = vadd.f32 %v2131, %v2331
      %v2400 = vadd.f32 %v2133, %v2333
      %v2401 = vadd.f32 %v2136, %v2336
      %v2402 = vadd.f32 %v2138, %v2338
      %v2403 = vadd.f32 %v2141, %v2341
      %v2404 = vadd.f32 %v2143, %v2343
      %v2405 = vadd.f32 %v2146, %v2346
      %v2406 = vadd.f32 %v2148, %v2348
      %v2407 = vadd.f32 %v2151, %v2351
      %v2408 = vadd.f32 %v2153, %v2353
      %v2409 = vadd.f32 %v2156, %v2356
      %v2410 = vadd.f32 %v2158, %v2358
      %v2411 = vadd.f32 %v2161, %v2361
      %v2412 = vadd.f32 %v2163, %v2363
      %v2413 = vadd.f32 %v2166, %v2366
      %v2414 = vadd.f32 %v2168, %v2368
      %v2415 = vadd.f32 %v2171, %v2371
      %v2416 = vadd.f32 %v2173, %v2373
      %v2417 = vadd.f32 %v2176, %v2376
      %v2418 = vadd.f32 %v2178, %v2378
      %v2419 = vadd.f32 %v2181, %v2381
      %v2420 = vadd.f32 %v2183, %v2383
      %v2421 = vld [vmem:[%s272 + $0x8] sm:$0xe]
      %v2422 = vld [vmem:[%s272 + $0xc] sm:$0xf]
      %v2423 = vld [vmem:[%s272 + $0x10] sm:$0xf]
      %v2424 = vld [vmem:[%s272 + $0x14] sm:$0xf]
      %v2425 = vld [vmem:[%s272 + $0x18] sm:$0xf]
      %v2426 = vld [vmem:[%s272 + $0x1c] sm:$0xf]
      %v2427 = vld [vmem:[%s272 + $0x20] sm:$0xf]
      %v2428 = vld [vmem:[%s272 + $0x24] sm:$0xf]
      %v2429 = vld [vmem:[%s272 + $0x28] sm:$0xf]
      %v2430 = vld [vmem:[%s272 + $0x2c] sm:$0xf]
      %v2431 = vld [vmem:[%s272 + $0x30] sm:$0xf]
      %v2432 = vld [vmem:[%s272 + $0x34] sm:$0xf]
      %v2433 = vld [vmem:[%s272 + $0x38] sm:$0xf]
      %v2434 = vld [vmem:[%s272 + $0x3c] sm:$0xf]
      %v2435 = vld [vmem:[%s272 + $0x40] sm:$0xf]
      %v2436 = vld [vmem:[%s272 + $0x44] sm:$0xf]
      %v2437 = vld [vmem:[%s272 + $0x48] sm:$0xf]
      %v2438 = vld [vmem:[%s272 + $0x4c] sm:$0xf]
      %v2439 = vld [vmem:[%s272 + $0x50] sm:$0xf]
      %v2440 = vld [vmem:[%s272 + $0x54] sm:$0xf]
      %v2441 = vld [vmem:[%s272 + $0x58] sm:$0xf]
      %v2442 = vld [vmem:[%s272 + $0x5c] sm:$0xf]
      %v2443 = vld [vmem:[%s272 + $0x60] sm:$0xf]
      %v2444 = vld [vmem:[%s272 + $0x64] sm:$0xf]
      %v2445 = vld [vmem:[%s272 + $0x68] sm:$0xf]
      %v2446 = vld [vmem:[%s272 + $0x6c] sm:$0xf]
      %v2447 = vld [vmem:[%s272 + $0x70] sm:$0xf]
      %v2448 = vld [vmem:[%s272 + $0x74] sm:$0xf]
      %v2449 = vld [vmem:[%s272 + $0x78] sm:$0xf]
      %v2450 = vld [vmem:[%s272 + $0x7c] sm:$0xf]
      %v2451 = vld [vmem:[%s272 + $0x80] sm:$0xf]
      %v2452 = vld [vmem:[%s272 + $0x84] sm:$0xf]
      %v2453 = vld [vmem:[%s272 + $0x88] sm:$0xf]
      %v2454 = vld [vmem:[%s272 + $0x8c] sm:$0xf]
      %v2455 = vld [vmem:[%s272 + $0x90] sm:$0xf]
      %v2456 = vld [vmem:[%s272 + $0x94] sm:$0xf]
      %v2457 = vld [vmem:[%s272 + $0x98] sm:$0x1]
      %s2458 = scalar_lea.vmem %s1, 6
      %v2459 = vld [vmem:[%s2458] sm:$0x3]
      %v2497 = vunpack.c.l.b16 %v2421
      %v2498 = vunpack.c.l.b16 %v2422
      %v2499 = vunpack.c.l.b16 %v2423
      %v2500 = vunpack.c.l.b16 %v2424
      %v2501 = vunpack.c.l.b16 %v2425
      %v2502 = vunpack.c.l.b16 %v2426
      %v2503 = vunpack.c.l.b16 %v2427
      %v2504 = vunpack.c.l.b16 %v2428
      %v2505 = vunpack.c.l.b16 %v2429
      %v2506 = vunpack.c.l.b16 %v2430
      %v2507 = vunpack.c.l.b16 %v2431
      %v2508 = vunpack.c.l.b16 %v2432
      %v2509 = vunpack.c.l.b16 %v2433
      %v2510 = vunpack.c.l.b16 %v2434
      %v2511 = vunpack.c.l.b16 %v2435
      %v2512 = vunpack.c.l.b16 %v2436
      %v2513 = vunpack.c.l.b16 %v2437
      %v2514 = vunpack.c.l.b16 %v2438
      %v2515 = vunpack.c.l.b16 %v2439
      %v2516 = vunpack.c.l.b16 %v2440
      %v2517 = vunpack.c.l.b16 %v2441
      %v2518 = vunpack.c.l.b16 %v2442
      %v2519 = vunpack.c.l.b16 %v2443
      %v2520 = vunpack.c.l.b16 %v2444
      %v2521 = vunpack.c.l.b16 %v2445
      %v2522 = vunpack.c.l.b16 %v2446
      %v2523 = vunpack.c.l.b16 %v2447
      %v2524 = vunpack.c.l.b16 %v2448
      %v2525 = vunpack.c.l.b16 %v2449
      %v2526 = vunpack.c.l.b16 %v2450
      %v2527 = vunpack.c.l.b16 %v2451
      %v2528 = vunpack.c.l.b16 %v2452
      %v2529 = vunpack.c.l.b16 %v2453
      %v2530 = vunpack.c.l.b16 %v2454
      %v2531 = vunpack.c.l.b16 %v2455
      %v2532 = vunpack.c.l.b16 %v2456
      %v2533 = vunpack.c.l.b16 %v2457
      %v2534 = vpack.c.b16 %v2498, %v2497
      %v2535 = vpack.c.b16 %v2500, %v2499
      %v2536 = vpack.c.b16 %v2502, %v2501
      %v2537 = vpack.c.b16 %v2504, %v2503
      %v2538 = vpack.c.b16 %v2506, %v2505
      %v2539 = vpack.c.b16 %v2508, %v2507
      %v2540 = vpack.c.b16 %v2510, %v2509
      %v2541 = vpack.c.b16 %v2512, %v2511
      %v2542 = vpack.c.b16 %v2514, %v2513
      %v2543 = vpack.c.b16 %v2516, %v2515
      %v2544 = vpack.c.b16 %v2518, %v2517
      %v2545 = vpack.c.b16 %v2520, %v2519
      %v2546 = vpack.c.b16 %v2522, %v2521
      %v2547 = vpack.c.b16 %v2524, %v2523
      %v2548 = vpack.c.b16 %v2526, %v2525
      %v2549 = vpack.c.b16 %v2528, %v2527
      %v2550 = vpack.c.b16 %v2530, %v2529
      %v2551 = vpack.c.b16 %v2532, %v2531
      %v2552 = vpack.c.b16 %v2533, %v2533
      %v2553 = vrot.slane %v2534, 1
      %v2554 = vrot.slane %v2535, 1
      %v2555 = vsel %vm2191, %v2553, %v2554
      %v2556 = vrot.slane %v2536, 1
      %v2557 = vsel %vm2191, %v2554, %v2556
      %v2558 = vrot.slane %v2537, 1
      %v2559 = vsel %vm2191, %v2556, %v2558
      %v2560 = vrot.slane %v2538, 1
      %v2561 = vsel %vm2191, %v2558, %v2560
      %v2562 = vrot.slane %v2539, 1
      %v2563 = vsel %vm2191, %v2560, %v2562
      %v2564 = vrot.slane %v2540, 1
      %v2565 = vsel %vm2191, %v2562, %v2564
      %v2566 = vrot.slane %v2541, 1
      %v2567 = vsel %vm2191, %v2564, %v2566
      %v2568 = vrot.slane %v2542, 1
      %v2569 = vsel %vm2191, %v2566, %v2568
      %v2570 = vrot.slane %v2543, 1
      %v2571 = vsel %vm2191, %v2568, %v2570
      %v2572 = vrot.slane %v2544, 1
      %v2573 = vsel %vm2191, %v2570, %v2572
      %v2574 = vrot.slane %v2545, 1
      %v2575 = vsel %vm2191, %v2572, %v2574
      %v2576 = vrot.slane %v2546, 1
      %v2577 = vsel %vm2191, %v2574, %v2576
      %v2578 = vrot.slane %v2547, 1
      %v2579 = vsel %vm2191, %v2576, %v2578
      %v2580 = vrot.slane %v2548, 1
      %v2581 = vsel %vm2191, %v2578, %v2580
      %v2582 = vrot.slane %v2549, 1
      %v2583 = vsel %vm2191, %v2580, %v2582
      %v2584 = vrot.slane %v2550, 1
      %v2585 = vsel %vm2191, %v2582, %v2584
      %v2586 = vrot.slane %v2551, 1
      %v2587 = vsel %vm2191, %v2584, %v2586
      %v2588 = vrot.slane %v2552, 1
      %v2589 = vsel %vm2191, %v2586, %v2588
      %v2591 = vsel %vm1889, %v2555, 0
      %v2594 = vsel %vm1889, %v2557, 0
      %v2597 = vsel %vm1889, %v2559, 0
      %v2600 = vsel %vm1889, %v2561, 0
      %v2603 = vsel %vm1889, %v2563, 0
      %v2606 = vsel %vm1889, %v2565, 0
      %v2609 = vsel %vm1889, %v2567, 0
      %v2612 = vsel %vm1889, %v2569, 0
      %v2615 = vsel %vm1889, %v2571, 0
      %v2618 = vsel %vm1889, %v2573, 0
      %v2621 = vsel %vm1889, %v2575, 0
      %v2624 = vsel %vm1889, %v2577, 0
      %v2627 = vsel %vm1889, %v2579, 0
      %v2630 = vsel %vm1889, %v2581, 0
      %v2633 = vsel %vm1889, %v2583, 0
      %v2636 = vsel %vm1889, %v2585, 0
      %v2639 = vsel %vm1889, %v2587, 0
      %v2642 = vsel %vm1889, %v2589, 0
      %v2645 = vsel %vm1944, %v2459, 0
      %2647 = vmatpush.bf16.msra.mxu0 0
      %2648 = vmatpush.bf16.msra.mxu0 0
      %2649 = vmatpush.bf16.msra.mxu0 0
      %2650 = vmatpush.bf16.msra.mxu0 0
      %2651 = vmatpush.bf16.msra.mxu0 0
      %2652 = vmatpush.bf16.msra.mxu0 0
      %2653 = vmatpush.bf16.msra.mxu0 0
      %2654 = vmatpush.bf16.msra.mxu0 %v2645
      %2655 = vmatmul.bf16.gmra.mxu0 %v2591
      %v2656 = vpop.f32.mrf.mxu0
      %v2657 = vadd.f32 0.0, %v2656
      %v2658 = vpop.f32.mrf.mxu0
      %v2659 = vadd.f32 0.0, %v2658
      %2660 = vmatmul.bf16.gmra.mxu0 %v2594
      %v2661 = vpop.f32.mrf.mxu0
      %v2662 = vadd.f32 0.0, %v2661
      %v2663 = vpop.f32.mrf.mxu0
      %v2664 = vadd.f32 0.0, %v2663
      %2665 = vmatmul.bf16.gmra.mxu0 %v2597
      %v2666 = vpop.f32.mrf.mxu0
      %v2667 = vadd.f32 0.0, %v2666
      %v2668 = vpop.f32.mrf.mxu0
      %v2669 = vadd.f32 0.0, %v2668
      %2670 = vmatmul.bf16.gmra.mxu0 %v2600
      %v2671 = vpop.f32.mrf.mxu0
      %v2672 = vadd.f32 0.0, %v2671
      %v2673 = vpop.f32.mrf.mxu0
      %v2674 = vadd.f32 0.0, %v2673
      %2675 = vmatmul.bf16.gmra.mxu0 %v2603
      %v2676 = vpop.f32.mrf.mxu0
      %v2677 = vadd.f32 0.0, %v2676
      %v2678 = vpop.f32.mrf.mxu0
      %v2679 = vadd.f32 0.0, %v2678
      %2680 = vmatmul.bf16.gmra.mxu0 %v2606
      %v2681 = vpop.f32.mrf.mxu0
      %v2682 = vadd.f32 0.0, %v2681
      %v2683 = vpop.f32.mrf.mxu0
      %v2684 = vadd.f32 0.0, %v2683
      %2685 = vmatmul.bf16.gmra.mxu0 %v2609
      %v2686 = vpop.f32.mrf.mxu0
      %v2687 = vadd.f32 0.0, %v2686
      %v2688 = vpop.f32.mrf.mxu0
      %v2689 = vadd.f32 0.0, %v2688
      %2690 = vmatmul.bf16.gmra.mxu0 %v2612
      %v2691 = vpop.f32.mrf.mxu0
      %v2692 = vadd.f32 0.0, %v2691
      %v2693 = vpop.f32.mrf.mxu0
      %v2694 = vadd.f32 0.0, %v2693
      %2695 = vmatmul.bf16.gmra.mxu0 %v2615
      %v2696 = vpop.f32.mrf.mxu0
      %v2697 = vadd.f32 0.0, %v2696
      %v2698 = vpop.f32.mrf.mxu0
      %v2699 = vadd.f32 0.0, %v2698
      %2700 = vmatmul.bf16.gmra.mxu0 %v2618
      %v2701 = vpop.f32.mrf.mxu0
      %v2702 = vadd.f32 0.0, %v2701
      %v2703 = vpop.f32.mrf.mxu0
      %v2704 = vadd.f32 0.0, %v2703
      %2705 = vmatmul.bf16.gmra.mxu0 %v2621
      %v2706 = vpop.f32.mrf.mxu0
      %v2707 = vadd.f32 0.0, %v2706
      %v2708 = vpop.f32.mrf.mxu0
      %v2709 = vadd.f32 0.0, %v2708
      %2710 = vmatmul.bf16.gmra.mxu0 %v2624
      %v2711 = vpop.f32.mrf.mxu0
      %v2712 = vadd.f32 0.0, %v2711
      %v2713 = vpop.f32.mrf.mxu0
      %v2714 = vadd.f32 0.0, %v2713
      %2715 = vmatmul.bf16.gmra.mxu0 %v2627
      %v2716 = vpop.f32.mrf.mxu0
      %v2717 = vadd.f32 0.0, %v2716
      %v2718 = vpop.f32.mrf.mxu0
      %v2719 = vadd.f32 0.0, %v2718
      %2720 = vmatmul.bf16.gmra.mxu0 %v2630
      %v2721 = vpop.f32.mrf.mxu0
      %v2722 = vadd.f32 0.0, %v2721
      %v2723 = vpop.f32.mrf.mxu0
      %v2724 = vadd.f32 0.0, %v2723
      %2725 = vmatmul.bf16.gmra.mxu0 %v2633
      %v2726 = vpop.f32.mrf.mxu0
      %v2727 = vadd.f32 0.0, %v2726
      %v2728 = vpop.f32.mrf.mxu0
      %v2729 = vadd.f32 0.0, %v2728
      %2730 = vmatmul.bf16.gmra.mxu0 %v2636
      %v2731 = vpop.f32.mrf.mxu0
      %v2732 = vadd.f32 0.0, %v2731
      %v2733 = vpop.f32.mrf.mxu0
      %v2734 = vadd.f32 0.0, %v2733
      %2735 = vmatmul.bf16.gmra.mxu0 %v2639
      %v2736 = vpop.f32.mrf.mxu0
      %v2737 = vadd.f32 0.0, %v2736
      %v2738 = vpop.f32.mrf.mxu0
      %v2739 = vadd.f32 0.0, %v2738
      %2740 = vmatmul.bf16.gmra.mxu0 %v2642
      %v2741 = vpop.f32.mrf.mxu0
      %v2742 = vadd.f32 0.0, %v2741
      %v2743 = vpop.f32.mrf.mxu0
      %v2744 = vadd.f32 0.0, %v2743
      %2745 = vdwg.mxu0
      %v2746 = vadd.f32 %v2385, %v2657
      %v2747 = vadd.f32 %v2386, %v2659
      %v2748 = vadd.f32 %v2387, %v2662
      %v2749 = vadd.f32 %v2388, %v2664
      %v2750 = vadd.f32 %v2389, %v2667
      %v2751 = vadd.f32 %v2390, %v2669
      %v2752 = vadd.f32 %v2391, %v2672
      %v2753 = vadd.f32 %v2392, %v2674
      %v2754 = vadd.f32 %v2393, %v2677
      %v2755 = vadd.f32 %v2394, %v2679
      %v2756 = vadd.f32 %v2395, %v2682
      %v2757 = vadd.f32 %v2396, %v2684
      %v2758 = vadd.f32 %v2397, %v2687
      %v2759 = vadd.f32 %v2398, %v2689
      %v2760 = vadd.f32 %v2399, %v2692
      %v2761 = vadd.f32 %v2400, %v2694
      %v2762 = vadd.f32 %v2401, %v2697
      %v2763 = vadd.f32 %v2402, %v2699
      %v2764 = vadd.f32 %v2403, %v2702
      %v2765 = vadd.f32 %v2404, %v2704
      %v2766 = vadd.f32 %v2405, %v2707
      %v2767 = vadd.f32 %v2406, %v2709
      %v2768 = vadd.f32 %v2407, %v2712
      %v2769 = vadd.f32 %v2408, %v2714
      %v2770 = vadd.f32 %v2409, %v2717
      %v2771 = vadd.f32 %v2410, %v2719
      %v2772 = vadd.f32 %v2411, %v2722
      %v2773 = vadd.f32 %v2412, %v2724
      %v2774 = vadd.f32 %v2413, %v2727
      %v2775 = vadd.f32 %v2414, %v2729
      %v2776 = vadd.f32 %v2415, %v2732
      %v2777 = vadd.f32 %v2416, %v2734
      %v2778 = vadd.f32 %v2417, %v2737
      %v2779 = vadd.f32 %v2418, %v2739
      %v2780 = vadd.f32 %v2419, %v2742
      %v2781 = vadd.f32 %v2420, %v2744
      %v2782 = vld [vmem:[%s272 + $0x98] sm:$0x3]
      %s2783 = scalar_lea.vmem %s1, 8
      %v2784 = vld [vmem:[%s2783] sm:$0x3]
      %v2786 = vunpack.c.l.b16 %v2782
      %v2787 = vpack.c.b16 %v2786, %v2786
      %vm2788 = vsmask.f32 6400
      %v2790 = vshrl.u32 %v2534, 16
      %v2792 = vrot.slane %v2790, 1
      %v2793 = vshll.u32 %v2534, 16
      %v2795 = vrot.slane %v2793, 2
      %v2796 = vor.u32 %v2792, %v2795
      %v2798 = vshrl.u32 %v2535, 16
      %v2800 = vrot.slane %v2798, 1
      %v2801 = vshll.u32 %v2535, 16
      %v2803 = vrot.slane %v2801, 2
      %v2804 = vor.u32 %v2800, %v2803
      %v2805 = vsel %vm2788, %v2796, %v2804
      %v2807 = vshrl.u32 %v2536, 16
      %v2809 = vrot.slane %v2807, 1
      %v2810 = vshll.u32 %v2536, 16
      %v2812 = vrot.slane %v2810, 2
      %v2813 = vor.u32 %v2809, %v2812
      %v2814 = vsel %vm2788, %v2804, %v2813
      %v2816 = vshrl.u32 %v2537, 16
      %v2818 = vrot.slane %v2816, 1
      %v2819 = vshll.u32 %v2537, 16
      %v2821 = vrot.slane %v2819, 2
      %v2822 = vor.u32 %v2818, %v2821
      %v2823 = vsel %vm2788, %v2813, %v2822
      %v2825 = vshrl.u32 %v2538, 16
      %v2827 = vrot.slane %v2825, 1
      %v2828 = vshll.u32 %v2538, 16
      %v2830 = vrot.slane %v2828, 2
      %v2831 = vor.u32 %v2827, %v2830
      %v2832 = vsel %vm2788, %v2822, %v2831
      %v2834 = vshrl.u32 %v2539, 16
      %v2836 = vrot.slane %v2834, 1
      %v2837 = vshll.u32 %v2539, 16
      %v2839 = vrot.slane %v2837, 2
      %v2840 = vor.u32 %v2836, %v2839
      %v2841 = vsel %vm2788, %v2831, %v2840
      %v2843 = vshrl.u32 %v2540, 16
      %v2845 = vrot.slane %v2843, 1
      %v2846 = vshll.u32 %v2540, 16
      %v2848 = vrot.slane %v2846, 2
      %v2849 = vor.u32 %v2845, %v2848
      %v2850 = vsel %vm2788, %v2840, %v2849
      %v2852 = vshrl.u32 %v2541, 16
      %v2854 = vrot.slane %v2852, 1
      %v2855 = vshll.u32 %v2541, 16
      %v2857 = vrot.slane %v2855, 2
      %v2858 = vor.u32 %v2854, %v2857
      %v2859 = vsel %vm2788, %v2849, %v2858
      %v2861 = vshrl.u32 %v2542, 16
      %v2863 = vrot.slane %v2861, 1
      %v2864 = vshll.u32 %v2542, 16
      %v2866 = vrot.slane %v2864, 2
      %v2867 = vor.u32 %v2863, %v2866
      %v2868 = vsel %vm2788, %v2858, %v2867
      %v2870 = vshrl.u32 %v2543, 16
      %v2872 = vrot.slane %v2870, 1
      %v2873 = vshll.u32 %v2543, 16
      %v2875 = vrot.slane %v2873, 2
      %v2876 = vor.u32 %v2872, %v2875
      %v2877 = vsel %vm2788, %v2867, %v2876
      %v2879 = vshrl.u32 %v2544, 16
      %v2881 = vrot.slane %v2879, 1
      %v2882 = vshll.u32 %v2544, 16
      %v2884 = vrot.slane %v2882, 2
      %v2885 = vor.u32 %v2881, %v2884
      %v2886 = vsel %vm2788, %v2876, %v2885
      %v2888 = vshrl.u32 %v2545, 16
      %v2890 = vrot.slane %v2888, 1
      %v2891 = vshll.u32 %v2545, 16
      %v2893 = vrot.slane %v2891, 2
      %v2894 = vor.u32 %v2890, %v2893
      %v2895 = vsel %vm2788, %v2885, %v2894
      %v2897 = vshrl.u32 %v2546, 16
      %v2899 = vrot.slane %v2897, 1
      %v2900 = vshll.u32 %v2546, 16
      %v2902 = vrot.slane %v2900, 2
      %v2903 = vor.u32 %v2899, %v2902
      %v2904 = vsel %vm2788, %v2894, %v2903
      %v2906 = vshrl.u32 %v2547, 16
      %v2908 = vrot.slane %v2906, 1
      %v2909 = vshll.u32 %v2547, 16
      %v2911 = vrot.slane %v2909, 2
      %v2912 = vor.u32 %v2908, %v2911
      %v2913 = vsel %vm2788, %v2903, %v2912
      %v2915 = vshrl.u32 %v2548, 16
      %v2917 = vrot.slane %v2915, 1
      %v2918 = vshll.u32 %v2548, 16
      %v2920 = vrot.slane %v2918, 2
      %v2921 = vor.u32 %v2917, %v2920
      %v2922 = vsel %vm2788, %v2912, %v2921
      %v2924 = vshrl.u32 %v2549, 16
      %v2926 = vrot.slane %v2924, 1
      %v2927 = vshll.u32 %v2549, 16
      %v2929 = vrot.slane %v2927, 2
      %v2930 = vor.u32 %v2926, %v2929
      %v2931 = vsel %vm2788, %v2921, %v2930
      %v2933 = vshrl.u32 %v2550, 16
      %v2935 = vrot.slane %v2933, 1
      %v2936 = vshll.u32 %v2550, 16
      %v2938 = vrot.slane %v2936, 2
      %v2939 = vor.u32 %v2935, %v2938
      %v2940 = vsel %vm2788, %v2930, %v2939
      %v2942 = vshrl.u32 %v2551, 16
      %v2944 = vrot.slane %v2942, 1
      %v2945 = vshll.u32 %v2551, 16
      %v2947 = vrot.slane %v2945, 2
      %v2948 = vor.u32 %v2944, %v2947
      %v2949 = vsel %vm2788, %v2939, %v2948
      %v2951 = vshrl.u32 %v2787, 16
      %v2953 = vrot.slane %v2951, 1
      %v2954 = vshll.u32 %v2787, 16
      %v2956 = vrot.slane %v2954, 2
      %v2957 = vor.u32 %v2953, %v2956
      %v2958 = vsel %vm2788, %v2948, %v2957
      %v2960 = vsel %vm1889, %v2805, 0
      %v2963 = vsel %vm1889, %v2814, 0
      %v2966 = vsel %vm1889, %v2823, 0
      %v2969 = vsel %vm1889, %v2832, 0
      %v2972 = vsel %vm1889, %v2841, 0
      %v2975 = vsel %vm1889, %v2850, 0
      %v2978 = vsel %vm1889, %v2859, 0
      %v2981 = vsel %vm1889, %v2868, 0
      %v2984 = vsel %vm1889, %v2877, 0
      %v2987 = vsel %vm1889, %v2886, 0
      %v2990 = vsel %vm1889, %v2895, 0
      %v2993 = vsel %vm1889, %v2904, 0
      %v2996 = vsel %vm1889, %v2913, 0
      %v2999 = vsel %vm1889, %v2922, 0
      %v3002 = vsel %vm1889, %v2931, 0
      %v3005 = vsel %vm1889, %v2940, 0
      %v3008 = vsel %vm1889, %v2949, 0
      %v3011 = vsel %vm1889, %v2958, 0
      %v3014 = vsel %vm1944, %v2784, 0
      %3016 = vmatpush.bf16.msra.mxu0 0
      %3017 = vmatpush.bf16.msra.mxu0 0
      %3018 = vmatpush.bf16.msra.mxu0 0
      %3019 = vmatpush.bf16.msra.mxu0 0
      %3020 = vmatpush.bf16.msra.mxu0 0
      %3021 = vmatpush.bf16.msra.mxu0 0
      %3022 = vmatpush.bf16.msra.mxu0 0
      %3023 = vmatpush.bf16.msra.mxu0 %v3014
      %3024 = vmatmul.bf16.gmra.mxu0 %v2960
      %v3025 = vpop.f32.mrf.mxu0
      %v3026 = vadd.f32 0.0, %v3025
      %v3027 = vpop.f32.mrf.mxu0
      %v3028 = vadd.f32 0.0, %v3027
      %3029 = vmatmul.bf16.gmra.mxu0 %v2963
      %v3030 = vpop.f32.mrf.mxu0
      %v3031 = vadd.f32 0.0, %v3030
      %v3032 = vpop.f32.mrf.mxu0
      %v3033 = vadd.f32 0.0, %v3032
      %3034 = vmatmul.bf16.gmra.mxu0 %v2966
      %v3035 = vpop.f32.mrf.mxu0
      %v3036 = vadd.f32 0.0, %v3035
      %v3037 = vpop.f32.mrf.mxu0
      %v3038 = vadd.f32 0.0, %v3037
      %3039 = vmatmul.bf16.gmra.mxu0 %v2969
      %v3040 = vpop.f32.mrf.mxu0
      %v3041 = vadd.f32 0.0, %v3040
      %v3042 = vpop.f32.mrf.mxu0
      %v3043 = vadd.f32 0.0, %v3042
      %3044 = vmatmul.bf16.gmra.mxu0 %v2972
      %v3045 = vpop.f32.mrf.mxu0
      %v3046 = vadd.f32 0.0, %v3045
      %v3047 = vpop.f32.mrf.mxu0
      %v3048 = vadd.f32 0.0, %v3047
      %3049 = vmatmul.bf16.gmra.mxu0 %v2975
      %v3050 = vpop.f32.mrf.mxu0
      %v3051 = vadd.f32 0.0, %v3050
      %v3052 = vpop.f32.mrf.mxu0
      %v3053 = vadd.f32 0.0, %v3052
      %3054 = vmatmul.bf16.gmra.mxu0 %v2978
      %v3055 = vpop.f32.mrf.mxu0
      %v3056 = vadd.f32 0.0, %v3055
      %v3057 = vpop.f32.mrf.mxu0
      %v3058 = vadd.f32 0.0, %v3057
      %3059 = vmatmul.bf16.gmra.mxu0 %v2981
      %v3060 = vpop.f32.mrf.mxu0
      %v3061 = vadd.f32 0.0, %v3060
      %v3062 = vpop.f32.mrf.mxu0
      %v3063 = vadd.f32 0.0, %v3062
      %3064 = vmatmul.bf16.gmra.mxu0 %v2984
      %v3065 = vpop.f32.mrf.mxu0
      %v3066 = vadd.f32 0.0, %v3065
      %v3067 = vpop.f32.mrf.mxu0
      %v3068 = vadd.f32 0.0, %v3067
      %3069 = vmatmul.bf16.gmra.mxu0 %v2987
      %v3070 = vpop.f32.mrf.mxu0
      %v3071 = vadd.f32 0.0, %v3070
      %v3072 = vpop.f32.mrf.mxu0
      %v3073 = vadd.f32 0.0, %v3072
      %3074 = vmatmul.bf16.gmra.mxu0 %v2990
      %v3075 = vpop.f32.mrf.mxu0
      %v3076 = vadd.f32 0.0, %v3075
      %v3077 = vpop.f32.mrf.mxu0
      %v3078 = vadd.f32 0.0, %v3077
      %3079 = vmatmul.bf16.gmra.mxu0 %v2993
      %v3080 = vpop.f32.mrf.mxu0
      %v3081 = vadd.f32 0.0, %v3080
      %v3082 = vpop.f32.mrf.mxu0
      %v3083 = vadd.f32 0.0, %v3082
      %3084 = vmatmul.bf16.gmra.mxu0 %v2996
      %v3085 = vpop.f32.mrf.mxu0
      %v3086 = vadd.f32 0.0, %v3085
      %v3087 = vpop.f32.mrf.mxu0
      %v3088 = vadd.f32 0.0, %v3087
      %3089 = vmatmul.bf16.gmra.mxu0 %v2999
      %v3090 = vpop.f32.mrf.mxu0
      %v3091 = vadd.f32 0.0, %v3090
      %v3092 = vpop.f32.mrf.mxu0
      %v3093 = vadd.f32 0.0, %v3092
      %3094 = vmatmul.bf16.gmra.mxu0 %v3002
      %v3095 = vpop.f32.mrf.mxu0
      %v3096 = vadd.f32 0.0, %v3095
      %v3097 = vpop.f32.mrf.mxu0
      %v3098 = vadd.f32 0.0, %v3097
      %3099 = vmatmul.bf16.gmra.mxu0 %v3005
      %v3100 = vpop.f32.mrf.mxu0
      %v3101 = vadd.f32 0.0, %v3100
      %v3102 = vpop.f32.mrf.mxu0
      %v3103 = vadd.f32 0.0, %v3102
      %3104 = vmatmul.bf16.gmra.mxu0 %v3008
      %v3105 = vpop.f32.mrf.mxu0
      %v3106 = vadd.f32 0.0, %v3105
      %v3107 = vpop.f32.mrf.mxu0
      %v3108 = vadd.f32 0.0, %v3107
      %3109 = vmatmul.bf16.gmra.mxu0 %v3011
      %v3110 = vpop.f32.mrf.mxu0
      %v3111 = vadd.f32 0.0, %v3110
      %v3112 = vpop.f32.mrf.mxu0
      %v3113 = vadd.f32 0.0, %v3112
      %3114 = vdwg.mxu0
      %v3115 = vadd.f32 %v2746, %v3026
      %v3116 = vadd.f32 %v2747, %v3028
      %v3117 = vadd.f32 %v2748, %v3031
      %v3118 = vadd.f32 %v2749, %v3033
      %v3119 = vadd.f32 %v2750, %v3036
      %v3120 = vadd.f32 %v2751, %v3038
      %v3121 = vadd.f32 %v2752, %v3041
      %v3122 = vadd.f32 %v2753, %v3043
      %v3123 = vadd.f32 %v2754, %v3046
      %v3124 = vadd.f32 %v2755, %v3048
      %v3125 = vadd.f32 %v2756, %v3051
      %v3126 = vadd.f32 %v2757, %v3053
      %v3127 = vadd.f32 %v2758, %v3056
      %v3128 = vadd.f32 %v2759, %v3058
      %v3129 = vadd.f32 %v2760, %v3061
      %v3130 = vadd.f32 %v2761, %v3063
      %v3131 = vadd.f32 %v2762, %v3066
      %v3132 = vadd.f32 %v2763, %v3068
      %v3133 = vadd.f32 %v2764, %v3071
      %v3134 = vadd.f32 %v2765, %v3073
      %v3135 = vadd.f32 %v2766, %v3076
      %v3136 = vadd.f32 %v2767, %v3078
      %v3137 = vadd.f32 %v2768, %v3081
      %v3138 = vadd.f32 %v2769, %v3083
      %v3139 = vadd.f32 %v2770, %v3086
      %v3140 = vadd.f32 %v2771, %v3088
      %v3141 = vadd.f32 %v2772, %v3091
      %v3142 = vadd.f32 %v2773, %v3093
      %v3143 = vadd.f32 %v2774, %v3096
      %v3144 = vadd.f32 %v2775, %v3098
      %v3145 = vadd.f32 %v2776, %v3101
      %v3146 = vadd.f32 %v2777, %v3103
      %v3147 = vadd.f32 %v2778, %v3106
      %v3148 = vadd.f32 %v2779, %v3108
      %v3149 = vadd.f32 %v2780, %v3111
      %v3150 = vadd.f32 %v2781, %v3113
      %v3151 = vld [vmem:[%s272 + $0x8] sm:$0xc]
      %s3152 = scalar_lea.vmem %s1, 10
      %v3153 = vld [vmem:[%s3152] sm:$0x3]
      %v3155 = vunpack.c.l.b16 %v3151
      %v3156 = vpack.c.b16 %v2498, %v3155
      %vm3157 = vcmask 1045504
      %v3158 = vrot.slane %v3156, 2
      %v3159 = vrot.slane %v2535, 2
      %v3160 = vsel %vm3157, %v3158, %v3159
      %v3161 = vrot.slane %v2536, 2
      %v3162 = vsel %vm3157, %v3159, %v3161
      %v3163 = vrot.slane %v2537, 2
      %v3164 = vsel %vm3157, %v3161, %v3163
      %v3165 = vrot.slane %v2538, 2
      %v3166 = vsel %vm3157, %v3163, %v3165
      %v3167 = vrot.slane %v2539, 2
      %v3168 = vsel %vm3157, %v3165, %v3167
      %v3169 = vrot.slane %v2540, 2
      %v3170 = vsel %vm3157, %v3167, %v3169
      %v3171 = vrot.slane %v2541, 2
      %v3172 = vsel %vm3157, %v3169, %v3171
      %v3173 = vrot.slane %v2542, 2
      %v3174 = vsel %vm3157, %v3171, %v3173
      %v3175 = vrot.slane %v2543, 2
      %v3176 = vsel %vm3157, %v3173, %v3175
      %v3177 = vrot.slane %v2544, 2
      %v3178 = vsel %vm3157, %v3175, %v3177
      %v3179 = vrot.slane %v2545, 2
      %v3180 = vsel %vm3157, %v3177, %v3179
      %v3181 = vrot.slane %v2546, 2
      %v3182 = vsel %vm3157, %v3179, %v3181
      %v3183 = vrot.slane %v2547, 2
      %v3184 = vsel %vm3157, %v3181, %v3183
      %v3185 = vrot.slane %v2548, 2
      %v3186 = vsel %vm3157, %v3183, %v3185
      %v3187 = vrot.slane %v2549, 2
      %v3188 = vsel %vm3157, %v3185, %v3187
      %v3189 = vrot.slane %v2550, 2
      %v3190 = vsel %vm3157, %v3187, %v3189
      %v3191 = vrot.slane %v2551, 2
      %v3192 = vsel %vm3157, %v3189, %v3191
      %v3193 = vrot.slane %v2787, 2
      %v3194 = vsel %vm3157, %v3191, %v3193
      %v3196 = vsel %vm1889, %v3160, 0
      %v3199 = vsel %vm1889, %v3162, 0
      %v3202 = vsel %vm1889, %v3164, 0
      %v3205 = vsel %vm1889, %v3166, 0
      %v3208 = vsel %vm1889, %v3168, 0
      %v3211 = vsel %vm1889, %v3170, 0
      %v3214 = vsel %vm1889, %v3172, 0
      %v3217 = vsel %vm1889, %v3174, 0
      %v3220 = vsel %vm1889, %v3176, 0
      %v3223 = vsel %vm1889, %v3178, 0
      %v3226 = vsel %vm1889, %v3180, 0
      %v3229 = vsel %vm1889, %v3182, 0
      %v3232 = vsel %vm1889, %v3184, 0
      %v3235 = vsel %vm1889, %v3186, 0
      %v3238 = vsel %vm1889, %v3188, 0
      %v3241 = vsel %vm1889, %v3190, 0
      %v3244 = vsel %vm1889, %v3192, 0
      %v3247 = vsel %vm1889, %v3194, 0
      %v3250 = vsel %vm1944, %v3153, 0
      %3252 = vmatpush.bf16.msra.mxu0 0
      %3253 = vmatpush.bf16.msra.mxu0 0
      %3254 = vmatpush.bf16.msra.mxu0 0
      %3255 = vmatpush.bf16.msra.mxu0 0
      %3256 = vmatpush.bf16.msra.mxu0 0
      %3257 = vmatpush.bf16.msra.mxu0 0
      %3258 = vmatpush.bf16.msra.mxu0 0
      %3259 = vmatpush.bf16.msra.mxu0 %v3250
      %3260 = vmatmul.bf16.gmra.mxu0 %v3196
      %v3261 = vpop.f32.mrf.mxu0
      %v3262 = vadd.f32 0.0, %v3261
      %v3263 = vpop.f32.mrf.mxu0
      %v3264 = vadd.f32 0.0, %v3263
      %3265 = vmatmul.bf16.gmra.mxu0 %v3199
      %v3266 = vpop.f32.mrf.mxu0
      %v3267 = vadd.f32 0.0, %v3266
      %v3268 = vpop.f32.mrf.mxu0
      %v3269 = vadd.f32 0.0, %v3268
      %3270 = vmatmul.bf16.gmra.mxu0 %v3202
      %v3271 = vpop.f32.mrf.mxu0
      %v3272 = vadd.f32 0.0, %v3271
      %v3273 = vpop.f32.mrf.mxu0
      %v3274 = vadd.f32 0.0, %v3273
      %3275 = vmatmul.bf16.gmra.mxu0 %v3205
      %v3276 = vpop.f32.mrf.mxu0
      %v3277 = vadd.f32 0.0, %v3276
      %v3278 = vpop.f32.mrf.mxu0
      %v3279 = vadd.f32 0.0, %v3278
      %3280 = vmatmul.bf16.gmra.mxu0 %v3208
      %v3281 = vpop.f32.mrf.mxu0
      %v3282 = vadd.f32 0.0, %v3281
      %v3283 = vpop.f32.mrf.mxu0
      %v3284 = vadd.f32 0.0, %v3283
      %3285 = vmatmul.bf16.gmra.mxu0 %v3211
      %v3286 = vpop.f32.mrf.mxu0
      %v3287 = vadd.f32 0.0, %v3286
      %v3288 = vpop.f32.mrf.mxu0
      %v3289 = vadd.f32 0.0, %v3288
      %3290 = vmatmul.bf16.gmra.mxu0 %v3214
      %v3291 = vpop.f32.mrf.mxu0
      %v3292 = vadd.f32 0.0, %v3291
      %v3293 = vpop.f32.mrf.mxu0
      %v3294 = vadd.f32 0.0, %v3293
      %3295 = vmatmul.bf16.gmra.mxu0 %v3217
      %v3296 = vpop.f32.mrf.mxu0
      %v3297 = vadd.f32 0.0, %v3296
      %v3298 = vpop.f32.mrf.mxu0
      %v3299 = vadd.f32 0.0, %v3298
      %3300 = vmatmul.bf16.gmra.mxu0 %v3220
      %v3301 = vpop.f32.mrf.mxu0
      %v3302 = vadd.f32 0.0, %v3301
      %v3303 = vpop.f32.mrf.mxu0
      %v3304 = vadd.f32 0.0, %v3303
      %3305 = vmatmul.bf16.gmra.mxu0 %v3223
      %v3306 = vpop.f32.mrf.mxu0
      %v3307 = vadd.f32 0.0, %v3306
      %v3308 = vpop.f32.mrf.mxu0
      %v3309 = vadd.f32 0.0, %v3308
      %3310 = vmatmul.bf16.gmra.mxu0 %v3226
      %v3311 = vpop.f32.mrf.mxu0
      %v3312 = vadd.f32 0.0, %v3311
      %v3313 = vpop.f32.mrf.mxu0
      %v3314 = vadd.f32 0.0, %v3313
      %3315 = vmatmul.bf16.gmra.mxu0 %v3229
      %v3316 = vpop.f32.mrf.mxu0
      %v3317 = vadd.f32 0.0, %v3316
      %v3318 = vpop.f32.mrf.mxu0
      %v3319 = vadd.f32 0.0, %v3318
      %3320 = vmatmul.bf16.gmra.mxu0 %v3232
      %v3321 = vpop.f32.mrf.mxu0
      %v3322 = vadd.f32 0.0, %v3321
      %v3323 = vpop.f32.mrf.mxu0
      %v3324 = vadd.f32 0.0, %v3323
      %3325 = vmatmul.bf16.gmra.mxu0 %v3235
      %v3326 = vpop.f32.mrf.mxu0
      %v3327 = vadd.f32 0.0, %v3326
      %v3328 = vpop.f32.mrf.mxu0
      %v3329 = vadd.f32 0.0, %v3328
      %3330 = vmatmul.bf16.gmra.mxu0 %v3238
      %v3331 = vpop.f32.mrf.mxu0
      %v3332 = vadd.f32 0.0, %v3331
      %v3333 = vpop.f32.mrf.mxu0
      %v3334 = vadd.f32 0.0, %v3333
      %3335 = vmatmul.bf16.gmra.mxu0 %v3241
      %v3336 = vpop.f32.mrf.mxu0
      %v3337 = vadd.f32 0.0, %v3336
      %v3338 = vpop.f32.mrf.mxu0
      %v3339 = vadd.f32 0.0, %v3338
      %3340 = vmatmul.bf16.gmra.mxu0 %v3244
      %v3341 = vpop.f32.mrf.mxu0
      %v3342 = vadd.f32 0.0, %v3341
      %v3343 = vpop.f32.mrf.mxu0
      %v3344 = vadd.f32 0.0, %v3343
      %3345 = vmatmul.bf16.gmra.mxu0 %v3247
      %v3346 = vpop.f32.mrf.mxu0
      %v3347 = vadd.f32 0.0, %v3346
      %v3348 = vpop.f32.mrf.mxu0
      %v3349 = vadd.f32 0.0, %v3348
      %3350 = vdwg.mxu0
      %v3351 = vadd.f32 %v3115, %v3262
      %v3352 = vadd.f32 %v3116, %v3264
      %v3353 = vadd.f32 %v3117, %v3267
      %v3354 = vadd.f32 %v3118, %v3269
      %v3355 = vadd.f32 %v3119, %v3272
      %v3356 = vadd.f32 %v3120, %v3274
      %v3357 = vadd.f32 %v3121, %v3277
      %v3358 = vadd.f32 %v3122, %v3279
      %v3359 = vadd.f32 %v3123, %v3282
      %v3360 = vadd.f32 %v3124, %v3284
      %v3361 = vadd.f32 %v3125, %v3287
      %v3362 = vadd.f32 %v3126, %v3289
      %v3363 = vadd.f32 %v3127, %v3292
      %v3364 = vadd.f32 %v3128, %v3294
      %v3365 = vadd.f32 %v3129, %v3297
      %v3366 = vadd.f32 %v3130, %v3299
      %v3367 = vadd.f32 %v3131, %v3302
      %v3368 = vadd.f32 %v3132, %v3304
      %v3369 = vadd.f32 %v3133, %v3307
      %v3370 = vadd.f32 %v3134, %v3309
      %v3371 = vadd.f32 %v3135, %v3312
      %v3372 = vadd.f32 %v3136, %v3314
      %v3373 = vadd.f32 %v3137, %v3317
      %v3374 = vadd.f32 %v3138, %v3319
      %v3375 = vadd.f32 %v3139, %v3322
      %v3376 = vadd.f32 %v3140, %v3324
      %v3377 = vadd.f32 %v3141, %v3327
      %v3378 = vadd.f32 %v3142, %v3329
      %v3379 = vadd.f32 %v3143, %v3332
      %v3380 = vadd.f32 %v3144, %v3334
      %v3381 = vadd.f32 %v3145, %v3337
      %v3382 = vadd.f32 %v3146, %v3339
      %v3383 = vadd.f32 %v3147, %v3342
      %v3384 = vadd.f32 %v3148, %v3344
      %v3385 = vadd.f32 %v3149, %v3347
      %v3386 = vadd.f32 %v3150, %v3349
      %v3387 = vld [vmem:[%s272 + $0x10] sm:$0xc]
      %v3388 = vld [vmem:[%s272 + $0x14] sm:$0xf]
      %v3389 = vld [vmem:[%s272 + $0x18] sm:$0xf]
      %v3390 = vld [vmem:[%s272 + $0x1c] sm:$0xf]
      %v3391 = vld [vmem:[%s272 + $0x20] sm:$0xf]
      %v3392 = vld [vmem:[%s272 + $0x24] sm:$0xf]
      %v3393 = vld [vmem:[%s272 + $0x28] sm:$0xf]
      %v3394 = vld [vmem:[%s272 + $0x2c] sm:$0xf]
      %v3395 = vld [vmem:[%s272 + $0x30] sm:$0xf]
      %v3396 = vld [vmem:[%s272 + $0x34] sm:$0xf]
      %v3397 = vld [vmem:[%s272 + $0x38] sm:$0xf]
      %v3398 = vld [vmem:[%s272 + $0x3c] sm:$0xf]
      %v3399 = vld [vmem:[%s272 + $0x40] sm:$0xf]
      %v3400 = vld [vmem:[%s272 + $0x44] sm:$0xf]
      %v3401 = vld [vmem:[%s272 + $0x48] sm:$0xf]
      %v3402 = vld [vmem:[%s272 + $0x4c] sm:$0xf]
      %v3403 = vld [vmem:[%s272 + $0x50] sm:$0xf]
      %v3404 = vld [vmem:[%s272 + $0x54] sm:$0xf]
      %v3405 = vld [vmem:[%s272 + $0x58] sm:$0xf]
      %v3406 = vld [vmem:[%s272 + $0x5c] sm:$0xf]
      %v3407 = vld [vmem:[%s272 + $0x60] sm:$0xf]
      %v3408 = vld [vmem:[%s272 + $0x64] sm:$0xf]
      %v3409 = vld [vmem:[%s272 + $0x68] sm:$0xf]
      %v3410 = vld [vmem:[%s272 + $0x6c] sm:$0xf]
      %v3411 = vld [vmem:[%s272 + $0x70] sm:$0xf]
      %v3412 = vld [vmem:[%s272 + $0x74] sm:$0xf]
      %v3413 = vld [vmem:[%s272 + $0x78] sm:$0xf]
      %v3414 = vld [vmem:[%s272 + $0x7c] sm:$0xf]
      %v3415 = vld [vmem:[%s272 + $0x80] sm:$0xf]
      %v3416 = vld [vmem:[%s272 + $0x84] sm:$0xf]
      %v3417 = vld [vmem:[%s272 + $0x88] sm:$0xf]
      %v3418 = vld [vmem:[%s272 + $0x8c] sm:$0xf]
      %v3419 = vld [vmem:[%s272 + $0x90] sm:$0xf]
      %v3420 = vld [vmem:[%s272 + $0x94] sm:$0xf]
      %v3421 = vld [vmem:[%s272 + $0x98] sm:$0xf]
      %v3422 = vld [vmem:[%s272 + $0x9c] sm:$0xf]
      %v3423 = vld [vmem:[%s272 + $0xa0] sm:$0x3]
      %s3424 = scalar_lea.vmem %s1, 12
      %v3425 = vld [vmem:[%s3424] sm:$0x3]
      %v3463 = vunpack.c.l.b16 %v3387
      %v3464 = vunpack.c.l.b16 %v3388
      %v3465 = vunpack.c.l.b16 %v3389
      %v3466 = vunpack.c.l.b16 %v3390
      %v3467 = vunpack.c.l.b16 %v3391
      %v3468 = vunpack.c.l.b16 %v3392
      %v3469 = vunpack.c.l.b16 %v3393
      %v3470 = vunpack.c.l.b16 %v3394
      %v3471 = vunpack.c.l.b16 %v3395
      %v3472 = vunpack.c.l.b16 %v3396
      %v3473 = vunpack.c.l.b16 %v3397
      %v3474 = vunpack.c.l.b16 %v3398
      %v3475 = vunpack.c.l.b16 %v3399
      %v3476 = vunpack.c.l.b16 %v3400
      %v3477 = vunpack.c.l.b16 %v3401
      %v3478 = vunpack.c.l.b16 %v3402
      %v3479 = vunpack.c.l.b16 %v3403
      %v3480 = vunpack.c.l.b16 %v3404
      %v3481 = vunpack.c.l.b16 %v3405
      %v3482 = vunpack.c.l.b16 %v3406
      %v3483 = vunpack.c.l.b16 %v3407
      %v3484 = vunpack.c.l.b16 %v3408
      %v3485 = vunpack.c.l.b16 %v3409
      %v3486 = vunpack.c.l.b16 %v3410
      %v3487 = vunpack.c.l.b16 %v3411
      %v3488 = vunpack.c.l.b16 %v3412
      %v3489 = vunpack.c.l.b16 %v3413
      %v3490 = vunpack.c.l.b16 %v3414
      %v3491 = vunpack.c.l.b16 %v3415
      %v3492 = vunpack.c.l.b16 %v3416
      %v3493 = vunpack.c.l.b16 %v3417
      %v3494 = vunpack.c.l.b16 %v3418
      %v3495 = vunpack.c.l.b16 %v3419
      %v3496 = vunpack.c.l.b16 %v3420
      %v3497 = vunpack.c.l.b16 %v3421
      %v3498 = vunpack.c.l.b16 %v3422
      %v3499 = vunpack.c.l.b16 %v3423
      %v3500 = vpack.c.b16 %v3464, %v3463
      %v3501 = vpack.c.b16 %v3466, %v3465
      %v3502 = vpack.c.b16 %v3468, %v3467
      %v3503 = vpack.c.b16 %v3470, %v3469
      %v3504 = vpack.c.b16 %v3472, %v3471
      %v3505 = vpack.c.b16 %v3474, %v3473
      %v3506 = vpack.c.b16 %v3476, %v3475
      %v3507 = vpack.c.b16 %v3478, %v3477
      %v3508 = vpack.c.b16 %v3480, %v3479
      %v3509 = vpack.c.b16 %v3482, %v3481
      %v3510 = vpack.c.b16 %v3484, %v3483
      %v3511 = vpack.c.b16 %v3486, %v3485
      %v3512 = vpack.c.b16 %v3488, %v3487
      %v3513 = vpack.c.b16 %v3490, %v3489
      %v3514 = vpack.c.b16 %v3492, %v3491
      %v3515 = vpack.c.b16 %v3494, %v3493
      %v3516 = vpack.c.b16 %v3496, %v3495
      %v3517 = vpack.c.b16 %v3498, %v3497
      %v3518 = vpack.c.b16 %v3499, %v3499
      %v3519 = vrot.slane %v3500, 2
      %v3520 = vrot.slane %v3501, 2
      %v3521 = vsel %vm3157, %v3519, %v3520
      %v3522 = vrot.slane %v3502, 2
      %v3523 = vsel %vm3157, %v3520, %v3522
      %v3524 = vrot.slane %v3503, 2
      %v3525 = vsel %vm3157, %v3522, %v3524
      %v3526 = vrot.slane %v3504, 2
      %v3527 = vsel %vm3157, %v3524, %v3526
      %v3528 = vrot.slane %v3505, 2
      %v3529 = vsel %vm3157, %v3526, %v3528
      %v3530 = vrot.slane %v3506, 2
      %v3531 = vsel %vm3157, %v3528, %v3530
      %v3532 = vrot.slane %v3507, 2
      %v3533 = vsel %vm3157, %v3530, %v3532
      %v3534 = vrot.slane %v3508, 2
      %v3535 = vsel %vm3157, %v3532, %v3534
      %v3536 = vrot.slane %v3509, 2
      %v3537 = vsel %vm3157, %v3534, %v3536
      %v3538 = vrot.slane %v3510, 2
      %v3539 = vsel %vm3157, %v3536, %v3538
      %v3540 = vrot.slane %v3511, 2
      %v3541 = vsel %vm3157, %v3538, %v3540
      %v3542 = vrot.slane %v3512, 2
      %v3543 = vsel %vm3157, %v3540, %v3542
      %v3544 = vrot.slane %v3513, 2
      %v3545 = vsel %vm3157, %v3542, %v3544
      %v3546 = vrot.slane %v3514, 2
      %v3547 = vsel %vm3157, %v3544, %v3546
      %v3548 = vrot.slane %v3515, 2
      %v3549 = vsel %vm3157, %v3546, %v3548
      %v3550 = vrot.slane %v3516, 2
      %v3551 = vsel %vm3157, %v3548, %v3550
      %v3552 = vrot.slane %v3517, 2
      %v3553 = vsel %vm3157, %v3550, %v3552
      %v3554 = vrot.slane %v3518, 2
      %v3555 = vsel %vm3157, %v3552, %v3554
      %v3557 = vsel %vm1889, %v3521, 0
      %v3560 = vsel %vm1889, %v3523, 0
      %v3563 = vsel %vm1889, %v3525, 0
      %v3566 = vsel %vm1889, %v3527, 0
      %v3569 = vsel %vm1889, %v3529, 0
      %v3572 = vsel %vm1889, %v3531, 0
      %v3575 = vsel %vm1889, %v3533, 0
      %v3578 = vsel %vm1889, %v3535, 0
      %v3581 = vsel %vm1889, %v3537, 0
      %v3584 = vsel %vm1889, %v3539, 0
      %v3587 = vsel %vm1889, %v3541, 0
      %v3590 = vsel %vm1889, %v3543, 0
      %v3593 = vsel %vm1889, %v3545, 0
      %v3596 = vsel %vm1889, %v3547, 0
      %v3599 = vsel %vm1889, %v3549, 0
      %v3602 = vsel %vm1889, %v3551, 0
      %v3605 = vsel %vm1889, %v3553, 0
      %v3608 = vsel %vm1889, %v3555, 0
      %v3611 = vsel %vm1944, %v3425, 0
      %3613 = vmatpush.bf16.msra.mxu0 0
      %3614 = vmatpush.bf16.msra.mxu0 0
      %3615 = vmatpush.bf16.msra.mxu0 0
      %3616 = vmatpush.bf16.msra.mxu0 0
      %3617 = vmatpush.bf16.msra.mxu0 0
      %3618 = vmatpush.bf16.msra.mxu0 0
      %3619 = vmatpush.bf16.msra.mxu0 0
      %3620 = vmatpush.bf16.msra.mxu0 %v3611
      %3621 = vmatmul.bf16.gmra.mxu0 %v3557
      %v3622 = vpop.f32.mrf.mxu0
      %v3623 = vadd.f32 0.0, %v3622
      %v3624 = vpop.f32.mrf.mxu0
      %v3625 = vadd.f32 0.0, %v3624
      %3626 = vmatmul.bf16.gmra.mxu0 %v3560
      %v3627 = vpop.f32.mrf.mxu0
      %v3628 = vadd.f32 0.0, %v3627
      %v3629 = vpop.f32.mrf.mxu0
      %v3630 = vadd.f32 0.0, %v3629
      %3631 = vmatmul.bf16.gmra.mxu0 %v3563
      %v3632 = vpop.f32.mrf.mxu0
      %v3633 = vadd.f32 0.0, %v3632
      %v3634 = vpop.f32.mrf.mxu0
      %v3635 = vadd.f32 0.0, %v3634
      %3636 = vmatmul.bf16.gmra.mxu0 %v3566
      %v3637 = vpop.f32.mrf.mxu0
      %v3638 = vadd.f32 0.0, %v3637
      %v3639 = vpop.f32.mrf.mxu0
      %v3640 = vadd.f32 0.0, %v3639
      %3641 = vmatmul.bf16.gmra.mxu0 %v3569
      %v3642 = vpop.f32.mrf.mxu0
      %v3643 = vadd.f32 0.0, %v3642
      %v3644 = vpop.f32.mrf.mxu0
      %v3645 = vadd.f32 0.0, %v3644
      %3646 = vmatmul.bf16.gmra.mxu0 %v3572
      %v3647 = vpop.f32.mrf.mxu0
      %v3648 = vadd.f32 0.0, %v3647
      %v3649 = vpop.f32.mrf.mxu0
      %v3650 = vadd.f32 0.0, %v3649
      %3651 = vmatmul.bf16.gmra.mxu0 %v3575
      %v3652 = vpop.f32.mrf.mxu0
      %v3653 = vadd.f32 0.0, %v3652
      %v3654 = vpop.f32.mrf.mxu0
      %v3655 = vadd.f32 0.0, %v3654
      %3656 = vmatmul.bf16.gmra.mxu0 %v3578
      %v3657 = vpop.f32.mrf.mxu0
      %v3658 = vadd.f32 0.0, %v3657
      %v3659 = vpop.f32.mrf.mxu0
      %v3660 = vadd.f32 0.0, %v3659
      %3661 = vmatmul.bf16.gmra.mxu0 %v3581
      %v3662 = vpop.f32.mrf.mxu0
      %v3663 = vadd.f32 0.0, %v3662
      %v3664 = vpop.f32.mrf.mxu0
      %v3665 = vadd.f32 0.0, %v3664
      %3666 = vmatmul.bf16.gmra.mxu0 %v3584
      %v3667 = vpop.f32.mrf.mxu0
      %v3668 = vadd.f32 0.0, %v3667
      %v3669 = vpop.f32.mrf.mxu0
      %v3670 = vadd.f32 0.0, %v3669
      %3671 = vmatmul.bf16.gmra.mxu0 %v3587
      %v3672 = vpop.f32.mrf.mxu0
      %v3673 = vadd.f32 0.0, %v3672
      %v3674 = vpop.f32.mrf.mxu0
      %v3675 = vadd.f32 0.0, %v3674
      %3676 = vmatmul.bf16.gmra.mxu0 %v3590
      %v3677 = vpop.f32.mrf.mxu0
      %v3678 = vadd.f32 0.0, %v3677
      %v3679 = vpop.f32.mrf.mxu0
      %v3680 = vadd.f32 0.0, %v3679
      %3681 = vmatmul.bf16.gmra.mxu0 %v3593
      %v3682 = vpop.f32.mrf.mxu0
      %v3683 = vadd.f32 0.0, %v3682
      %v3684 = vpop.f32.mrf.mxu0
      %v3685 = vadd.f32 0.0, %v3684
      %3686 = vmatmul.bf16.gmra.mxu0 %v3596
      %v3687 = vpop.f32.mrf.mxu0
      %v3688 = vadd.f32 0.0, %v3687
      %v3689 = vpop.f32.mrf.mxu0
      %v3690 = vadd.f32 0.0, %v3689
      %3691 = vmatmul.bf16.gmra.mxu0 %v3599
      %v3692 = vpop.f32.mrf.mxu0
      %v3693 = vadd.f32 0.0, %v3692
      %v3694 = vpop.f32.mrf.mxu0
      %v3695 = vadd.f32 0.0, %v3694
      %3696 = vmatmul.bf16.gmra.mxu0 %v3602
      %v3697 = vpop.f32.mrf.mxu0
      %v3698 = vadd.f32 0.0, %v3697
      %v3699 = vpop.f32.mrf.mxu0
      %v3700 = vadd.f32 0.0, %v3699
      %3701 = vmatmul.bf16.gmra.mxu0 %v3605
      %v3702 = vpop.f32.mrf.mxu0
      %v3703 = vadd.f32 0.0, %v3702
      %v3704 = vpop.f32.mrf.mxu0
      %v3705 = vadd.f32 0.0, %v3704
      %3706 = vmatmul.bf16.gmra.mxu0 %v3608
      %v3707 = vpop.f32.mrf.mxu0
      %v3708 = vadd.f32 0.0, %v3707
      %v3709 = vpop.f32.mrf.mxu0
      %v3710 = vadd.f32 0.0, %v3709
      %3711 = vdwg.mxu0
      %v3712 = vadd.f32 %v3351, %v3623
      %v3713 = vadd.f32 %v3352, %v3625
      %v3714 = vadd.f32 %v3353, %v3628
      %v3715 = vadd.f32 %v3354, %v3630
      %v3716 = vadd.f32 %v3355, %v3633
      %v3717 = vadd.f32 %v3356, %v3635
      %v3718 = vadd.f32 %v3357, %v3638
      %v3719 = vadd.f32 %v3358, %v3640
      %v3720 = vadd.f32 %v3359, %v3643
      %v3721 = vadd.f32 %v3360, %v3645
      %v3722 = vadd.f32 %v3361, %v3648
      %v3723 = vadd.f32 %v3362, %v3650
      %v3724 = vadd.f32 %v3363, %v3653
      %v3725 = vadd.f32 %v3364, %v3655
      %v3726 = vadd.f32 %v3365, %v3658
      %v3727 = vadd.f32 %v3366, %v3660
      %v3728 = vadd.f32 %v3367, %v3663
      %v3729 = vadd.f32 %v3368, %v3665
      %v3730 = vadd.f32 %v3369, %v3668
      %v3731 = vadd.f32 %v3370, %v3670
      %v3732 = vadd.f32 %v3371, %v3673
      %v3733 = vadd.f32 %v3372, %v3675
      %v3734 = vadd.f32 %v3373, %v3678
      %v3735 = vadd.f32 %v3374, %v3680
      %v3736 = vadd.f32 %v3375, %v3683
      %v3737 = vadd.f32 %v3376, %v3685
      %v3738 = vadd.f32 %v3377, %v3688
      %v3739 = vadd.f32 %v3378, %v3690
      %v3740 = vadd.f32 %v3379, %v3693
      %v3741 = vadd.f32 %v3380, %v3695
      %v3742 = vadd.f32 %v3381, %v3698
      %v3743 = vadd.f32 %v3382, %v3700
      %v3744 = vadd.f32 %v3383, %v3703
      %v3745 = vadd.f32 %v3384, %v3705
      %v3746 = vadd.f32 %v3385, %v3708
      %v3747 = vadd.f32 %v3386, %v3710
      %v3748 = vld [vmem:[%s272 + $0xa0] sm:$0x7]
      %s3749 = scalar_lea.vmem %s1, 14
      %v3750 = vld [vmem:[%s3749] sm:$0x3]
      %v3752 = vunpack.c.l.b16 %v3748
      %v3753 = vpack.c.b16 %v3752, %v3752
      %vm3754 = vsmask.f32 5376
      %v3756 = vshrl.u32 %v3500, 16
      %v3758 = vrot.slane %v3756, 2
      %v3759 = vshll.u32 %v3500, 16
      %v3761 = vrot.slane %v3759, 3
      %v3762 = vor.u32 %v3758, %v3761
      %v3764 = vshrl.u32 %v3501, 16
      %v3766 = vrot.slane %v3764, 2
      %v3767 = vshll.u32 %v3501, 16
      %v3769 = vrot.slane %v3767, 3
      %v3770 = vor.u32 %v3766, %v3769
      %v3771 = vsel %vm3754, %v3762, %v3770
      %v3773 = vshrl.u32 %v3502, 16
      %v3775 = vrot.slane %v3773, 2
      %v3776 = vshll.u32 %v3502, 16
      %v3778 = vrot.slane %v3776, 3
      %v3779 = vor.u32 %v3775, %v3778
      %v3780 = vsel %vm3754, %v3770, %v3779
      %v3782 = vshrl.u32 %v3503, 16
      %v3784 = vrot.slane %v3782, 2
      %v3785 = vshll.u32 %v3503, 16
      %v3787 = vrot.slane %v3785, 3
      %v3788 = vor.u32 %v3784, %v3787
      %v3789 = vsel %vm3754, %v3779, %v3788
      %v3791 = vshrl.u32 %v3504, 16
      %v3793 = vrot.slane %v3791, 2
      %v3794 = vshll.u32 %v3504, 16
      %v3796 = vrot.slane %v3794, 3
      %v3797 = vor.u32 %v3793, %v3796
      %v3798 = vsel %vm3754, %v3788, %v3797
      %v3800 = vshrl.u32 %v3505, 16
      %v3802 = vrot.slane %v3800, 2
      %v3803 = vshll.u32 %v3505, 16
      %v3805 = vrot.slane %v3803, 3
      %v3806 = vor.u32 %v3802, %v3805
      %v3807 = vsel %vm3754, %v3797, %v3806
      %v3809 = vshrl.u32 %v3506, 16
      %v3811 = vrot.slane %v3809, 2
      %v3812 = vshll.u32 %v3506, 16
      %v3814 = vrot.slane %v3812, 3
      %v3815 = vor.u32 %v3811, %v3814
      %v3816 = vsel %vm3754, %v3806, %v3815
      %v3818 = vshrl.u32 %v3507, 16
      %v3820 = vrot.slane %v3818, 2
      %v3821 = vshll.u32 %v3507, 16
      %v3823 = vrot.slane %v3821, 3
      %v3824 = vor.u32 %v3820, %v3823
      %v3825 = vsel %vm3754, %v3815, %v3824
      %v3827 = vshrl.u32 %v3508, 16
      %v3829 = vrot.slane %v3827, 2
      %v3830 = vshll.u32 %v3508, 16
      %v3832 = vrot.slane %v3830, 3
      %v3833 = vor.u32 %v3829, %v3832
      %v3834 = vsel %vm3754, %v3824, %v3833
      %v3836 = vshrl.u32 %v3509, 16
      %v3838 = vrot.slane %v3836, 2
      %v3839 = vshll.u32 %v3509, 16
      %v3841 = vrot.slane %v3839, 3
      %v3842 = vor.u32 %v3838, %v3841
      %v3843 = vsel %vm3754, %v3833, %v3842
      %v3845 = vshrl.u32 %v3510, 16
      %v3847 = vrot.slane %v3845, 2
      %v3848 = vshll.u32 %v3510, 16
      %v3850 = vrot.slane %v3848, 3
      %v3851 = vor.u32 %v3847, %v3850
      %v3852 = vsel %vm3754, %v3842, %v3851
      %v3854 = vshrl.u32 %v3511, 16
      %v3856 = vrot.slane %v3854, 2
      %v3857 = vshll.u32 %v3511, 16
      %v3859 = vrot.slane %v3857, 3
      %v3860 = vor.u32 %v3856, %v3859
      %v3861 = vsel %vm3754, %v3851, %v3860
      %v3863 = vshrl.u32 %v3512, 16
      %v3865 = vrot.slane %v3863, 2
      %v3866 = vshll.u32 %v3512, 16
      %v3868 = vrot.slane %v3866, 3
      %v3869 = vor.u32 %v3865, %v3868
      %v3870 = vsel %vm3754, %v3860, %v3869
      %v3872 = vshrl.u32 %v3513, 16
      %v3874 = vrot.slane %v3872, 2
      %v3875 = vshll.u32 %v3513, 16
      %v3877 = vrot.slane %v3875, 3
      %v3878 = vor.u32 %v3874, %v3877
      %v3879 = vsel %vm3754, %v3869, %v3878
      %v3881 = vshrl.u32 %v3514, 16
      %v3883 = vrot.slane %v3881, 2
      %v3884 = vshll.u32 %v3514, 16
      %v3886 = vrot.slane %v3884, 3
      %v3887 = vor.u32 %v3883, %v3886
      %v3888 = vsel %vm3754, %v3878, %v3887
      %v3890 = vshrl.u32 %v3515, 16
      %v3892 = vrot.slane %v3890, 2
      %v3893 = vshll.u32 %v3515, 16
      %v3895 = vrot.slane %v3893, 3
      %v3896 = vor.u32 %v3892, %v3895
      %v3897 = vsel %vm3754, %v3887, %v3896
      %v3899 = vshrl.u32 %v3516, 16
      %v3901 = vrot.slane %v3899, 2
      %v3902 = vshll.u32 %v3516, 16
      %v3904 = vrot.slane %v3902, 3
      %v3905 = vor.u32 %v3901, %v3904
      %v3906 = vsel %vm3754, %v3896, %v3905
      %v3908 = vshrl.u32 %v3517, 16
      %v3910 = vrot.slane %v3908, 2
      %v3911 = vshll.u32 %v3517, 16
      %v3913 = vrot.slane %v3911, 3
      %v3914 = vor.u32 %v3910, %v3913
      %v3915 = vsel %vm3754, %v3905, %v3914
      %v3917 = vshrl.u32 %v3753, 16
      %v3919 = vrot.slane %v3917, 2
      %v3920 = vshll.u32 %v3753, 16
      %v3922 = vrot.slane %v3920, 3
      %v3923 = vor.u32 %v3919, %v3922
      %v3924 = vsel %vm3754, %v3914, %v3923
      %v3926 = vsel %vm1889, %v3771, 0
      %v3929 = vsel %vm1889, %v3780, 0
      %v3932 = vsel %vm1889, %v3789, 0
      %v3935 = vsel %vm1889, %v3798, 0
      %v3938 = vsel %vm1889, %v3807, 0
      %v3941 = vsel %vm1889, %v3816, 0
      %v3944 = vsel %vm1889, %v3825, 0
      %v3947 = vsel %vm1889, %v3834, 0
      %v3950 = vsel %vm1889, %v3843, 0
      %v3953 = vsel %vm1889, %v3852, 0
      %v3956 = vsel %vm1889, %v3861, 0
      %v3959 = vsel %vm1889, %v3870, 0
      %v3962 = vsel %vm1889, %v3879, 0
      %v3965 = vsel %vm1889, %v3888, 0
      %v3968 = vsel %vm1889, %v3897, 0
      %v3971 = vsel %vm1889, %v3906, 0
      %v3974 = vsel %vm1889, %v3915, 0
      %v3977 = vsel %vm1889, %v3924, 0
      %v3980 = vsel %vm1944, %v3750, 0
      %3982 = vmatpush.bf16.msra.mxu0 0
      %3983 = vmatpush.bf16.msra.mxu0 0
      %3984 = vmatpush.bf16.msra.mxu0 0
      %3985 = vmatpush.bf16.msra.mxu0 0
      %3986 = vmatpush.bf16.msra.mxu0 0
      %3987 = vmatpush.bf16.msra.mxu0 0
      %3988 = vmatpush.bf16.msra.mxu0 0
      %3989 = vmatpush.bf16.msra.mxu0 %v3980
      %3990 = vmatmul.bf16.gmra.mxu0 %v3926
      %v3991 = vpop.f32.mrf.mxu0
      %v3992 = vadd.f32 0.0, %v3991
      %v3993 = vpop.f32.mrf.mxu0
      %v3994 = vadd.f32 0.0, %v3993
      %3995 = vmatmul.bf16.gmra.mxu0 %v3929
      %v3996 = vpop.f32.mrf.mxu0
      %v3997 = vadd.f32 0.0, %v3996
      %v3998 = vpop.f32.mrf.mxu0
      %v3999 = vadd.f32 0.0, %v3998
      %4000 = vmatmul.bf16.gmra.mxu0 %v3932
      %v4001 = vpop.f32.mrf.mxu0
      %v4002 = vadd.f32 0.0, %v4001
      %v4003 = vpop.f32.mrf.mxu0
      %v4004 = vadd.f32 0.0, %v4003
      %4005 = vmatmul.bf16.gmra.mxu0 %v3935
      %v4006 = vpop.f32.mrf.mxu0
      %v4007 = vadd.f32 0.0, %v4006
      %v4008 = vpop.f32.mrf.mxu0
      %v4009 = vadd.f32 0.0, %v4008
      %4010 = vmatmul.bf16.gmra.mxu0 %v3938
      %v4011 = vpop.f32.mrf.mxu0
      %v4012 = vadd.f32 0.0, %v4011
      %v4013 = vpop.f32.mrf.mxu0
      %v4014 = vadd.f32 0.0, %v4013
      %4015 = vmatmul.bf16.gmra.mxu0 %v3941
      %v4016 = vpop.f32.mrf.mxu0
      %v4017 = vadd.f32 0.0, %v4016
      %v4018 = vpop.f32.mrf.mxu0
      %v4019 = vadd.f32 0.0, %v4018
      %4020 = vmatmul.bf16.gmra.mxu0 %v3944
      %v4021 = vpop.f32.mrf.mxu0
      %v4022 = vadd.f32 0.0, %v4021
      %v4023 = vpop.f32.mrf.mxu0
      %v4024 = vadd.f32 0.0, %v4023
      %4025 = vmatmul.bf16.gmra.mxu0 %v3947
      %v4026 = vpop.f32.mrf.mxu0
      %v4027 = vadd.f32 0.0, %v4026
      %v4028 = vpop.f32.mrf.mxu0
      %v4029 = vadd.f32 0.0, %v4028
      %4030 = vmatmul.bf16.gmra.mxu0 %v3950
      %v4031 = vpop.f32.mrf.mxu0
      %v4032 = vadd.f32 0.0, %v4031
      %v4033 = vpop.f32.mrf.mxu0
      %v4034 = vadd.f32 0.0, %v4033
      %4035 = vmatmul.bf16.gmra.mxu0 %v3953
      %v4036 = vpop.f32.mrf.mxu0
      %v4037 = vadd.f32 0.0, %v4036
      %v4038 = vpop.f32.mrf.mxu0
      %v4039 = vadd.f32 0.0, %v4038
      %4040 = vmatmul.bf16.gmra.mxu0 %v3956
      %v4041 = vpop.f32.mrf.mxu0
      %v4042 = vadd.f32 0.0, %v4041
      %v4043 = vpop.f32.mrf.mxu0
      %v4044 = vadd.f32 0.0, %v4043
      %4045 = vmatmul.bf16.gmra.mxu0 %v3959
      %v4046 = vpop.f32.mrf.mxu0
      %v4047 = vadd.f32 0.0, %v4046
      %v4048 = vpop.f32.mrf.mxu0
      %v4049 = vadd.f32 0.0, %v4048
      %4050 = vmatmul.bf16.gmra.mxu0 %v3962
      %v4051 = vpop.f32.mrf.mxu0
      %v4052 = vadd.f32 0.0, %v4051
      %v4053 = vpop.f32.mrf.mxu0
      %v4054 = vadd.f32 0.0, %v4053
      %4055 = vmatmul.bf16.gmra.mxu0 %v3965
      %v4056 = vpop.f32.mrf.mxu0
      %v4057 = vadd.f32 0.0, %v4056
      %v4058 = vpop.f32.mrf.mxu0
      %v4059 = vadd.f32 0.0, %v4058
      %4060 = vmatmul.bf16.gmra.mxu0 %v3968
      %v4061 = vpop.f32.mrf.mxu0
      %v4062 = vadd.f32 0.0, %v4061
      %v4063 = vpop.f32.mrf.mxu0
      %v4064 = vadd.f32 0.0, %v4063
      %4065 = vmatmul.bf16.gmra.mxu0 %v3971
      %v4066 = vpop.f32.mrf.mxu0
      %v4067 = vadd.f32 0.0, %v4066
      %v4068 = vpop.f32.mrf.mxu0
      %v4069 = vadd.f32 0.0, %v4068
      %4070 = vmatmul.bf16.gmra.mxu0 %v3974
      %v4071 = vpop.f32.mrf.mxu0
      %v4072 = vadd.f32 0.0, %v4071
      %v4073 = vpop.f32.mrf.mxu0
      %v4074 = vadd.f32 0.0, %v4073
      %4075 = vmatmul.bf16.gmra.mxu0 %v3977
      %v4076 = vpop.f32.mrf.mxu0
      %v4077 = vadd.f32 0.0, %v4076
      %v4078 = vpop.f32.mrf.mxu0
      %v4079 = vadd.f32 0.0, %v4078
      %4080 = vdwg.mxu0
      %v4081 = vadd.f32 %v3712, %v3992
      %v4082 = vadd.f32 %v3713, %v3994
      %v4083 = vadd.f32 %v3714, %v3997
      %v4084 = vadd.f32 %v3715, %v3999
      %v4085 = vadd.f32 %v3716, %v4002
      %v4086 = vadd.f32 %v3717, %v4004
      %v4087 = vadd.f32 %v3718, %v4007
      %v4088 = vadd.f32 %v3719, %v4009
      %v4089 = vadd.f32 %v3720, %v4012
      %v4090 = vadd.f32 %v3721, %v4014
      %v4091 = vadd.f32 %v3722, %v4017
      %v4092 = vadd.f32 %v3723, %v4019
      %v4093 = vadd.f32 %v3724, %v4022
      %v4094 = vadd.f32 %v3725, %v4024
      %v4095 = vadd.f32 %v3726, %v4027
      %v4096 = vadd.f32 %v3727, %v4029
      %v4097 = vadd.f32 %v3728, %v4032
      %v4098 = vadd.f32 %v3729, %v4034
      %v4099 = vadd.f32 %v3730, %v4037
      %v4100 = vadd.f32 %v3731, %v4039
      %v4101 = vadd.f32 %v3732, %v4042
      %v4102 = vadd.f32 %v3733, %v4044
      %v4103 = vadd.f32 %v3734, %v4047
      %v4104 = vadd.f32 %v3735, %v4049
      %v4105 = vadd.f32 %v3736, %v4052
      %v4106 = vadd.f32 %v3737, %v4054
      %v4107 = vadd.f32 %v3738, %v4057
      %v4108 = vadd.f32 %v3739, %v4059
      %v4109 = vadd.f32 %v3740, %v4062
      %v4110 = vadd.f32 %v3741, %v4064
      %v4111 = vadd.f32 %v3742, %v4067
      %v4112 = vadd.f32 %v3743, %v4069
      %v4113 = vadd.f32 %v3744, %v4072
      %v4114 = vadd.f32 %v3745, %v4074
      %v4115 = vadd.f32 %v3746, %v4077
      %v4116 = vadd.f32 %v3747, %v4079
      %v4117 = vld [vmem:[%s272 + $0x10] sm:$0x8]
      %s4118 = scalar_lea.vmem %s1, 16
      %v4119 = vld [vmem:[%s4118] sm:$0x3]
      %v4121 = vunpack.c.l.b16 %v4117
      %v4122 = vpack.c.b16 %v3464, %v4121
      %vm4123 = vcmask 1044480
      %v4124 = vrot.slane %v4122, 3
      %v4125 = vrot.slane %v3501, 3
      %v4126 = vsel %vm4123, %v4124, %v4125
      %v4127 = vrot.slane %v3502, 3
      %v4128 = vsel %vm4123, %v4125, %v4127
      %v4129 = vrot.slane %v3503, 3
      %v4130 = vsel %vm4123, %v4127, %v4129
      %v4131 = vrot.slane %v3504, 3
      %v4132 = vsel %vm4123, %v4129, %v4131
      %v4133 = vrot.slane %v3505, 3
      %v4134 = vsel %vm4123, %v4131, %v4133
      %v4135 = vrot.slane %v3506, 3
      %v4136 = vsel %vm4123, %v4133, %v4135
      %v4137 = vrot.slane %v3507, 3
      %v4138 = vsel %vm4123, %v4135, %v4137
      %v4139 = vrot.slane %v3508, 3
      %v4140 = vsel %vm4123, %v4137, %v4139
      %v4141 = vrot.slane %v3509, 3
      %v4142 = vsel %vm4123, %v4139, %v4141
      %v4143 = vrot.slane %v3510, 3
      %v4144 = vsel %vm4123, %v4141, %v4143
      %v4145 = vrot.slane %v3511, 3
      %v4146 = vsel %vm4123, %v4143, %v4145
      %v4147 = vrot.slane %v3512, 3
      %v4148 = vsel %vm4123, %v4145, %v4147
      %v4149 = vrot.slane %v3513, 3
      %v4150 = vsel %vm4123, %v4147, %v4149
      %v4151 = vrot.slane %v3514, 3
      %v4152 = vsel %vm4123, %v4149, %v4151
      %v4153 = vrot.slane %v3515, 3
      %v4154 = vsel %vm4123, %v4151, %v4153
      %v4155 = vrot.slane %v3516, 3
      %v4156 = vsel %vm4123, %v4153, %v4155
      %v4157 = vrot.slane %v3517, 3
      %v4158 = vsel %vm4123, %v4155, %v4157
      %v4159 = vrot.slane %v3753, 3
      %v4160 = vsel %vm4123, %v4157, %v4159
      %v4162 = vsel %vm1889, %v4126, 0
      %v4165 = vsel %vm1889, %v4128, 0
      %v4168 = vsel %vm1889, %v4130, 0
      %v4171 = vsel %vm1889, %v4132, 0
      %v4174 = vsel %vm1889, %v4134, 0
      %v4177 = vsel %vm1889, %v4136, 0
      %v4180 = vsel %vm1889, %v4138, 0
      %v4183 = vsel %vm1889, %v4140, 0
      %v4186 = vsel %vm1889, %v4142, 0
      %v4189 = vsel %vm1889, %v4144, 0
      %v4192 = vsel %vm1889, %v4146, 0
      %v4195 = vsel %vm1889, %v4148, 0
      %v4198 = vsel %vm1889, %v4150, 0
      %v4201 = vsel %vm1889, %v4152, 0
      %v4204 = vsel %vm1889, %v4154, 0
      %v4207 = vsel %vm1889, %v4156, 0
      %v4210 = vsel %vm1889, %v4158, 0
      %v4213 = vsel %vm1889, %v4160, 0
      %v4216 = vsel %vm1944, %v4119, 0
      %4218 = vmatpush.bf16.msra.mxu0 0
      %4219 = vmatpush.bf16.msra.mxu0 0
      %4220 = vmatpush.bf16.msra.mxu0 0
      %4221 = vmatpush.bf16.msra.mxu0 0
      %4222 = vmatpush.bf16.msra.mxu0 0
      %4223 = vmatpush.bf16.msra.mxu0 0
      %4224 = vmatpush.bf16.msra.mxu0 0
      %4225 = vmatpush.bf16.msra.mxu0 %v4216
      %4226 = vmatmul.bf16.gmra.mxu0 %v4162
      %v4227 = vpop.f32.mrf.mxu0
      %v4228 = vadd.f32 0.0, %v4227
      %v4229 = vpop.f32.mrf.mxu0
      %v4230 = vadd.f32 0.0, %v4229
      %4231 = vmatmul.bf16.gmra.mxu0 %v4165
      %v4232 = vpop.f32.mrf.mxu0
      %v4233 = vadd.f32 0.0, %v4232
      %v4234 = vpop.f32.mrf.mxu0
      %v4235 = vadd.f32 0.0, %v4234
      %4236 = vmatmul.bf16.gmra.mxu0 %v4168
      %v4237 = vpop.f32.mrf.mxu0
      %v4238 = vadd.f32 0.0, %v4237
      %v4239 = vpop.f32.mrf.mxu0
      %v4240 = vadd.f32 0.0, %v4239
      %4241 = vmatmul.bf16.gmra.mxu0 %v4171
      %v4242 = vpop.f32.mrf.mxu0
      %v4243 = vadd.f32 0.0, %v4242
      %v4244 = vpop.f32.mrf.mxu0
      %v4245 = vadd.f32 0.0, %v4244
      %4246 = vmatmul.bf16.gmra.mxu0 %v4174
      %v4247 = vpop.f32.mrf.mxu0
      %v4248 = vadd.f32 0.0, %v4247
      %v4249 = vpop.f32.mrf.mxu0
      %v4250 = vadd.f32 0.0, %v4249
      %4251 = vmatmul.bf16.gmra.mxu0 %v4177
      %v4252 = vpop.f32.mrf.mxu0
      %v4253 = vadd.f32 0.0, %v4252
      %v4254 = vpop.f32.mrf.mxu0
      %v4255 = vadd.f32 0.0, %v4254
      %4256 = vmatmul.bf16.gmra.mxu0 %v4180
      %v4257 = vpop.f32.mrf.mxu0
      %v4258 = vadd.f32 0.0, %v4257
      %v4259 = vpop.f32.mrf.mxu0
      %v4260 = vadd.f32 0.0, %v4259
      %4261 = vmatmul.bf16.gmra.mxu0 %v4183
      %v4262 = vpop.f32.mrf.mxu0
      %v4263 = vadd.f32 0.0, %v4262
      %v4264 = vpop.f32.mrf.mxu0
      %v4265 = vadd.f32 0.0, %v4264
      %4266 = vmatmul.bf16.gmra.mxu0 %v4186
      %v4267 = vpop.f32.mrf.mxu0
      %v4268 = vadd.f32 0.0, %v4267
      %v4269 = vpop.f32.mrf.mxu0
      %v4270 = vadd.f32 0.0, %v4269
      %4271 = vmatmul.bf16.gmra.mxu0 %v4189
      %v4272 = vpop.f32.mrf.mxu0
      %v4273 = vadd.f32 0.0, %v4272
      %v4274 = vpop.f32.mrf.mxu0
      %v4275 = vadd.f32 0.0, %v4274
      %4276 = vmatmul.bf16.gmra.mxu0 %v4192
      %v4277 = vpop.f32.mrf.mxu0
      %v4278 = vadd.f32 0.0, %v4277
      %v4279 = vpop.f32.mrf.mxu0
      %v4280 = vadd.f32 0.0, %v4279
      %4281 = vmatmul.bf16.gmra.mxu0 %v4195
      %v4282 = vpop.f32.mrf.mxu0
      %v4283 = vadd.f32 0.0, %v4282
      %v4284 = vpop.f32.mrf.mxu0
      %v4285 = vadd.f32 0.0, %v4284
      %4286 = vmatmul.bf16.gmra.mxu0 %v4198
      %v4287 = vpop.f32.mrf.mxu0
      %v4288 = vadd.f32 0.0, %v4287
      %v4289 = vpop.f32.mrf.mxu0
      %v4290 = vadd.f32 0.0, %v4289
      %4291 = vmatmul.bf16.gmra.mxu0 %v4201
      %v4292 = vpop.f32.mrf.mxu0
      %v4293 = vadd.f32 0.0, %v4292
      %v4294 = vpop.f32.mrf.mxu0
      %v4295 = vadd.f32 0.0, %v4294
      %4296 = vmatmul.bf16.gmra.mxu0 %v4204
      %v4297 = vpop.f32.mrf.mxu0
      %v4298 = vadd.f32 0.0, %v4297
      %v4299 = vpop.f32.mrf.mxu0
      %v4300 = vadd.f32 0.0, %v4299
      %4301 = vmatmul.bf16.gmra.mxu0 %v4207
      %v4302 = vpop.f32.mrf.mxu0
      %v4303 = vadd.f32 0.0, %v4302
      %v4304 = vpop.f32.mrf.mxu0
      %v4305 = vadd.f32 0.0, %v4304
      %4306 = vmatmul.bf16.gmra.mxu0 %v4210
      %v4307 = vpop.f32.mrf.mxu0
      %v4308 = vadd.f32 0.0, %v4307
      %v4309 = vpop.f32.mrf.mxu0
      %v4310 = vadd.f32 0.0, %v4309
      %4311 = vmatmul.bf16.gmra.mxu0 %v4213
      %v4312 = vpop.f32.mrf.mxu0
      %v4313 = vadd.f32 0.0, %v4312
      %v4314 = vpop.f32.mrf.mxu0
      %v4315 = vadd.f32 0.0, %v4314
      %4316 = vdwg.mxu0
      %v4317 = vadd.f32 %v4081, %v4228
      %v4318 = vadd.f32 %v4082, %v4230
      %v4319 = vadd.f32 %v4083, %v4233
      %v4320 = vadd.f32 %v4084, %v4235
      %v4321 = vadd.f32 %v4085, %v4238
      %v4322 = vadd.f32 %v4086, %v4240
      %v4323 = vadd.f32 %v4087, %v4243
      %v4324 = vadd.f32 %v4088, %v4245
      %v4325 = vadd.f32 %v4089, %v4248
      %v4326 = vadd.f32 %v4090, %v4250
      %v4327 = vadd.f32 %v4091, %v4253
      %v4328 = vadd.f32 %v4092, %v4255
      %v4329 = vadd.f32 %v4093, %v4258
      %v4330 = vadd.f32 %v4094, %v4260
      %v4331 = vadd.f32 %v4095, %v4263
      %v4332 = vadd.f32 %v4096, %v4265
      %v4333 = vadd.f32 %v4097, %v4268
      %v4334 = vadd.f32 %v4098, %v4270
      %v4335 = vadd.f32 %v4099, %v4273
      %v4336 = vadd.f32 %v4100, %v4275
      %v4337 = vadd.f32 %v4101, %v4278
      %v4338 = vadd.f32 %v4102, %v4280
      %v4339 = vadd.f32 %v4103, %v4283
      %v4340 = vadd.f32 %v4104, %v4285
      %v4341 = vadd.f32 %v4105, %v4288
      %v4342 = vadd.f32 %v4106, %v4290
      %v4343 = vadd.f32 %v4107, %v4293
      %v4344 = vadd.f32 %v4108, %v4295
      %v4345 = vadd.f32 %v4109, %v4298
      %v4346 = vadd.f32 %v4110, %v4300
      %v4347 = vadd.f32 %v4111, %v4303
      %v4348 = vadd.f32 %v4112, %v4305
      %v4349 = vadd.f32 %v4113, %v4308
      %v4350 = vadd.f32 %v4114, %v4310
      %v4351 = vadd.f32 %v4115, %v4313
      %v4352 = vadd.f32 %v4116, %v4315
      %v4353 = vld [vmem:[%s2] sm:$0x1]
      %v4355 = vperm.slane %v4353, 0
      %v4357 = vadd.f32 %v4317, %v4355
      %v4358 = vadd.f32 %v4318, %v4355
      %v4359 = vadd.f32 %v4319, %v4355
      %v4360 = vadd.f32 %v4320, %v4355
      %v4361 = vadd.f32 %v4321, %v4355
      %v4362 = vadd.f32 %v4322, %v4355
      %v4363 = vadd.f32 %v4323, %v4355
      %v4364 = vadd.f32 %v4324, %v4355
      %v4365 = vadd.f32 %v4325, %v4355
      %v4366 = vadd.f32 %v4326, %v4355
      %v4367 = vadd.f32 %v4327, %v4355
      %v4368 = vadd.f32 %v4328, %v4355
      %v4369 = vadd.f32 %v4329, %v4355
      %v4370 = vadd.f32 %v4330, %v4355
      %v4371 = vadd.f32 %v4331, %v4355
      %v4372 = vadd.f32 %v4332, %v4355
      %v4373 = vadd.f32 %v4333, %v4355
      %v4374 = vadd.f32 %v4334, %v4355
      %v4375 = vadd.f32 %v4335, %v4355
      %v4376 = vadd.f32 %v4336, %v4355
      %v4377 = vadd.f32 %v4337, %v4355
      %v4378 = vadd.f32 %v4338, %v4355
      %v4379 = vadd.f32 %v4339, %v4355
      %v4380 = vadd.f32 %v4340, %v4355
      %v4381 = vadd.f32 %v4341, %v4355
      %v4382 = vadd.f32 %v4342, %v4355
      %v4383 = vadd.f32 %v4343, %v4355
      %v4384 = vadd.f32 %v4344, %v4355
      %v4385 = vadd.f32 %v4345, %v4355
      %v4386 = vadd.f32 %v4346, %v4355
      %v4387 = vadd.f32 %v4347, %v4355
      %v4388 = vadd.f32 %v4348, %v4355
      %v4389 = vadd.f32 %v4349, %v4355
      %v4390 = vadd.f32 %v4350, %v4355
      %v4391 = vadd.f32 %v4351, %v4355
      %v4392 = vadd.f32 %v4352, %v4355
      %v4393 = vmax.f32 %v4357, 0.0
      %v4394 = vmax.f32 %v4358, 0.0
      %v4395 = vmax.f32 %v4359, 0.0
      %v4396 = vmax.f32 %v4360, 0.0
      %v4397 = vmax.f32 %v4361, 0.0
      %v4398 = vmax.f32 %v4362, 0.0
      %v4399 = vmax.f32 %v4363, 0.0
      %v4400 = vmax.f32 %v4364, 0.0
      %v4401 = vmax.f32 %v4365, 0.0
      %v4402 = vmax.f32 %v4366, 0.0
      %v4403 = vmax.f32 %v4367, 0.0
      %v4404 = vmax.f32 %v4368, 0.0
      %v4405 = vmax.f32 %v4369, 0.0
      %v4406 = vmax.f32 %v4370, 0.0
      %v4407 = vmax.f32 %v4371, 0.0
      %v4408 = vmax.f32 %v4372, 0.0
      %v4409 = vmax.f32 %v4373, 0.0
      %v4410 = vmax.f32 %v4374, 0.0
      %v4411 = vmax.f32 %v4375, 0.0
      %v4412 = vmax.f32 %v4376, 0.0
      %v4413 = vmax.f32 %v4377, 0.0
      %v4414 = vmax.f32 %v4378, 0.0
      %v4415 = vmax.f32 %v4379, 0.0
      %v4416 = vmax.f32 %v4380, 0.0
      %v4417 = vmax.f32 %v4381, 0.0
      %v4418 = vmax.f32 %v4382, 0.0
      %v4419 = vmax.f32 %v4383, 0.0
      %v4420 = vmax.f32 %v4384, 0.0
      %v4421 = vmax.f32 %v4385, 0.0
      %v4422 = vmax.f32 %v4386, 0.0
      %v4423 = vmax.f32 %v4387, 0.0
      %v4424 = vmax.f32 %v4388, 0.0
      %v4425 = vmax.f32 %v4389, 0.0
      %v4426 = vmax.f32 %v4390, 0.0
      %v4427 = vmax.f32 %v4391, 0.0
      %v4428 = vmax.f32 %v4392, 0.0
      %v4429 = vsel %vm1571, 1, 0
      %v4430 = vsel %vm1572, 1, 0
      %v4431 = vsel %vm1573, 1, 0
      %v4432 = vsel %vm1574, 1, 0
      %v4433 = vsel %vm1575, 1, 0
      %v4434 = vsel %vm1576, 1, 0
      %v4435 = vsel %vm1577, 1, 0
      %v4436 = vsel %vm1578, 1, 0
      %v4437 = vsel %vm1579, 1, 0
      %v4438 = vsel %vm1580, 1, 0
      %v4439 = vsel %vm1581, 1, 0
      %v4440 = vsel %vm1582, 1, 0
      %v4441 = vsel %vm1583, 1, 0
      %v4442 = vsel %vm1584, 1, 0
      %v4443 = vsel %vm1585, 1, 0
      %v4444 = vsel %vm1586, 1, 0
      %v4445 = vsel %vm1587, 1, 0
      %v4446 = vsel %vm1588, 1, 0
      %v4447 = vsel %vm1589, 1, 0
      %v4448 = vsel %vm1590, 1, 0
      %v4449 = vsel %vm1591, 1, 0
      %v4450 = vsel %vm1592, 1, 0
      %v4451 = vsel %vm1593, 1, 0
      %v4452 = vsel %vm1594, 1, 0
      %v4453 = vsel %vm1595, 1, 0
      %v4454 = vsel %vm1596, 1, 0
      %v4455 = vsel %vm1597, 1, 0
      %v4456 = vsel %vm1598, 1, 0
      %v4457 = vsel %vm1599, 1, 0
      %v4458 = vsel %vm1600, 1, 0
      %v4459 = vsel %vm1601, 1, 0
      %v4460 = vsel %vm1602, 1, 0
      %v4461 = vsel %vm1603, 1, 0
      %v4462 = vsel %vm1604, 1, 0
      %v4463 = vsel %vm1605, 1, 0
      %v4464 = vsel %vm1606, 1, 0
      %vm4465 = vcmp.eq.s32.totalorder %v4429, 1
      %vm4466 = vcmp.eq.s32.totalorder %v4430, 1
      %vm4467 = vcmp.eq.s32.totalorder %v4431, 1
      %vm4468 = vcmp.eq.s32.totalorder %v4432, 1
      %vm4469 = vcmp.eq.s32.totalorder %v4433, 1
      %vm4470 = vcmp.eq.s32.totalorder %v4434, 1
      %vm4471 = vcmp.eq.s32.totalorder %v4435, 1
      %vm4472 = vcmp.eq.s32.totalorder %v4436, 1
      %vm4473 = vcmp.eq.s32.totalorder %v4437, 1
      %vm4474 = vcmp.eq.s32.totalorder %v4438, 1
      %vm4475 = vcmp.eq.s32.totalorder %v4439, 1
      %vm4476 = vcmp.eq.s32.totalorder %v4440, 1
      %vm4477 = vcmp.eq.s32.totalorder %v4441, 1
      %vm4478 = vcmp.eq.s32.totalorder %v4442, 1
      %vm4479 = vcmp.eq.s32.totalorder %v4443, 1
      %vm4480 = vcmp.eq.s32.totalorder %v4444, 1
      %vm4481 = vcmp.eq.s32.totalorder %v4445, 1
      %vm4482 = vcmp.eq.s32.totalorder %v4446, 1
      %vm4483 = vcmp.eq.s32.totalorder %v4447, 1
      %vm4484 = vcmp.eq.s32.totalorder %v4448, 1
      %vm4485 = vcmp.eq.s32.totalorder %v4449, 1
      %vm4486 = vcmp.eq.s32.totalorder %v4450, 1
      %vm4487 = vcmp.eq.s32.totalorder %v4451, 1
      %vm4488 = vcmp.eq.s32.totalorder %v4452, 1
      %vm4489 = vcmp.eq.s32.totalorder %v4453, 1
      %vm4490 = vcmp.eq.s32.totalorder %v4454, 1
      %vm4491 = vcmp.eq.s32.totalorder %v4455, 1
      %vm4492 = vcmp.eq.s32.totalorder %v4456, 1
      %vm4493 = vcmp.eq.s32.totalorder %v4457, 1
      %vm4494 = vcmp.eq.s32.totalorder %v4458, 1
      %vm4495 = vcmp.eq.s32.totalorder %v4459, 1
      %vm4496 = vcmp.eq.s32.totalorder %v4460, 1
      %vm4497 = vcmp.eq.s32.totalorder %v4461, 1
      %vm4498 = vcmp.eq.s32.totalorder %v4462, 1
      %vm4499 = vcmp.eq.s32.totalorder %v4463, 1
      %vm4500 = vcmp.eq.s32.totalorder %v4464, 1
      %v4501 = vsel %vm4465, %v4393, 0.0
      %v4502 = vsel %vm4466, %v4394, 0.0
      %v4503 = vsel %vm4467, %v4395, 0.0
      %v4504 = vsel %vm4468, %v4396, 0.0
      %v4505 = vsel %vm4469, %v4397, 0.0
      %v4506 = vsel %vm4470, %v4398, 0.0
      %v4507 = vsel %vm4471, %v4399, 0.0
      %v4508 = vsel %vm4472, %v4400, 0.0
      %v4509 = vsel %vm4473, %v4401, 0.0
      %v4510 = vsel %vm4474, %v4402, 0.0
      %v4511 = vsel %vm4475, %v4403, 0.0
      %v4512 = vsel %vm4476, %v4404, 0.0
      %v4513 = vsel %vm4477, %v4405, 0.0
      %v4514 = vsel %vm4478, %v4406, 0.0
      %v4515 = vsel %vm4479, %v4407, 0.0
      %v4516 = vsel %vm4480, %v4408, 0.0
      %v4517 = vsel %vm4481, %v4409, 0.0
      %v4518 = vsel %vm4482, %v4410, 0.0
      %v4519 = vsel %vm4483, %v4411, 0.0
      %v4520 = vsel %vm4484, %v4412, 0.0
      %v4521 = vsel %vm4485, %v4413, 0.0
      %v4522 = vsel %vm4486, %v4414, 0.0
      %v4523 = vsel %vm4487, %v4415, 0.0
      %v4524 = vsel %vm4488, %v4416, 0.0
      %v4525 = vsel %vm4489, %v4417, 0.0
      %v4526 = vsel %vm4490, %v4418, 0.0
      %v4527 = vsel %vm4491, %v4419, 0.0
      %v4528 = vsel %vm4492, %v4420, 0.0
      %v4529 = vsel %vm4493, %v4421, 0.0
      %v4530 = vsel %vm4494, %v4422, 0.0
      %v4531 = vsel %vm4495, %v4423, 0.0
      %v4532 = vsel %vm4496, %v4424, 0.0
      %v4533 = vsel %vm4497, %v4425, 0.0
      %v4534 = vsel %vm4498, %v4426, 0.0
      %v4535 = vsel %vm4499, %v4427, 0.0
      %v4536 = vsel %vm4500, %v4428, 0.0
      %v4537 = vpack.c.bf16 %v4501, %v4501
      %v4538 = vpack.c.bf16 %v4502, %v4502
      %v4539 = vpack.c.bf16 %v4503, %v4503
      %v4540 = vpack.c.bf16 %v4504, %v4504
      %v4541 = vpack.c.bf16 %v4505, %v4505
      %v4542 = vpack.c.bf16 %v4506, %v4506
      %v4543 = vpack.c.bf16 %v4507, %v4507
      %v4544 = vpack.c.bf16 %v4508, %v4508
      %v4545 = vpack.c.bf16 %v4509, %v4509
      %v4546 = vpack.c.bf16 %v4510, %v4510
      %v4547 = vpack.c.bf16 %v4511, %v4511
      %v4548 = vpack.c.bf16 %v4512, %v4512
      %v4549 = vpack.c.bf16 %v4513, %v4513
      %v4550 = vpack.c.bf16 %v4514, %v4514
      %v4551 = vpack.c.bf16 %v4515, %v4515
      %v4552 = vpack.c.bf16 %v4516, %v4516
      %v4553 = vpack.c.bf16 %v4517, %v4517
      %v4554 = vpack.c.bf16 %v4518, %v4518
      %v4555 = vpack.c.bf16 %v4519, %v4519
      %v4556 = vpack.c.bf16 %v4520, %v4520
      %v4557 = vpack.c.bf16 %v4521, %v4521
      %v4558 = vpack.c.bf16 %v4522, %v4522
      %v4559 = vpack.c.bf16 %v4523, %v4523
      %v4560 = vpack.c.bf16 %v4524, %v4524
      %v4561 = vpack.c.bf16 %v4525, %v4525
      %v4562 = vpack.c.bf16 %v4526, %v4526
      %v4563 = vpack.c.bf16 %v4527, %v4527
      %v4564 = vpack.c.bf16 %v4528, %v4528
      %v4565 = vpack.c.bf16 %v4529, %v4529
      %v4566 = vpack.c.bf16 %v4530, %v4530
      %v4567 = vpack.c.bf16 %v4531, %v4531
      %v4568 = vpack.c.bf16 %v4532, %v4532
      %v4569 = vpack.c.bf16 %v4533, %v4533
      %v4570 = vpack.c.bf16 %v4534, %v4534
      %v4571 = vpack.c.bf16 %v4535, %v4535
      %v4572 = vpack.c.bf16 %v4536, %v4536
      %vm4573 = vsmask.f32 5392
      %vm4574 = vmor %vm282, %vm4573
      %v4576 = vshrl.u32 %v4537, 16
      %v4578 = vrot.slane %v4576, 6
      %v4579 = vshll.u32 %v4537, 16
      %v4581 = vrot.slane %v4579, 7
      %v4582 = vor.u32 %v4578, %v4581
      %v4583 = vrot.slane %v4582, 4
      %v4585 = vshrl.u32 %v4538, 16
      %v4587 = vrot.slane %v4585, 6
      %v4588 = vshll.u32 %v4538, 16
      %v4590 = vrot.slane %v4588, 7
      %v4591 = vor.u32 %v4587, %v4590
      %v4592 = vsel %vm4574, %v4583, %v4591
      %v4593 = vrot.slane %v4591, 4
      %v4595 = vshrl.u32 %v4539, 16
      %v4597 = vrot.slane %v4595, 6
      %v4598 = vshll.u32 %v4539, 16
      %v4600 = vrot.slane %v4598, 7
      %v4601 = vor.u32 %v4597, %v4600
      %v4602 = vsel %vm4574, %v4593, %v4601
      %v4603 = vrot.slane %v4601, 4
      %v4605 = vshrl.u32 %v4540, 16
      %v4607 = vrot.slane %v4605, 6
      %v4608 = vshll.u32 %v4540, 16
      %v4610 = vrot.slane %v4608, 7
      %v4611 = vor.u32 %v4607, %v4610
      %v4612 = vsel %vm4574, %v4603, %v4611
      %v4613 = vrot.slane %v4611, 4
      %v4615 = vshrl.u32 %v4541, 16
      %v4617 = vrot.slane %v4615, 6
      %v4618 = vshll.u32 %v4541, 16
      %v4620 = vrot.slane %v4618, 7
      %v4621 = vor.u32 %v4617, %v4620
      %v4622 = vsel %vm4574, %v4613, %v4621
      %v4623 = vrot.slane %v4621, 4
      %v4625 = vshrl.u32 %v4542, 16
      %v4627 = vrot.slane %v4625, 6
      %v4628 = vshll.u32 %v4542, 16
      %v4630 = vrot.slane %v4628, 7
      %v4631 = vor.u32 %v4627, %v4630
      %v4632 = vsel %vm4574, %v4623, %v4631
      %v4633 = vrot.slane %v4631, 4
      %v4635 = vshrl.u32 %v4543, 16
      %v4637 = vrot.slane %v4635, 6
      %v4638 = vshll.u32 %v4543, 16
      %v4640 = vrot.slane %v4638, 7
      %v4641 = vor.u32 %v4637, %v4640
      %v4642 = vsel %vm4574, %v4633, %v4641
      %v4643 = vrot.slane %v4641, 4
      %v4645 = vshrl.u32 %v4544, 16
      %v4647 = vrot.slane %v4645, 6
      %v4648 = vshll.u32 %v4544, 16
      %v4650 = vrot.slane %v4648, 7
      %v4651 = vor.u32 %v4647, %v4650
      %v4652 = vsel %vm4574, %v4643, %v4651
      %v4653 = vrot.slane %v4651, 4
      %v4655 = vshrl.u32 %v4545, 16
      %v4657 = vrot.slane %v4655, 6
      %v4658 = vshll.u32 %v4545, 16
      %v4660 = vrot.slane %v4658, 7
      %v4661 = vor.u32 %v4657, %v4660
      %v4662 = vsel %vm4574, %v4653, %v4661
      %v4663 = vrot.slane %v4661, 4
      %v4665 = vshrl.u32 %v4546, 16
      %v4667 = vrot.slane %v4665, 6
      %v4668 = vshll.u32 %v4546, 16
      %v4670 = vrot.slane %v4668, 7
      %v4671 = vor.u32 %v4667, %v4670
      %v4672 = vsel %vm4574, %v4663, %v4671
      %v4673 = vrot.slane %v4671, 4
      %v4675 = vshrl.u32 %v4547, 16
      %v4677 = vrot.slane %v4675, 6
      %v4678 = vshll.u32 %v4547, 16
      %v4680 = vrot.slane %v4678, 7
      %v4681 = vor.u32 %v4677, %v4680
      %v4682 = vsel %vm4574, %v4673, %v4681
      %v4683 = vrot.slane %v4681, 4
      %v4685 = vshrl.u32 %v4548, 16
      %v4687 = vrot.slane %v4685, 6
      %v4688 = vshll.u32 %v4548, 16
      %v4690 = vrot.slane %v4688, 7
      %v4691 = vor.u32 %v4687, %v4690
      %v4692 = vsel %vm4574, %v4683, %v4691
      %v4693 = vrot.slane %v4691, 4
      %v4695 = vshrl.u32 %v4549, 16
      %v4697 = vrot.slane %v4695, 6
      %v4698 = vshll.u32 %v4549, 16
      %v4700 = vrot.slane %v4698, 7
      %v4701 = vor.u32 %v4697, %v4700
      %v4702 = vsel %vm4574, %v4693, %v4701
      %v4703 = vrot.slane %v4701, 4
      %v4705 = vshrl.u32 %v4550, 16
      %v4707 = vrot.slane %v4705, 6
      %v4708 = vshll.u32 %v4550, 16
      %v4710 = vrot.slane %v4708, 7
      %v4711 = vor.u32 %v4707, %v4710
      %v4712 = vsel %vm4574, %v4703, %v4711
      %v4713 = vrot.slane %v4711, 4
      %v4715 = vshrl.u32 %v4551, 16
      %v4717 = vrot.slane %v4715, 6
      %v4718 = vshll.u32 %v4551, 16
      %v4720 = vrot.slane %v4718, 7
      %v4721 = vor.u32 %v4717, %v4720
      %v4722 = vsel %vm4574, %v4713, %v4721
      %v4723 = vrot.slane %v4721, 4
      %v4725 = vshrl.u32 %v4552, 16
      %v4727 = vrot.slane %v4725, 6
      %v4728 = vshll.u32 %v4552, 16
      %v4730 = vrot.slane %v4728, 7
      %v4731 = vor.u32 %v4727, %v4730
      %v4732 = vsel %vm4574, %v4723, %v4731
      %v4733 = vrot.slane %v4731, 4
      %v4735 = vshrl.u32 %v4553, 16
      %v4737 = vrot.slane %v4735, 6
      %v4738 = vshll.u32 %v4553, 16
      %v4740 = vrot.slane %v4738, 7
      %v4741 = vor.u32 %v4737, %v4740
      %v4742 = vsel %vm4574, %v4733, %v4741
      %v4743 = vrot.slane %v4741, 4
      %v4745 = vshrl.u32 %v4554, 16
      %v4747 = vrot.slane %v4745, 6
      %v4748 = vshll.u32 %v4554, 16
      %v4750 = vrot.slane %v4748, 7
      %v4751 = vor.u32 %v4747, %v4750
      %v4752 = vsel %vm4574, %v4743, %v4751
      %v4753 = vrot.slane %v4751, 4
      %v4755 = vshrl.u32 %v4555, 16
      %v4757 = vrot.slane %v4755, 6
      %v4758 = vshll.u32 %v4555, 16
      %v4760 = vrot.slane %v4758, 7
      %v4761 = vor.u32 %v4757, %v4760
      %v4762 = vsel %vm4574, %v4753, %v4761
      %v4763 = vrot.slane %v4761, 4
      %v4765 = vshrl.u32 %v4556, 16
      %v4767 = vrot.slane %v4765, 6
      %v4768 = vshll.u32 %v4556, 16
      %v4770 = vrot.slane %v4768, 7
      %v4771 = vor.u32 %v4767, %v4770
      %v4772 = vsel %vm4574, %v4763, %v4771
      %v4773 = vrot.slane %v4771, 4
      %v4775 = vshrl.u32 %v4557, 16
      %v4777 = vrot.slane %v4775, 6
      %v4778 = vshll.u32 %v4557, 16
      %v4780 = vrot.slane %v4778, 7
      %v4781 = vor.u32 %v4777, %v4780
      %v4782 = vsel %vm4574, %v4773, %v4781
      %v4783 = vrot.slane %v4781, 4
      %v4785 = vshrl.u32 %v4558, 16
      %v4787 = vrot.slane %v4785, 6
      %v4788 = vshll.u32 %v4558, 16
      %v4790 = vrot.slane %v4788, 7
      %v4791 = vor.u32 %v4787, %v4790
      %v4792 = vsel %vm4574, %v4783, %v4791
      %v4793 = vrot.slane %v4791, 4
      %v4795 = vshrl.u32 %v4559, 16
      %v4797 = vrot.slane %v4795, 6
      %v4798 = vshll.u32 %v4559, 16
      %v4800 = vrot.slane %v4798, 7
      %v4801 = vor.u32 %v4797, %v4800
      %v4802 = vsel %vm4574, %v4793, %v4801
      %v4803 = vrot.slane %v4801, 4
      %v4805 = vshrl.u32 %v4560, 16
      %v4807 = vrot.slane %v4805, 6
      %v4808 = vshll.u32 %v4560, 16
      %v4810 = vrot.slane %v4808, 7
      %v4811 = vor.u32 %v4807, %v4810
      %v4812 = vsel %vm4574, %v4803, %v4811
      %v4813 = vrot.slane %v4811, 4
      %v4815 = vshrl.u32 %v4561, 16
      %v4817 = vrot.slane %v4815, 6
      %v4818 = vshll.u32 %v4561, 16
      %v4820 = vrot.slane %v4818, 7
      %v4821 = vor.u32 %v4817, %v4820
      %v4822 = vsel %vm4574, %v4813, %v4821
      %v4823 = vrot.slane %v4821, 4
      %v4825 = vshrl.u32 %v4562, 16
      %v4827 = vrot.slane %v4825, 6
      %v4828 = vshll.u32 %v4562, 16
      %v4830 = vrot.slane %v4828, 7
      %v4831 = vor.u32 %v4827, %v4830
      %v4832 = vsel %vm4574, %v4823, %v4831
      %v4833 = vrot.slane %v4831, 4
      %v4835 = vshrl.u32 %v4563, 16
      %v4837 = vrot.slane %v4835, 6
      %v4838 = vshll.u32 %v4563, 16
      %v4840 = vrot.slane %v4838, 7
      %v4841 = vor.u32 %v4837, %v4840
      %v4842 = vsel %vm4574, %v4833, %v4841
      %v4843 = vrot.slane %v4841, 4
      %v4845 = vshrl.u32 %v4564, 16
      %v4847 = vrot.slane %v4845, 6
      %v4848 = vshll.u32 %v4564, 16
      %v4850 = vrot.slane %v4848, 7
      %v4851 = vor.u32 %v4847, %v4850
      %v4852 = vsel %vm4574, %v4843, %v4851
      %v4853 = vrot.slane %v4851, 4
      %v4855 = vshrl.u32 %v4565, 16
      %v4857 = vrot.slane %v4855, 6
      %v4858 = vshll.u32 %v4565, 16
      %v4860 = vrot.slane %v4858, 7
      %v4861 = vor.u32 %v4857, %v4860
      %v4862 = vsel %vm4574, %v4853, %v4861
      %v4863 = vrot.slane %v4861, 4
      %v4865 = vshrl.u32 %v4566, 16
      %v4867 = vrot.slane %v4865, 6
      %v4868 = vshll.u32 %v4566, 16
      %v4870 = vrot.slane %v4868, 7
      %v4871 = vor.u32 %v4867, %v4870
      %v4872 = vsel %vm4574, %v4863, %v4871
      %v4873 = vrot.slane %v4871, 4
      %v4875 = vshrl.u32 %v4567, 16
      %v4877 = vrot.slane %v4875, 6
      %v4878 = vshll.u32 %v4567, 16
      %v4880 = vrot.slane %v4878, 7
      %v4881 = vor.u32 %v4877, %v4880
      %v4882 = vsel %vm4574, %v4873, %v4881
      %v4883 = vrot.slane %v4881, 4
      %v4885 = vshrl.u32 %v4568, 16
      %v4887 = vrot.slane %v4885, 6
      %v4888 = vshll.u32 %v4568, 16
      %v4890 = vrot.slane %v4888, 7
      %v4891 = vor.u32 %v4887, %v4890
      %v4892 = vsel %vm4574, %v4883, %v4891
      %v4893 = vrot.slane %v4891, 4
      %v4895 = vshrl.u32 %v4569, 16
      %v4897 = vrot.slane %v4895, 6
      %v4898 = vshll.u32 %v4569, 16
      %v4900 = vrot.slane %v4898, 7
      %v4901 = vor.u32 %v4897, %v4900
      %v4902 = vsel %vm4574, %v4893, %v4901
      %v4903 = vrot.slane %v4901, 4
      %v4905 = vshrl.u32 %v4570, 16
      %v4907 = vrot.slane %v4905, 6
      %v4908 = vshll.u32 %v4570, 16
      %v4910 = vrot.slane %v4908, 7
      %v4911 = vor.u32 %v4907, %v4910
      %v4912 = vsel %vm4574, %v4903, %v4911
      %v4913 = vrot.slane %v4911, 4
      %v4915 = vshrl.u32 %v4571, 16
      %v4917 = vrot.slane %v4915, 6
      %v4918 = vshll.u32 %v4571, 16
      %v4920 = vrot.slane %v4918, 7
      %v4921 = vor.u32 %v4917, %v4920
      %v4922 = vsel %vm4574, %v4913, %v4921
      %v4923 = vrot.slane %v4921, 4
      %v4925 = vshrl.u32 %v4572, 16
      %v4927 = vrot.slane %v4925, 6
      %v4928 = vshll.u32 %v4572, 16
      %v4930 = vrot.slane %v4928, 7
      %v4931 = vor.u32 %v4927, %v4930
      %v4932 = vsel %vm4574, %v4923, %v4931
      %v4933 = vrot.slane %v4931, 4
      %v4971 = vld [vmem:[#allocation2 + $0x8] sm:$0xe]
      %v4972 = vsel %vm289, %v4582, %v4971
      %4973 = vst [vmem:[#allocation2 + $0x8] sm:$0xe] %v4972
      %4974 = vst.msk [vmem:[#allocation2 + $0xc] sm:$0xf] %vm278, %v4592
      %4975 = vst.msk [vmem:[#allocation2 + $0x10] sm:$0xf] %vm278, %v4602
      %4976 = vst.msk [vmem:[#allocation2 + $0x14] sm:$0xf] %vm278, %v4612
      %4977 = vst.msk [vmem:[#allocation2 + $0x18] sm:$0xf] %vm278, %v4622
      %4978 = vst.msk [vmem:[#allocation2 + $0x1c] sm:$0xf] %vm278, %v4632
      %4979 = vst.msk [vmem:[#allocation2 + $0x20] sm:$0xf] %vm278, %v4642
      %4980 = vst.msk [vmem:[#allocation2 + $0x24] sm:$0xf] %vm278, %v4652
      %4981 = vst.msk [vmem:[#allocation2 + $0x28] sm:$0xf] %vm278, %v4662
      %4982 = vst.msk [vmem:[#allocation2 + $0x2c] sm:$0xf] %vm278, %v4672
      %4983 = vst.msk [vmem:[#allocation2 + $0x30] sm:$0xf] %vm278, %v4682
      %4984 = vst.msk [vmem:[#allocation2 + $0x34] sm:$0xf] %vm278, %v4692
      %4985 = vst.msk [vmem:[#allocation2 + $0x38] sm:$0xf] %vm278, %v4702
      %4986 = vst.msk [vmem:[#allocation2 + $0x3c] sm:$0xf] %vm278, %v4712
      %4987 = vst.msk [vmem:[#allocation2 + $0x40] sm:$0xf] %vm278, %v4722
      %4988 = vst.msk [vmem:[#allocation2 + $0x44] sm:$0xf] %vm278, %v4732
      %4989 = vst.msk [vmem:[#allocation2 + $0x48] sm:$0xf] %vm278, %v4742
      %4990 = vst.msk [vmem:[#allocation2 + $0x4c] sm:$0xf] %vm278, %v4752
      %4991 = vst.msk [vmem:[#allocation2 + $0x50] sm:$0xf] %vm278, %v4762
      %4992 = vst.msk [vmem:[#allocation2 + $0x54] sm:$0xf] %vm278, %v4772
      %4993 = vst.msk [vmem:[#allocation2 + $0x58] sm:$0xf] %vm278, %v4782
      %4994 = vst.msk [vmem:[#allocation2 + $0x5c] sm:$0xf] %vm278, %v4792
      %4995 = vst.msk [vmem:[#allocation2 + $0x60] sm:$0xf] %vm278, %v4802
      %4996 = vst.msk [vmem:[#allocation2 + $0x64] sm:$0xf] %vm278, %v4812
      %4997 = vst.msk [vmem:[#allocation2 + $0x68] sm:$0xf] %vm278, %v4822
      %4998 = vst.msk [vmem:[#allocation2 + $0x6c] sm:$0xf] %vm278, %v4832
      %4999 = vst.msk [vmem:[#allocation2 + $0x70] sm:$0xf] %vm278, %v4842
      %5000 = vst.msk [vmem:[#allocation2 + $0x74] sm:$0xf] %vm278, %v4852
      %5001 = vst.msk [vmem:[#allocation2 + $0x78] sm:$0xf] %vm278, %v4862
      %5002 = vst.msk [vmem:[#allocation2 + $0x7c] sm:$0xf] %vm278, %v4872
      %5003 = vst.msk [vmem:[#allocation2 + $0x80] sm:$0xf] %vm278, %v4882
      %5004 = vst.msk [vmem:[#allocation2 + $0x84] sm:$0xf] %vm278, %v4892
      %5005 = vst.msk [vmem:[#allocation2 + $0x88] sm:$0xf] %vm278, %v4902
      %5006 = vst.msk [vmem:[#allocation2 + $0x8c] sm:$0xf] %vm278, %v4912
      %5007 = vst.msk [vmem:[#allocation2 + $0x90] sm:$0xf] %vm278, %v4922
      %5008 = vst.msk [vmem:[#allocation2 + $0x94] sm:$0xf] %vm278, %v4932
      %v5009 = vld [vmem:[#allocation2 + $0x98] sm:$0x3]
      %v5010 = vsel %vm283, %v4933, %v5009
      %5011 = vst [vmem:[#allocation2 + $0x98] sm:$0x3] %v5010
      %v5012 = vld [vmem:[#allocation2] sm:$0xf]
      %v5013 = vld [vmem:[#allocation2 + $0x4] sm:$0xf]
      %v5014 = vld [vmem:[#allocation2 + $0x8] sm:$0xf]
      %v5015 = vld [vmem:[#allocation2 + $0xc] sm:$0xf]
      %v5016 = vld [vmem:[#allocation2 + $0x10] sm:$0xf]
      %v5017 = vld [vmem:[#allocation2 + $0x14] sm:$0xf]
      %v5018 = vld [vmem:[#allocation2 + $0x18] sm:$0xf]
      %v5019 = vld [vmem:[#allocation2 + $0x1c] sm:$0xf]
      %v5020 = vld [vmem:[#allocation2 + $0x20] sm:$0xf]
      %v5021 = vld [vmem:[#allocation2 + $0x24] sm:$0xf]
      %v5022 = vld [vmem:[#allocation2 + $0x28] sm:$0xf]
      %v5023 = vld [vmem:[#allocation2 + $0x2c] sm:$0xf]
      %v5024 = vld [vmem:[#allocation2 + $0x30] sm:$0xf]
      %v5025 = vld [vmem:[#allocation2 + $0x34] sm:$0xf]
      %v5026 = vld [vmem:[#allocation2 + $0x38] sm:$0xf]
      %v5027 = vld [vmem:[#allocation2 + $0x3c] sm:$0xf]
      %v5028 = vld [vmem:[#allocation2 + $0x40] sm:$0xf]
      %v5029 = vld [vmem:[#allocation2 + $0x44] sm:$0xf]
      %v5030 = vld [vmem:[#allocation2 + $0x48] sm:$0xf]
      %v5031 = vld [vmem:[#allocation2 + $0x4c] sm:$0xf]
      %v5032 = vld [vmem:[#allocation2 + $0x50] sm:$0xf]
      %v5033 = vld [vmem:[#allocation2 + $0x54] sm:$0xf]
      %v5034 = vld [vmem:[#allocation2 + $0x58] sm:$0xf]
      %v5035 = vld [vmem:[#allocation2 + $0x5c] sm:$0xf]
      %v5036 = vld [vmem:[#allocation2 + $0x60] sm:$0xf]
      %v5037 = vld [vmem:[#allocation2 + $0x64] sm:$0xf]
      %v5038 = vld [vmem:[#allocation2 + $0x68] sm:$0xf]
      %v5039 = vld [vmem:[#allocation2 + $0x6c] sm:$0xf]
      %v5040 = vld [vmem:[#allocation2 + $0x70] sm:$0xf]
      %v5041 = vld [vmem:[#allocation2 + $0x74] sm:$0xf]
      %v5042 = vld [vmem:[#allocation2 + $0x78] sm:$0xf]
      %v5043 = vld [vmem:[#allocation2 + $0x7c] sm:$0xf]
      %v5044 = vld [vmem:[#allocation2 + $0x80] sm:$0xf]
      %v5045 = vld [vmem:[#allocation2 + $0x84] sm:$0xf]
      %v5046 = vld [vmem:[#allocation2 + $0x88] sm:$0xf]
      %v5047 = vld [vmem:[#allocation2 + $0x8c] sm:$0xf]
      %v5048 = vld [vmem:[%s3] sm:$0xf]
      %v5049 = vld [vmem:[#allocation2 + $0x90] sm:$0x1]
      %s5050 = scalar_lea.vmem %s3, 4
      %v5051 = vld [vmem:[%s5050] sm:$0xf]
      %v5089 = vunpack.c.l.b16 %v5012
      %v5090 = vunpack.c.l.b16 %v5013
      %v5091 = vunpack.c.l.b16 %v5014
      %v5092 = vunpack.c.l.b16 %v5015
      %v5093 = vunpack.c.l.b16 %v5016
      %v5094 = vunpack.c.l.b16 %v5017
      %v5095 = vunpack.c.l.b16 %v5018
      %v5096 = vunpack.c.l.b16 %v5019
      %v5097 = vunpack.c.l.b16 %v5020
      %v5098 = vunpack.c.l.b16 %v5021
      %v5099 = vunpack.c.l.b16 %v5022
      %v5100 = vunpack.c.l.b16 %v5023
      %v5101 = vunpack.c.l.b16 %v5024
      %v5102 = vunpack.c.l.b16 %v5025
      %v5103 = vunpack.c.l.b16 %v5026
      %v5104 = vunpack.c.l.b16 %v5027
      %v5105 = vunpack.c.l.b16 %v5028
      %v5106 = vunpack.c.l.b16 %v5029
      %v5107 = vunpack.c.l.b16 %v5030
      %v5108 = vunpack.c.l.b16 %v5031
      %v5109 = vunpack.c.l.b16 %v5032
      %v5110 = vunpack.c.l.b16 %v5033
      %v5111 = vunpack.c.l.b16 %v5034
      %v5112 = vunpack.c.l.b16 %v5035
      %v5113 = vunpack.c.l.b16 %v5036
      %v5114 = vunpack.c.l.b16 %v5037
      %v5115 = vunpack.c.l.b16 %v5038
      %v5116 = vunpack.c.l.b16 %v5039
      %v5117 = vunpack.c.l.b16 %v5040
      %v5118 = vunpack.c.l.b16 %v5041
      %v5119 = vunpack.c.l.b16 %v5042
      %v5120 = vunpack.c.l.b16 %v5043
      %v5121 = vunpack.c.l.b16 %v5044
      %v5122 = vunpack.c.l.b16 %v5045
      %v5123 = vunpack.c.l.b16 %v5046
      %v5124 = vunpack.c.l.b16 %v5047
      %v5125 = vunpack.c.l.b16 %v5049
      %v5126 = vpack.c.b16 %v5090, %v5089
      %v5127 = vpack.c.b16 %v5092, %v5091
      %v5128 = vpack.c.b16 %v5094, %v5093
      %v5129 = vpack.c.b16 %v5096, %v5095
      %v5130 = vpack.c.b16 %v5098, %v5097
      %v5131 = vpack.c.b16 %v5100, %v5099
      %v5132 = vpack.c.b16 %v5102, %v5101
      %v5133 = vpack.c.b16 %v5104, %v5103
      %v5134 = vpack.c.b16 %v5106, %v5105
      %v5135 = vpack.c.b16 %v5108, %v5107
      %v5136 = vpack.c.b16 %v5110, %v5109
      %v5137 = vpack.c.b16 %v5112, %v5111
      %v5138 = vpack.c.b16 %v5114, %v5113
      %v5139 = vpack.c.b16 %v5116, %v5115
      %v5140 = vpack.c.b16 %v5118, %v5117
      %v5141 = vpack.c.b16 %v5120, %v5119
      %v5142 = vpack.c.b16 %v5122, %v5121
      %v5143 = vpack.c.b16 %v5124, %v5123
      %v5144 = vpack.c.b16 %v5125, %v5125
      %v5146 = vshrl.u32 %v5126, 16
      %v5148 = vshll.u32 %v5126, 16
      %v5150 = vrot.slane %v5148, 1
      %v5151 = vor.u32 %v5146, %v5150
      %v5153 = vshll.u32 %v5127, 16
      %v5155 = vrot.slane %v5153, 1
      %v5156 = vsel %vm1740, %v5151, %v5155
      %v5157 = vshrl.u32 %v5127, 16
      %v5159 = vor.u32 %v5157, %v5155
      %v5161 = vshll.u32 %v5128, 16
      %v5163 = vrot.slane %v5161, 1
      %v5164 = vsel %vm1740, %v5159, %v5163
      %v5165 = vshrl.u32 %v5128, 16
      %v5167 = vor.u32 %v5165, %v5163
      %v5169 = vshll.u32 %v5129, 16
      %v5171 = vrot.slane %v5169, 1
      %v5172 = vsel %vm1740, %v5167, %v5171
      %v5173 = vshrl.u32 %v5129, 16
      %v5175 = vor.u32 %v5173, %v5171
      %v5177 = vshll.u32 %v5130, 16
      %v5179 = vrot.slane %v5177, 1
      %v5180 = vsel %vm1740, %v5175, %v5179
      %v5181 = vshrl.u32 %v5130, 16
      %v5183 = vor.u32 %v5181, %v5179
      %v5185 = vshll.u32 %v5131, 16
      %v5187 = vrot.slane %v5185, 1
      %v5188 = vsel %vm1740, %v5183, %v5187
      %v5189 = vshrl.u32 %v5131, 16
      %v5191 = vor.u32 %v5189, %v5187
      %v5193 = vshll.u32 %v5132, 16
      %v5195 = vrot.slane %v5193, 1
      %v5196 = vsel %vm1740, %v5191, %v5195
      %v5197 = vshrl.u32 %v5132, 16
      %v5199 = vor.u32 %v5197, %v5195
      %v5201 = vshll.u32 %v5133, 16
      %v5203 = vrot.slane %v5201, 1
      %v5204 = vsel %vm1740, %v5199, %v5203
      %v5205 = vshrl.u32 %v5133, 16
      %v5207 = vor.u32 %v5205, %v5203
      %v5209 = vshll.u32 %v5134, 16
      %v5211 = vrot.slane %v5209, 1
      %v5212 = vsel %vm1740, %v5207, %v5211
      %v5213 = vshrl.u32 %v5134, 16
      %v5215 = vor.u32 %v5213, %v5211
      %v5217 = vshll.u32 %v5135, 16
      %v5219 = vrot.slane %v5217, 1
      %v5220 = vsel %vm1740, %v5215, %v5219
      %v5221 = vshrl.u32 %v5135, 16
      %v5223 = vor.u32 %v5221, %v5219
      %v5225 = vshll.u32 %v5136, 16
      %v5227 = vrot.slane %v5225, 1
      %v5228 = vsel %vm1740, %v5223, %v5227
      %v5229 = vshrl.u32 %v5136, 16
      %v5231 = vor.u32 %v5229, %v5227
      %v5233 = vshll.u32 %v5137, 16
      %v5235 = vrot.slane %v5233, 1
      %v5236 = vsel %vm1740, %v5231, %v5235
      %v5237 = vshrl.u32 %v5137, 16
      %v5239 = vor.u32 %v5237, %v5235
      %v5241 = vshll.u32 %v5138, 16
      %v5243 = vrot.slane %v5241, 1
      %v5244 = vsel %vm1740, %v5239, %v5243
      %v5245 = vshrl.u32 %v5138, 16
      %v5247 = vor.u32 %v5245, %v5243
      %v5249 = vshll.u32 %v5139, 16
      %v5251 = vrot.slane %v5249, 1
      %v5252 = vsel %vm1740, %v5247, %v5251
      %v5253 = vshrl.u32 %v5139, 16
      %v5255 = vor.u32 %v5253, %v5251
      %v5257 = vshll.u32 %v5140, 16
      %v5259 = vrot.slane %v5257, 1
      %v5260 = vsel %vm1740, %v5255, %v5259
      %v5261 = vshrl.u32 %v5140, 16
      %v5263 = vor.u32 %v5261, %v5259
      %v5265 = vshll.u32 %v5141, 16
      %v5267 = vrot.slane %v5265, 1
      %v5268 = vsel %vm1740, %v5263, %v5267
      %v5269 = vshrl.u32 %v5141, 16
      %v5271 = vor.u32 %v5269, %v5267
      %v5273 = vshll.u32 %v5142, 16
      %v5275 = vrot.slane %v5273, 1
      %v5276 = vsel %vm1740, %v5271, %v5275
      %v5277 = vshrl.u32 %v5142, 16
      %v5279 = vor.u32 %v5277, %v5275
      %v5281 = vshll.u32 %v5143, 16
      %v5283 = vrot.slane %v5281, 1
      %v5284 = vsel %vm1740, %v5279, %v5283
      %v5285 = vshrl.u32 %v5143, 16
      %v5287 = vor.u32 %v5285, %v5283
      %v5289 = vshll.u32 %v5144, 16
      %v5291 = vrot.slane %v5289, 1
      %v5292 = vsel %vm1740, %v5287, %v5291
      %vm5293 = vcmask 64512
      %v5295 = vsel %vm5293, %v5156, 0
      %v5298 = vsel %vm5293, %v5164, 0
      %v5301 = vsel %vm5293, %v5172, 0
      %v5304 = vsel %vm5293, %v5180, 0
      %v5307 = vsel %vm5293, %v5188, 0
      %v5310 = vsel %vm5293, %v5196, 0
      %v5313 = vsel %vm5293, %v5204, 0
      %v5316 = vsel %vm5293, %v5212, 0
      %v5319 = vsel %vm5293, %v5220, 0
      %v5322 = vsel %vm5293, %v5228, 0
      %v5325 = vsel %vm5293, %v5236, 0
      %v5328 = vsel %vm5293, %v5244, 0
      %v5331 = vsel %vm5293, %v5252, 0
      %v5334 = vsel %vm5293, %v5260, 0
      %v5337 = vsel %vm5293, %v5268, 0
      %v5340 = vsel %vm5293, %v5276, 0
      %v5343 = vsel %vm5293, %v5284, 0
      %v5346 = vsel %vm5293, %v5292, 0
      %vm5348 = vcmask 1043456
      %v5350 = vsel %vm5348, %v5051, 0
      %5352 = vmatpush.bf16.msra.mxu0 0
      %5353 = vmatpush.bf16.msra.mxu0 0
      %5354 = vmatpush.bf16.msra.mxu0 0
      %5355 = vmatpush.bf16.msra.mxu0 0
      %5356 = vmatpush.bf16.msra.mxu0 0
      %5357 = vmatpush.bf16.msra.mxu0 0
      %5358 = vmatpush.bf16.msra.mxu0 0
      %5359 = vmatpush.bf16.msra.mxu0 %v5350
      %5360 = vmatmul.bf16.gmra.mxu0 %v5295
      %v5361 = vpop.f32.mrf.mxu0
      %v5362 = vadd.f32 0.0, %v5361
      %v5363 = vpop.f32.mrf.mxu0
      %v5364 = vadd.f32 0.0, %v5363
      %5365 = vmatmul.bf16.gmra.mxu0 %v5298
      %v5366 = vpop.f32.mrf.mxu0
      %v5367 = vadd.f32 0.0, %v5366
      %v5368 = vpop.f32.mrf.mxu0
      %v5369 = vadd.f32 0.0, %v5368
      %5370 = vmatmul.bf16.gmra.mxu0 %v5301
      %v5371 = vpop.f32.mrf.mxu0
      %v5372 = vadd.f32 0.0, %v5371
      %v5373 = vpop.f32.mrf.mxu0
      %v5374 = vadd.f32 0.0, %v5373
      %5375 = vmatmul.bf16.gmra.mxu0 %v5304
      %v5376 = vpop.f32.mrf.mxu0
      %v5377 = vadd.f32 0.0, %v5376
      %v5378 = vpop.f32.mrf.mxu0
      %v5379 = vadd.f32 0.0, %v5378
      %5380 = vmatmul.bf16.gmra.mxu0 %v5307
      %v5381 = vpop.f32.mrf.mxu0
      %v5382 = vadd.f32 0.0, %v5381
      %v5383 = vpop.f32.mrf.mxu0
      %v5384 = vadd.f32 0.0, %v5383
      %5385 = vmatmul.bf16.gmra.mxu0 %v5310
      %v5386 = vpop.f32.mrf.mxu0
      %v5387 = vadd.f32 0.0, %v5386
      %v5388 = vpop.f32.mrf.mxu0
      %v5389 = vadd.f32 0.0, %v5388
      %5390 = vmatmul.bf16.gmra.mxu0 %v5313
      %v5391 = vpop.f32.mrf.mxu0
      %v5392 = vadd.f32 0.0, %v5391
      %v5393 = vpop.f32.mrf.mxu0
      %v5394 = vadd.f32 0.0, %v5393
      %5395 = vmatmul.bf16.gmra.mxu0 %v5316
      %v5396 = vpop.f32.mrf.mxu0
      %v5397 = vadd.f32 0.0, %v5396
      %v5398 = vpop.f32.mrf.mxu0
      %v5399 = vadd.f32 0.0, %v5398
      %5400 = vmatmul.bf16.gmra.mxu0 %v5319
      %v5401 = vpop.f32.mrf.mxu0
      %v5402 = vadd.f32 0.0, %v5401
      %v5403 = vpop.f32.mrf.mxu0
      %v5404 = vadd.f32 0.0, %v5403
      %5405 = vmatmul.bf16.gmra.mxu0 %v5322
      %v5406 = vpop.f32.mrf.mxu0
      %v5407 = vadd.f32 0.0, %v5406
      %v5408 = vpop.f32.mrf.mxu0
      %v5409 = vadd.f32 0.0, %v5408
      %5410 = vmatmul.bf16.gmra.mxu0 %v5325
      %v5411 = vpop.f32.mrf.mxu0
      %v5412 = vadd.f32 0.0, %v5411
      %v5413 = vpop.f32.mrf.mxu0
      %v5414 = vadd.f32 0.0, %v5413
      %5415 = vmatmul.bf16.gmra.mxu0 %v5328
      %v5416 = vpop.f32.mrf.mxu0
      %v5417 = vadd.f32 0.0, %v5416
      %v5418 = vpop.f32.mrf.mxu0
      %v5419 = vadd.f32 0.0, %v5418
      %5420 = vmatmul.bf16.gmra.mxu0 %v5331
      %v5421 = vpop.f32.mrf.mxu0
      %v5422 = vadd.f32 0.0, %v5421
      %v5423 = vpop.f32.mrf.mxu0
      %v5424 = vadd.f32 0.0, %v5423
      %5425 = vmatmul.bf16.gmra.mxu0 %v5334
      %v5426 = vpop.f32.mrf.mxu0
      %v5427 = vadd.f32 0.0, %v5426
      %v5428 = vpop.f32.mrf.mxu0
      %v5429 = vadd.f32 0.0, %v5428
      %5430 = vmatmul.bf16.gmra.mxu0 %v5337
      %v5431 = vpop.f32.mrf.mxu0
      %v5432 = vadd.f32 0.0, %v5431
      %v5433 = vpop.f32.mrf.mxu0
      %v5434 = vadd.f32 0.0, %v5433
      %5435 = vmatmul.bf16.gmra.mxu0 %v5340
      %v5436 = vpop.f32.mrf.mxu0
      %v5437 = vadd.f32 0.0, %v5436
      %v5438 = vpop.f32.mrf.mxu0
      %v5439 = vadd.f32 0.0, %v5438
      %5440 = vmatmul.bf16.gmra.mxu0 %v5343
      %v5441 = vpop.f32.mrf.mxu0
      %v5442 = vadd.f32 0.0, %v5441
      %v5443 = vpop.f32.mrf.mxu0
      %v5444 = vadd.f32 0.0, %v5443
      %5445 = vmatmul.bf16.gmra.mxu0 %v5346
      %v5446 = vpop.f32.mrf.mxu0
      %v5447 = vadd.f32 0.0, %v5446
      %v5448 = vpop.f32.mrf.mxu0
      %v5449 = vadd.f32 0.0, %v5448
      %5450 = vdwg.mxu0
      %v5451 = vsel %vm5293, %v5126, 0
      %v5453 = vsel %vm5293, %v5127, 0
      %v5455 = vsel %vm5293, %v5128, 0
      %v5457 = vsel %vm5293, %v5129, 0
      %v5459 = vsel %vm5293, %v5130, 0
      %v5461 = vsel %vm5293, %v5131, 0
      %v5463 = vsel %vm5293, %v5132, 0
      %v5465 = vsel %vm5293, %v5133, 0
      %v5467 = vsel %vm5293, %v5134, 0
      %v5469 = vsel %vm5293, %v5135, 0
      %v5471 = vsel %vm5293, %v5136, 0
      %v5473 = vsel %vm5293, %v5137, 0
      %v5475 = vsel %vm5293, %v5138, 0
      %v5477 = vsel %vm5293, %v5139, 0
      %v5479 = vsel %vm5293, %v5140, 0
      %v5481 = vsel %vm5293, %v5141, 0
      %v5483 = vsel %vm5293, %v5142, 0
      %v5485 = vsel %vm5293, %v5143, 0
      %v5488 = vsel %vm5348, %v5048, 0
      %5490 = vmatpush.bf16.msra.mxu0 0
      %5491 = vmatpush.bf16.msra.mxu0 0
      %5492 = vmatpush.bf16.msra.mxu0 0
      %5493 = vmatpush.bf16.msra.mxu0 0
      %5494 = vmatpush.bf16.msra.mxu0 0
      %5495 = vmatpush.bf16.msra.mxu0 0
      %5496 = vmatpush.bf16.msra.mxu0 0
      %5497 = vmatpush.bf16.msra.mxu0 %v5488
      %5498 = vmatmul.bf16.gmra.mxu0 %v5451
      %v5499 = vpop.f32.mrf.mxu0
      %v5500 = vadd.f32 %v5362, %v5499
      %v5501 = vpop.f32.mrf.mxu0
      %v5502 = vadd.f32 %v5364, %v5501
      %5503 = vmatmul.bf16.gmra.mxu0 %v5453
      %v5504 = vpop.f32.mrf.mxu0
      %v5505 = vadd.f32 %v5367, %v5504
      %v5506 = vpop.f32.mrf.mxu0
      %v5507 = vadd.f32 %v5369, %v5506
      %5508 = vmatmul.bf16.gmra.mxu0 %v5455
      %v5509 = vpop.f32.mrf.mxu0
      %v5510 = vadd.f32 %v5372, %v5509
      %v5511 = vpop.f32.mrf.mxu0
      %v5512 = vadd.f32 %v5374, %v5511
      %5513 = vmatmul.bf16.gmra.mxu0 %v5457
      %v5514 = vpop.f32.mrf.mxu0
      %v5515 = vadd.f32 %v5377, %v5514
      %v5516 = vpop.f32.mrf.mxu0
      %v5517 = vadd.f32 %v5379, %v5516
      %5518 = vmatmul.bf16.gmra.mxu0 %v5459
      %v5519 = vpop.f32.mrf.mxu0
      %v5520 = vadd.f32 %v5382, %v5519
      %v5521 = vpop.f32.mrf.mxu0
      %v5522 = vadd.f32 %v5384, %v5521
      %5523 = vmatmul.bf16.gmra.mxu0 %v5461
      %v5524 = vpop.f32.mrf.mxu0
      %v5525 = vadd.f32 %v5387, %v5524
      %v5526 = vpop.f32.mrf.mxu0
      %v5527 = vadd.f32 %v5389, %v5526
      %5528 = vmatmul.bf16.gmra.mxu0 %v5463
      %v5529 = vpop.f32.mrf.mxu0
      %v5530 = vadd.f32 %v5392, %v5529
      %v5531 = vpop.f32.mrf.mxu0
      %v5532 = vadd.f32 %v5394, %v5531
      %5533 = vmatmul.bf16.gmra.mxu0 %v5465
      %v5534 = vpop.f32.mrf.mxu0
      %v5535 = vadd.f32 %v5397, %v5534
      %v5536 = vpop.f32.mrf.mxu0
      %v5537 = vadd.f32 %v5399, %v5536
      %5538 = vmatmul.bf16.gmra.mxu0 %v5467
      %v5539 = vpop.f32.mrf.mxu0
      %v5540 = vadd.f32 %v5402, %v5539
      %v5541 = vpop.f32.mrf.mxu0
      %v5542 = vadd.f32 %v5404, %v5541
      %5543 = vmatmul.bf16.gmra.mxu0 %v5469
      %v5544 = vpop.f32.mrf.mxu0
      %v5545 = vadd.f32 %v5407, %v5544
      %v5546 = vpop.f32.mrf.mxu0
      %v5547 = vadd.f32 %v5409, %v5546
      %5548 = vmatmul.bf16.gmra.mxu0 %v5471
      %v5549 = vpop.f32.mrf.mxu0
      %v5550 = vadd.f32 %v5412, %v5549
      %v5551 = vpop.f32.mrf.mxu0
      %v5552 = vadd.f32 %v5414, %v5551
      %5553 = vmatmul.bf16.gmra.mxu0 %v5473
      %v5554 = vpop.f32.mrf.mxu0
      %v5555 = vadd.f32 %v5417, %v5554
      %v5556 = vpop.f32.mrf.mxu0
      %v5557 = vadd.f32 %v5419, %v5556
      %5558 = vmatmul.bf16.gmra.mxu0 %v5475
      %v5559 = vpop.f32.mrf.mxu0
      %v5560 = vadd.f32 %v5422, %v5559
      %v5561 = vpop.f32.mrf.mxu0
      %v5562 = vadd.f32 %v5424, %v5561
      %5563 = vmatmul.bf16.gmra.mxu0 %v5477
      %v5564 = vpop.f32.mrf.mxu0
      %v5565 = vadd.f32 %v5427, %v5564
      %v5566 = vpop.f32.mrf.mxu0
      %v5567 = vadd.f32 %v5429, %v5566
      %5568 = vmatmul.bf16.gmra.mxu0 %v5479
      %v5569 = vpop.f32.mrf.mxu0
      %v5570 = vadd.f32 %v5432, %v5569
      %v5571 = vpop.f32.mrf.mxu0
      %v5572 = vadd.f32 %v5434, %v5571
      %5573 = vmatmul.bf16.gmra.mxu0 %v5481
      %v5574 = vpop.f32.mrf.mxu0
      %v5575 = vadd.f32 %v5437, %v5574
      %v5576 = vpop.f32.mrf.mxu0
      %v5577 = vadd.f32 %v5439, %v5576
      %5578 = vmatmul.bf16.gmra.mxu0 %v5483
      %v5579 = vpop.f32.mrf.mxu0
      %v5580 = vadd.f32 %v5442, %v5579
      %v5581 = vpop.f32.mrf.mxu0
      %v5582 = vadd.f32 %v5444, %v5581
      %5583 = vmatmul.bf16.gmra.mxu0 %v5485
      %v5584 = vpop.f32.mrf.mxu0
      %v5585 = vadd.f32 %v5447, %v5584
      %v5586 = vpop.f32.mrf.mxu0
      %v5587 = vadd.f32 %v5449, %v5586
      %5588 = vdwg.mxu0
      %v5589 = vld [vmem:[#allocation2] sm:$0xe]
      %s5590 = scalar_lea.vmem %s3, 8
      %v5591 = vld [vmem:[%s5590] sm:$0xf]
      %v5593 = vunpack.c.l.b16 %v5589
      %v5594 = vpack.c.b16 %v5090, %v5593
      %v5595 = vrot.slane %v5594, 1
      %v5596 = vrot.slane %v5127, 1
      %v5597 = vsel %vm2191, %v5595, %v5596
      %v5598 = vrot.slane %v5128, 1
      %v5599 = vsel %vm2191, %v5596, %v5598
      %v5600 = vrot.slane %v5129, 1
      %v5601 = vsel %vm2191, %v5598, %v5600
      %v5602 = vrot.slane %v5130, 1
      %v5603 = vsel %vm2191, %v5600, %v5602
      %v5604 = vrot.slane %v5131, 1
      %v5605 = vsel %vm2191, %v5602, %v5604
      %v5606 = vrot.slane %v5132, 1
      %v5607 = vsel %vm2191, %v5604, %v5606
      %v5608 = vrot.slane %v5133, 1
      %v5609 = vsel %vm2191, %v5606, %v5608
      %v5610 = vrot.slane %v5134, 1
      %v5611 = vsel %vm2191, %v5608, %v5610
      %v5612 = vrot.slane %v5135, 1
      %v5613 = vsel %vm2191, %v5610, %v5612
      %v5614 = vrot.slane %v5136, 1
      %v5615 = vsel %vm2191, %v5612, %v5614
      %v5616 = vrot.slane %v5137, 1
      %v5617 = vsel %vm2191, %v5614, %v5616
      %v5618 = vrot.slane %v5138, 1
      %v5619 = vsel %vm2191, %v5616, %v5618
      %v5620 = vrot.slane %v5139, 1
      %v5621 = vsel %vm2191, %v5618, %v5620
      %v5622 = vrot.slane %v5140, 1
      %v5623 = vsel %vm2191, %v5620, %v5622
      %v5624 = vrot.slane %v5141, 1
      %v5625 = vsel %vm2191, %v5622, %v5624
      %v5626 = vrot.slane %v5142, 1
      %v5627 = vsel %vm2191, %v5624, %v5626
      %v5628 = vrot.slane %v5143, 1
      %v5629 = vsel %vm2191, %v5626, %v5628
      %v5630 = vrot.slane %v5144, 1
      %v5631 = vsel %vm2191, %v5628, %v5630
      %v5633 = vsel %vm5293, %v5597, 0
      %v5636 = vsel %vm5293, %v5599, 0
      %v5639 = vsel %vm5293, %v5601, 0
      %v5642 = vsel %vm5293, %v5603, 0
      %v5645 = vsel %vm5293, %v5605, 0
      %v5648 = vsel %vm5293, %v5607, 0
      %v5651 = vsel %vm5293, %v5609, 0
      %v5654 = vsel %vm5293, %v5611, 0
      %v5657 = vsel %vm5293, %v5613, 0
      %v5660 = vsel %vm5293, %v5615, 0
      %v5663 = vsel %vm5293, %v5617, 0
      %v5666 = vsel %vm5293, %v5619, 0
      %v5669 = vsel %vm5293, %v5621, 0
      %v5672 = vsel %vm5293, %v5623, 0
      %v5675 = vsel %vm5293, %v5625, 0
      %v5678 = vsel %vm5293, %v5627, 0
      %v5681 = vsel %vm5293, %v5629, 0
      %v5684 = vsel %vm5293, %v5631, 0
      %v5687 = vsel %vm5348, %v5591, 0
      %5689 = vmatpush.bf16.msra.mxu0 0
      %5690 = vmatpush.bf16.msra.mxu0 0
      %5691 = vmatpush.bf16.msra.mxu0 0
      %5692 = vmatpush.bf16.msra.mxu0 0
      %5693 = vmatpush.bf16.msra.mxu0 0
      %5694 = vmatpush.bf16.msra.mxu0 0
      %5695 = vmatpush.bf16.msra.mxu0 0
      %5696 = vmatpush.bf16.msra.mxu0 %v5687
      %5697 = vmatmul.bf16.gmra.mxu0 %v5633
      %v5698 = vpop.f32.mrf.mxu0
      %v5699 = vadd.f32 0.0, %v5698
      %v5700 = vpop.f32.mrf.mxu0
      %v5701 = vadd.f32 0.0, %v5700
      %5702 = vmatmul.bf16.gmra.mxu0 %v5636
      %v5703 = vpop.f32.mrf.mxu0
      %v5704 = vadd.f32 0.0, %v5703
      %v5705 = vpop.f32.mrf.mxu0
      %v5706 = vadd.f32 0.0, %v5705
      %5707 = vmatmul.bf16.gmra.mxu0 %v5639
      %v5708 = vpop.f32.mrf.mxu0
      %v5709 = vadd.f32 0.0, %v5708
      %v5710 = vpop.f32.mrf.mxu0
      %v5711 = vadd.f32 0.0, %v5710
      %5712 = vmatmul.bf16.gmra.mxu0 %v5642
      %v5713 = vpop.f32.mrf.mxu0
      %v5714 = vadd.f32 0.0, %v5713
      %v5715 = vpop.f32.mrf.mxu0
      %v5716 = vadd.f32 0.0, %v5715
      %5717 = vmatmul.bf16.gmra.mxu0 %v5645
      %v5718 = vpop.f32.mrf.mxu0
      %v5719 = vadd.f32 0.0, %v5718
      %v5720 = vpop.f32.mrf.mxu0
      %v5721 = vadd.f32 0.0, %v5720
      %5722 = vmatmul.bf16.gmra.mxu0 %v5648
      %v5723 = vpop.f32.mrf.mxu0
      %v5724 = vadd.f32 0.0, %v5723
      %v5725 = vpop.f32.mrf.mxu0
      %v5726 = vadd.f32 0.0, %v5725
      %5727 = vmatmul.bf16.gmra.mxu0 %v5651
      %v5728 = vpop.f32.mrf.mxu0
      %v5729 = vadd.f32 0.0, %v5728
      %v5730 = vpop.f32.mrf.mxu0
      %v5731 = vadd.f32 0.0, %v5730
      %5732 = vmatmul.bf16.gmra.mxu0 %v5654
      %v5733 = vpop.f32.mrf.mxu0
      %v5734 = vadd.f32 0.0, %v5733
      %v5735 = vpop.f32.mrf.mxu0
      %v5736 = vadd.f32 0.0, %v5735
      %5737 = vmatmul.bf16.gmra.mxu0 %v5657
      %v5738 = vpop.f32.mrf.mxu0
      %v5739 = vadd.f32 0.0, %v5738
      %v5740 = vpop.f32.mrf.mxu0
      %v5741 = vadd.f32 0.0, %v5740
      %5742 = vmatmul.bf16.gmra.mxu0 %v5660
      %v5743 = vpop.f32.mrf.mxu0
      %v5744 = vadd.f32 0.0, %v5743
      %v5745 = vpop.f32.mrf.mxu0
      %v5746 = vadd.f32 0.0, %v5745
      %5747 = vmatmul.bf16.gmra.mxu0 %v5663
      %v5748 = vpop.f32.mrf.mxu0
      %v5749 = vadd.f32 0.0, %v5748
      %v5750 = vpop.f32.mrf.mxu0
      %v5751 = vadd.f32 0.0, %v5750
      %5752 = vmatmul.bf16.gmra.mxu0 %v5666
      %v5753 = vpop.f32.mrf.mxu0
      %v5754 = vadd.f32 0.0, %v5753
      %v5755 = vpop.f32.mrf.mxu0
      %v5756 = vadd.f32 0.0, %v5755
      %5757 = vmatmul.bf16.gmra.mxu0 %v5669
      %v5758 = vpop.f32.mrf.mxu0
      %v5759 = vadd.f32 0.0, %v5758
      %v5760 = vpop.f32.mrf.mxu0
      %v5761 = vadd.f32 0.0, %v5760
      %5762 = vmatmul.bf16.gmra.mxu0 %v5672
      %v5763 = vpop.f32.mrf.mxu0
      %v5764 = vadd.f32 0.0, %v5763
      %v5765 = vpop.f32.mrf.mxu0
      %v5766 = vadd.f32 0.0, %v5765
      %5767 = vmatmul.bf16.gmra.mxu0 %v5675
      %v5768 = vpop.f32.mrf.mxu0
      %v5769 = vadd.f32 0.0, %v5768
      %v5770 = vpop.f32.mrf.mxu0
      %v5771 = vadd.f32 0.0, %v5770
      %5772 = vmatmul.bf16.gmra.mxu0 %v5678
      %v5773 = vpop.f32.mrf.mxu0
      %v5774 = vadd.f32 0.0, %v5773
      %v5775 = vpop.f32.mrf.mxu0
      %v5776 = vadd.f32 0.0, %v5775
      %5777 = vmatmul.bf16.gmra.mxu0 %v5681
      %v5778 = vpop.f32.mrf.mxu0
      %v5779 = vadd.f32 0.0, %v5778
      %v5780 = vpop.f32.mrf.mxu0
      %v5781 = vadd.f32 0.0, %v5780
      %5782 = vmatmul.bf16.gmra.mxu0 %v5684
      %v5783 = vpop.f32.mrf.mxu0
      %v5784 = vadd.f32 0.0, %v5783
      %v5785 = vpop.f32.mrf.mxu0
      %v5786 = vadd.f32 0.0, %v5785
      %5787 = vdwg.mxu0
      %v5788 = vadd.f32 %v5500, %v5699
      %v5789 = vadd.f32 %v5502, %v5701
      %v5790 = vadd.f32 %v5505, %v5704
      %v5791 = vadd.f32 %v5507, %v5706
      %v5792 = vadd.f32 %v5510, %v5709
      %v5793 = vadd.f32 %v5512, %v5711
      %v5794 = vadd.f32 %v5515, %v5714
      %v5795 = vadd.f32 %v5517, %v5716
      %v5796 = vadd.f32 %v5520, %v5719
      %v5797 = vadd.f32 %v5522, %v5721
      %v5798 = vadd.f32 %v5525, %v5724
      %v5799 = vadd.f32 %v5527, %v5726
      %v5800 = vadd.f32 %v5530, %v5729
      %v5801 = vadd.f32 %v5532, %v5731
      %v5802 = vadd.f32 %v5535, %v5734
      %v5803 = vadd.f32 %v5537, %v5736
      %v5804 = vadd.f32 %v5540, %v5739
      %v5805 = vadd.f32 %v5542, %v5741
      %v5806 = vadd.f32 %v5545, %v5744
      %v5807 = vadd.f32 %v5547, %v5746
      %v5808 = vadd.f32 %v5550, %v5749
      %v5809 = vadd.f32 %v5552, %v5751
      %v5810 = vadd.f32 %v5555, %v5754
      %v5811 = vadd.f32 %v5557, %v5756
      %v5812 = vadd.f32 %v5560, %v5759
      %v5813 = vadd.f32 %v5562, %v5761
      %v5814 = vadd.f32 %v5565, %v5764
      %v5815 = vadd.f32 %v5567, %v5766
      %v5816 = vadd.f32 %v5570, %v5769
      %v5817 = vadd.f32 %v5572, %v5771
      %v5818 = vadd.f32 %v5575, %v5774
      %v5819 = vadd.f32 %v5577, %v5776
      %v5820 = vadd.f32 %v5580, %v5779
      %v5821 = vadd.f32 %v5582, %v5781
      %v5822 = vadd.f32 %v5585, %v5784
      %v5823 = vadd.f32 %v5587, %v5786
      %v5824 = vld [vmem:[#allocation2 + $0x8] sm:$0xe]
      %v5825 = vld [vmem:[#allocation2 + $0xc] sm:$0xf]
      %v5826 = vld [vmem:[#allocation2 + $0x10] sm:$0xf]
      %v5827 = vld [vmem:[#allocation2 + $0x14] sm:$0xf]
      %v5828 = vld [vmem:[#allocation2 + $0x18] sm:$0xf]
      %v5829 = vld [vmem:[#allocation2 + $0x1c] sm:$0xf]
      %v5830 = vld [vmem:[#allocation2 + $0x20] sm:$0xf]
      %v5831 = vld [vmem:[#allocation2 + $0x24] sm:$0xf]
      %v5832 = vld [vmem:[#allocation2 + $0x28] sm:$0xf]
      %v5833 = vld [vmem:[#allocation2 + $0x2c] sm:$0xf]
      %v5834 = vld [vmem:[#allocation2 + $0x30] sm:$0xf]
      %v5835 = vld [vmem:[#allocation2 + $0x34] sm:$0xf]
      %v5836 = vld [vmem:[#allocation2 + $0x38] sm:$0xf]
      %v5837 = vld [vmem:[#allocation2 + $0x3c] sm:$0xf]
      %v5838 = vld [vmem:[#allocation2 + $0x40] sm:$0xf]
      %v5839 = vld [vmem:[#allocation2 + $0x44] sm:$0xf]
      %v5840 = vld [vmem:[#allocation2 + $0x48] sm:$0xf]
      %v5841 = vld [vmem:[#allocation2 + $0x4c] sm:$0xf]
      %v5842 = vld [vmem:[#allocation2 + $0x50] sm:$0xf]
      %v5843 = vld [vmem:[#allocation2 + $0x54] sm:$0xf]
      %v5844 = vld [vmem:[#allocation2 + $0x58] sm:$0xf]
      %v5845 = vld [vmem:[#allocation2 + $0x5c] sm:$0xf]
      %v5846 = vld [vmem:[#allocation2 + $0x60] sm:$0xf]
      %v5847 = vld [vmem:[#allocation2 + $0x64] sm:$0xf]
      %v5848 = vld [vmem:[#allocation2 + $0x68] sm:$0xf]
      %v5849 = vld [vmem:[#allocation2 + $0x6c] sm:$0xf]
      %v5850 = vld [vmem:[#allocation2 + $0x70] sm:$0xf]
      %v5851 = vld [vmem:[#allocation2 + $0x74] sm:$0xf]
      %v5852 = vld [vmem:[#allocation2 + $0x78] sm:$0xf]
      %v5853 = vld [vmem:[#allocation2 + $0x7c] sm:$0xf]
      %v5854 = vld [vmem:[#allocation2 + $0x80] sm:$0xf]
      %v5855 = vld [vmem:[#allocation2 + $0x84] sm:$0xf]
      %v5856 = vld [vmem:[#allocation2 + $0x88] sm:$0xf]
      %v5857 = vld [vmem:[#allocation2 + $0x8c] sm:$0xf]
      %v5858 = vld [vmem:[#allocation2 + $0x90] sm:$0xf]
      %v5859 = vld [vmem:[#allocation2 + $0x94] sm:$0xf]
      %v5860 = vld [vmem:[#allocation2 + $0x98] sm:$0x1]
      %s5861 = scalar_lea.vmem %s3, 12
      %v5862 = vld [vmem:[%s5861] sm:$0xf]
      %v5900 = vunpack.c.l.b16 %v5824
      %v5901 = vunpack.c.l.b16 %v5825
      %v5902 = vunpack.c.l.b16 %v5826
      %v5903 = vunpack.c.l.b16 %v5827
      %v5904 = vunpack.c.l.b16 %v5828
      %v5905 = vunpack.c.l.b16 %v5829
      %v5906 = vunpack.c.l.b16 %v5830
      %v5907 = vunpack.c.l.b16 %v5831
      %v5908 = vunpack.c.l.b16 %v5832
      %v5909 = vunpack.c.l.b16 %v5833
      %v5910 = vunpack.c.l.b16 %v5834
      %v5911 = vunpack.c.l.b16 %v5835
      %v5912 = vunpack.c.l.b16 %v5836
      %v5913 = vunpack.c.l.b16 %v5837
      %v5914 = vunpack.c.l.b16 %v5838
      %v5915 = vunpack.c.l.b16 %v5839
      %v5916 = vunpack.c.l.b16 %v5840
      %v5917 = vunpack.c.l.b16 %v5841
      %v5918 = vunpack.c.l.b16 %v5842
      %v5919 = vunpack.c.l.b16 %v5843
      %v5920 = vunpack.c.l.b16 %v5844
      %v5921 = vunpack.c.l.b16 %v5845
      %v5922 = vunpack.c.l.b16 %v5846
      %v5923 = vunpack.c.l.b16 %v5847
      %v5924 = vunpack.c.l.b16 %v5848
      %v5925 = vunpack.c.l.b16 %v5849
      %v5926 = vunpack.c.l.b16 %v5850
      %v5927 = vunpack.c.l.b16 %v5851
      %v5928 = vunpack.c.l.b16 %v5852
      %v5929 = vunpack.c.l.b16 %v5853
      %v5930 = vunpack.c.l.b16 %v5854
      %v5931 = vunpack.c.l.b16 %v5855
      %v5932 = vunpack.c.l.b16 %v5856
      %v5933 = vunpack.c.l.b16 %v5857
      %v5934 = vunpack.c.l.b16 %v5858
      %v5935 = vunpack.c.l.b16 %v5859
      %v5936 = vunpack.c.l.b16 %v5860
      %v5937 = vpack.c.b16 %v5901, %v5900
      %v5938 = vpack.c.b16 %v5903, %v5902
      %v5939 = vpack.c.b16 %v5905, %v5904
      %v5940 = vpack.c.b16 %v5907, %v5906
      %v5941 = vpack.c.b16 %v5909, %v5908
      %v5942 = vpack.c.b16 %v5911, %v5910
      %v5943 = vpack.c.b16 %v5913, %v5912
      %v5944 = vpack.c.b16 %v5915, %v5914
      %v5945 = vpack.c.b16 %v5917, %v5916
      %v5946 = vpack.c.b16 %v5919, %v5918
      %v5947 = vpack.c.b16 %v5921, %v5920
      %v5948 = vpack.c.b16 %v5923, %v5922
      %v5949 = vpack.c.b16 %v5925, %v5924
      %v5950 = vpack.c.b16 %v5927, %v5926
      %v5951 = vpack.c.b16 %v5929, %v5928
      %v5952 = vpack.c.b16 %v5931, %v5930
      %v5953 = vpack.c.b16 %v5933, %v5932
      %v5954 = vpack.c.b16 %v5935, %v5934
      %v5955 = vpack.c.b16 %v5936, %v5936
      %v5956 = vrot.slane %v5937, 1
      %v5957 = vrot.slane %v5938, 1
      %v5958 = vsel %vm2191, %v5956, %v5957
      %v5959 = vrot.slane %v5939, 1
      %v5960 = vsel %vm2191, %v5957, %v5959
      %v5961 = vrot.slane %v5940, 1
      %v5962 = vsel %vm2191, %v5959, %v5961
      %v5963 = vrot.slane %v5941, 1
      %v5964 = vsel %vm2191, %v5961, %v5963
      %v5965 = vrot.slane %v5942, 1
      %v5966 = vsel %vm2191, %v5963, %v5965
      %v5967 = vrot.slane %v5943, 1
      %v5968 = vsel %vm2191, %v5965, %v5967
      %v5969 = vrot.slane %v5944, 1
      %v5970 = vsel %vm2191, %v5967, %v5969
      %v5971 = vrot.slane %v5945, 1
      %v5972 = vsel %vm2191, %v5969, %v5971
      %v5973 = vrot.slane %v5946, 1
      %v5974 = vsel %vm2191, %v5971, %v5973
      %v5975 = vrot.slane %v5947, 1
      %v5976 = vsel %vm2191, %v5973, %v5975
      %v5977 = vrot.slane %v5948, 1
      %v5978 = vsel %vm2191, %v5975, %v5977
      %v5979 = vrot.slane %v5949, 1
      %v5980 = vsel %vm2191, %v5977, %v5979
      %v5981 = vrot.slane %v5950, 1
      %v5982 = vsel %vm2191, %v5979, %v5981
      %v5983 = vrot.slane %v5951, 1
      %v5984 = vsel %vm2191, %v5981, %v5983
      %v5985 = vrot.slane %v5952, 1
      %v5986 = vsel %vm2191, %v5983, %v5985
      %v5987 = vrot.slane %v5953, 1
      %v5988 = vsel %vm2191, %v5985, %v5987
      %v5989 = vrot.slane %v5954, 1
      %v5990 = vsel %vm2191, %v5987, %v5989
      %v5991 = vrot.slane %v5955, 1
      %v5992 = vsel %vm2191, %v5989, %v5991
      %v5994 = vsel %vm5293, %v5958, 0
      %v5997 = vsel %vm5293, %v5960, 0
      %v6000 = vsel %vm5293, %v5962, 0
      %v6003 = vsel %vm5293, %v5964, 0
      %v6006 = vsel %vm5293, %v5966, 0
      %v6009 = vsel %vm5293, %v5968, 0
      %v6012 = vsel %vm5293, %v5970, 0
      %v6015 = vsel %vm5293, %v5972, 0
      %v6018 = vsel %vm5293, %v5974, 0
      %v6021 = vsel %vm5293, %v5976, 0
      %v6024 = vsel %vm5293, %v5978, 0
      %v6027 = vsel %vm5293, %v5980, 0
      %v6030 = vsel %vm5293, %v5982, 0
      %v6033 = vsel %vm5293, %v5984, 0
      %v6036 = vsel %vm5293, %v5986, 0
      %v6039 = vsel %vm5293, %v5988, 0
      %v6042 = vsel %vm5293, %v5990, 0
      %v6045 = vsel %vm5293, %v5992, 0
      %v6048 = vsel %vm5348, %v5862, 0
      %6050 = vmatpush.bf16.msra.mxu0 0
      %6051 = vmatpush.bf16.msra.mxu0 0
      %6052 = vmatpush.bf16.msra.mxu0 0
      %6053 = vmatpush.bf16.msra.mxu0 0
      %6054 = vmatpush.bf16.msra.mxu0 0
      %6055 = vmatpush.bf16.msra.mxu0 0
      %6056 = vmatpush.bf16.msra.mxu0 0
      %6057 = vmatpush.bf16.msra.mxu0 %v6048
      %6058 = vmatmul.bf16.gmra.mxu0 %v5994
      %v6059 = vpop.f32.mrf.mxu0
      %v6060 = vadd.f32 0.0, %v6059
      %v6061 = vpop.f32.mrf.mxu0
      %v6062 = vadd.f32 0.0, %v6061
      %6063 = vmatmul.bf16.gmra.mxu0 %v5997
      %v6064 = vpop.f32.mrf.mxu0
      %v6065 = vadd.f32 0.0, %v6064
      %v6066 = vpop.f32.mrf.mxu0
      %v6067 = vadd.f32 0.0, %v6066
      %6068 = vmatmul.bf16.gmra.mxu0 %v6000
      %v6069 = vpop.f32.mrf.mxu0
      %v6070 = vadd.f32 0.0, %v6069
      %v6071 = vpop.f32.mrf.mxu0
      %v6072 = vadd.f32 0.0, %v6071
      %6073 = vmatmul.bf16.gmra.mxu0 %v6003
      %v6074 = vpop.f32.mrf.mxu0
      %v6075 = vadd.f32 0.0, %v6074
      %v6076 = vpop.f32.mrf.mxu0
      %v6077 = vadd.f32 0.0, %v6076
      %6078 = vmatmul.bf16.gmra.mxu0 %v6006
      %v6079 = vpop.f32.mrf.mxu0
      %v6080 = vadd.f32 0.0, %v6079
      %v6081 = vpop.f32.mrf.mxu0
      %v6082 = vadd.f32 0.0, %v6081
      %6083 = vmatmul.bf16.gmra.mxu0 %v6009
      %v6084 = vpop.f32.mrf.mxu0
      %v6085 = vadd.f32 0.0, %v6084
      %v6086 = vpop.f32.mrf.mxu0
      %v6087 = vadd.f32 0.0, %v6086
      %6088 = vmatmul.bf16.gmra.mxu0 %v6012
      %v6089 = vpop.f32.mrf.mxu0
      %v6090 = vadd.f32 0.0, %v6089
      %v6091 = vpop.f32.mrf.mxu0
      %v6092 = vadd.f32 0.0, %v6091
      %6093 = vmatmul.bf16.gmra.mxu0 %v6015
      %v6094 = vpop.f32.mrf.mxu0
      %v6095 = vadd.f32 0.0, %v6094
      %v6096 = vpop.f32.mrf.mxu0
      %v6097 = vadd.f32 0.0, %v6096
      %6098 = vmatmul.bf16.gmra.mxu0 %v6018
      %v6099 = vpop.f32.mrf.mxu0
      %v6100 = vadd.f32 0.0, %v6099
      %v6101 = vpop.f32.mrf.mxu0
      %v6102 = vadd.f32 0.0, %v6101
      %6103 = vmatmul.bf16.gmra.mxu0 %v6021
      %v6104 = vpop.f32.mrf.mxu0
      %v6105 = vadd.f32 0.0, %v6104
      %v6106 = vpop.f32.mrf.mxu0
      %v6107 = vadd.f32 0.0, %v6106
      %6108 = vmatmul.bf16.gmra.mxu0 %v6024
      %v6109 = vpop.f32.mrf.mxu0
      %v6110 = vadd.f32 0.0, %v6109
      %v6111 = vpop.f32.mrf.mxu0
      %v6112 = vadd.f32 0.0, %v6111
      %6113 = vmatmul.bf16.gmra.mxu0 %v6027
      %v6114 = vpop.f32.mrf.mxu0
      %v6115 = vadd.f32 0.0, %v6114
      %v6116 = vpop.f32.mrf.mxu0
      %v6117 = vadd.f32 0.0, %v6116
      %6118 = vmatmul.bf16.gmra.mxu0 %v6030
      %v6119 = vpop.f32.mrf.mxu0
      %v6120 = vadd.f32 0.0, %v6119
      %v6121 = vpop.f32.mrf.mxu0
      %v6122 = vadd.f32 0.0, %v6121
      %6123 = vmatmul.bf16.gmra.mxu0 %v6033
      %v6124 = vpop.f32.mrf.mxu0
      %v6125 = vadd.f32 0.0, %v6124
      %v6126 = vpop.f32.mrf.mxu0
      %v6127 = vadd.f32 0.0, %v6126
      %6128 = vmatmul.bf16.gmra.mxu0 %v6036
      %v6129 = vpop.f32.mrf.mxu0
      %v6130 = vadd.f32 0.0, %v6129
      %v6131 = vpop.f32.mrf.mxu0
      %v6132 = vadd.f32 0.0, %v6131
      %6133 = vmatmul.bf16.gmra.mxu0 %v6039
      %v6134 = vpop.f32.mrf.mxu0
      %v6135 = vadd.f32 0.0, %v6134
      %v6136 = vpop.f32.mrf.mxu0
      %v6137 = vadd.f32 0.0, %v6136
      %6138 = vmatmul.bf16.gmra.mxu0 %v6042
      %v6139 = vpop.f32.mrf.mxu0
      %v6140 = vadd.f32 0.0, %v6139
      %v6141 = vpop.f32.mrf.mxu0
      %v6142 = vadd.f32 0.0, %v6141
      %6143 = vmatmul.bf16.gmra.mxu0 %v6045
      %v6144 = vpop.f32.mrf.mxu0
      %v6145 = vadd.f32 0.0, %v6144
      %v6146 = vpop.f32.mrf.mxu0
      %v6147 = vadd.f32 0.0, %v6146
      %6148 = vdwg.mxu0
      %v6149 = vadd.f32 %v5788, %v6060
      %v6150 = vadd.f32 %v5789, %v6062
      %v6151 = vadd.f32 %v5790, %v6065
      %v6152 = vadd.f32 %v5791, %v6067
      %v6153 = vadd.f32 %v5792, %v6070
      %v6154 = vadd.f32 %v5793, %v6072
      %v6155 = vadd.f32 %v5794, %v6075
      %v6156 = vadd.f32 %v5795, %v6077
      %v6157 = vadd.f32 %v5796, %v6080
      %v6158 = vadd.f32 %v5797, %v6082
      %v6159 = vadd.f32 %v5798, %v6085
      %v6160 = vadd.f32 %v5799, %v6087
      %v6161 = vadd.f32 %v5800, %v6090
      %v6162 = vadd.f32 %v5801, %v6092
      %v6163 = vadd.f32 %v5802, %v6095
      %v6164 = vadd.f32 %v5803, %v6097
      %v6165 = vadd.f32 %v5804, %v6100
      %v6166 = vadd.f32 %v5805, %v6102
      %v6167 = vadd.f32 %v5806, %v6105
      %v6168 = vadd.f32 %v5807, %v6107
      %v6169 = vadd.f32 %v5808, %v6110
      %v6170 = vadd.f32 %v5809, %v6112
      %v6171 = vadd.f32 %v5810, %v6115
      %v6172 = vadd.f32 %v5811, %v6117
      %v6173 = vadd.f32 %v5812, %v6120
      %v6174 = vadd.f32 %v5813, %v6122
      %v6175 = vadd.f32 %v5814, %v6125
      %v6176 = vadd.f32 %v5815, %v6127
      %v6177 = vadd.f32 %v5816, %v6130
      %v6178 = vadd.f32 %v5817, %v6132
      %v6179 = vadd.f32 %v5818, %v6135
      %v6180 = vadd.f32 %v5819, %v6137
      %v6181 = vadd.f32 %v5820, %v6140
      %v6182 = vadd.f32 %v5821, %v6142
      %v6183 = vadd.f32 %v5822, %v6145
      %v6184 = vadd.f32 %v5823, %v6147
      %v6185 = vld [vmem:[#allocation2 + $0x98] sm:$0x3]
      %s6186 = scalar_lea.vmem %s3, 16
      %v6187 = vld [vmem:[%s6186] sm:$0xf]
      %v6189 = vunpack.c.l.b16 %v6185
      %v6190 = vpack.c.b16 %v6189, %v6189
      %v6192 = vshrl.u32 %v5937, 16
      %v6194 = vrot.slane %v6192, 1
      %v6195 = vshll.u32 %v5937, 16
      %v6197 = vrot.slane %v6195, 2
      %v6198 = vor.u32 %v6194, %v6197
      %v6200 = vshrl.u32 %v5938, 16
      %v6202 = vrot.slane %v6200, 1
      %v6203 = vshll.u32 %v5938, 16
      %v6205 = vrot.slane %v6203, 2
      %v6206 = vor.u32 %v6202, %v6205
      %v6207 = vsel %vm2788, %v6198, %v6206
      %v6209 = vshrl.u32 %v5939, 16
      %v6211 = vrot.slane %v6209, 1
      %v6212 = vshll.u32 %v5939, 16
      %v6214 = vrot.slane %v6212, 2
      %v6215 = vor.u32 %v6211, %v6214
      %v6216 = vsel %vm2788, %v6206, %v6215
      %v6218 = vshrl.u32 %v5940, 16
      %v6220 = vrot.slane %v6218, 1
      %v6221 = vshll.u32 %v5940, 16
      %v6223 = vrot.slane %v6221, 2
      %v6224 = vor.u32 %v6220, %v6223
      %v6225 = vsel %vm2788, %v6215, %v6224
      %v6227 = vshrl.u32 %v5941, 16
      %v6229 = vrot.slane %v6227, 1
      %v6230 = vshll.u32 %v5941, 16
      %v6232 = vrot.slane %v6230, 2
      %v6233 = vor.u32 %v6229, %v6232
      %v6234 = vsel %vm2788, %v6224, %v6233
      %v6236 = vshrl.u32 %v5942, 16
      %v6238 = vrot.slane %v6236, 1
      %v6239 = vshll.u32 %v5942, 16
      %v6241 = vrot.slane %v6239, 2
      %v6242 = vor.u32 %v6238, %v6241
      %v6243 = vsel %vm2788, %v6233, %v6242
      %v6245 = vshrl.u32 %v5943, 16
      %v6247 = vrot.slane %v6245, 1
      %v6248 = vshll.u32 %v5943, 16
      %v6250 = vrot.slane %v6248, 2
      %v6251 = vor.u32 %v6247, %v6250
      %v6252 = vsel %vm2788, %v6242, %v6251
      %v6254 = vshrl.u32 %v5944, 16
      %v6256 = vrot.slane %v6254, 1
      %v6257 = vshll.u32 %v5944, 16
      %v6259 = vrot.slane %v6257, 2
      %v6260 = vor.u32 %v6256, %v6259
      %v6261 = vsel %vm2788, %v6251, %v6260
      %v6263 = vshrl.u32 %v5945, 16
      %v6265 = vrot.slane %v6263, 1
      %v6266 = vshll.u32 %v5945, 16
      %v6268 = vrot.slane %v6266, 2
      %v6269 = vor.u32 %v6265, %v6268
      %v6270 = vsel %vm2788, %v6260, %v6269
      %v6272 = vshrl.u32 %v5946, 16
      %v6274 = vrot.slane %v6272, 1
      %v6275 = vshll.u32 %v5946, 16
      %v6277 = vrot.slane %v6275, 2
      %v6278 = vor.u32 %v6274, %v6277
      %v6279 = vsel %vm2788, %v6269, %v6278
      %v6281 = vshrl.u32 %v5947, 16
      %v6283 = vrot.slane %v6281, 1
      %v6284 = vshll.u32 %v5947, 16
      %v6286 = vrot.slane %v6284, 2
      %v6287 = vor.u32 %v6283, %v6286
      %v6288 = vsel %vm2788, %v6278, %v6287
      %v6290 = vshrl.u32 %v5948, 16
      %v6292 = vrot.slane %v6290, 1
      %v6293 = vshll.u32 %v5948, 16
      %v6295 = vrot.slane %v6293, 2
      %v6296 = vor.u32 %v6292, %v6295
      %v6297 = vsel %vm2788, %v6287, %v6296
      %v6299 = vshrl.u32 %v5949, 16
      %v6301 = vrot.slane %v6299, 1
      %v6302 = vshll.u32 %v5949, 16
      %v6304 = vrot.slane %v6302, 2
      %v6305 = vor.u32 %v6301, %v6304
      %v6306 = vsel %vm2788, %v6296, %v6305
      %v6308 = vshrl.u32 %v5950, 16
      %v6310 = vrot.slane %v6308, 1
      %v6311 = vshll.u32 %v5950, 16
      %v6313 = vrot.slane %v6311, 2
      %v6314 = vor.u32 %v6310, %v6313
      %v6315 = vsel %vm2788, %v6305, %v6314
      %v6317 = vshrl.u32 %v5951, 16
      %v6319 = vrot.slane %v6317, 1
      %v6320 = vshll.u32 %v5951, 16
      %v6322 = vrot.slane %v6320, 2
      %v6323 = vor.u32 %v6319, %v6322
      %v6324 = vsel %vm2788, %v6314, %v6323
      %v6326 = vshrl.u32 %v5952, 16
      %v6328 = vrot.slane %v6326, 1
      %v6329 = vshll.u32 %v5952, 16
      %v6331 = vrot.slane %v6329, 2
      %v6332 = vor.u32 %v6328, %v6331
      %v6333 = vsel %vm2788, %v6323, %v6332
      %v6335 = vshrl.u32 %v5953, 16
      %v6337 = vrot.slane %v6335, 1
      %v6338 = vshll.u32 %v5953, 16
      %v6340 = vrot.slane %v6338, 2
      %v6341 = vor.u32 %v6337, %v6340
      %v6342 = vsel %vm2788, %v6332, %v6341
      %v6344 = vshrl.u32 %v5954, 16
      %v6346 = vrot.slane %v6344, 1
      %v6347 = vshll.u32 %v5954, 16
      %v6349 = vrot.slane %v6347, 2
      %v6350 = vor.u32 %v6346, %v6349
      %v6351 = vsel %vm2788, %v6341, %v6350
      %v6353 = vshrl.u32 %v6190, 16
      %v6355 = vrot.slane %v6353, 1
      %v6356 = vshll.u32 %v6190, 16
      %v6358 = vrot.slane %v6356, 2
      %v6359 = vor.u32 %v6355, %v6358
      %v6360 = vsel %vm2788, %v6350, %v6359
      %v6362 = vsel %vm5293, %v6207, 0
      %v6365 = vsel %vm5293, %v6216, 0
      %v6368 = vsel %vm5293, %v6225, 0
      %v6371 = vsel %vm5293, %v6234, 0
      %v6374 = vsel %vm5293, %v6243, 0
      %v6377 = vsel %vm5293, %v6252, 0
      %v6380 = vsel %vm5293, %v6261, 0
      %v6383 = vsel %vm5293, %v6270, 0
      %v6386 = vsel %vm5293, %v6279, 0
      %v6389 = vsel %vm5293, %v6288, 0
      %v6392 = vsel %vm5293, %v6297, 0
      %v6395 = vsel %vm5293, %v6306, 0
      %v6398 = vsel %vm5293, %v6315, 0
      %v6401 = vsel %vm5293, %v6324, 0
      %v6404 = vsel %vm5293, %v6333, 0
      %v6407 = vsel %vm5293, %v6342, 0
      %v6410 = vsel %vm5293, %v6351, 0
      %v6413 = vsel %vm5293, %v6360, 0
      %v6416 = vsel %vm5348, %v6187, 0
      %6418 = vmatpush.bf16.msra.mxu0 0
      %6419 = vmatpush.bf16.msra.mxu0 0
      %6420 = vmatpush.bf16.msra.mxu0 0
      %6421 = vmatpush.bf16.msra.mxu0 0
      %6422 = vmatpush.bf16.msra.mxu0 0
      %6423 = vmatpush.bf16.msra.mxu0 0
      %6424 = vmatpush.bf16.msra.mxu0 0
      %6425 = vmatpush.bf16.msra.mxu0 %v6416
      %6426 = vmatmul.bf16.gmra.mxu0 %v6362
      %v6427 = vpop.f32.mrf.mxu0
      %v6428 = vadd.f32 0.0, %v6427
      %v6429 = vpop.f32.mrf.mxu0
      %v6430 = vadd.f32 0.0, %v6429
      %6431 = vmatmul.bf16.gmra.mxu0 %v6365
      %v6432 = vpop.f32.mrf.mxu0
      %v6433 = vadd.f32 0.0, %v6432
      %v6434 = vpop.f32.mrf.mxu0
      %v6435 = vadd.f32 0.0, %v6434
      %6436 = vmatmul.bf16.gmra.mxu0 %v6368
      %v6437 = vpop.f32.mrf.mxu0
      %v6438 = vadd.f32 0.0, %v6437
      %v6439 = vpop.f32.mrf.mxu0
      %v6440 = vadd.f32 0.0, %v6439
      %6441 = vmatmul.bf16.gmra.mxu0 %v6371
      %v6442 = vpop.f32.mrf.mxu0
      %v6443 = vadd.f32 0.0, %v6442
      %v6444 = vpop.f32.mrf.mxu0
      %v6445 = vadd.f32 0.0, %v6444
      %6446 = vmatmul.bf16.gmra.mxu0 %v6374
      %v6447 = vpop.f32.mrf.mxu0
      %v6448 = vadd.f32 0.0, %v6447
      %v6449 = vpop.f32.mrf.mxu0
      %v6450 = vadd.f32 0.0, %v6449
      %6451 = vmatmul.bf16.gmra.mxu0 %v6377
      %v6452 = vpop.f32.mrf.mxu0
      %v6453 = vadd.f32 0.0, %v6452
      %v6454 = vpop.f32.mrf.mxu0
      %v6455 = vadd.f32 0.0, %v6454
      %6456 = vmatmul.bf16.gmra.mxu0 %v6380
      %v6457 = vpop.f32.mrf.mxu0
      %v6458 = vadd.f32 0.0, %v6457
      %v6459 = vpop.f32.mrf.mxu0
      %v6460 = vadd.f32 0.0, %v6459
      %6461 = vmatmul.bf16.gmra.mxu0 %v6383
      %v6462 = vpop.f32.mrf.mxu0
      %v6463 = vadd.f32 0.0, %v6462
      %v6464 = vpop.f32.mrf.mxu0
      %v6465 = vadd.f32 0.0, %v6464
      %6466 = vmatmul.bf16.gmra.mxu0 %v6386
      %v6467 = vpop.f32.mrf.mxu0
      %v6468 = vadd.f32 0.0, %v6467
      %v6469 = vpop.f32.mrf.mxu0
      %v6470 = vadd.f32 0.0, %v6469
      %6471 = vmatmul.bf16.gmra.mxu0 %v6389
      %v6472 = vpop.f32.mrf.mxu0
      %v6473 = vadd.f32 0.0, %v6472
      %v6474 = vpop.f32.mrf.mxu0
      %v6475 = vadd.f32 0.0, %v6474
      %6476 = vmatmul.bf16.gmra.mxu0 %v6392
      %v6477 = vpop.f32.mrf.mxu0
      %v6478 = vadd.f32 0.0, %v6477
      %v6479 = vpop.f32.mrf.mxu0
      %v6480 = vadd.f32 0.0, %v6479
      %6481 = vmatmul.bf16.gmra.mxu0 %v6395
      %v6482 = vpop.f32.mrf.mxu0
      %v6483 = vadd.f32 0.0, %v6482
      %v6484 = vpop.f32.mrf.mxu0
      %v6485 = vadd.f32 0.0, %v6484
      %6486 = vmatmul.bf16.gmra.mxu0 %v6398
      %v6487 = vpop.f32.mrf.mxu0
      %v6488 = vadd.f32 0.0, %v6487
      %v6489 = vpop.f32.mrf.mxu0
      %v6490 = vadd.f32 0.0, %v6489
      %6491 = vmatmul.bf16.gmra.mxu0 %v6401
      %v6492 = vpop.f32.mrf.mxu0
      %v6493 = vadd.f32 0.0, %v6492
      %v6494 = vpop.f32.mrf.mxu0
      %v6495 = vadd.f32 0.0, %v6494
      %6496 = vmatmul.bf16.gmra.mxu0 %v6404
      %v6497 = vpop.f32.mrf.mxu0
      %v6498 = vadd.f32 0.0, %v6497
      %v6499 = vpop.f32.mrf.mxu0
      %v6500 = vadd.f32 0.0, %v6499
      %6501 = vmatmul.bf16.gmra.mxu0 %v6407
      %v6502 = vpop.f32.mrf.mxu0
      %v6503 = vadd.f32 0.0, %v6502
      %v6504 = vpop.f32.mrf.mxu0
      %v6505 = vadd.f32 0.0, %v6504
      %6506 = vmatmul.bf16.gmra.mxu0 %v6410
      %v6507 = vpop.f32.mrf.mxu0
      %v6508 = vadd.f32 0.0, %v6507
      %v6509 = vpop.f32.mrf.mxu0
      %v6510 = vadd.f32 0.0, %v6509
      %6511 = vmatmul.bf16.gmra.mxu0 %v6413
      %v6512 = vpop.f32.mrf.mxu0
      %v6513 = vadd.f32 0.0, %v6512
      %v6514 = vpop.f32.mrf.mxu0
      %v6515 = vadd.f32 0.0, %v6514
      %6516 = vdwg.mxu0
      %v6517 = vadd.f32 %v6149, %v6428
      %v6518 = vadd.f32 %v6150, %v6430
      %v6519 = vadd.f32 %v6151, %v6433
      %v6520 = vadd.f32 %v6152, %v6435
      %v6521 = vadd.f32 %v6153, %v6438
      %v6522 = vadd.f32 %v6154, %v6440
      %v6523 = vadd.f32 %v6155, %v6443
      %v6524 = vadd.f32 %v6156, %v6445
      %v6525 = vadd.f32 %v6157, %v6448
      %v6526 = vadd.f32 %v6158, %v6450
      %v6527 = vadd.f32 %v6159, %v6453
      %v6528 = vadd.f32 %v6160, %v6455
      %v6529 = vadd.f32 %v6161, %v6458
      %v6530 = vadd.f32 %v6162, %v6460
      %v6531 = vadd.f32 %v6163, %v6463
      %v6532 = vadd.f32 %v6164, %v6465
      %v6533 = vadd.f32 %v6165, %v6468
      %v6534 = vadd.f32 %v6166, %v6470
      %v6535 = vadd.f32 %v6167, %v6473
      %v6536 = vadd.f32 %v6168, %v6475
      %v6537 = vadd.f32 %v6169, %v6478
      %v6538 = vadd.f32 %v6170, %v6480
      %v6539 = vadd.f32 %v6171, %v6483
      %v6540 = vadd.f32 %v6172, %v6485
      %v6541 = vadd.f32 %v6173, %v6488
      %v6542 = vadd.f32 %v6174, %v6490
      %v6543 = vadd.f32 %v6175, %v6493
      %v6544 = vadd.f32 %v6176, %v6495
      %v6545 = vadd.f32 %v6177, %v6498
      %v6546 = vadd.f32 %v6178, %v6500
      %v6547 = vadd.f32 %v6179, %v6503
      %v6548 = vadd.f32 %v6180, %v6505
      %v6549 = vadd.f32 %v6181, %v6508
      %v6550 = vadd.f32 %v6182, %v6510
      %v6551 = vadd.f32 %v6183, %v6513
      %v6552 = vadd.f32 %v6184, %v6515
      %v6553 = vld [vmem:[#allocation2 + $0x8] sm:$0xc]
      %s6554 = scalar_lea.vmem %s3, 20
      %v6555 = vld [vmem:[%s6554] sm:$0xf]
      %v6557 = vunpack.c.l.b16 %v6553
      %v6558 = vpack.c.b16 %v5901, %v6557
      %v6559 = vrot.slane %v6558, 2
      %v6560 = vrot.slane %v5938, 2
      %v6561 = vsel %vm3157, %v6559, %v6560
      %v6562 = vrot.slane %v5939, 2
      %v6563 = vsel %vm3157, %v6560, %v6562
      %v6564 = vrot.slane %v5940, 2
      %v6565 = vsel %vm3157, %v6562, %v6564
      %v6566 = vrot.slane %v5941, 2
      %v6567 = vsel %vm3157, %v6564, %v6566
      %v6568 = vrot.slane %v5942, 2
      %v6569 = vsel %vm3157, %v6566, %v6568
      %v6570 = vrot.slane %v5943, 2
      %v6571 = vsel %vm3157, %v6568, %v6570
      %v6572 = vrot.slane %v5944, 2
      %v6573 = vsel %vm3157, %v6570, %v6572
      %v6574 = vrot.slane %v5945, 2
      %v6575 = vsel %vm3157, %v6572, %v6574
      %v6576 = vrot.slane %v5946, 2
      %v6577 = vsel %vm3157, %v6574, %v6576
      %v6578 = vrot.slane %v5947, 2
      %v6579 = vsel %vm3157, %v6576, %v6578
      %v6580 = vrot.slane %v5948, 2
      %v6581 = vsel %vm3157, %v6578, %v6580
      %v6582 = vrot.slane %v5949, 2
      %v6583 = vsel %vm3157, %v6580, %v6582
      %v6584 = vrot.slane %v5950, 2
      %v6585 = vsel %vm3157, %v6582, %v6584
      %v6586 = vrot.slane %v5951, 2
      %v6587 = vsel %vm3157, %v6584, %v6586
      %v6588 = vrot.slane %v5952, 2
      %v6589 = vsel %vm3157, %v6586, %v6588
      %v6590 = vrot.slane %v5953, 2
      %v6591 = vsel %vm3157, %v6588, %v6590
      %v6592 = vrot.slane %v5954, 2
      %v6593 = vsel %vm3157, %v6590, %v6592
      %v6594 = vrot.slane %v6190, 2
      %v6595 = vsel %vm3157, %v6592, %v6594
      %v6597 = vsel %vm5293, %v6561, 0
      %v6600 = vsel %vm5293, %v6563, 0
      %v6603 = vsel %vm5293, %v6565, 0
      %v6606 = vsel %vm5293, %v6567, 0
      %v6609 = vsel %vm5293, %v6569, 0
      %v6612 = vsel %vm5293, %v6571, 0
      %v6615 = vsel %vm5293, %v6573, 0
      %v6618 = vsel %vm5293, %v6575, 0
      %v6621 = vsel %vm5293, %v6577, 0
      %v6624 = vsel %vm5293, %v6579, 0
      %v6627 = vsel %vm5293, %v6581, 0
      %v6630 = vsel %vm5293, %v6583, 0
      %v6633 = vsel %vm5293, %v6585, 0
      %v6636 = vsel %vm5293, %v6587, 0
      %v6639 = vsel %vm5293, %v6589, 0
      %v6642 = vsel %vm5293, %v6591, 0
      %v6645 = vsel %vm5293, %v6593, 0
      %v6648 = vsel %vm5293, %v6595, 0
      %v6651 = vsel %vm5348, %v6555, 0
      %6653 = vmatpush.bf16.msra.mxu0 0
      %6654 = vmatpush.bf16.msra.mxu0 0
      %6655 = vmatpush.bf16.msra.mxu0 0
      %6656 = vmatpush.bf16.msra.mxu0 0
      %6657 = vmatpush.bf16.msra.mxu0 0
      %6658 = vmatpush.bf16.msra.mxu0 0
      %6659 = vmatpush.bf16.msra.mxu0 0
      %6660 = vmatpush.bf16.msra.mxu0 %v6651
      %6661 = vmatmul.bf16.gmra.mxu0 %v6597
      %v6662 = vpop.f32.mrf.mxu0
      %v6663 = vadd.f32 0.0, %v6662
      %v6664 = vpop.f32.mrf.mxu0
      %v6665 = vadd.f32 0.0, %v6664
      %6666 = vmatmul.bf16.gmra.mxu0 %v6600
      %v6667 = vpop.f32.mrf.mxu0
      %v6668 = vadd.f32 0.0, %v6667
      %v6669 = vpop.f32.mrf.mxu0
      %v6670 = vadd.f32 0.0, %v6669
      %6671 = vmatmul.bf16.gmra.mxu0 %v6603
      %v6672 = vpop.f32.mrf.mxu0
      %v6673 = vadd.f32 0.0, %v6672
      %v6674 = vpop.f32.mrf.mxu0
      %v6675 = vadd.f32 0.0, %v6674
      %6676 = vmatmul.bf16.gmra.mxu0 %v6606
      %v6677 = vpop.f32.mrf.mxu0
      %v6678 = vadd.f32 0.0, %v6677
      %v6679 = vpop.f32.mrf.mxu0
      %v6680 = vadd.f32 0.0, %v6679
      %6681 = vmatmul.bf16.gmra.mxu0 %v6609
      %v6682 = vpop.f32.mrf.mxu0
      %v6683 = vadd.f32 0.0, %v6682
      %v6684 = vpop.f32.mrf.mxu0
      %v6685 = vadd.f32 0.0, %v6684
      %6686 = vmatmul.bf16.gmra.mxu0 %v6612
      %v6687 = vpop.f32.mrf.mxu0
      %v6688 = vadd.f32 0.0, %v6687
      %v6689 = vpop.f32.mrf.mxu0
      %v6690 = vadd.f32 0.0, %v6689
      %6691 = vmatmul.bf16.gmra.mxu0 %v6615
      %v6692 = vpop.f32.mrf.mxu0
      %v6693 = vadd.f32 0.0, %v6692
      %v6694 = vpop.f32.mrf.mxu0
      %v6695 = vadd.f32 0.0, %v6694
      %6696 = vmatmul.bf16.gmra.mxu0 %v6618
      %v6697 = vpop.f32.mrf.mxu0
      %v6698 = vadd.f32 0.0, %v6697
      %v6699 = vpop.f32.mrf.mxu0
      %v6700 = vadd.f32 0.0, %v6699
      %6701 = vmatmul.bf16.gmra.mxu0 %v6621
      %v6702 = vpop.f32.mrf.mxu0
      %v6703 = vadd.f32 0.0, %v6702
      %v6704 = vpop.f32.mrf.mxu0
      %v6705 = vadd.f32 0.0, %v6704
      %6706 = vmatmul.bf16.gmra.mxu0 %v6624
      %v6707 = vpop.f32.mrf.mxu0
      %v6708 = vadd.f32 0.0, %v6707
      %v6709 = vpop.f32.mrf.mxu0
      %v6710 = vadd.f32 0.0, %v6709
      %6711 = vmatmul.bf16.gmra.mxu0 %v6627
      %v6712 = vpop.f32.mrf.mxu0
      %v6713 = vadd.f32 0.0, %v6712
      %v6714 = vpop.f32.mrf.mxu0
      %v6715 = vadd.f32 0.0, %v6714
      %6716 = vmatmul.bf16.gmra.mxu0 %v6630
      %v6717 = vpop.f32.mrf.mxu0
      %v6718 = vadd.f32 0.0, %v6717
      %v6719 = vpop.f32.mrf.mxu0
      %v6720 = vadd.f32 0.0, %v6719
      %6721 = vmatmul.bf16.gmra.mxu0 %v6633
      %v6722 = vpop.f32.mrf.mxu0
      %v6723 = vadd.f32 0.0, %v6722
      %v6724 = vpop.f32.mrf.mxu0
      %v6725 = vadd.f32 0.0, %v6724
      %6726 = vmatmul.bf16.gmra.mxu0 %v6636
      %v6727 = vpop.f32.mrf.mxu0
      %v6728 = vadd.f32 0.0, %v6727
      %v6729 = vpop.f32.mrf.mxu0
      %v6730 = vadd.f32 0.0, %v6729
      %6731 = vmatmul.bf16.gmra.mxu0 %v6639
      %v6732 = vpop.f32.mrf.mxu0
      %v6733 = vadd.f32 0.0, %v6732
      %v6734 = vpop.f32.mrf.mxu0
      %v6735 = vadd.f32 0.0, %v6734
      %6736 = vmatmul.bf16.gmra.mxu0 %v6642
      %v6737 = vpop.f32.mrf.mxu0
      %v6738 = vadd.f32 0.0, %v6737
      %v6739 = vpop.f32.mrf.mxu0
      %v6740 = vadd.f32 0.0, %v6739
      %6741 = vmatmul.bf16.gmra.mxu0 %v6645
      %v6742 = vpop.f32.mrf.mxu0
      %v6743 = vadd.f32 0.0, %v6742
      %v6744 = vpop.f32.mrf.mxu0
      %v6745 = vadd.f32 0.0, %v6744
      %6746 = vmatmul.bf16.gmra.mxu0 %v6648
      %v6747 = vpop.f32.mrf.mxu0
      %v6748 = vadd.f32 0.0, %v6747
      %v6749 = vpop.f32.mrf.mxu0
      %v6750 = vadd.f32 0.0, %v6749
      %6751 = vdwg.mxu0
      %v6752 = vadd.f32 %v6517, %v6663
      %v6753 = vadd.f32 %v6518, %v6665
      %v6754 = vadd.f32 %v6519, %v6668
      %v6755 = vadd.f32 %v6520, %v6670
      %v6756 = vadd.f32 %v6521, %v6673
      %v6757 = vadd.f32 %v6522, %v6675
      %v6758 = vadd.f32 %v6523, %v6678
      %v6759 = vadd.f32 %v6524, %v6680
      %v6760 = vadd.f32 %v6525, %v6683
      %v6761 = vadd.f32 %v6526, %v6685
      %v6762 = vadd.f32 %v6527, %v6688
      %v6763 = vadd.f32 %v6528, %v6690
      %v6764 = vadd.f32 %v6529, %v6693
      %v6765 = vadd.f32 %v6530, %v6695
      %v6766 = vadd.f32 %v6531, %v6698
      %v6767 = vadd.f32 %v6532, %v6700
      %v6768 = vadd.f32 %v6533, %v6703
      %v6769 = vadd.f32 %v6534, %v6705
      %v6770 = vadd.f32 %v6535, %v6708
      %v6771 = vadd.f32 %v6536, %v6710
      %v6772 = vadd.f32 %v6537, %v6713
      %v6773 = vadd.f32 %v6538, %v6715
      %v6774 = vadd.f32 %v6539, %v6718
      %v6775 = vadd.f32 %v6540, %v6720
      %v6776 = vadd.f32 %v6541, %v6723
      %v6777 = vadd.f32 %v6542, %v6725
      %v6778 = vadd.f32 %v6543, %v6728
      %v6779 = vadd.f32 %v6544, %v6730
      %v6780 = vadd.f32 %v6545, %v6733
      %v6781 = vadd.f32 %v6546, %v6735
      %v6782 = vadd.f32 %v6547, %v6738
      %v6783 = vadd.f32 %v6548, %v6740
      %v6784 = vadd.f32 %v6549, %v6743
      %v6785 = vadd.f32 %v6550, %v6745
      %v6786 = vadd.f32 %v6551, %v6748
      %v6787 = vadd.f32 %v6552, %v6750
      %v6788 = vld [vmem:[#allocation2 + $0x10] sm:$0xc]
      %v6789 = vld [vmem:[#allocation2 + $0x14] sm:$0xf]
      %v6790 = vld [vmem:[#allocation2 + $0x18] sm:$0xf]
      %v6791 = vld [vmem:[#allocation2 + $0x1c] sm:$0xf]
      %v6792 = vld [vmem:[#allocation2 + $0x20] sm:$0xf]
      %v6793 = vld [vmem:[#allocation2 + $0x24] sm:$0xf]
      %v6794 = vld [vmem:[#allocation2 + $0x28] sm:$0xf]
      %v6795 = vld [vmem:[#allocation2 + $0x2c] sm:$0xf]
      %v6796 = vld [vmem:[#allocation2 + $0x30] sm:$0xf]
      %v6797 = vld [vmem:[#allocation2 + $0x34] sm:$0xf]
      %v6798 = vld [vmem:[#allocation2 + $0x38] sm:$0xf]
      %v6799 = vld [vmem:[#allocation2 + $0x3c] sm:$0xf]
      %v6800 = vld [vmem:[#allocation2 + $0x40] sm:$0xf]
      %v6801 = vld [vmem:[#allocation2 + $0x44] sm:$0xf]
      %v6802 = vld [vmem:[#allocation2 + $0x48] sm:$0xf]
      %v6803 = vld [vmem:[#allocation2 + $0x4c] sm:$0xf]
      %v6804 = vld [vmem:[#allocation2 + $0x50] sm:$0xf]
      %v6805 = vld [vmem:[#allocation2 + $0x54] sm:$0xf]
      %v6806 = vld [vmem:[#allocation2 + $0x58] sm:$0xf]
      %v6807 = vld [vmem:[#allocation2 + $0x5c] sm:$0xf]
      %v6808 = vld [vmem:[#allocation2 + $0x60] sm:$0xf]
      %v6809 = vld [vmem:[#allocation2 + $0x64] sm:$0xf]
      %v6810 = vld [vmem:[#allocation2 + $0x68] sm:$0xf]
      %v6811 = vld [vmem:[#allocation2 + $0x6c] sm:$0xf]
      %v6812 = vld [vmem:[#allocation2 + $0x70] sm:$0xf]
      %v6813 = vld [vmem:[#allocation2 + $0x74] sm:$0xf]
      %v6814 = vld [vmem:[#allocation2 + $0x78] sm:$0xf]
      %v6815 = vld [vmem:[#allocation2 + $0x7c] sm:$0xf]
      %v6816 = vld [vmem:[#allocation2 + $0x80] sm:$0xf]
      %v6817 = vld [vmem:[#allocation2 + $0x84] sm:$0xf]
      %v6818 = vld [vmem:[#allocation2 + $0x88] sm:$0xf]
      %v6819 = vld [vmem:[#allocation2 + $0x8c] sm:$0xf]
      %v6820 = vld [vmem:[#allocation2 + $0x90] sm:$0xf]
      %v6821 = vld [vmem:[#allocation2 + $0x94] sm:$0xf]
      %v6822 = vld [vmem:[#allocation2 + $0x98] sm:$0xf]
      %v6823 = vld [vmem:[#allocation2 + $0x9c] sm:$0xf]
      %v6824 = vld [vmem:[#allocation2 + $0xa0] sm:$0x3]
      %s6825 = scalar_lea.vmem %s3, 24
      %v6826 = vld [vmem:[%s6825] sm:$0xf]
      %v6864 = vunpack.c.l.b16 %v6788
      %v6865 = vunpack.c.l.b16 %v6789
      %v6866 = vunpack.c.l.b16 %v6790
      %v6867 = vunpack.c.l.b16 %v6791
      %v6868 = vunpack.c.l.b16 %v6792
      %v6869 = vunpack.c.l.b16 %v6793
      %v6870 = vunpack.c.l.b16 %v6794
      %v6871 = vunpack.c.l.b16 %v6795
      %v6872 = vunpack.c.l.b16 %v6796
      %v6873 = vunpack.c.l.b16 %v6797
      %v6874 = vunpack.c.l.b16 %v6798
      %v6875 = vunpack.c.l.b16 %v6799
      %v6876 = vunpack.c.l.b16 %v6800
      %v6877 = vunpack.c.l.b16 %v6801
      %v6878 = vunpack.c.l.b16 %v6802
      %v6879 = vunpack.c.l.b16 %v6803
      %v6880 = vunpack.c.l.b16 %v6804
      %v6881 = vunpack.c.l.b16 %v6805
      %v6882 = vunpack.c.l.b16 %v6806
      %v6883 = vunpack.c.l.b16 %v6807
      %v6884 = vunpack.c.l.b16 %v6808
      %v6885 = vunpack.c.l.b16 %v6809
      %v6886 = vunpack.c.l.b16 %v6810
      %v6887 = vunpack.c.l.b16 %v6811
      %v6888 = vunpack.c.l.b16 %v6812
      %v6889 = vunpack.c.l.b16 %v6813
      %v6890 = vunpack.c.l.b16 %v6814
      %v6891 = vunpack.c.l.b16 %v6815
      %v6892 = vunpack.c.l.b16 %v6816
      %v6893 = vunpack.c.l.b16 %v6817
      %v6894 = vunpack.c.l.b16 %v6818
      %v6895 = vunpack.c.l.b16 %v6819
      %v6896 = vunpack.c.l.b16 %v6820
      %v6897 = vunpack.c.l.b16 %v6821
      %v6898 = vunpack.c.l.b16 %v6822
      %v6899 = vunpack.c.l.b16 %v6823
      %v6900 = vunpack.c.l.b16 %v6824
      %v6901 = vpack.c.b16 %v6865, %v6864
      %v6902 = vpack.c.b16 %v6867, %v6866
      %v6903 = vpack.c.b16 %v6869, %v6868
      %v6904 = vpack.c.b16 %v6871, %v6870
      %v6905 = vpack.c.b16 %v6873, %v6872
      %v6906 = vpack.c.b16 %v6875, %v6874
      %v6907 = vpack.c.b16 %v6877, %v6876
      %v6908 = vpack.c.b16 %v6879, %v6878
      %v6909 = vpack.c.b16 %v6881, %v6880
      %v6910 = vpack.c.b16 %v6883, %v6882
      %v6911 = vpack.c.b16 %v6885, %v6884
      %v6912 = vpack.c.b16 %v6887, %v6886
      %v6913 = vpack.c.b16 %v6889, %v6888
      %v6914 = vpack.c.b16 %v6891, %v6890
      %v6915 = vpack.c.b16 %v6893, %v6892
      %v6916 = vpack.c.b16 %v6895, %v6894
      %v6917 = vpack.c.b16 %v6897, %v6896
      %v6918 = vpack.c.b16 %v6899, %v6898
      %v6919 = vpack.c.b16 %v6900, %v6900
      %v6920 = vrot.slane %v6901, 2
      %v6921 = vrot.slane %v6902, 2
      %v6922 = vsel %vm3157, %v6920, %v6921
      %v6923 = vrot.slane %v6903, 2
      %v6924 = vsel %vm3157, %v6921, %v6923
      %v6925 = vrot.slane %v6904, 2
      %v6926 = vsel %vm3157, %v6923, %v6925
      %v6927 = vrot.slane %v6905, 2
      %v6928 = vsel %vm3157, %v6925, %v6927
      %v6929 = vrot.slane %v6906, 2
      %v6930 = vsel %vm3157, %v6927, %v6929
      %v6931 = vrot.slane %v6907, 2
      %v6932 = vsel %vm3157, %v6929, %v6931
      %v6933 = vrot.slane %v6908, 2
      %v6934 = vsel %vm3157, %v6931, %v6933
      %v6935 = vrot.slane %v6909, 2
      %v6936 = vsel %vm3157, %v6933, %v6935
      %v6937 = vrot.slane %v6910, 2
      %v6938 = vsel %vm3157, %v6935, %v6937
      %v6939 = vrot.slane %v6911, 2
      %v6940 = vsel %vm3157, %v6937, %v6939
      %v6941 = vrot.slane %v6912, 2
      %v6942 = vsel %vm3157, %v6939, %v6941
      %v6943 = vrot.slane %v6913, 2
      %v6944 = vsel %vm3157, %v6941, %v6943
      %v6945 = vrot.slane %v6914, 2
      %v6946 = vsel %vm3157, %v6943, %v6945
      %v6947 = vrot.slane %v6915, 2
      %v6948 = vsel %vm3157, %v6945, %v6947
      %v6949 = vrot.slane %v6916, 2
      %v6950 = vsel %vm3157, %v6947, %v6949
      %v6951 = vrot.slane %v6917, 2
      %v6952 = vsel %vm3157, %v6949, %v6951
      %v6953 = vrot.slane %v6918, 2
      %v6954 = vsel %vm3157, %v6951, %v6953
      %v6955 = vrot.slane %v6919, 2
      %v6956 = vsel %vm3157, %v6953, %v6955
      %v6958 = vsel %vm5293, %v6922, 0
      %v6961 = vsel %vm5293, %v6924, 0
      %v6964 = vsel %vm5293, %v6926, 0
      %v6967 = vsel %vm5293, %v6928, 0
      %v6970 = vsel %vm5293, %v6930, 0
      %v6973 = vsel %vm5293, %v6932, 0
      %v6976 = vsel %vm5293, %v6934, 0
      %v6979 = vsel %vm5293, %v6936, 0
      %v6982 = vsel %vm5293, %v6938, 0
      %v6985 = vsel %vm5293, %v6940, 0
      %v6988 = vsel %vm5293, %v6942, 0
      %v6991 = vsel %vm5293, %v6944, 0
      %v6994 = vsel %vm5293, %v6946, 0
      %v6997 = vsel %vm5293, %v6948, 0
      %v7000 = vsel %vm5293, %v6950, 0
      %v7003 = vsel %vm5293, %v6952, 0
      %v7006 = vsel %vm5293, %v6954, 0
      %v7009 = vsel %vm5293, %v6956, 0
      %v7012 = vsel %vm5348, %v6826, 0
      %7014 = vmatpush.bf16.msra.mxu0 0
      %7015 = vmatpush.bf16.msra.mxu0 0
      %7016 = vmatpush.bf16.msra.mxu0 0
      %7017 = vmatpush.bf16.msra.mxu0 0
      %7018 = vmatpush.bf16.msra.mxu0 0
      %7019 = vmatpush.bf16.msra.mxu0 0
      %7020 = vmatpush.bf16.msra.mxu0 0
      %7021 = vmatpush.bf16.msra.mxu0 %v7012
      %7022 = vmatmul.bf16.gmra.mxu0 %v6958
      %v7023 = vpop.f32.mrf.mxu0
      %v7024 = vadd.f32 0.0, %v7023
      %v7025 = vpop.f32.mrf.mxu0
      %v7026 = vadd.f32 0.0, %v7025
      %7027 = vmatmul.bf16.gmra.mxu0 %v6961
      %v7028 = vpop.f32.mrf.mxu0
      %v7029 = vadd.f32 0.0, %v7028
      %v7030 = vpop.f32.mrf.mxu0
      %v7031 = vadd.f32 0.0, %v7030
      %7032 = vmatmul.bf16.gmra.mxu0 %v6964
      %v7033 = vpop.f32.mrf.mxu0
      %v7034 = vadd.f32 0.0, %v7033
      %v7035 = vpop.f32.mrf.mxu0
      %v7036 = vadd.f32 0.0, %v7035
      %7037 = vmatmul.bf16.gmra.mxu0 %v6967
      %v7038 = vpop.f32.mrf.mxu0
      %v7039 = vadd.f32 0.0, %v7038
      %v7040 = vpop.f32.mrf.mxu0
      %v7041 = vadd.f32 0.0, %v7040
      %7042 = vmatmul.bf16.gmra.mxu0 %v6970
      %v7043 = vpop.f32.mrf.mxu0
      %v7044 = vadd.f32 0.0, %v7043
      %v7045 = vpop.f32.mrf.mxu0
      %v7046 = vadd.f32 0.0, %v7045
      %7047 = vmatmul.bf16.gmra.mxu0 %v6973
      %v7048 = vpop.f32.mrf.mxu0
      %v7049 = vadd.f32 0.0, %v7048
      %v7050 = vpop.f32.mrf.mxu0
      %v7051 = vadd.f32 0.0, %v7050
      %7052 = vmatmul.bf16.gmra.mxu0 %v6976
      %v7053 = vpop.f32.mrf.mxu0
      %v7054 = vadd.f32 0.0, %v7053
      %v7055 = vpop.f32.mrf.mxu0
      %v7056 = vadd.f32 0.0, %v7055
      %7057 = vmatmul.bf16.gmra.mxu0 %v6979
      %v7058 = vpop.f32.mrf.mxu0
      %v7059 = vadd.f32 0.0, %v7058
      %v7060 = vpop.f32.mrf.mxu0
      %v7061 = vadd.f32 0.0, %v7060
      %7062 = vmatmul.bf16.gmra.mxu0 %v6982
      %v7063 = vpop.f32.mrf.mxu0
      %v7064 = vadd.f32 0.0, %v7063
      %v7065 = vpop.f32.mrf.mxu0
      %v7066 = vadd.f32 0.0, %v7065
      %7067 = vmatmul.bf16.gmra.mxu0 %v6985
      %v7068 = vpop.f32.mrf.mxu0
      %v7069 = vadd.f32 0.0, %v7068
      %v7070 = vpop.f32.mrf.mxu0
      %v7071 = vadd.f32 0.0, %v7070
      %7072 = vmatmul.bf16.gmra.mxu0 %v6988
      %v7073 = vpop.f32.mrf.mxu0
      %v7074 = vadd.f32 0.0, %v7073
      %v7075 = vpop.f32.mrf.mxu0
      %v7076 = vadd.f32 0.0, %v7075
      %7077 = vmatmul.bf16.gmra.mxu0 %v6991
      %v7078 = vpop.f32.mrf.mxu0
      %v7079 = vadd.f32 0.0, %v7078
      %v7080 = vpop.f32.mrf.mxu0
      %v7081 = vadd.f32 0.0, %v7080
      %7082 = vmatmul.bf16.gmra.mxu0 %v6994
      %v7083 = vpop.f32.mrf.mxu0
      %v7084 = vadd.f32 0.0, %v7083
      %v7085 = vpop.f32.mrf.mxu0
      %v7086 = vadd.f32 0.0, %v7085
      %7087 = vmatmul.bf16.gmra.mxu0 %v6997
      %v7088 = vpop.f32.mrf.mxu0
      %v7089 = vadd.f32 0.0, %v7088
      %v7090 = vpop.f32.mrf.mxu0
      %v7091 = vadd.f32 0.0, %v7090
      %7092 = vmatmul.bf16.gmra.mxu0 %v7000
      %v7093 = vpop.f32.mrf.mxu0
      %v7094 = vadd.f32 0.0, %v7093
      %v7095 = vpop.f32.mrf.mxu0
      %v7096 = vadd.f32 0.0, %v7095
      %7097 = vmatmul.bf16.gmra.mxu0 %v7003
      %v7098 = vpop.f32.mrf.mxu0
      %v7099 = vadd.f32 0.0, %v7098
      %v7100 = vpop.f32.mrf.mxu0
      %v7101 = vadd.f32 0.0, %v7100
      %7102 = vmatmul.bf16.gmra.mxu0 %v7006
      %v7103 = vpop.f32.mrf.mxu0
      %v7104 = vadd.f32 0.0, %v7103
      %v7105 = vpop.f32.mrf.mxu0
      %v7106 = vadd.f32 0.0, %v7105
      %7107 = vmatmul.bf16.gmra.mxu0 %v7009
      %v7108 = vpop.f32.mrf.mxu0
      %v7109 = vadd.f32 0.0, %v7108
      %v7110 = vpop.f32.mrf.mxu0
      %v7111 = vadd.f32 0.0, %v7110
      %7112 = vdwg.mxu0
      %v7113 = vadd.f32 %v6752, %v7024
      %v7114 = vadd.f32 %v6753, %v7026
      %v7115 = vadd.f32 %v6754, %v7029
      %v7116 = vadd.f32 %v6755, %v7031
      %v7117 = vadd.f32 %v6756, %v7034
      %v7118 = vadd.f32 %v6757, %v7036
      %v7119 = vadd.f32 %v6758, %v7039
      %v7120 = vadd.f32 %v6759, %v7041
      %v7121 = vadd.f32 %v6760, %v7044
      %v7122 = vadd.f32 %v6761, %v7046
      %v7123 = vadd.f32 %v6762, %v7049
      %v7124 = vadd.f32 %v6763, %v7051
      %v7125 = vadd.f32 %v6764, %v7054
      %v7126 = vadd.f32 %v6765, %v7056
      %v7127 = vadd.f32 %v6766, %v7059
      %v7128 = vadd.f32 %v6767, %v7061
      %v7129 = vadd.f32 %v6768, %v7064
      %v7130 = vadd.f32 %v6769, %v7066
      %v7131 = vadd.f32 %v6770, %v7069
      %v7132 = vadd.f32 %v6771, %v7071
      %v7133 = vadd.f32 %v6772, %v7074
      %v7134 = vadd.f32 %v6773, %v7076
      %v7135 = vadd.f32 %v6774, %v7079
      %v7136 = vadd.f32 %v6775, %v7081
      %v7137 = vadd.f32 %v6776, %v7084
      %v7138 = vadd.f32 %v6777, %v7086
      %v7139 = vadd.f32 %v6778, %v7089
      %v7140 = vadd.f32 %v6779, %v7091
      %v7141 = vadd.f32 %v6780, %v7094
      %v7142 = vadd.f32 %v6781, %v7096
      %v7143 = vadd.f32 %v6782, %v7099
      %v7144 = vadd.f32 %v6783, %v7101
      %v7145 = vadd.f32 %v6784, %v7104
      %v7146 = vadd.f32 %v6785, %v7106
      %v7147 = vadd.f32 %v6786, %v7109
      %v7148 = vadd.f32 %v6787, %v7111
      %v7149 = vld [vmem:[#allocation2 + $0xa0] sm:$0x7]
      %s7150 = scalar_lea.vmem %s3, 28
      %v7151 = vld [vmem:[%s7150] sm:$0xf]
      %v7153 = vunpack.c.l.b16 %v7149
      %v7154 = vpack.c.b16 %v7153, %v7153
      %v7156 = vshrl.u32 %v6901, 16
      %v7158 = vrot.slane %v7156, 2
      %v7159 = vshll.u32 %v6901, 16
      %v7161 = vrot.slane %v7159, 3
      %v7162 = vor.u32 %v7158, %v7161
      %v7164 = vshrl.u32 %v6902, 16
      %v7166 = vrot.slane %v7164, 2
      %v7167 = vshll.u32 %v6902, 16
      %v7169 = vrot.slane %v7167, 3
      %v7170 = vor.u32 %v7166, %v7169
      %v7171 = vsel %vm3754, %v7162, %v7170
      %v7173 = vshrl.u32 %v6903, 16
      %v7175 = vrot.slane %v7173, 2
      %v7176 = vshll.u32 %v6903, 16
      %v7178 = vrot.slane %v7176, 3
      %v7179 = vor.u32 %v7175, %v7178
      %v7180 = vsel %vm3754, %v7170, %v7179
      %v7182 = vshrl.u32 %v6904, 16
      %v7184 = vrot.slane %v7182, 2
      %v7185 = vshll.u32 %v6904, 16
      %v7187 = vrot.slane %v7185, 3
      %v7188 = vor.u32 %v7184, %v7187
      %v7189 = vsel %vm3754, %v7179, %v7188
      %v7191 = vshrl.u32 %v6905, 16
      %v7193 = vrot.slane %v7191, 2
      %v7194 = vshll.u32 %v6905, 16
      %v7196 = vrot.slane %v7194, 3
      %v7197 = vor.u32 %v7193, %v7196
      %v7198 = vsel %vm3754, %v7188, %v7197
      %v7200 = vshrl.u32 %v6906, 16
      %v7202 = vrot.slane %v7200, 2
      %v7203 = vshll.u32 %v6906, 16
      %v7205 = vrot.slane %v7203, 3
      %v7206 = vor.u32 %v7202, %v7205
      %v7207 = vsel %vm3754, %v7197, %v7206
      %v7209 = vshrl.u32 %v6907, 16
      %v7211 = vrot.slane %v7209, 2
      %v7212 = vshll.u32 %v6907, 16
      %v7214 = vrot.slane %v7212, 3
      %v7215 = vor.u32 %v7211, %v7214
      %v7216 = vsel %vm3754, %v7206, %v7215
      %v7218 = vshrl.u32 %v6908, 16
      %v7220 = vrot.slane %v7218, 2
      %v7221 = vshll.u32 %v6908, 16
      %v7223 = vrot.slane %v7221, 3
      %v7224 = vor.u32 %v7220, %v7223
      %v7225 = vsel %vm3754, %v7215, %v7224
      %v7227 = vshrl.u32 %v6909, 16
      %v7229 = vrot.slane %v7227, 2
      %v7230 = vshll.u32 %v6909, 16
      %v7232 = vrot.slane %v7230, 3
      %v7233 = vor.u32 %v7229, %v7232
      %v7234 = vsel %vm3754, %v7224, %v7233
      %v7236 = vshrl.u32 %v6910, 16
      %v7238 = vrot.slane %v7236, 2
      %v7239 = vshll.u32 %v6910, 16
      %v7241 = vrot.slane %v7239, 3
      %v7242 = vor.u32 %v7238, %v7241
      %v7243 = vsel %vm3754, %v7233, %v7242
      %v7245 = vshrl.u32 %v6911, 16
      %v7247 = vrot.slane %v7245, 2
      %v7248 = vshll.u32 %v6911, 16
      %v7250 = vrot.slane %v7248, 3
      %v7251 = vor.u32 %v7247, %v7250
      %v7252 = vsel %vm3754, %v7242, %v7251
      %v7254 = vshrl.u32 %v6912, 16
      %v7256 = vrot.slane %v7254, 2
      %v7257 = vshll.u32 %v6912, 16
      %v7259 = vrot.slane %v7257, 3
      %v7260 = vor.u32 %v7256, %v7259
      %v7261 = vsel %vm3754, %v7251, %v7260
      %v7263 = vshrl.u32 %v6913, 16
      %v7265 = vrot.slane %v7263, 2
      %v7266 = vshll.u32 %v6913, 16
      %v7268 = vrot.slane %v7266, 3
      %v7269 = vor.u32 %v7265, %v7268
      %v7270 = vsel %vm3754, %v7260, %v7269
      %v7272 = vshrl.u32 %v6914, 16
      %v7274 = vrot.slane %v7272, 2
      %v7275 = vshll.u32 %v6914, 16
      %v7277 = vrot.slane %v7275, 3
      %v7278 = vor.u32 %v7274, %v7277
      %v7279 = vsel %vm3754, %v7269, %v7278
      %v7281 = vshrl.u32 %v6915, 16
      %v7283 = vrot.slane %v7281, 2
      %v7284 = vshll.u32 %v6915, 16
      %v7286 = vrot.slane %v7284, 3
      %v7287 = vor.u32 %v7283, %v7286
      %v7288 = vsel %vm3754, %v7278, %v7287
      %v7290 = vshrl.u32 %v6916, 16
      %v7292 = vrot.slane %v7290, 2
      %v7293 = vshll.u32 %v6916, 16
      %v7295 = vrot.slane %v7293, 3
      %v7296 = vor.u32 %v7292, %v7295
      %v7297 = vsel %vm3754, %v7287, %v7296
      %v7299 = vshrl.u32 %v6917, 16
      %v7301 = vrot.slane %v7299, 2
      %v7302 = vshll.u32 %v6917, 16
      %v7304 = vrot.slane %v7302, 3
      %v7305 = vor.u32 %v7301, %v7304
      %v7306 = vsel %vm3754, %v7296, %v7305
      %v7308 = vshrl.u32 %v6918, 16
      %v7310 = vrot.slane %v7308, 2
      %v7311 = vshll.u32 %v6918, 16
      %v7313 = vrot.slane %v7311, 3
      %v7314 = vor.u32 %v7310, %v7313
      %v7315 = vsel %vm3754, %v7305, %v7314
      %v7317 = vshrl.u32 %v7154, 16
      %v7319 = vrot.slane %v7317, 2
      %v7320 = vshll.u32 %v7154, 16
      %v7322 = vrot.slane %v7320, 3
      %v7323 = vor.u32 %v7319, %v7322
      %v7324 = vsel %vm3754, %v7314, %v7323
      %v7326 = vsel %vm5293, %v7171, 0
      %v7329 = vsel %vm5293, %v7180, 0
      %v7332 = vsel %vm5293, %v7189, 0
      %v7335 = vsel %vm5293, %v7198, 0
      %v7338 = vsel %vm5293, %v7207, 0
      %v7341 = vsel %vm5293, %v7216, 0
      %v7344 = vsel %vm5293, %v7225, 0
      %v7347 = vsel %vm5293, %v7234, 0
      %v7350 = vsel %vm5293, %v7243, 0
      %v7353 = vsel %vm5293, %v7252, 0
      %v7356 = vsel %vm5293, %v7261, 0
      %v7359 = vsel %vm5293, %v7270, 0
      %v7362 = vsel %vm5293, %v7279, 0
      %v7365 = vsel %vm5293, %v7288, 0
      %v7368 = vsel %vm5293, %v7297, 0
      %v7371 = vsel %vm5293, %v7306, 0
      %v7374 = vsel %vm5293, %v7315, 0
      %v7377 = vsel %vm5293, %v7324, 0
      %v7380 = vsel %vm5348, %v7151, 0
      %7382 = vmatpush.bf16.msra.mxu0 0
      %7383 = vmatpush.bf16.msra.mxu0 0
      %7384 = vmatpush.bf16.msra.mxu0 0
      %7385 = vmatpush.bf16.msra.mxu0 0
      %7386 = vmatpush.bf16.msra.mxu0 0
      %7387 = vmatpush.bf16.msra.mxu0 0
      %7388 = vmatpush.bf16.msra.mxu0 0
      %7389 = vmatpush.bf16.msra.mxu0 %v7380
      %7390 = vmatmul.bf16.gmra.mxu0 %v7326
      %v7391 = vpop.f32.mrf.mxu0
      %v7392 = vadd.f32 0.0, %v7391
      %v7393 = vpop.f32.mrf.mxu0
      %v7394 = vadd.f32 0.0, %v7393
      %7395 = vmatmul.bf16.gmra.mxu0 %v7329
      %v7396 = vpop.f32.mrf.mxu0
      %v7397 = vadd.f32 0.0, %v7396
      %v7398 = vpop.f32.mrf.mxu0
      %v7399 = vadd.f32 0.0, %v7398
      %7400 = vmatmul.bf16.gmra.mxu0 %v7332
      %v7401 = vpop.f32.mrf.mxu0
      %v7402 = vadd.f32 0.0, %v7401
      %v7403 = vpop.f32.mrf.mxu0
      %v7404 = vadd.f32 0.0, %v7403
      %7405 = vmatmul.bf16.gmra.mxu0 %v7335
      %v7406 = vpop.f32.mrf.mxu0
      %v7407 = vadd.f32 0.0, %v7406
      %v7408 = vpop.f32.mrf.mxu0
      %v7409 = vadd.f32 0.0, %v7408
      %7410 = vmatmul.bf16.gmra.mxu0 %v7338
      %v7411 = vpop.f32.mrf.mxu0
      %v7412 = vadd.f32 0.0, %v7411
      %v7413 = vpop.f32.mrf.mxu0
      %v7414 = vadd.f32 0.0, %v7413
      %7415 = vmatmul.bf16.gmra.mxu0 %v7341
      %v7416 = vpop.f32.mrf.mxu0
      %v7417 = vadd.f32 0.0, %v7416
      %v7418 = vpop.f32.mrf.mxu0
      %v7419 = vadd.f32 0.0, %v7418
      %7420 = vmatmul.bf16.gmra.mxu0 %v7344
      %v7421 = vpop.f32.mrf.mxu0
      %v7422 = vadd.f32 0.0, %v7421
      %v7423 = vpop.f32.mrf.mxu0
      %v7424 = vadd.f32 0.0, %v7423
      %7425 = vmatmul.bf16.gmra.mxu0 %v7347
      %v7426 = vpop.f32.mrf.mxu0
      %v7427 = vadd.f32 0.0, %v7426
      %v7428 = vpop.f32.mrf.mxu0
      %v7429 = vadd.f32 0.0, %v7428
      %7430 = vmatmul.bf16.gmra.mxu0 %v7350
      %v7431 = vpop.f32.mrf.mxu0
      %v7432 = vadd.f32 0.0, %v7431
      %v7433 = vpop.f32.mrf.mxu0
      %v7434 = vadd.f32 0.0, %v7433
      %7435 = vmatmul.bf16.gmra.mxu0 %v7353
      %v7436 = vpop.f32.mrf.mxu0
      %v7437 = vadd.f32 0.0, %v7436
      %v7438 = vpop.f32.mrf.mxu0
      %v7439 = vadd.f32 0.0, %v7438
      %7440 = vmatmul.bf16.gmra.mxu0 %v7356
      %v7441 = vpop.f32.mrf.mxu0
      %v7442 = vadd.f32 0.0, %v7441
      %v7443 = vpop.f32.mrf.mxu0
      %v7444 = vadd.f32 0.0, %v7443
      %7445 = vmatmul.bf16.gmra.mxu0 %v7359
      %v7446 = vpop.f32.mrf.mxu0
      %v7447 = vadd.f32 0.0, %v7446
      %v7448 = vpop.f32.mrf.mxu0
      %v7449 = vadd.f32 0.0, %v7448
      %7450 = vmatmul.bf16.gmra.mxu0 %v7362
      %v7451 = vpop.f32.mrf.mxu0
      %v7452 = vadd.f32 0.0, %v7451
      %v7453 = vpop.f32.mrf.mxu0
      %v7454 = vadd.f32 0.0, %v7453
      %7455 = vmatmul.bf16.gmra.mxu0 %v7365
      %v7456 = vpop.f32.mrf.mxu0
      %v7457 = vadd.f32 0.0, %v7456
      %v7458 = vpop.f32.mrf.mxu0
      %v7459 = vadd.f32 0.0, %v7458
      %7460 = vmatmul.bf16.gmra.mxu0 %v7368
      %v7461 = vpop.f32.mrf.mxu0
      %v7462 = vadd.f32 0.0, %v7461
      %v7463 = vpop.f32.mrf.mxu0
      %v7464 = vadd.f32 0.0, %v7463
      %7465 = vmatmul.bf16.gmra.mxu0 %v7371
      %v7466 = vpop.f32.mrf.mxu0
      %v7467 = vadd.f32 0.0, %v7466
      %v7468 = vpop.f32.mrf.mxu0
      %v7469 = vadd.f32 0.0, %v7468
      %7470 = vmatmul.bf16.gmra.mxu0 %v7374
      %v7471 = vpop.f32.mrf.mxu0
      %v7472 = vadd.f32 0.0, %v7471
      %v7473 = vpop.f32.mrf.mxu0
      %v7474 = vadd.f32 0.0, %v7473
      %7475 = vmatmul.bf16.gmra.mxu0 %v7377
      %v7476 = vpop.f32.mrf.mxu0
      %v7477 = vadd.f32 0.0, %v7476
      %v7478 = vpop.f32.mrf.mxu0
      %v7479 = vadd.f32 0.0, %v7478
      %7480 = vdwg.mxu0
      %v7481 = vadd.f32 %v7113, %v7392
      %v7482 = vadd.f32 %v7114, %v7394
      %v7483 = vadd.f32 %v7115, %v7397
      %v7484 = vadd.f32 %v7116, %v7399
      %v7485 = vadd.f32 %v7117, %v7402
      %v7486 = vadd.f32 %v7118, %v7404
      %v7487 = vadd.f32 %v7119, %v7407
      %v7488 = vadd.f32 %v7120, %v7409
      %v7489 = vadd.f32 %v7121, %v7412
      %v7490 = vadd.f32 %v7122, %v7414
      %v7491 = vadd.f32 %v7123, %v7417
      %v7492 = vadd.f32 %v7124, %v7419
      %v7493 = vadd.f32 %v7125, %v7422
      %v7494 = vadd.f32 %v7126, %v7424
      %v7495 = vadd.f32 %v7127, %v7427
      %v7496 = vadd.f32 %v7128, %v7429
      %v7497 = vadd.f32 %v7129, %v7432
      %v7498 = vadd.f32 %v7130, %v7434
      %v7499 = vadd.f32 %v7131, %v7437
      %v7500 = vadd.f32 %v7132, %v7439
      %v7501 = vadd.f32 %v7133, %v7442
      %v7502 = vadd.f32 %v7134, %v7444
      %v7503 = vadd.f32 %v7135, %v7447
      %v7504 = vadd.f32 %v7136, %v7449
      %v7505 = vadd.f32 %v7137, %v7452
      %v7506 = vadd.f32 %v7138, %v7454
      %v7507 = vadd.f32 %v7139, %v7457
      %v7508 = vadd.f32 %v7140, %v7459
      %v7509 = vadd.f32 %v7141, %v7462
      %v7510 = vadd.f32 %v7142, %v7464
      %v7511 = vadd.f32 %v7143, %v7467
      %v7512 = vadd.f32 %v7144, %v7469
      %v7513 = vadd.f32 %v7145, %v7472
      %v7514 = vadd.f32 %v7146, %v7474
      %v7515 = vadd.f32 %v7147, %v7477
      %v7516 = vadd.f32 %v7148, %v7479
      %v7517 = vld [vmem:[#allocation2 + $0x10] sm:$0x8]
      %s7518 = scalar_lea.vmem %s3, 32
      %v7519 = vld [vmem:[%s7518] sm:$0xf]
      %v7521 = vunpack.c.l.b16 %v7517
      %v7522 = vpack.c.b16 %v6865, %v7521
      %v7523 = vrot.slane %v7522, 3
      %v7524 = vrot.slane %v6902, 3
      %v7525 = vsel %vm4123, %v7523, %v7524
      %v7526 = vrot.slane %v6903, 3
      %v7527 = vsel %vm4123, %v7524, %v7526
      %v7528 = vrot.slane %v6904, 3
      %v7529 = vsel %vm4123, %v7526, %v7528
      %v7530 = vrot.slane %v6905, 3
      %v7531 = vsel %vm4123, %v7528, %v7530
      %v7532 = vrot.slane %v6906, 3
      %v7533 = vsel %vm4123, %v7530, %v7532
      %v7534 = vrot.slane %v6907, 3
      %v7535 = vsel %vm4123, %v7532, %v7534
      %v7536 = vrot.slane %v6908, 3
      %v7537 = vsel %vm4123, %v7534, %v7536
      %v7538 = vrot.slane %v6909, 3
      %v7539 = vsel %vm4123, %v7536, %v7538
      %v7540 = vrot.slane %v6910, 3
      %v7541 = vsel %vm4123, %v7538, %v7540
      %v7542 = vrot.slane %v6911, 3
      %v7543 = vsel %vm4123, %v7540, %v7542
      %v7544 = vrot.slane %v6912, 3
      %v7545 = vsel %vm4123, %v7542, %v7544
      %v7546 = vrot.slane %v6913, 3
      %v7547 = vsel %vm4123, %v7544, %v7546
      %v7548 = vrot.slane %v6914, 3
      %v7549 = vsel %vm4123, %v7546, %v7548
      %v7550 = vrot.slane %v6915, 3
      %v7551 = vsel %vm4123, %v7548, %v7550
      %v7552 = vrot.slane %v6916, 3
      %v7553 = vsel %vm4123, %v7550, %v7552
      %v7554 = vrot.slane %v6917, 3
      %v7555 = vsel %vm4123, %v7552, %v7554
      %v7556 = vrot.slane %v6918, 3
      %v7557 = vsel %vm4123, %v7554, %v7556
      %v7558 = vrot.slane %v7154, 3
      %v7559 = vsel %vm4123, %v7556, %v7558
      %v7561 = vsel %vm5293, %v7525, 0
      %v7564 = vsel %vm5293, %v7527, 0
      %v7567 = vsel %vm5293, %v7529, 0
      %v7570 = vsel %vm5293, %v7531, 0
      %v7573 = vsel %vm5293, %v7533, 0
      %v7576 = vsel %vm5293, %v7535, 0
      %v7579 = vsel %vm5293, %v7537, 0
      %v7582 = vsel %vm5293, %v7539, 0
      %v7585 = vsel %vm5293, %v7541, 0
      %v7588 = vsel %vm5293, %v7543, 0
      %v7591 = vsel %vm5293, %v7545, 0
      %v7594 = vsel %vm5293, %v7547, 0
      %v7597 = vsel %vm5293, %v7549, 0
      %v7600 = vsel %vm5293, %v7551, 0
      %v7603 = vsel %vm5293, %v7553, 0
      %v7606 = vsel %vm5293, %v7555, 0
      %v7609 = vsel %vm5293, %v7557, 0
      %v7612 = vsel %vm5293, %v7559, 0
      %v7615 = vsel %vm5348, %v7519, 0
      %7617 = vmatpush.bf16.msra.mxu0 0
      %7618 = vmatpush.bf16.msra.mxu0 0
      %7619 = vmatpush.bf16.msra.mxu0 0
      %7620 = vmatpush.bf16.msra.mxu0 0
      %7621 = vmatpush.bf16.msra.mxu0 0
      %7622 = vmatpush.bf16.msra.mxu0 0
      %7623 = vmatpush.bf16.msra.mxu0 0
      %7624 = vmatpush.bf16.msra.mxu0 %v7615
      %7625 = vmatmul.bf16.gmra.mxu0 %v7561
      %v7626 = vpop.f32.mrf.mxu0
      %v7627 = vadd.f32 0.0, %v7626
      %v7628 = vpop.f32.mrf.mxu0
      %v7629 = vadd.f32 0.0, %v7628
      %7630 = vmatmul.bf16.gmra.mxu0 %v7564
      %v7631 = vpop.f32.mrf.mxu0
      %v7632 = vadd.f32 0.0, %v7631
      %v7633 = vpop.f32.mrf.mxu0
      %v7634 = vadd.f32 0.0, %v7633
      %7635 = vmatmul.bf16.gmra.mxu0 %v7567
      %v7636 = vpop.f32.mrf.mxu0
      %v7637 = vadd.f32 0.0, %v7636
      %v7638 = vpop.f32.mrf.mxu0
      %v7639 = vadd.f32 0.0, %v7638
      %7640 = vmatmul.bf16.gmra.mxu0 %v7570
      %v7641 = vpop.f32.mrf.mxu0
      %v7642 = vadd.f32 0.0, %v7641
      %v7643 = vpop.f32.mrf.mxu0
      %v7644 = vadd.f32 0.0, %v7643
      %7645 = vmatmul.bf16.gmra.mxu0 %v7573
      %v7646 = vpop.f32.mrf.mxu0
      %v7647 = vadd.f32 0.0, %v7646
      %v7648 = vpop.f32.mrf.mxu0
      %v7649 = vadd.f32 0.0, %v7648
      %7650 = vmatmul.bf16.gmra.mxu0 %v7576
      %v7651 = vpop.f32.mrf.mxu0
      %v7652 = vadd.f32 0.0, %v7651
      %v7653 = vpop.f32.mrf.mxu0
      %v7654 = vadd.f32 0.0, %v7653
      %7655 = vmatmul.bf16.gmra.mxu0 %v7579
      %v7656 = vpop.f32.mrf.mxu0
      %v7657 = vadd.f32 0.0, %v7656
      %v7658 = vpop.f32.mrf.mxu0
      %v7659 = vadd.f32 0.0, %v7658
      %7660 = vmatmul.bf16.gmra.mxu0 %v7582
      %v7661 = vpop.f32.mrf.mxu0
      %v7662 = vadd.f32 0.0, %v7661
      %v7663 = vpop.f32.mrf.mxu0
      %v7664 = vadd.f32 0.0, %v7663
      %7665 = vmatmul.bf16.gmra.mxu0 %v7585
      %v7666 = vpop.f32.mrf.mxu0
      %v7667 = vadd.f32 0.0, %v7666
      %v7668 = vpop.f32.mrf.mxu0
      %v7669 = vadd.f32 0.0, %v7668
      %7670 = vmatmul.bf16.gmra.mxu0 %v7588
      %v7671 = vpop.f32.mrf.mxu0
      %v7672 = vadd.f32 0.0, %v7671
      %v7673 = vpop.f32.mrf.mxu0
      %v7674 = vadd.f32 0.0, %v7673
      %7675 = vmatmul.bf16.gmra.mxu0 %v7591
      %v7676 = vpop.f32.mrf.mxu0
      %v7677 = vadd.f32 0.0, %v7676
      %v7678 = vpop.f32.mrf.mxu0
      %v7679 = vadd.f32 0.0, %v7678
      %7680 = vmatmul.bf16.gmra.mxu0 %v7594
      %v7681 = vpop.f32.mrf.mxu0
      %v7682 = vadd.f32 0.0, %v7681
      %v7683 = vpop.f32.mrf.mxu0
      %v7684 = vadd.f32 0.0, %v7683
      %7685 = vmatmul.bf16.gmra.mxu0 %v7597
      %v7686 = vpop.f32.mrf.mxu0
      %v7687 = vadd.f32 0.0, %v7686
      %v7688 = vpop.f32.mrf.mxu0
      %v7689 = vadd.f32 0.0, %v7688
      %7690 = vmatmul.bf16.gmra.mxu0 %v7600
      %v7691 = vpop.f32.mrf.mxu0
      %v7692 = vadd.f32 0.0, %v7691
      %v7693 = vpop.f32.mrf.mxu0
      %v7694 = vadd.f32 0.0, %v7693
      %7695 = vmatmul.bf16.gmra.mxu0 %v7603
      %v7696 = vpop.f32.mrf.mxu0
      %v7697 = vadd.f32 0.0, %v7696
      %v7698 = vpop.f32.mrf.mxu0
      %v7699 = vadd.f32 0.0, %v7698
      %7700 = vmatmul.bf16.gmra.mxu0 %v7606
      %v7701 = vpop.f32.mrf.mxu0
      %v7702 = vadd.f32 0.0, %v7701
      %v7703 = vpop.f32.mrf.mxu0
      %v7704 = vadd.f32 0.0, %v7703
      %7705 = vmatmul.bf16.gmra.mxu0 %v7609
      %v7706 = vpop.f32.mrf.mxu0
      %v7707 = vadd.f32 0.0, %v7706
      %v7708 = vpop.f32.mrf.mxu0
      %v7709 = vadd.f32 0.0, %v7708
      %7710 = vmatmul.bf16.gmra.mxu0 %v7612
      %v7711 = vpop.f32.mrf.mxu0
      %v7712 = vadd.f32 0.0, %v7711
      %v7713 = vpop.f32.mrf.mxu0
      %v7714 = vadd.f32 0.0, %v7713
      %7715 = vdwg.mxu0
      %v7716 = vadd.f32 %v7481, %v7627
      %v7717 = vadd.f32 %v7482, %v7629
      %v7718 = vadd.f32 %v7483, %v7632
      %v7719 = vadd.f32 %v7484, %v7634
      %v7720 = vadd.f32 %v7485, %v7637
      %v7721 = vadd.f32 %v7486, %v7639
      %v7722 = vadd.f32 %v7487, %v7642
      %v7723 = vadd.f32 %v7488, %v7644
      %v7724 = vadd.f32 %v7489, %v7647
      %v7725 = vadd.f32 %v7490, %v7649
      %v7726 = vadd.f32 %v7491, %v7652
      %v7727 = vadd.f32 %v7492, %v7654
      %v7728 = vadd.f32 %v7493, %v7657
      %v7729 = vadd.f32 %v7494, %v7659
      %v7730 = vadd.f32 %v7495, %v7662
      %v7731 = vadd.f32 %v7496, %v7664
      %v7732 = vadd.f32 %v7497, %v7667
      %v7733 = vadd.f32 %v7498, %v7669
      %v7734 = vadd.f32 %v7499, %v7672
      %v7735 = vadd.f32 %v7500, %v7674
      %v7736 = vadd.f32 %v7501, %v7677
      %v7737 = vadd.f32 %v7502, %v7679
      %v7738 = vadd.f32 %v7503, %v7682
      %v7739 = vadd.f32 %v7504, %v7684
      %v7740 = vadd.f32 %v7505, %v7687
      %v7741 = vadd.f32 %v7506, %v7689
      %v7742 = vadd.f32 %v7507, %v7692
      %v7743 = vadd.f32 %v7508, %v7694
      %v7744 = vadd.f32 %v7509, %v7697
      %v7745 = vadd.f32 %v7510, %v7699
      %v7746 = vadd.f32 %v7511, %v7702
      %v7747 = vadd.f32 %v7512, %v7704
      %v7748 = vadd.f32 %v7513, %v7707
      %v7749 = vadd.f32 %v7514, %v7709
      %v7750 = vadd.f32 %v7515, %v7712
      %v7751 = vadd.f32 %v7516, %v7714
      %v7752 = vld [vmem:[%s4] sm:$0x1]
      %v7754 = vperm.slane %v7752, 0
      %v7756 = vadd.f32 %v7716, %v7754
      %v7757 = vadd.f32 %v7717, %v7754
      %v7758 = vadd.f32 %v7718, %v7754
      %v7759 = vadd.f32 %v7719, %v7754
      %v7760 = vadd.f32 %v7720, %v7754
      %v7761 = vadd.f32 %v7721, %v7754
      %v7762 = vadd.f32 %v7722, %v7754
      %v7763 = vadd.f32 %v7723, %v7754
      %v7764 = vadd.f32 %v7724, %v7754
      %v7765 = vadd.f32 %v7725, %v7754
      %v7766 = vadd.f32 %v7726, %v7754
      %v7767 = vadd.f32 %v7727, %v7754
      %v7768 = vadd.f32 %v7728, %v7754
      %v7769 = vadd.f32 %v7729, %v7754
      %v7770 = vadd.f32 %v7730, %v7754
      %v7771 = vadd.f32 %v7731, %v7754
      %v7772 = vadd.f32 %v7732, %v7754
      %v7773 = vadd.f32 %v7733, %v7754
      %v7774 = vadd.f32 %v7734, %v7754
      %v7775 = vadd.f32 %v7735, %v7754
      %v7776 = vadd.f32 %v7736, %v7754
      %v7777 = vadd.f32 %v7737, %v7754
      %v7778 = vadd.f32 %v7738, %v7754
      %v7779 = vadd.f32 %v7739, %v7754
      %v7780 = vadd.f32 %v7740, %v7754
      %v7781 = vadd.f32 %v7741, %v7754
      %v7782 = vadd.f32 %v7742, %v7754
      %v7783 = vadd.f32 %v7743, %v7754
      %v7784 = vadd.f32 %v7744, %v7754
      %v7785 = vadd.f32 %v7745, %v7754
      %v7786 = vadd.f32 %v7746, %v7754
      %v7787 = vadd.f32 %v7747, %v7754
      %v7788 = vadd.f32 %v7748, %v7754
      %v7789 = vadd.f32 %v7749, %v7754
      %v7790 = vadd.f32 %v7750, %v7754
      %v7791 = vadd.f32 %v7751, %v7754
      %v7792 = vmax.f32 %v7756, 0.0
      %v7793 = vmax.f32 %v7757, 0.0
      %v7794 = vmax.f32 %v7758, 0.0
      %v7795 = vmax.f32 %v7759, 0.0
      %v7796 = vmax.f32 %v7760, 0.0
      %v7797 = vmax.f32 %v7761, 0.0
      %v7798 = vmax.f32 %v7762, 0.0
      %v7799 = vmax.f32 %v7763, 0.0
      %v7800 = vmax.f32 %v7764, 0.0
      %v7801 = vmax.f32 %v7765, 0.0
      %v7802 = vmax.f32 %v7766, 0.0
      %v7803 = vmax.f32 %v7767, 0.0
      %v7804 = vmax.f32 %v7768, 0.0
      %v7805 = vmax.f32 %v7769, 0.0
      %v7806 = vmax.f32 %v7770, 0.0
      %v7807 = vmax.f32 %v7771, 0.0
      %v7808 = vmax.f32 %v7772, 0.0
      %v7809 = vmax.f32 %v7773, 0.0
      %v7810 = vmax.f32 %v7774, 0.0
      %v7811 = vmax.f32 %v7775, 0.0
      %v7812 = vmax.f32 %v7776, 0.0
      %v7813 = vmax.f32 %v7777, 0.0
      %v7814 = vmax.f32 %v7778, 0.0
      %v7815 = vmax.f32 %v7779, 0.0
      %v7816 = vmax.f32 %v7780, 0.0
      %v7817 = vmax.f32 %v7781, 0.0
      %v7818 = vmax.f32 %v7782, 0.0
      %v7819 = vmax.f32 %v7783, 0.0
      %v7820 = vmax.f32 %v7784, 0.0
      %v7821 = vmax.f32 %v7785, 0.0
      %v7822 = vmax.f32 %v7786, 0.0
      %v7823 = vmax.f32 %v7787, 0.0
      %v7824 = vmax.f32 %v7788, 0.0
      %v7825 = vmax.f32 %v7789, 0.0
      %v7826 = vmax.f32 %v7790, 0.0
      %v7827 = vmax.f32 %v7791, 0.0
      %v7828 = vsel %vm4465, %v7792, 0.0
      %v7829 = vsel %vm4466, %v7793, 0.0
      %v7830 = vsel %vm4467, %v7794, 0.0
      %v7831 = vsel %vm4468, %v7795, 0.0
      %v7832 = vsel %vm4469, %v7796, 0.0
      %v7833 = vsel %vm4470, %v7797, 0.0
      %v7834 = vsel %vm4471, %v7798, 0.0
      %v7835 = vsel %vm4472, %v7799, 0.0
      %v7836 = vsel %vm4473, %v7800, 0.0
      %v7837 = vsel %vm4474, %v7801, 0.0
      %v7838 = vsel %vm4475, %v7802, 0.0
      %v7839 = vsel %vm4476, %v7803, 0.0
      %v7840 = vsel %vm4477, %v7804, 0.0
      %v7841 = vsel %vm4478, %v7805, 0.0
      %v7842 = vsel %vm4479, %v7806, 0.0
      %v7843 = vsel %vm4480, %v7807, 0.0
      %v7844 = vsel %vm4481, %v7808, 0.0
      %v7845 = vsel %vm4482, %v7809, 0.0
      %v7846 = vsel %vm4483, %v7810, 0.0
      %v7847 = vsel %vm4484, %v7811, 0.0
      %v7848 = vsel %vm4485, %v7812, 0.0
      %v7849 = vsel %vm4486, %v7813, 0.0
      %v7850 = vsel %vm4487, %v7814, 0.0
      %v7851 = vsel %vm4488, %v7815, 0.0
      %v7852 = vsel %vm4489, %v7816, 0.0
      %v7853 = vsel %vm4490, %v7817, 0.0
      %v7854 = vsel %vm4491, %v7818, 0.0
      %v7855 = vsel %vm4492, %v7819, 0.0
      %v7856 = vsel %vm4493, %v7820, 0.0
      %v7857 = vsel %vm4494, %v7821, 0.0
      %v7858 = vsel %vm4495, %v7822, 0.0
      %v7859 = vsel %vm4496, %v7823, 0.0
      %v7860 = vsel %vm4497, %v7824, 0.0
      %v7861 = vsel %vm4498, %v7825, 0.0
      %v7862 = vsel %vm4499, %v7826, 0.0
      %v7863 = vsel %vm4500, %v7827, 0.0
      %v7864 = vpack.c.bf16 %v7828, %v7828
      %v7865 = vpack.c.bf16 %v7829, %v7829
      %v7866 = vpack.c.bf16 %v7830, %v7830
      %v7867 = vpack.c.bf16 %v7831, %v7831
      %v7868 = vpack.c.bf16 %v7832, %v7832
      %v7869 = vpack.c.bf16 %v7833, %v7833
      %v7870 = vpack.c.bf16 %v7834, %v7834
      %v7871 = vpack.c.bf16 %v7835, %v7835
      %v7872 = vpack.c.bf16 %v7836, %v7836
      %v7873 = vpack.c.bf16 %v7837, %v7837
      %v7874 = vpack.c.bf16 %v7838, %v7838
      %v7875 = vpack.c.bf16 %v7839, %v7839
      %v7876 = vpack.c.bf16 %v7840, %v7840
      %v7877 = vpack.c.bf16 %v7841, %v7841
      %v7878 = vpack.c.bf16 %v7842, %v7842
      %v7879 = vpack.c.bf16 %v7843, %v7843
      %v7880 = vpack.c.bf16 %v7844, %v7844
      %v7881 = vpack.c.bf16 %v7845, %v7845
      %v7882 = vpack.c.bf16 %v7846, %v7846
      %v7883 = vpack.c.bf16 %v7847, %v7847
      %v7884 = vpack.c.bf16 %v7848, %v7848
      %v7885 = vpack.c.bf16 %v7849, %v7849
      %v7886 = vpack.c.bf16 %v7850, %v7850
      %v7887 = vpack.c.bf16 %v7851, %v7851
      %v7888 = vpack.c.bf16 %v7852, %v7852
      %v7889 = vpack.c.bf16 %v7853, %v7853
      %v7890 = vpack.c.bf16 %v7854, %v7854
      %v7891 = vpack.c.bf16 %v7855, %v7855
      %v7892 = vpack.c.bf16 %v7856, %v7856
      %v7893 = vpack.c.bf16 %v7857, %v7857
      %v7894 = vpack.c.bf16 %v7858, %v7858
      %v7895 = vpack.c.bf16 %v7859, %v7859
      %v7896 = vpack.c.bf16 %v7860, %v7860
      %v7897 = vpack.c.bf16 %v7861, %v7861
      %v7898 = vpack.c.bf16 %v7862, %v7862
      %v7899 = vpack.c.bf16 %v7863, %v7863
      %v7901 = vshrl.u32 %v7864, 16
      %v7903 = vrot.slane %v7901, 6
      %v7904 = vshll.u32 %v7864, 16
      %v7906 = vrot.slane %v7904, 7
      %v7907 = vor.u32 %v7903, %v7906
      %v7908 = vrot.slane %v7907, 4
      %v7910 = vshrl.u32 %v7865, 16
      %v7912 = vrot.slane %v7910, 6
      %v7913 = vshll.u32 %v7865, 16
      %v7915 = vrot.slane %v7913, 7
      %v7916 = vor.u32 %v7912, %v7915
      %v7917 = vsel %vm4574, %v7908, %v7916
      %v7918 = vrot.slane %v7916, 4
      %v7920 = vshrl.u32 %v7866, 16
      %v7922 = vrot.slane %v7920, 6
      %v7923 = vshll.u32 %v7866, 16
      %v7925 = vrot.slane %v7923, 7
      %v7926 = vor.u32 %v7922, %v7925
      %v7927 = vsel %vm4574, %v7918, %v7926
      %v7928 = vrot.slane %v7926, 4
      %v7930 = vshrl.u32 %v7867, 16
      %v7932 = vrot.slane %v7930, 6
      %v7933 = vshll.u32 %v7867, 16
      %v7935 = vrot.slane %v7933, 7
      %v7936 = vor.u32 %v7932, %v7935
      %v7937 = vsel %vm4574, %v7928, %v7936
      %v7938 = vrot.slane %v7936, 4
      %v7940 = vshrl.u32 %v7868, 16
      %v7942 = vrot.slane %v7940, 6
      %v7943 = vshll.u32 %v7868, 16
      %v7945 = vrot.slane %v7943, 7
      %v7946 = vor.u32 %v7942, %v7945
      %v7947 = vsel %vm4574, %v7938, %v7946
      %v7948 = vrot.slane %v7946, 4
      %v7950 = vshrl.u32 %v7869, 16
      %v7952 = vrot.slane %v7950, 6
      %v7953 = vshll.u32 %v7869, 16
      %v7955 = vrot.slane %v7953, 7
      %v7956 = vor.u32 %v7952, %v7955
      %v7957 = vsel %vm4574, %v7948, %v7956
      %v7958 = vrot.slane %v7956, 4
      %v7960 = vshrl.u32 %v7870, 16
      %v7962 = vrot.slane %v7960, 6
      %v7963 = vshll.u32 %v7870, 16
      %v7965 = vrot.slane %v7963, 7
      %v7966 = vor.u32 %v7962, %v7965
      %v7967 = vsel %vm4574, %v7958, %v7966
      %v7968 = vrot.slane %v7966, 4
      %v7970 = vshrl.u32 %v7871, 16
      %v7972 = vrot.slane %v7970, 6
      %v7973 = vshll.u32 %v7871, 16
      %v7975 = vrot.slane %v7973, 7
      %v7976 = vor.u32 %v7972, %v7975
      %v7977 = vsel %vm4574, %v7968, %v7976
      %v7978 = vrot.slane %v7976, 4
      %v7980 = vshrl.u32 %v7872, 16
      %v7982 = vrot.slane %v7980, 6
      %v7983 = vshll.u32 %v7872, 16
      %v7985 = vrot.slane %v7983, 7
      %v7986 = vor.u32 %v7982, %v7985
      %v7987 = vsel %vm4574, %v7978, %v7986
      %v7988 = vrot.slane %v7986, 4
      %v7990 = vshrl.u32 %v7873, 16
      %v7992 = vrot.slane %v7990, 6
      %v7993 = vshll.u32 %v7873, 16
      %v7995 = vrot.slane %v7993, 7
      %v7996 = vor.u32 %v7992, %v7995
      %v7997 = vsel %vm4574, %v7988, %v7996
      %v7998 = vrot.slane %v7996, 4
      %v8000 = vshrl.u32 %v7874, 16
      %v8002 = vrot.slane %v8000, 6
      %v8003 = vshll.u32 %v7874, 16
      %v8005 = vrot.slane %v8003, 7
      %v8006 = vor.u32 %v8002, %v8005
      %v8007 = vsel %vm4574, %v7998, %v8006
      %v8008 = vrot.slane %v8006, 4
      %v8010 = vshrl.u32 %v7875, 16
      %v8012 = vrot.slane %v8010, 6
      %v8013 = vshll.u32 %v7875, 16
      %v8015 = vrot.slane %v8013, 7
      %v8016 = vor.u32 %v8012, %v8015
      %v8017 = vsel %vm4574, %v8008, %v8016
      %v8018 = vrot.slane %v8016, 4
      %v8020 = vshrl.u32 %v7876, 16
      %v8022 = vrot.slane %v8020, 6
      %v8023 = vshll.u32 %v7876, 16
      %v8025 = vrot.slane %v8023, 7
      %v8026 = vor.u32 %v8022, %v8025
      %v8027 = vsel %vm4574, %v8018, %v8026
      %v8028 = vrot.slane %v8026, 4
      %v8030 = vshrl.u32 %v7877, 16
      %v8032 = vrot.slane %v8030, 6
      %v8033 = vshll.u32 %v7877, 16
      %v8035 = vrot.slane %v8033, 7
      %v8036 = vor.u32 %v8032, %v8035
      %v8037 = vsel %vm4574, %v8028, %v8036
      %v8038 = vrot.slane %v8036, 4
      %v8040 = vshrl.u32 %v7878, 16
      %v8042 = vrot.slane %v8040, 6
      %v8043 = vshll.u32 %v7878, 16
      %v8045 = vrot.slane %v8043, 7
      %v8046 = vor.u32 %v8042, %v8045
      %v8047 = vsel %vm4574, %v8038, %v8046
      %v8048 = vrot.slane %v8046, 4
      %v8050 = vshrl.u32 %v7879, 16
      %v8052 = vrot.slane %v8050, 6
      %v8053 = vshll.u32 %v7879, 16
      %v8055 = vrot.slane %v8053, 7
      %v8056 = vor.u32 %v8052, %v8055
      %v8057 = vsel %vm4574, %v8048, %v8056
      %v8058 = vrot.slane %v8056, 4
      %v8060 = vshrl.u32 %v7880, 16
      %v8062 = vrot.slane %v8060, 6
      %v8063 = vshll.u32 %v7880, 16
      %v8065 = vrot.slane %v8063, 7
      %v8066 = vor.u32 %v8062, %v8065
      %v8067 = vsel %vm4574, %v8058, %v8066
      %v8068 = vrot.slane %v8066, 4
      %v8070 = vshrl.u32 %v7881, 16
      %v8072 = vrot.slane %v8070, 6
      %v8073 = vshll.u32 %v7881, 16
      %v8075 = vrot.slane %v8073, 7
      %v8076 = vor.u32 %v8072, %v8075
      %v8077 = vsel %vm4574, %v8068, %v8076
      %v8078 = vrot.slane %v8076, 4
      %v8080 = vshrl.u32 %v7882, 16
      %v8082 = vrot.slane %v8080, 6
      %v8083 = vshll.u32 %v7882, 16
      %v8085 = vrot.slane %v8083, 7
      %v8086 = vor.u32 %v8082, %v8085
      %v8087 = vsel %vm4574, %v8078, %v8086
      %v8088 = vrot.slane %v8086, 4
      %v8090 = vshrl.u32 %v7883, 16
      %v8092 = vrot.slane %v8090, 6
      %v8093 = vshll.u32 %v7883, 16
      %v8095 = vrot.slane %v8093, 7
      %v8096 = vor.u32 %v8092, %v8095
      %v8097 = vsel %vm4574, %v8088, %v8096
      %v8098 = vrot.slane %v8096, 4
      %v8100 = vshrl.u32 %v7884, 16
      %v8102 = vrot.slane %v8100, 6
      %v8103 = vshll.u32 %v7884, 16
      %v8105 = vrot.slane %v8103, 7
      %v8106 = vor.u32 %v8102, %v8105
      %v8107 = vsel %vm4574, %v8098, %v8106
      %v8108 = vrot.slane %v8106, 4
      %v8110 = vshrl.u32 %v7885, 16
      %v8112 = vrot.slane %v8110, 6
      %v8113 = vshll.u32 %v7885, 16
      %v8115 = vrot.slane %v8113, 7
      %v8116 = vor.u32 %v8112, %v8115
      %v8117 = vsel %vm4574, %v8108, %v8116
      %v8118 = vrot.slane %v8116, 4
      %v8120 = vshrl.u32 %v7886, 16
      %v8122 = vrot.slane %v8120, 6
      %v8123 = vshll.u32 %v7886, 16
      %v8125 = vrot.slane %v8123, 7
      %v8126 = vor.u32 %v8122, %v8125
      %v8127 = vsel %vm4574, %v8118, %v8126
      %v8128 = vrot.slane %v8126, 4
      %v8130 = vshrl.u32 %v7887, 16
      %v8132 = vrot.slane %v8130, 6
      %v8133 = vshll.u32 %v7887, 16
      %v8135 = vrot.slane %v8133, 7
      %v8136 = vor.u32 %v8132, %v8135
      %v8137 = vsel %vm4574, %v8128, %v8136
      %v8138 = vrot.slane %v8136, 4
      %v8140 = vshrl.u32 %v7888, 16
      %v8142 = vrot.slane %v8140, 6
      %v8143 = vshll.u32 %v7888, 16
      %v8145 = vrot.slane %v8143, 7
      %v8146 = vor.u32 %v8142, %v8145
      %v8147 = vsel %vm4574, %v8138, %v8146
      %v8148 = vrot.slane %v8146, 4
      %v8150 = vshrl.u32 %v7889, 16
      %v8152 = vrot.slane %v8150, 6
      %v8153 = vshll.u32 %v7889, 16
      %v8155 = vrot.slane %v8153, 7
      %v8156 = vor.u32 %v8152, %v8155
      %v8157 = vsel %vm4574, %v8148, %v8156
      %v8158 = vrot.slane %v8156, 4
      %v8160 = vshrl.u32 %v7890, 16
      %v8162 = vrot.slane %v8160, 6
      %v8163 = vshll.u32 %v7890, 16
      %v8165 = vrot.slane %v8163, 7
      %v8166 = vor.u32 %v8162, %v8165
      %v8167 = vsel %vm4574, %v8158, %v8166
      %v8168 = vrot.slane %v8166, 4
      %v8170 = vshrl.u32 %v7891, 16
      %v8172 = vrot.slane %v8170, 6
      %v8173 = vshll.u32 %v7891, 16
      %v8175 = vrot.slane %v8173, 7
      %v8176 = vor.u32 %v8172, %v8175
      %v8177 = vsel %vm4574, %v8168, %v8176
      %v8178 = vrot.slane %v8176, 4
      %v8180 = vshrl.u32 %v7892, 16
      %v8182 = vrot.slane %v8180, 6
      %v8183 = vshll.u32 %v7892, 16
      %v8185 = vrot.slane %v8183, 7
      %v8186 = vor.u32 %v8182, %v8185
      %v8187 = vsel %vm4574, %v8178, %v8186
      %v8188 = vrot.slane %v8186, 4
      %v8190 = vshrl.u32 %v7893, 16
      %v8192 = vrot.slane %v8190, 6
      %v8193 = vshll.u32 %v7893, 16
      %v8195 = vrot.slane %v8193, 7
      %v8196 = vor.u32 %v8192, %v8195
      %v8197 = vsel %vm4574, %v8188, %v8196
      %v8198 = vrot.slane %v8196, 4
      %v8200 = vshrl.u32 %v7894, 16
      %v8202 = vrot.slane %v8200, 6
      %v8203 = vshll.u32 %v7894, 16
      %v8205 = vrot.slane %v8203, 7
      %v8206 = vor.u32 %v8202, %v8205
      %v8207 = vsel %vm4574, %v8198, %v8206
      %v8208 = vrot.slane %v8206, 4
      %v8210 = vshrl.u32 %v7895, 16
      %v8212 = vrot.slane %v8210, 6
      %v8213 = vshll.u32 %v7895, 16
      %v8215 = vrot.slane %v8213, 7
      %v8216 = vor.u32 %v8212, %v8215
      %v8217 = vsel %vm4574, %v8208, %v8216
      %v8218 = vrot.slane %v8216, 4
      %v8220 = vshrl.u32 %v7896, 16
      %v8222 = vrot.slane %v8220, 6
      %v8223 = vshll.u32 %v7896, 16
      %v8225 = vrot.slane %v8223, 7
      %v8226 = vor.u32 %v8222, %v8225
      %v8227 = vsel %vm4574, %v8218, %v8226
      %v8228 = vrot.slane %v8226, 4
      %v8230 = vshrl.u32 %v7897, 16
      %v8232 = vrot.slane %v8230, 6
      %v8233 = vshll.u32 %v7897, 16
      %v8235 = vrot.slane %v8233, 7
      %v8236 = vor.u32 %v8232, %v8235
      %v8237 = vsel %vm4574, %v8228, %v8236
      %v8238 = vrot.slane %v8236, 4
      %v8240 = vshrl.u32 %v7898, 16
      %v8242 = vrot.slane %v8240, 6
      %v8243 = vshll.u32 %v7898, 16
      %v8245 = vrot.slane %v8243, 7
      %v8246 = vor.u32 %v8242, %v8245
      %v8247 = vsel %vm4574, %v8238, %v8246
      %v8248 = vrot.slane %v8246, 4
      %v8250 = vshrl.u32 %v7899, 16
      %v8252 = vrot.slane %v8250, 6
      %v8253 = vshll.u32 %v7899, 16
      %v8255 = vrot.slane %v8253, 7
      %v8256 = vor.u32 %v8252, %v8255
      %v8257 = vsel %vm4574, %v8248, %v8256
      %v8258 = vrot.slane %v8256, 4
      %v8296 = vld [vmem:[#allocation3 + $0x8] sm:$0xe]
      %v8297 = vsel %vm289, %v7907, %v8296
      %8298 = vst [vmem:[#allocation3 + $0x8] sm:$0xe] %v8297
      %8299 = vst.msk [vmem:[#allocation3 + $0xc] sm:$0xf] %vm278, %v7917
      %8300 = vst.msk [vmem:[#allocation3 + $0x10] sm:$0xf] %vm278, %v7927
      %8301 = vst.msk [vmem:[#allocation3 + $0x14] sm:$0xf] %vm278, %v7937
      %8302 = vst.msk [vmem:[#allocation3 + $0x18] sm:$0xf] %vm278, %v7947
      %8303 = vst.msk [vmem:[#allocation3 + $0x1c] sm:$0xf] %vm278, %v7957
      %8304 = vst.msk [vmem:[#allocation3 + $0x20] sm:$0xf] %vm278, %v7967
      %8305 = vst.msk [vmem:[#allocation3 + $0x24] sm:$0xf] %vm278, %v7977
      %8306 = vst.msk [vmem:[#allocation3 + $0x28] sm:$0xf] %vm278, %v7987
      %8307 = vst.msk [vmem:[#allocation3 + $0x2c] sm:$0xf] %vm278, %v7997
      %8308 = vst.msk [vmem:[#allocation3 + $0x30] sm:$0xf] %vm278, %v8007
      %8309 = vst.msk [vmem:[#allocation3 + $0x34] sm:$0xf] %vm278, %v8017
      %8310 = vst.msk [vmem:[#allocation3 + $0x38] sm:$0xf] %vm278, %v8027
      %8311 = vst.msk [vmem:[#allocation3 + $0x3c] sm:$0xf] %vm278, %v8037
      %8312 = vst.msk [vmem:[#allocation3 + $0x40] sm:$0xf] %vm278, %v8047
      %8313 = vst.msk [vmem:[#allocation3 + $0x44] sm:$0xf] %vm278, %v8057
      %8314 = vst.msk [vmem:[#allocation3 + $0x48] sm:$0xf] %vm278, %v8067
      %8315 = vst.msk [vmem:[#allocation3 + $0x4c] sm:$0xf] %vm278, %v8077
      %8316 = vst.msk [vmem:[#allocation3 + $0x50] sm:$0xf] %vm278, %v8087
      %8317 = vst.msk [vmem:[#allocation3 + $0x54] sm:$0xf] %vm278, %v8097
      %8318 = vst.msk [vmem:[#allocation3 + $0x58] sm:$0xf] %vm278, %v8107
      %8319 = vst.msk [vmem:[#allocation3 + $0x5c] sm:$0xf] %vm278, %v8117
      %8320 = vst.msk [vmem:[#allocation3 + $0x60] sm:$0xf] %vm278, %v8127
      %8321 = vst.msk [vmem:[#allocation3 + $0x64] sm:$0xf] %vm278, %v8137
      %8322 = vst.msk [vmem:[#allocation3 + $0x68] sm:$0xf] %vm278, %v8147
      %8323 = vst.msk [vmem:[#allocation3 + $0x6c] sm:$0xf] %vm278, %v8157
      %8324 = vst.msk [vmem:[#allocation3 + $0x70] sm:$0xf] %vm278, %v8167
      %8325 = vst.msk [vmem:[#allocation3 + $0x74] sm:$0xf] %vm278, %v8177
      %8326 = vst.msk [vmem:[#allocation3 + $0x78] sm:$0xf] %vm278, %v8187
      %8327 = vst.msk [vmem:[#allocation3 + $0x7c] sm:$0xf] %vm278, %v8197
      %8328 = vst.msk [vmem:[#allocation3 + $0x80] sm:$0xf] %vm278, %v8207
      %8329 = vst.msk [vmem:[#allocation3 + $0x84] sm:$0xf] %vm278, %v8217
      %8330 = vst.msk [vmem:[#allocation3 + $0x88] sm:$0xf] %vm278, %v8227
      %8331 = vst.msk [vmem:[#allocation3 + $0x8c] sm:$0xf] %vm278, %v8237
      %8332 = vst.msk [vmem:[#allocation3 + $0x90] sm:$0xf] %vm278, %v8247
      %8333 = vst.msk [vmem:[#allocation3 + $0x94] sm:$0xf] %vm278, %v8257
      %v8334 = vld [vmem:[#allocation3 + $0x98] sm:$0x3]
      %v8335 = vsel %vm283, %v8258, %v8334
      %8336 = vst [vmem:[#allocation3 + $0x98] sm:$0x3] %v8335
      %v8337 = vld [vmem:[#allocation3] sm:$0xf]
      %v8338 = vld [vmem:[#allocation3 + $0x4] sm:$0xf]
      %v8339 = vld [vmem:[#allocation3 + $0x8] sm:$0xf]
      %v8340 = vld [vmem:[#allocation3 + $0xc] sm:$0xf]
      %v8341 = vld [vmem:[#allocation3 + $0x10] sm:$0xf]
      %v8342 = vld [vmem:[#allocation3 + $0x14] sm:$0xf]
      %v8343 = vld [vmem:[#allocation3 + $0x18] sm:$0xf]
      %v8344 = vld [vmem:[#allocation3 + $0x1c] sm:$0xf]
      %v8345 = vld [vmem:[#allocation3 + $0x20] sm:$0xf]
      %v8346 = vld [vmem:[#allocation3 + $0x24] sm:$0xf]
      %v8347 = vld [vmem:[#allocation3 + $0x28] sm:$0xf]
      %v8348 = vld [vmem:[#allocation3 + $0x2c] sm:$0xf]
      %v8349 = vld [vmem:[#allocation3 + $0x30] sm:$0xf]
      %v8350 = vld [vmem:[#allocation3 + $0x34] sm:$0xf]
      %v8351 = vld [vmem:[#allocation3 + $0x38] sm:$0xf]
      %v8352 = vld [vmem:[#allocation3 + $0x3c] sm:$0xf]
      %v8353 = vld [vmem:[#allocation3 + $0x40] sm:$0xf]
      %v8354 = vld [vmem:[#allocation3 + $0x44] sm:$0xf]
      %v8355 = vld [vmem:[#allocation3 + $0x48] sm:$0xf]
      %v8356 = vld [vmem:[#allocation3 + $0x4c] sm:$0xf]
      %v8357 = vld [vmem:[#allocation3 + $0x50] sm:$0xf]
      %v8358 = vld [vmem:[#allocation3 + $0x54] sm:$0xf]
      %v8359 = vld [vmem:[#allocation3 + $0x58] sm:$0xf]
      %v8360 = vld [vmem:[#allocation3 + $0x5c] sm:$0xf]
      %v8361 = vld [vmem:[#allocation3 + $0x60] sm:$0xf]
      %v8362 = vld [vmem:[#allocation3 + $0x64] sm:$0xf]
      %v8363 = vld [vmem:[#allocation3 + $0x68] sm:$0xf]
      %v8364 = vld [vmem:[#allocation3 + $0x6c] sm:$0xf]
      %v8365 = vld [vmem:[#allocation3 + $0x70] sm:$0xf]
      %v8366 = vld [vmem:[#allocation3 + $0x74] sm:$0xf]
      %v8367 = vld [vmem:[#allocation3 + $0x78] sm:$0xf]
      %v8368 = vld [vmem:[#allocation3 + $0x7c] sm:$0xf]
      %v8369 = vld [vmem:[#allocation3 + $0x80] sm:$0xf]
      %v8370 = vld [vmem:[#allocation3 + $0x84] sm:$0xf]
      %v8371 = vld [vmem:[#allocation3 + $0x88] sm:$0xf]
      %v8372 = vld [vmem:[#allocation3 + $0x8c] sm:$0xf]
      %v8373 = vld [vmem:[%s5] sm:$0xf]
      %v8374 = vld [vmem:[#allocation3 + $0x90] sm:$0x1]
      %s8375 = scalar_lea.vmem %s5, 4
      %v8376 = vld [vmem:[%s8375] sm:$0xf]
      %v8414 = vunpack.c.l.b16 %v8337
      %v8415 = vunpack.c.l.b16 %v8338
      %v8416 = vunpack.c.l.b16 %v8339
      %v8417 = vunpack.c.l.b16 %v8340
      %v8418 = vunpack.c.l.b16 %v8341
      %v8419 = vunpack.c.l.b16 %v8342
      %v8420 = vunpack.c.l.b16 %v8343
      %v8421 = vunpack.c.l.b16 %v8344
      %v8422 = vunpack.c.l.b16 %v8345
      %v8423 = vunpack.c.l.b16 %v8346
      %v8424 = vunpack.c.l.b16 %v8347
      %v8425 = vunpack.c.l.b16 %v8348
      %v8426 = vunpack.c.l.b16 %v8349
      %v8427 = vunpack.c.l.b16 %v8350
      %v8428 = vunpack.c.l.b16 %v8351
      %v8429 = vunpack.c.l.b16 %v8352
      %v8430 = vunpack.c.l.b16 %v8353
      %v8431 = vunpack.c.l.b16 %v8354
      %v8432 = vunpack.c.l.b16 %v8355
      %v8433 = vunpack.c.l.b16 %v8356
      %v8434 = vunpack.c.l.b16 %v8357
      %v8435 = vunpack.c.l.b16 %v8358
      %v8436 = vunpack.c.l.b16 %v8359
      %v8437 = vunpack.c.l.b16 %v8360
      %v8438 = vunpack.c.l.b16 %v8361
      %v8439 = vunpack.c.l.b16 %v8362
      %v8440 = vunpack.c.l.b16 %v8363
      %v8441 = vunpack.c.l.b16 %v8364
      %v8442 = vunpack.c.l.b16 %v8365
      %v8443 = vunpack.c.l.b16 %v8366
      %v8444 = vunpack.c.l.b16 %v8367
      %v8445 = vunpack.c.l.b16 %v8368
      %v8446 = vunpack.c.l.b16 %v8369
      %v8447 = vunpack.c.l.b16 %v8370
      %v8448 = vunpack.c.l.b16 %v8371
      %v8449 = vunpack.c.l.b16 %v8372
      %v8450 = vunpack.c.l.b16 %v8374
      %v8451 = vpack.c.b16 %v8415, %v8414
      %v8452 = vpack.c.b16 %v8417, %v8416
      %v8453 = vpack.c.b16 %v8419, %v8418
      %v8454 = vpack.c.b16 %v8421, %v8420
      %v8455 = vpack.c.b16 %v8423, %v8422
      %v8456 = vpack.c.b16 %v8425, %v8424
      %v8457 = vpack.c.b16 %v8427, %v8426
      %v8458 = vpack.c.b16 %v8429, %v8428
      %v8459 = vpack.c.b16 %v8431, %v8430
      %v8460 = vpack.c.b16 %v8433, %v8432
      %v8461 = vpack.c.b16 %v8435, %v8434
      %v8462 = vpack.c.b16 %v8437, %v8436
      %v8463 = vpack.c.b16 %v8439, %v8438
      %v8464 = vpack.c.b16 %v8441, %v8440
      %v8465 = vpack.c.b16 %v8443, %v8442
      %v8466 = vpack.c.b16 %v8445, %v8444
      %v8467 = vpack.c.b16 %v8447, %v8446
      %v8468 = vpack.c.b16 %v8449, %v8448
      %v8469 = vpack.c.b16 %v8450, %v8450
      %v8471 = vshrl.u32 %v8451, 16
      %v8473 = vshll.u32 %v8451, 16
      %v8475 = vrot.slane %v8473, 1
      %v8476 = vor.u32 %v8471, %v8475
      %v8478 = vshll.u32 %v8452, 16
      %v8480 = vrot.slane %v8478, 1
      %v8481 = vsel %vm1740, %v8476, %v8480
      %v8482 = vshrl.u32 %v8452, 16
      %v8484 = vor.u32 %v8482, %v8480
      %v8486 = vshll.u32 %v8453, 16
      %v8488 = vrot.slane %v8486, 1
      %v8489 = vsel %vm1740, %v8484, %v8488
      %v8490 = vshrl.u32 %v8453, 16
      %v8492 = vor.u32 %v8490, %v8488
      %v8494 = vshll.u32 %v8454, 16
      %v8496 = vrot.slane %v8494, 1
      %v8497 = vsel %vm1740, %v8492, %v8496
      %v8498 = vshrl.u32 %v8454, 16
      %v8500 = vor.u32 %v8498, %v8496
      %v8502 = vshll.u32 %v8455, 16
      %v8504 = vrot.slane %v8502, 1
      %v8505 = vsel %vm1740, %v8500, %v8504
      %v8506 = vshrl.u32 %v8455, 16
      %v8508 = vor.u32 %v8506, %v8504
      %v8510 = vshll.u32 %v8456, 16
      %v8512 = vrot.slane %v8510, 1
      %v8513 = vsel %vm1740, %v8508, %v8512
      %v8514 = vshrl.u32 %v8456, 16
      %v8516 = vor.u32 %v8514, %v8512
      %v8518 = vshll.u32 %v8457, 16
      %v8520 = vrot.slane %v8518, 1
      %v8521 = vsel %vm1740, %v8516, %v8520
      %v8522 = vshrl.u32 %v8457, 16
      %v8524 = vor.u32 %v8522, %v8520
      %v8526 = vshll.u32 %v8458, 16
      %v8528 = vrot.slane %v8526, 1
      %v8529 = vsel %vm1740, %v8524, %v8528
      %v8530 = vshrl.u32 %v8458, 16
      %v8532 = vor.u32 %v8530, %v8528
      %v8534 = vshll.u32 %v8459, 16
      %v8536 = vrot.slane %v8534, 1
      %v8537 = vsel %vm1740, %v8532, %v8536
      %v8538 = vshrl.u32 %v8459, 16
      %v8540 = vor.u32 %v8538, %v8536
      %v8542 = vshll.u32 %v8460, 16
      %v8544 = vrot.slane %v8542, 1
      %v8545 = vsel %vm1740, %v8540, %v8544
      %v8546 = vshrl.u32 %v8460, 16
      %v8548 = vor.u32 %v8546, %v8544
      %v8550 = vshll.u32 %v8461, 16
      %v8552 = vrot.slane %v8550, 1
      %v8553 = vsel %vm1740, %v8548, %v8552
      %v8554 = vshrl.u32 %v8461, 16
      %v8556 = vor.u32 %v8554, %v8552
      %v8558 = vshll.u32 %v8462, 16
      %v8560 = vrot.slane %v8558, 1
      %v8561 = vsel %vm1740, %v8556, %v8560
      %v8562 = vshrl.u32 %v8462, 16
      %v8564 = vor.u32 %v8562, %v8560
      %v8566 = vshll.u32 %v8463, 16
      %v8568 = vrot.slane %v8566, 1
      %v8569 = vsel %vm1740, %v8564, %v8568
      %v8570 = vshrl.u32 %v8463, 16
      %v8572 = vor.u32 %v8570, %v8568
      %v8574 = vshll.u32 %v8464, 16
      %v8576 = vrot.slane %v8574, 1
      %v8577 = vsel %vm1740, %v8572, %v8576
      %v8578 = vshrl.u32 %v8464, 16
      %v8580 = vor.u32 %v8578, %v8576
      %v8582 = vshll.u32 %v8465, 16
      %v8584 = vrot.slane %v8582, 1
      %v8585 = vsel %vm1740, %v8580, %v8584
      %v8586 = vshrl.u32 %v8465, 16
      %v8588 = vor.u32 %v8586, %v8584
      %v8590 = vshll.u32 %v8466, 16
      %v8592 = vrot.slane %v8590, 1
      %v8593 = vsel %vm1740, %v8588, %v8592
      %v8594 = vshrl.u32 %v8466, 16
      %v8596 = vor.u32 %v8594, %v8592
      %v8598 = vshll.u32 %v8467, 16
      %v8600 = vrot.slane %v8598, 1
      %v8601 = vsel %vm1740, %v8596, %v8600
      %v8602 = vshrl.u32 %v8467, 16
      %v8604 = vor.u32 %v8602, %v8600
      %v8606 = vshll.u32 %v8468, 16
      %v8608 = vrot.slane %v8606, 1
      %v8609 = vsel %vm1740, %v8604, %v8608
      %v8610 = vshrl.u32 %v8468, 16
      %v8612 = vor.u32 %v8610, %v8608
      %v8614 = vshll.u32 %v8469, 16
      %v8616 = vrot.slane %v8614, 1
      %v8617 = vsel %vm1740, %v8612, %v8616
      %v8619 = vsel %vm5293, %v8481, 0
      %v8622 = vsel %vm5293, %v8489, 0
      %v8625 = vsel %vm5293, %v8497, 0
      %v8628 = vsel %vm5293, %v8505, 0
      %v8631 = vsel %vm5293, %v8513, 0
      %v8634 = vsel %vm5293, %v8521, 0
      %v8637 = vsel %vm5293, %v8529, 0
      %v8640 = vsel %vm5293, %v8537, 0
      %v8643 = vsel %vm5293, %v8545, 0
      %v8646 = vsel %vm5293, %v8553, 0
      %v8649 = vsel %vm5293, %v8561, 0
      %v8652 = vsel %vm5293, %v8569, 0
      %v8655 = vsel %vm5293, %v8577, 0
      %v8658 = vsel %vm5293, %v8585, 0
      %v8661 = vsel %vm5293, %v8593, 0
      %v8664 = vsel %vm5293, %v8601, 0
      %v8667 = vsel %vm5293, %v8609, 0
      %v8670 = vsel %vm5293, %v8617, 0
      %v8673 = vsel %vm5348, %v8376, 0
      %8675 = vmatpush.bf16.msra.mxu0 0
      %8676 = vmatpush.bf16.msra.mxu0 0
      %8677 = vmatpush.bf16.msra.mxu0 0
      %8678 = vmatpush.bf16.msra.mxu0 0
      %8679 = vmatpush.bf16.msra.mxu0 0
      %8680 = vmatpush.bf16.msra.mxu0 0
      %8681 = vmatpush.bf16.msra.mxu0 0
      %8682 = vmatpush.bf16.msra.mxu0 %v8673
      %8683 = vmatmul.bf16.gmra.mxu0 %v8619
      %v8684 = vpop.f32.mrf.mxu0
      %v8685 = vadd.f32 0.0, %v8684
      %v8686 = vpop.f32.mrf.mxu0
      %v8687 = vadd.f32 0.0, %v8686
      %8688 = vmatmul.bf16.gmra.mxu0 %v8622
      %v8689 = vpop.f32.mrf.mxu0
      %v8690 = vadd.f32 0.0, %v8689
      %v8691 = vpop.f32.mrf.mxu0
      %v8692 = vadd.f32 0.0, %v8691
      %8693 = vmatmul.bf16.gmra.mxu0 %v8625
      %v8694 = vpop.f32.mrf.mxu0
      %v8695 = vadd.f32 0.0, %v8694
      %v8696 = vpop.f32.mrf.mxu0
      %v8697 = vadd.f32 0.0, %v8696
      %8698 = vmatmul.bf16.gmra.mxu0 %v8628
      %v8699 = vpop.f32.mrf.mxu0
      %v8700 = vadd.f32 0.0, %v8699
      %v8701 = vpop.f32.mrf.mxu0
      %v8702 = vadd.f32 0.0, %v8701
      %8703 = vmatmul.bf16.gmra.mxu0 %v8631
      %v8704 = vpop.f32.mrf.mxu0
      %v8705 = vadd.f32 0.0, %v8704
      %v8706 = vpop.f32.mrf.mxu0
      %v8707 = vadd.f32 0.0, %v8706
      %8708 = vmatmul.bf16.gmra.mxu0 %v8634
      %v8709 = vpop.f32.mrf.mxu0
      %v8710 = vadd.f32 0.0, %v8709
      %v8711 = vpop.f32.mrf.mxu0
      %v8712 = vadd.f32 0.0, %v8711
      %8713 = vmatmul.bf16.gmra.mxu0 %v8637
      %v8714 = vpop.f32.mrf.mxu0
      %v8715 = vadd.f32 0.0, %v8714
      %v8716 = vpop.f32.mrf.mxu0
      %v8717 = vadd.f32 0.0, %v8716
      %8718 = vmatmul.bf16.gmra.mxu0 %v8640
      %v8719 = vpop.f32.mrf.mxu0
      %v8720 = vadd.f32 0.0, %v8719
      %v8721 = vpop.f32.mrf.mxu0
      %v8722 = vadd.f32 0.0, %v8721
      %8723 = vmatmul.bf16.gmra.mxu0 %v8643
      %v8724 = vpop.f32.mrf.mxu0
      %v8725 = vadd.f32 0.0, %v8724
      %v8726 = vpop.f32.mrf.mxu0
      %v8727 = vadd.f32 0.0, %v8726
      %8728 = vmatmul.bf16.gmra.mxu0 %v8646
      %v8729 = vpop.f32.mrf.mxu0
      %v8730 = vadd.f32 0.0, %v8729
      %v8731 = vpop.f32.mrf.mxu0
      %v8732 = vadd.f32 0.0, %v8731
      %8733 = vmatmul.bf16.gmra.mxu0 %v8649
      %v8734 = vpop.f32.mrf.mxu0
      %v8735 = vadd.f32 0.0, %v8734
      %v8736 = vpop.f32.mrf.mxu0
      %v8737 = vadd.f32 0.0, %v8736
      %8738 = vmatmul.bf16.gmra.mxu0 %v8652
      %v8739 = vpop.f32.mrf.mxu0
      %v8740 = vadd.f32 0.0, %v8739
      %v8741 = vpop.f32.mrf.mxu0
      %v8742 = vadd.f32 0.0, %v8741
      %8743 = vmatmul.bf16.gmra.mxu0 %v8655
      %v8744 = vpop.f32.mrf.mxu0
      %v8745 = vadd.f32 0.0, %v8744
      %v8746 = vpop.f32.mrf.mxu0
      %v8747 = vadd.f32 0.0, %v8746
      %8748 = vmatmul.bf16.gmra.mxu0 %v8658
      %v8749 = vpop.f32.mrf.mxu0
      %v8750 = vadd.f32 0.0, %v8749
      %v8751 = vpop.f32.mrf.mxu0
      %v8752 = vadd.f32 0.0, %v8751
      %8753 = vmatmul.bf16.gmra.mxu0 %v8661
      %v8754 = vpop.f32.mrf.mxu0
      %v8755 = vadd.f32 0.0, %v8754
      %v8756 = vpop.f32.mrf.mxu0
      %v8757 = vadd.f32 0.0, %v8756
      %8758 = vmatmul.bf16.gmra.mxu0 %v8664
      %v8759 = vpop.f32.mrf.mxu0
      %v8760 = vadd.f32 0.0, %v8759
      %v8761 = vpop.f32.mrf.mxu0
      %v8762 = vadd.f32 0.0, %v8761
      %8763 = vmatmul.bf16.gmra.mxu0 %v8667
      %v8764 = vpop.f32.mrf.mxu0
      %v8765 = vadd.f32 0.0, %v8764
      %v8766 = vpop.f32.mrf.mxu0
      %v8767 = vadd.f32 0.0, %v8766
      %8768 = vmatmul.bf16.gmra.mxu0 %v8670
      %v8769 = vpop.f32.mrf.mxu0
      %v8770 = vadd.f32 0.0, %v8769
      %v8771 = vpop.f32.mrf.mxu0
      %v8772 = vadd.f32 0.0, %v8771
      %8773 = vdwg.mxu0
      %v8774 = vsel %vm5293, %v8451, 0
      %v8776 = vsel %vm5293, %v8452, 0
      %v8778 = vsel %vm5293, %v8453, 0
      %v8780 = vsel %vm5293, %v8454, 0
      %v8782 = vsel %vm5293, %v8455, 0
      %v8784 = vsel %vm5293, %v8456, 0
      %v8786 = vsel %vm5293, %v8457, 0
      %v8788 = vsel %vm5293, %v8458, 0
      %v8790 = vsel %vm5293, %v8459, 0
      %v8792 = vsel %vm5293, %v8460, 0
      %v8794 = vsel %vm5293, %v8461, 0
      %v8796 = vsel %vm5293, %v8462, 0
      %v8798 = vsel %vm5293, %v8463, 0
      %v8800 = vsel %vm5293, %v8464, 0
      %v8802 = vsel %vm5293, %v8465, 0
      %v8804 = vsel %vm5293, %v8466, 0
      %v8806 = vsel %vm5293, %v8467, 0
      %v8808 = vsel %vm5293, %v8468, 0
      %v8811 = vsel %vm5348, %v8373, 0
      %8813 = vmatpush.bf16.msra.mxu0 0
      %8814 = vmatpush.bf16.msra.mxu0 0
      %8815 = vmatpush.bf16.msra.mxu0 0
      %8816 = vmatpush.bf16.msra.mxu0 0
      %8817 = vmatpush.bf16.msra.mxu0 0
      %8818 = vmatpush.bf16.msra.mxu0 0
      %8819 = vmatpush.bf16.msra.mxu0 0
      %8820 = vmatpush.bf16.msra.mxu0 %v8811
      %8821 = vmatmul.bf16.gmra.mxu0 %v8774
      %v8822 = vpop.f32.mrf.mxu0
      %v8823 = vadd.f32 %v8685, %v8822
      %v8824 = vpop.f32.mrf.mxu0
      %v8825 = vadd.f32 %v8687, %v8824
      %8826 = vmatmul.bf16.gmra.mxu0 %v8776
      %v8827 = vpop.f32.mrf.mxu0
      %v8828 = vadd.f32 %v8690, %v8827
      %v8829 = vpop.f32.mrf.mxu0
      %v8830 = vadd.f32 %v8692, %v8829
      %8831 = vmatmul.bf16.gmra.mxu0 %v8778
      %v8832 = vpop.f32.mrf.mxu0
      %v8833 = vadd.f32 %v8695, %v8832
      %v8834 = vpop.f32.mrf.mxu0
      %v8835 = vadd.f32 %v8697, %v8834
      %8836 = vmatmul.bf16.gmra.mxu0 %v8780
      %v8837 = vpop.f32.mrf.mxu0
      %v8838 = vadd.f32 %v8700, %v8837
      %v8839 = vpop.f32.mrf.mxu0
      %v8840 = vadd.f32 %v8702, %v8839
      %8841 = vmatmul.bf16.gmra.mxu0 %v8782
      %v8842 = vpop.f32.mrf.mxu0
      %v8843 = vadd.f32 %v8705, %v8842
      %v8844 = vpop.f32.mrf.mxu0
      %v8845 = vadd.f32 %v8707, %v8844
      %8846 = vmatmul.bf16.gmra.mxu0 %v8784
      %v8847 = vpop.f32.mrf.mxu0
      %v8848 = vadd.f32 %v8710, %v8847
      %v8849 = vpop.f32.mrf.mxu0
      %v8850 = vadd.f32 %v8712, %v8849
      %8851 = vmatmul.bf16.gmra.mxu0 %v8786
      %v8852 = vpop.f32.mrf.mxu0
      %v8853 = vadd.f32 %v8715, %v8852
      %v8854 = vpop.f32.mrf.mxu0
      %v8855 = vadd.f32 %v8717, %v8854
      %8856 = vmatmul.bf16.gmra.mxu0 %v8788
      %v8857 = vpop.f32.mrf.mxu0
      %v8858 = vadd.f32 %v8720, %v8857
      %v8859 = vpop.f32.mrf.mxu0
      %v8860 = vadd.f32 %v8722, %v8859
      %8861 = vmatmul.bf16.gmra.mxu0 %v8790
      %v8862 = vpop.f32.mrf.mxu0
      %v8863 = vadd.f32 %v8725, %v8862
      %v8864 = vpop.f32.mrf.mxu0
      %v8865 = vadd.f32 %v8727, %v8864
      %8866 = vmatmul.bf16.gmra.mxu0 %v8792
      %v8867 = vpop.f32.mrf.mxu0
      %v8868 = vadd.f32 %v8730, %v8867
      %v8869 = vpop.f32.mrf.mxu0
      %v8870 = vadd.f32 %v8732, %v8869
      %8871 = vmatmul.bf16.gmra.mxu0 %v8794
      %v8872 = vpop.f32.mrf.mxu0
      %v8873 = vadd.f32 %v8735, %v8872
      %v8874 = vpop.f32.mrf.mxu0
      %v8875 = vadd.f32 %v8737, %v8874
      %8876 = vmatmul.bf16.gmra.mxu0 %v8796
      %v8877 = vpop.f32.mrf.mxu0
      %v8878 = vadd.f32 %v8740, %v8877
      %v8879 = vpop.f32.mrf.mxu0
      %v8880 = vadd.f32 %v8742, %v8879
      %8881 = vmatmul.bf16.gmra.mxu0 %v8798
      %v8882 = vpop.f32.mrf.mxu0
      %v8883 = vadd.f32 %v8745, %v8882
      %v8884 = vpop.f32.mrf.mxu0
      %v8885 = vadd.f32 %v8747, %v8884
      %8886 = vmatmul.bf16.gmra.mxu0 %v8800
      %v8887 = vpop.f32.mrf.mxu0
      %v8888 = vadd.f32 %v8750, %v8887
      %v8889 = vpop.f32.mrf.mxu0
      %v8890 = vadd.f32 %v8752, %v8889
      %8891 = vmatmul.bf16.gmra.mxu0 %v8802
      %v8892 = vpop.f32.mrf.mxu0
      %v8893 = vadd.f32 %v8755, %v8892
      %v8894 = vpop.f32.mrf.mxu0
      %v8895 = vadd.f32 %v8757, %v8894
      %8896 = vmatmul.bf16.gmra.mxu0 %v8804
      %v8897 = vpop.f32.mrf.mxu0
      %v8898 = vadd.f32 %v8760, %v8897
      %v8899 = vpop.f32.mrf.mxu0
      %v8900 = vadd.f32 %v8762, %v8899
      %8901 = vmatmul.bf16.gmra.mxu0 %v8806
      %v8902 = vpop.f32.mrf.mxu0
      %v8903 = vadd.f32 %v8765, %v8902
      %v8904 = vpop.f32.mrf.mxu0
      %v8905 = vadd.f32 %v8767, %v8904
      %8906 = vmatmul.bf16.gmra.mxu0 %v8808
      %v8907 = vpop.f32.mrf.mxu0
      %v8908 = vadd.f32 %v8770, %v8907
      %v8909 = vpop.f32.mrf.mxu0
      %v8910 = vadd.f32 %v8772, %v8909
      %8911 = vdwg.mxu0
      %v8912 = vld [vmem:[#allocation3] sm:$0xe]
      %s8913 = scalar_lea.vmem %s5, 8
      %v8914 = vld [vmem:[%s8913] sm:$0xf]
      %v8916 = vunpack.c.l.b16 %v8912
      %v8917 = vpack.c.b16 %v8415, %v8916
      %v8918 = vrot.slane %v8917, 1
      %v8919 = vrot.slane %v8452, 1
      %v8920 = vsel %vm2191, %v8918, %v8919
      %v8921 = vrot.slane %v8453, 1
      %v8922 = vsel %vm2191, %v8919, %v8921
      %v8923 = vrot.slane %v8454, 1
      %v8924 = vsel %vm2191, %v8921, %v8923
      %v8925 = vrot.slane %v8455, 1
      %v8926 = vsel %vm2191, %v8923, %v8925
      %v8927 = vrot.slane %v8456, 1
      %v8928 = vsel %vm2191, %v8925, %v8927
      %v8929 = vrot.slane %v8457, 1
      %v8930 = vsel %vm2191, %v8927, %v8929
      %v8931 = vrot.slane %v8458, 1
      %v8932 = vsel %vm2191, %v8929, %v8931
      %v8933 = vrot.slane %v8459, 1
      %v8934 = vsel %vm2191, %v8931, %v8933
      %v8935 = vrot.slane %v8460, 1
      %v8936 = vsel %vm2191, %v8933, %v8935
      %v8937 = vrot.slane %v8461, 1
      %v8938 = vsel %vm2191, %v8935, %v8937
      %v8939 = vrot.slane %v8462, 1
      %v8940 = vsel %vm2191, %v8937, %v8939
      %v8941 = vrot.slane %v8463, 1
      %v8942 = vsel %vm2191, %v8939, %v8941
      %v8943 = vrot.slane %v8464, 1
      %v8944 = vsel %vm2191, %v8941, %v8943
      %v8945 = vrot.slane %v8465, 1
      %v8946 = vsel %vm2191, %v8943, %v8945
      %v8947 = vrot.slane %v8466, 1
      %v8948 = vsel %vm2191, %v8945, %v8947
      %v8949 = vrot.slane %v8467, 1
      %v8950 = vsel %vm2191, %v8947, %v8949
      %v8951 = vrot.slane %v8468, 1
      %v8952 = vsel %vm2191, %v8949, %v8951
      %v8953 = vrot.slane %v8469, 1
      %v8954 = vsel %vm2191, %v8951, %v8953
      %v8956 = vsel %vm5293, %v8920, 0
      %v8959 = vsel %vm5293, %v8922, 0
      %v8962 = vsel %vm5293, %v8924, 0
      %v8965 = vsel %vm5293, %v8926, 0
      %v8968 = vsel %vm5293, %v8928, 0
      %v8971 = vsel %vm5293, %v8930, 0
      %v8974 = vsel %vm5293, %v8932, 0
      %v8977 = vsel %vm5293, %v8934, 0
      %v8980 = vsel %vm5293, %v8936, 0
      %v8983 = vsel %vm5293, %v8938, 0
      %v8986 = vsel %vm5293, %v8940, 0
      %v8989 = vsel %vm5293, %v8942, 0
      %v8992 = vsel %vm5293, %v8944, 0
      %v8995 = vsel %vm5293, %v8946, 0
      %v8998 = vsel %vm5293, %v8948, 0
      %v9001 = vsel %vm5293, %v8950, 0
      %v9004 = vsel %vm5293, %v8952, 0
      %v9007 = vsel %vm5293, %v8954, 0
      %v9010 = vsel %vm5348, %v8914, 0
      %9012 = vmatpush.bf16.msra.mxu0 0
      %9013 = vmatpush.bf16.msra.mxu0 0
      %9014 = vmatpush.bf16.msra.mxu0 0
      %9015 = vmatpush.bf16.msra.mxu0 0
      %9016 = vmatpush.bf16.msra.mxu0 0
      %9017 = vmatpush.bf16.msra.mxu0 0
      %9018 = vmatpush.bf16.msra.mxu0 0
      %9019 = vmatpush.bf16.msra.mxu0 %v9010
      %9020 = vmatmul.bf16.gmra.mxu0 %v8956
      %v9021 = vpop.f32.mrf.mxu0
      %v9022 = vadd.f32 0.0, %v9021
      %v9023 = vpop.f32.mrf.mxu0
      %v9024 = vadd.f32 0.0, %v9023
      %9025 = vmatmul.bf16.gmra.mxu0 %v8959
      %v9026 = vpop.f32.mrf.mxu0
      %v9027 = vadd.f32 0.0, %v9026
      %v9028 = vpop.f32.mrf.mxu0
      %v9029 = vadd.f32 0.0, %v9028
      %9030 = vmatmul.bf16.gmra.mxu0 %v8962
      %v9031 = vpop.f32.mrf.mxu0
      %v9032 = vadd.f32 0.0, %v9031
      %v9033 = vpop.f32.mrf.mxu0
      %v9034 = vadd.f32 0.0, %v9033
      %9035 = vmatmul.bf16.gmra.mxu0 %v8965
      %v9036 = vpop.f32.mrf.mxu0
      %v9037 = vadd.f32 0.0, %v9036
      %v9038 = vpop.f32.mrf.mxu0
      %v9039 = vadd.f32 0.0, %v9038
      %9040 = vmatmul.bf16.gmra.mxu0 %v8968
      %v9041 = vpop.f32.mrf.mxu0
      %v9042 = vadd.f32 0.0, %v9041
      %v9043 = vpop.f32.mrf.mxu0
      %v9044 = vadd.f32 0.0, %v9043
      %9045 = vmatmul.bf16.gmra.mxu0 %v8971
      %v9046 = vpop.f32.mrf.mxu0
      %v9047 = vadd.f32 0.0, %v9046
      %v9048 = vpop.f32.mrf.mxu0
      %v9049 = vadd.f32 0.0, %v9048
      %9050 = vmatmul.bf16.gmra.mxu0 %v8974
      %v9051 = vpop.f32.mrf.mxu0
      %v9052 = vadd.f32 0.0, %v9051
      %v9053 = vpop.f32.mrf.mxu0
      %v9054 = vadd.f32 0.0, %v9053
      %9055 = vmatmul.bf16.gmra.mxu0 %v8977
      %v9056 = vpop.f32.mrf.mxu0
      %v9057 = vadd.f32 0.0, %v9056
      %v9058 = vpop.f32.mrf.mxu0
      %v9059 = vadd.f32 0.0, %v9058
      %9060 = vmatmul.bf16.gmra.mxu0 %v8980
      %v9061 = vpop.f32.mrf.mxu0
      %v9062 = vadd.f32 0.0, %v9061
      %v9063 = vpop.f32.mrf.mxu0
      %v9064 = vadd.f32 0.0, %v9063
      %9065 = vmatmul.bf16.gmra.mxu0 %v8983
      %v9066 = vpop.f32.mrf.mxu0
      %v9067 = vadd.f32 0.0, %v9066
      %v9068 = vpop.f32.mrf.mxu0
      %v9069 = vadd.f32 0.0, %v9068
      %9070 = vmatmul.bf16.gmra.mxu0 %v8986
      %v9071 = vpop.f32.mrf.mxu0
      %v9072 = vadd.f32 0.0, %v9071
      %v9073 = vpop.f32.mrf.mxu0
      %v9074 = vadd.f32 0.0, %v9073
      %9075 = vmatmul.bf16.gmra.mxu0 %v8989
      %v9076 = vpop.f32.mrf.mxu0
      %v9077 = vadd.f32 0.0, %v9076
      %v9078 = vpop.f32.mrf.mxu0
      %v9079 = vadd.f32 0.0, %v9078
      %9080 = vmatmul.bf16.gmra.mxu0 %v8992
      %v9081 = vpop.f32.mrf.mxu0
      %v9082 = vadd.f32 0.0, %v9081
      %v9083 = vpop.f32.mrf.mxu0
      %v9084 = vadd.f32 0.0, %v9083
      %9085 = vmatmul.bf16.gmra.mxu0 %v8995
      %v9086 = vpop.f32.mrf.mxu0
      %v9087 = vadd.f32 0.0, %v9086
      %v9088 = vpop.f32.mrf.mxu0
      %v9089 = vadd.f32 0.0, %v9088
      %9090 = vmatmul.bf16.gmra.mxu0 %v8998
      %v9091 = vpop.f32.mrf.mxu0
      %v9092 = vadd.f32 0.0, %v9091
      %v9093 = vpop.f32.mrf.mxu0
      %v9094 = vadd.f32 0.0, %v9093
      %9095 = vmatmul.bf16.gmra.mxu0 %v9001
      %v9096 = vpop.f32.mrf.mxu0
      %v9097 = vadd.f32 0.0, %v9096
      %v9098 = vpop.f32.mrf.mxu0
      %v9099 = vadd.f32 0.0, %v9098
      %9100 = vmatmul.bf16.gmra.mxu0 %v9004
      %v9101 = vpop.f32.mrf.mxu0
      %v9102 = vadd.f32 0.0, %v9101
      %v9103 = vpop.f32.mrf.mxu0
      %v9104 = vadd.f32 0.0, %v9103
      %9105 = vmatmul.bf16.gmra.mxu0 %v9007
      %v9106 = vpop.f32.mrf.mxu0
      %v9107 = vadd.f32 0.0, %v9106
      %v9108 = vpop.f32.mrf.mxu0
      %v9109 = vadd.f32 0.0, %v9108
      %9110 = vdwg.mxu0
      %v9111 = vadd.f32 %v8823, %v9022
      %v9112 = vadd.f32 %v8825, %v9024
      %v9113 = vadd.f32 %v8828, %v9027
      %v9114 = vadd.f32 %v8830, %v9029
      %v9115 = vadd.f32 %v8833, %v9032
      %v9116 = vadd.f32 %v8835, %v9034
      %v9117 = vadd.f32 %v8838, %v9037
      %v9118 = vadd.f32 %v8840, %v9039
      %v9119 = vadd.f32 %v8843, %v9042
      %v9120 = vadd.f32 %v8845, %v9044
      %v9121 = vadd.f32 %v8848, %v9047
      %v9122 = vadd.f32 %v8850, %v9049
      %v9123 = vadd.f32 %v8853, %v9052
      %v9124 = vadd.f32 %v8855, %v9054
      %v9125 = vadd.f32 %v8858, %v9057
      %v9126 = vadd.f32 %v8860, %v9059
      %v9127 = vadd.f32 %v8863, %v9062
      %v9128 = vadd.f32 %v8865, %v9064
      %v9129 = vadd.f32 %v8868, %v9067
      %v9130 = vadd.f32 %v8870, %v9069
      %v9131 = vadd.f32 %v8873, %v9072
      %v9132 = vadd.f32 %v8875, %v9074
      %v9133 = vadd.f32 %v8878, %v9077
      %v9134 = vadd.f32 %v8880, %v9079
      %v9135 = vadd.f32 %v8883, %v9082
      %v9136 = vadd.f32 %v8885, %v9084
      %v9137 = vadd.f32 %v8888, %v9087
      %v9138 = vadd.f32 %v8890, %v9089
      %v9139 = vadd.f32 %v8893, %v9092
      %v9140 = vadd.f32 %v8895, %v9094
      %v9141 = vadd.f32 %v8898, %v9097
      %v9142 = vadd.f32 %v8900, %v9099
      %v9143 = vadd.f32 %v8903, %v9102
      %v9144 = vadd.f32 %v8905, %v9104
      %v9145 = vadd.f32 %v8908, %v9107
      %v9146 = vadd.f32 %v8910, %v9109
      %v9147 = vld [vmem:[#allocation3 + $0x8] sm:$0xe]
      %v9148 = vld [vmem:[#allocation3 + $0xc] sm:$0xf]
      %v9149 = vld [vmem:[#allocation3 + $0x10] sm:$0xf]
      %v9150 = vld [vmem:[#allocation3 + $0x14] sm:$0xf]
      %v9151 = vld [vmem:[#allocation3 + $0x18] sm:$0xf]
      %v9152 = vld [vmem:[#allocation3 + $0x1c] sm:$0xf]
      %v9153 = vld [vmem:[#allocation3 + $0x20] sm:$0xf]
      %v9154 = vld [vmem:[#allocation3 + $0x24] sm:$0xf]
      %v9155 = vld [vmem:[#allocation3 + $0x28] sm:$0xf]
      %v9156 = vld [vmem:[#allocation3 + $0x2c] sm:$0xf]
      %v9157 = vld [vmem:[#allocation3 + $0x30] sm:$0xf]
      %v9158 = vld [vmem:[#allocation3 + $0x34] sm:$0xf]
      %v9159 = vld [vmem:[#allocation3 + $0x38] sm:$0xf]
      %v9160 = vld [vmem:[#allocation3 + $0x3c] sm:$0xf]
      %v9161 = vld [vmem:[#allocation3 + $0x40] sm:$0xf]
      %v9162 = vld [vmem:[#allocation3 + $0x44] sm:$0xf]
      %v9163 = vld [vmem:[#allocation3 + $0x48] sm:$0xf]
      %v9164 = vld [vmem:[#allocation3 + $0x4c] sm:$0xf]
      %v9165 = vld [vmem:[#allocation3 + $0x50] sm:$0xf]
      %v9166 = vld [vmem:[#allocation3 + $0x54] sm:$0xf]
      %v9167 = vld [vmem:[#allocation3 + $0x58] sm:$0xf]
      %v9168 = vld [vmem:[#allocation3 + $0x5c] sm:$0xf]
      %v9169 = vld [vmem:[#allocation3 + $0x60] sm:$0xf]
      %v9170 = vld [vmem:[#allocation3 + $0x64] sm:$0xf]
      %v9171 = vld [vmem:[#allocation3 + $0x68] sm:$0xf]
      %v9172 = vld [vmem:[#allocation3 + $0x6c] sm:$0xf]
      %v9173 = vld [vmem:[#allocation3 + $0x70] sm:$0xf]
      %v9174 = vld [vmem:[#allocation3 + $0x74] sm:$0xf]
      %v9175 = vld [vmem:[#allocation3 + $0x78] sm:$0xf]
      %v9176 = vld [vmem:[#allocation3 + $0x7c] sm:$0xf]
      %v9177 = vld [vmem:[#allocation3 + $0x80] sm:$0xf]
      %v9178 = vld [vmem:[#allocation3 + $0x84] sm:$0xf]
      %v9179 = vld [vmem:[#allocation3 + $0x88] sm:$0xf]
      %v9180 = vld [vmem:[#allocation3 + $0x8c] sm:$0xf]
      %v9181 = vld [vmem:[#allocation3 + $0x90] sm:$0xf]
      %v9182 = vld [vmem:[#allocation3 + $0x94] sm:$0xf]
      %v9183 = vld [vmem:[#allocation3 + $0x98] sm:$0x1]
      %s9184 = scalar_lea.vmem %s5, 12
      %v9185 = vld [vmem:[%s9184] sm:$0xf]
      %v9223 = vunpack.c.l.b16 %v9147
      %v9224 = vunpack.c.l.b16 %v9148
      %v9225 = vunpack.c.l.b16 %v9149
      %v9226 = vunpack.c.l.b16 %v9150
      %v9227 = vunpack.c.l.b16 %v9151
      %v9228 = vunpack.c.l.b16 %v9152
      %v9229 = vunpack.c.l.b16 %v9153
      %v9230 = vunpack.c.l.b16 %v9154
      %v9231 = vunpack.c.l.b16 %v9155
      %v9232 = vunpack.c.l.b16 %v9156
      %v9233 = vunpack.c.l.b16 %v9157
      %v9234 = vunpack.c.l.b16 %v9158
      %v9235 = vunpack.c.l.b16 %v9159
      %v9236 = vunpack.c.l.b16 %v9160
      %v9237 = vunpack.c.l.b16 %v9161
      %v9238 = vunpack.c.l.b16 %v9162
      %v9239 = vunpack.c.l.b16 %v9163
      %v9240 = vunpack.c.l.b16 %v9164
      %v9241 = vunpack.c.l.b16 %v9165
      %v9242 = vunpack.c.l.b16 %v9166
      %v9243 = vunpack.c.l.b16 %v9167
      %v9244 = vunpack.c.l.b16 %v9168
      %v9245 = vunpack.c.l.b16 %v9169
      %v9246 = vunpack.c.l.b16 %v9170
      %v9247 = vunpack.c.l.b16 %v9171
      %v9248 = vunpack.c.l.b16 %v9172
      %v9249 = vunpack.c.l.b16 %v9173
      %v9250 = vunpack.c.l.b16 %v9174
      %v9251 = vunpack.c.l.b16 %v9175
      %v9252 = vunpack.c.l.b16 %v9176
      %v9253 = vunpack.c.l.b16 %v9177
      %v9254 = vunpack.c.l.b16 %v9178
      %v9255 = vunpack.c.l.b16 %v9179
      %v9256 = vunpack.c.l.b16 %v9180
      %v9257 = vunpack.c.l.b16 %v9181
      %v9258 = vunpack.c.l.b16 %v9182
      %v9259 = vunpack.c.l.b16 %v9183
      %v9260 = vpack.c.b16 %v9224, %v9223
      %v9261 = vpack.c.b16 %v9226, %v9225
      %v9262 = vpack.c.b16 %v9228, %v9227
      %v9263 = vpack.c.b16 %v9230, %v9229
      %v9264 = vpack.c.b16 %v9232, %v9231
      %v9265 = vpack.c.b16 %v9234, %v9233
      %v9266 = vpack.c.b16 %v9236, %v9235
      %v9267 = vpack.c.b16 %v9238, %v9237
      %v9268 = vpack.c.b16 %v9240, %v9239
      %v9269 = vpack.c.b16 %v9242, %v9241
      %v9270 = vpack.c.b16 %v9244, %v9243
      %v9271 = vpack.c.b16 %v9246, %v9245
      %v9272 = vpack.c.b16 %v9248, %v9247
      %v9273 = vpack.c.b16 %v9250, %v9249
      %v9274 = vpack.c.b16 %v9252, %v9251
      %v9275 = vpack.c.b16 %v9254, %v9253
      %v9276 = vpack.c.b16 %v9256, %v9255
      %v9277 = vpack.c.b16 %v9258, %v9257
      %v9278 = vpack.c.b16 %v9259, %v9259
      %v9279 = vrot.slane %v9260, 1
      %v9280 = vrot.slane %v9261, 1
      %v9281 = vsel %vm2191, %v9279, %v9280
      %v9282 = vrot.slane %v9262, 1
      %v9283 = vsel %vm2191, %v9280, %v9282
      %v9284 = vrot.slane %v9263, 1
      %v9285 = vsel %vm2191, %v9282, %v9284
      %v9286 = vrot.slane %v9264, 1
      %v9287 = vsel %vm2191, %v9284, %v9286
      %v9288 = vrot.slane %v9265, 1
      %v9289 = vsel %vm2191, %v9286, %v9288
      %v9290 = vrot.slane %v9266, 1
      %v9291 = vsel %vm2191, %v9288, %v9290
      %v9292 = vrot.slane %v9267, 1
      %v9293 = vsel %vm2191, %v9290, %v9292
      %v9294 = vrot.slane %v9268, 1
      %v9295 = vsel %vm2191, %v9292, %v9294
      %v9296 = vrot.slane %v9269, 1
      %v9297 = vsel %vm2191, %v9294, %v9296
      %v9298 = vrot.slane %v9270, 1
      %v9299 = vsel %vm2191, %v9296, %v9298
      %v9300 = vrot.slane %v9271, 1
      %v9301 = vsel %vm2191, %v9298, %v9300
      %v9302 = vrot.slane %v9272, 1
      %v9303 = vsel %vm2191, %v9300, %v9302
      %v9304 = vrot.slane %v9273, 1
      %v9305 = vsel %vm2191, %v9302, %v9304
      %v9306 = vrot.slane %v9274, 1
      %v9307 = vsel %vm2191, %v9304, %v9306
      %v9308 = vrot.slane %v9275, 1
      %v9309 = vsel %vm2191, %v9306, %v9308
      %v9310 = vrot.slane %v9276, 1
      %v9311 = vsel %vm2191, %v9308, %v9310
      %v9312 = vrot.slane %v9277, 1
      %v9313 = vsel %vm2191, %v9310, %v9312
      %v9314 = vrot.slane %v9278, 1
      %v9315 = vsel %vm2191, %v9312, %v9314
      %v9317 = vsel %vm5293, %v9281, 0
      %v9320 = vsel %vm5293, %v9283, 0
      %v9323 = vsel %vm5293, %v9285, 0
      %v9326 = vsel %vm5293, %v9287, 0
      %v9329 = vsel %vm5293, %v9289, 0
      %v9332 = vsel %vm5293, %v9291, 0
      %v9335 = vsel %vm5293, %v9293, 0
      %v9338 = vsel %vm5293, %v9295, 0
      %v9341 = vsel %vm5293, %v9297, 0
      %v9344 = vsel %vm5293, %v9299, 0
      %v9347 = vsel %vm5293, %v9301, 0
      %v9350 = vsel %vm5293, %v9303, 0
      %v9353 = vsel %vm5293, %v9305, 0
      %v9356 = vsel %vm5293, %v9307, 0
      %v9359 = vsel %vm5293, %v9309, 0
      %v9362 = vsel %vm5293, %v9311, 0
      %v9365 = vsel %vm5293, %v9313, 0
      %v9368 = vsel %vm5293, %v9315, 0
      %v9371 = vsel %vm5348, %v9185, 0
      %9373 = vmatpush.bf16.msra.mxu0 0
      %9374 = vmatpush.bf16.msra.mxu0 0
      %9375 = vmatpush.bf16.msra.mxu0 0
      %9376 = vmatpush.bf16.msra.mxu0 0
      %9377 = vmatpush.bf16.msra.mxu0 0
      %9378 = vmatpush.bf16.msra.mxu0 0
      %9379 = vmatpush.bf16.msra.mxu0 0
      %9380 = vmatpush.bf16.msra.mxu0 %v9371
      %9381 = vmatmul.bf16.gmra.mxu0 %v9317
      %v9382 = vpop.f32.mrf.mxu0
      %v9383 = vadd.f32 0.0, %v9382
      %v9384 = vpop.f32.mrf.mxu0
      %v9385 = vadd.f32 0.0, %v9384
      %9386 = vmatmul.bf16.gmra.mxu0 %v9320
      %v9387 = vpop.f32.mrf.mxu0
      %v9388 = vadd.f32 0.0, %v9387
      %v9389 = vpop.f32.mrf.mxu0
      %v9390 = vadd.f32 0.0, %v9389
      %9391 = vmatmul.bf16.gmra.mxu0 %v9323
      %v9392 = vpop.f32.mrf.mxu0
      %v9393 = vadd.f32 0.0, %v9392
      %v9394 = vpop.f32.mrf.mxu0
      %v9395 = vadd.f32 0.0, %v9394
      %9396 = vmatmul.bf16.gmra.mxu0 %v9326
      %v9397 = vpop.f32.mrf.mxu0
      %v9398 = vadd.f32 0.0, %v9397
      %v9399 = vpop.f32.mrf.mxu0
      %v9400 = vadd.f32 0.0, %v9399
      %9401 = vmatmul.bf16.gmra.mxu0 %v9329
      %v9402 = vpop.f32.mrf.mxu0
      %v9403 = vadd.f32 0.0, %v9402
      %v9404 = vpop.f32.mrf.mxu0
      %v9405 = vadd.f32 0.0, %v9404
      %9406 = vmatmul.bf16.gmra.mxu0 %v9332
      %v9407 = vpop.f32.mrf.mxu0
      %v9408 = vadd.f32 0.0, %v9407
      %v9409 = vpop.f32.mrf.mxu0
      %v9410 = vadd.f32 0.0, %v9409
      %9411 = vmatmul.bf16.gmra.mxu0 %v9335
      %v9412 = vpop.f32.mrf.mxu0
      %v9413 = vadd.f32 0.0, %v9412
      %v9414 = vpop.f32.mrf.mxu0
      %v9415 = vadd.f32 0.0, %v9414
      %9416 = vmatmul.bf16.gmra.mxu0 %v9338
      %v9417 = vpop.f32.mrf.mxu0
      %v9418 = vadd.f32 0.0, %v9417
      %v9419 = vpop.f32.mrf.mxu0
      %v9420 = vadd.f32 0.0, %v9419
      %9421 = vmatmul.bf16.gmra.mxu0 %v9341
      %v9422 = vpop.f32.mrf.mxu0
      %v9423 = vadd.f32 0.0, %v9422
      %v9424 = vpop.f32.mrf.mxu0
      %v9425 = vadd.f32 0.0, %v9424
      %9426 = vmatmul.bf16.gmra.mxu0 %v9344
      %v9427 = vpop.f32.mrf.mxu0
      %v9428 = vadd.f32 0.0, %v9427
      %v9429 = vpop.f32.mrf.mxu0
      %v9430 = vadd.f32 0.0, %v9429
      %9431 = vmatmul.bf16.gmra.mxu0 %v9347
      %v9432 = vpop.f32.mrf.mxu0
      %v9433 = vadd.f32 0.0, %v9432
      %v9434 = vpop.f32.mrf.mxu0
      %v9435 = vadd.f32 0.0, %v9434
      %9436 = vmatmul.bf16.gmra.mxu0 %v9350
      %v9437 = vpop.f32.mrf.mxu0
      %v9438 = vadd.f32 0.0, %v9437
      %v9439 = vpop.f32.mrf.mxu0
      %v9440 = vadd.f32 0.0, %v9439
      %9441 = vmatmul.bf16.gmra.mxu0 %v9353
      %v9442 = vpop.f32.mrf.mxu0
      %v9443 = vadd.f32 0.0, %v9442
      %v9444 = vpop.f32.mrf.mxu0
      %v9445 = vadd.f32 0.0, %v9444
      %9446 = vmatmul.bf16.gmra.mxu0 %v9356
      %v9447 = vpop.f32.mrf.mxu0
      %v9448 = vadd.f32 0.0, %v9447
      %v9449 = vpop.f32.mrf.mxu0
      %v9450 = vadd.f32 0.0, %v9449
      %9451 = vmatmul.bf16.gmra.mxu0 %v9359
      %v9452 = vpop.f32.mrf.mxu0
      %v9453 = vadd.f32 0.0, %v9452
      %v9454 = vpop.f32.mrf.mxu0
      %v9455 = vadd.f32 0.0, %v9454
      %9456 = vmatmul.bf16.gmra.mxu0 %v9362
      %v9457 = vpop.f32.mrf.mxu0
      %v9458 = vadd.f32 0.0, %v9457
      %v9459 = vpop.f32.mrf.mxu0
      %v9460 = vadd.f32 0.0, %v9459
      %9461 = vmatmul.bf16.gmra.mxu0 %v9365
      %v9462 = vpop.f32.mrf.mxu0
      %v9463 = vadd.f32 0.0, %v9462
      %v9464 = vpop.f32.mrf.mxu0
      %v9465 = vadd.f32 0.0, %v9464
      %9466 = vmatmul.bf16.gmra.mxu0 %v9368
      %v9467 = vpop.f32.mrf.mxu0
      %v9468 = vadd.f32 0.0, %v9467
      %v9469 = vpop.f32.mrf.mxu0
      %v9470 = vadd.f32 0.0, %v9469
      %9471 = vdwg.mxu0
      %v9472 = vadd.f32 %v9111, %v9383
      %v9473 = vadd.f32 %v9112, %v9385
      %v9474 = vadd.f32 %v9113, %v9388
      %v9475 = vadd.f32 %v9114, %v9390
      %v9476 = vadd.f32 %v9115, %v9393
      %v9477 = vadd.f32 %v9116, %v9395
      %v9478 = vadd.f32 %v9117, %v9398
      %v9479 = vadd.f32 %v9118, %v9400
      %v9480 = vadd.f32 %v9119, %v9403
      %v9481 = vadd.f32 %v9120, %v9405
      %v9482 = vadd.f32 %v9121, %v9408
      %v9483 = vadd.f32 %v9122, %v9410
      %v9484 = vadd.f32 %v9123, %v9413
      %v9485 = vadd.f32 %v9124, %v9415
      %v9486 = vadd.f32 %v9125, %v9418
      %v9487 = vadd.f32 %v9126, %v9420
      %v9488 = vadd.f32 %v9127, %v9423
      %v9489 = vadd.f32 %v9128, %v9425
      %v9490 = vadd.f32 %v9129, %v9428
      %v9491 = vadd.f32 %v9130, %v9430
      %v9492 = vadd.f32 %v9131, %v9433
      %v9493 = vadd.f32 %v9132, %v9435
      %v9494 = vadd.f32 %v9133, %v9438
      %v9495 = vadd.f32 %v9134, %v9440
      %v9496 = vadd.f32 %v9135, %v9443
      %v9497 = vadd.f32 %v9136, %v9445
      %v9498 = vadd.f32 %v9137, %v9448
      %v9499 = vadd.f32 %v9138, %v9450
      %v9500 = vadd.f32 %v9139, %v9453
      %v9501 = vadd.f32 %v9140, %v9455
      %v9502 = vadd.f32 %v9141, %v9458
      %v9503 = vadd.f32 %v9142, %v9460
      %v9504 = vadd.f32 %v9143, %v9463
      %v9505 = vadd.f32 %v9144, %v9465
      %v9506 = vadd.f32 %v9145, %v9468
      %v9507 = vadd.f32 %v9146, %v9470
      %v9508 = vld [vmem:[#allocation3 + $0x98] sm:$0x3]
      %s9509 = scalar_lea.vmem %s5, 16
      %v9510 = vld [vmem:[%s9509] sm:$0xf]
      %v9512 = vunpack.c.l.b16 %v9508
      %v9513 = vpack.c.b16 %v9512, %v9512
      %v9515 = vshrl.u32 %v9260, 16
      %v9517 = vrot.slane %v9515, 1
      %v9518 = vshll.u32 %v9260, 16
      %v9520 = vrot.slane %v9518, 2
      %v9521 = vor.u32 %v9517, %v9520
      %v9523 = vshrl.u32 %v9261, 16
      %v9525 = vrot.slane %v9523, 1
      %v9526 = vshll.u32 %v9261, 16
      %v9528 = vrot.slane %v9526, 2
      %v9529 = vor.u32 %v9525, %v9528
      %v9530 = vsel %vm2788, %v9521, %v9529
      %v9532 = vshrl.u32 %v9262, 16
      %v9534 = vrot.slane %v9532, 1
      %v9535 = vshll.u32 %v9262, 16
      %v9537 = vrot.slane %v9535, 2
      %v9538 = vor.u32 %v9534, %v9537
      %v9539 = vsel %vm2788, %v9529, %v9538
      %v9541 = vshrl.u32 %v9263, 16
      %v9543 = vrot.slane %v9541, 1
      %v9544 = vshll.u32 %v9263, 16
      %v9546 = vrot.slane %v9544, 2
      %v9547 = vor.u32 %v9543, %v9546
      %v9548 = vsel %vm2788, %v9538, %v9547
      %v9550 = vshrl.u32 %v9264, 16
      %v9552 = vrot.slane %v9550, 1
      %v9553 = vshll.u32 %v9264, 16
      %v9555 = vrot.slane %v9553, 2
      %v9556 = vor.u32 %v9552, %v9555
      %v9557 = vsel %vm2788, %v9547, %v9556
      %v9559 = vshrl.u32 %v9265, 16
      %v9561 = vrot.slane %v9559, 1
      %v9562 = vshll.u32 %v9265, 16
      %v9564 = vrot.slane %v9562, 2
      %v9565 = vor.u32 %v9561, %v9564
      %v9566 = vsel %vm2788, %v9556, %v9565
      %v9568 = vshrl.u32 %v9266, 16
      %v9570 = vrot.slane %v9568, 1
      %v9571 = vshll.u32 %v9266, 16
      %v9573 = vrot.slane %v9571, 2
      %v9574 = vor.u32 %v9570, %v9573
      %v9575 = vsel %vm2788, %v9565, %v9574
      %v9577 = vshrl.u32 %v9267, 16
      %v9579 = vrot.slane %v9577, 1
      %v9580 = vshll.u32 %v9267, 16
      %v9582 = vrot.slane %v9580, 2
      %v9583 = vor.u32 %v9579, %v9582
      %v9584 = vsel %vm2788, %v9574, %v9583
      %v9586 = vshrl.u32 %v9268, 16
      %v9588 = vrot.slane %v9586, 1
      %v9589 = vshll.u32 %v9268, 16
      %v9591 = vrot.slane %v9589, 2
      %v9592 = vor.u32 %v9588, %v9591
      %v9593 = vsel %vm2788, %v9583, %v9592
      %v9595 = vshrl.u32 %v9269, 16
      %v9597 = vrot.slane %v9595, 1
      %v9598 = vshll.u32 %v9269, 16
      %v9600 = vrot.slane %v9598, 2
      %v9601 = vor.u32 %v9597, %v9600
      %v9602 = vsel %vm2788, %v9592, %v9601
      %v9604 = vshrl.u32 %v9270, 16
      %v9606 = vrot.slane %v9604, 1
      %v9607 = vshll.u32 %v9270, 16
      %v9609 = vrot.slane %v9607, 2
      %v9610 = vor.u32 %v9606, %v9609
      %v9611 = vsel %vm2788, %v9601, %v9610
      %v9613 = vshrl.u32 %v9271, 16
      %v9615 = vrot.slane %v9613, 1
      %v9616 = vshll.u32 %v9271, 16
      %v9618 = vrot.slane %v9616, 2
      %v9619 = vor.u32 %v9615, %v9618
      %v9620 = vsel %vm2788, %v9610, %v9619
      %v9622 = vshrl.u32 %v9272, 16
      %v9624 = vrot.slane %v9622, 1
      %v9625 = vshll.u32 %v9272, 16
      %v9627 = vrot.slane %v9625, 2
      %v9628 = vor.u32 %v9624, %v9627
      %v9629 = vsel %vm2788, %v9619, %v9628
      %v9631 = vshrl.u32 %v9273, 16
      %v9633 = vrot.slane %v9631, 1
      %v9634 = vshll.u32 %v9273, 16
      %v9636 = vrot.slane %v9634, 2
      %v9637 = vor.u32 %v9633, %v9636
      %v9638 = vsel %vm2788, %v9628, %v9637
      %v9640 = vshrl.u32 %v9274, 16
      %v9642 = vrot.slane %v9640, 1
      %v9643 = vshll.u32 %v9274, 16
      %v9645 = vrot.slane %v9643, 2
      %v9646 = vor.u32 %v9642, %v9645
      %v9647 = vsel %vm2788, %v9637, %v9646
      %v9649 = vshrl.u32 %v9275, 16
      %v9651 = vrot.slane %v9649, 1
      %v9652 = vshll.u32 %v9275, 16
      %v9654 = vrot.slane %v9652, 2
      %v9655 = vor.u32 %v9651, %v9654
      %v9656 = vsel %vm2788, %v9646, %v9655
      %v9658 = vshrl.u32 %v9276, 16
      %v9660 = vrot.slane %v9658, 1
      %v9661 = vshll.u32 %v9276, 16
      %v9663 = vrot.slane %v9661, 2
      %v9664 = vor.u32 %v9660, %v9663
      %v9665 = vsel %vm2788, %v9655, %v9664
      %v9667 = vshrl.u32 %v9277, 16
      %v9669 = vrot.slane %v9667, 1
      %v9670 = vshll.u32 %v9277, 16
      %v9672 = vrot.slane %v9670, 2
      %v9673 = vor.u32 %v9669, %v9672
      %v9674 = vsel %vm2788, %v9664, %v9673
      %v9676 = vshrl.u32 %v9513, 16
      %v9678 = vrot.slane %v9676, 1
      %v9679 = vshll.u32 %v9513, 16
      %v9681 = vrot.slane %v9679, 2
      %v9682 = vor.u32 %v9678, %v9681
      %v9683 = vsel %vm2788, %v9673, %v9682
      %v9685 = vsel %vm5293, %v9530, 0
      %v9688 = vsel %vm5293, %v9539, 0
      %v9691 = vsel %vm5293, %v9548, 0
      %v9694 = vsel %vm5293, %v9557, 0
      %v9697 = vsel %vm5293, %v9566, 0
      %v9700 = vsel %vm5293, %v9575, 0
      %v9703 = vsel %vm5293, %v9584, 0
      %v9706 = vsel %vm5293, %v9593, 0
      %v9709 = vsel %vm5293, %v9602, 0
      %v9712 = vsel %vm5293, %v9611, 0
      %v9715 = vsel %vm5293, %v9620, 0
      %v9718 = vsel %vm5293, %v9629, 0
      %v9721 = vsel %vm5293, %v9638, 0
      %v9724 = vsel %vm5293, %v9647, 0
      %v9727 = vsel %vm5293, %v9656, 0
      %v9730 = vsel %vm5293, %v9665, 0
      %v9733 = vsel %vm5293, %v9674, 0
      %v9736 = vsel %vm5293, %v9683, 0
      %v9739 = vsel %vm5348, %v9510, 0
      %9741 = vmatpush.bf16.msra.mxu0 0
      %9742 = vmatpush.bf16.msra.mxu0 0
      %9743 = vmatpush.bf16.msra.mxu0 0
      %9744 = vmatpush.bf16.msra.mxu0 0
      %9745 = vmatpush.bf16.msra.mxu0 0
      %9746 = vmatpush.bf16.msra.mxu0 0
      %9747 = vmatpush.bf16.msra.mxu0 0
      %9748 = vmatpush.bf16.msra.mxu0 %v9739
      %9749 = vmatmul.bf16.gmra.mxu0 %v9685
      %v9750 = vpop.f32.mrf.mxu0
      %v9751 = vadd.f32 0.0, %v9750
      %v9752 = vpop.f32.mrf.mxu0
      %v9753 = vadd.f32 0.0, %v9752
      %9754 = vmatmul.bf16.gmra.mxu0 %v9688
      %v9755 = vpop.f32.mrf.mxu0
      %v9756 = vadd.f32 0.0, %v9755
      %v9757 = vpop.f32.mrf.mxu0
      %v9758 = vadd.f32 0.0, %v9757
      %9759 = vmatmul.bf16.gmra.mxu0 %v9691
      %v9760 = vpop.f32.mrf.mxu0
      %v9761 = vadd.f32 0.0, %v9760
      %v9762 = vpop.f32.mrf.mxu0
      %v9763 = vadd.f32 0.0, %v9762
      %9764 = vmatmul.bf16.gmra.mxu0 %v9694
      %v9765 = vpop.f32.mrf.mxu0
      %v9766 = vadd.f32 0.0, %v9765
      %v9767 = vpop.f32.mrf.mxu0
      %v9768 = vadd.f32 0.0, %v9767
      %9769 = vmatmul.bf16.gmra.mxu0 %v9697
      %v9770 = vpop.f32.mrf.mxu0
      %v9771 = vadd.f32 0.0, %v9770
      %v9772 = vpop.f32.mrf.mxu0
      %v9773 = vadd.f32 0.0, %v9772
      %9774 = vmatmul.bf16.gmra.mxu0 %v9700
      %v9775 = vpop.f32.mrf.mxu0
      %v9776 = vadd.f32 0.0, %v9775
      %v9777 = vpop.f32.mrf.mxu0
      %v9778 = vadd.f32 0.0, %v9777
      %9779 = vmatmul.bf16.gmra.mxu0 %v9703
      %v9780 = vpop.f32.mrf.mxu0
      %v9781 = vadd.f32 0.0, %v9780
      %v9782 = vpop.f32.mrf.mxu0
      %v9783 = vadd.f32 0.0, %v9782
      %9784 = vmatmul.bf16.gmra.mxu0 %v9706
      %v9785 = vpop.f32.mrf.mxu0
      %v9786 = vadd.f32 0.0, %v9785
      %v9787 = vpop.f32.mrf.mxu0
      %v9788 = vadd.f32 0.0, %v9787
      %9789 = vmatmul.bf16.gmra.mxu0 %v9709
      %v9790 = vpop.f32.mrf.mxu0
      %v9791 = vadd.f32 0.0, %v9790
      %v9792 = vpop.f32.mrf.mxu0
      %v9793 = vadd.f32 0.0, %v9792
      %9794 = vmatmul.bf16.gmra.mxu0 %v9712
      %v9795 = vpop.f32.mrf.mxu0
      %v9796 = vadd.f32 0.0, %v9795
      %v9797 = vpop.f32.mrf.mxu0
      %v9798 = vadd.f32 0.0, %v9797
      %9799 = vmatmul.bf16.gmra.mxu0 %v9715
      %v9800 = vpop.f32.mrf.mxu0
      %v9801 = vadd.f32 0.0, %v9800
      %v9802 = vpop.f32.mrf.mxu0
      %v9803 = vadd.f32 0.0, %v9802
      %9804 = vmatmul.bf16.gmra.mxu0 %v9718
      %v9805 = vpop.f32.mrf.mxu0
      %v9806 = vadd.f32 0.0, %v9805
      %v9807 = vpop.f32.mrf.mxu0
      %v9808 = vadd.f32 0.0, %v9807
      %9809 = vmatmul.bf16.gmra.mxu0 %v9721
      %v9810 = vpop.f32.mrf.mxu0
      %v9811 = vadd.f32 0.0, %v9810
      %v9812 = vpop.f32.mrf.mxu0
      %v9813 = vadd.f32 0.0, %v9812
      %9814 = vmatmul.bf16.gmra.mxu0 %v9724
      %v9815 = vpop.f32.mrf.mxu0
      %v9816 = vadd.f32 0.0, %v9815
      %v9817 = vpop.f32.mrf.mxu0
      %v9818 = vadd.f32 0.0, %v9817
      %9819 = vmatmul.bf16.gmra.mxu0 %v9727
      %v9820 = vpop.f32.mrf.mxu0
      %v9821 = vadd.f32 0.0, %v9820
      %v9822 = vpop.f32.mrf.mxu0
      %v9823 = vadd.f32 0.0, %v9822
      %9824 = vmatmul.bf16.gmra.mxu0 %v9730
      %v9825 = vpop.f32.mrf.mxu0
      %v9826 = vadd.f32 0.0, %v9825
      %v9827 = vpop.f32.mrf.mxu0
      %v9828 = vadd.f32 0.0, %v9827
      %9829 = vmatmul.bf16.gmra.mxu0 %v9733
      %v9830 = vpop.f32.mrf.mxu0
      %v9831 = vadd.f32 0.0, %v9830
      %v9832 = vpop.f32.mrf.mxu0
      %v9833 = vadd.f32 0.0, %v9832
      %9834 = vmatmul.bf16.gmra.mxu0 %v9736
      %v9835 = vpop.f32.mrf.mxu0
      %v9836 = vadd.f32 0.0, %v9835
      %v9837 = vpop.f32.mrf.mxu0
      %v9838 = vadd.f32 0.0, %v9837
      %9839 = vdwg.mxu0
      %v9840 = vadd.f32 %v9472, %v9751
      %v9841 = vadd.f32 %v9473, %v9753
      %v9842 = vadd.f32 %v9474, %v9756
      %v9843 = vadd.f32 %v9475, %v9758
      %v9844 = vadd.f32 %v9476, %v9761
      %v9845 = vadd.f32 %v9477, %v9763
      %v9846 = vadd.f32 %v9478, %v9766
      %v9847 = vadd.f32 %v9479, %v9768
      %v9848 = vadd.f32 %v9480, %v9771
      %v9849 = vadd.f32 %v9481, %v9773
      %v9850 = vadd.f32 %v9482, %v9776
      %v9851 = vadd.f32 %v9483, %v9778
      %v9852 = vadd.f32 %v9484, %v9781
      %v9853 = vadd.f32 %v9485, %v9783
      %v9854 = vadd.f32 %v9486, %v9786
      %v9855 = vadd.f32 %v9487, %v9788
      %v9856 = vadd.f32 %v9488, %v9791
      %v9857 = vadd.f32 %v9489, %v9793
      %v9858 = vadd.f32 %v9490, %v9796
      %v9859 = vadd.f32 %v9491, %v9798
      %v9860 = vadd.f32 %v9492, %v9801
      %v9861 = vadd.f32 %v9493, %v9803
      %v9862 = vadd.f32 %v9494, %v9806
      %v9863 = vadd.f32 %v9495, %v9808
      %v9864 = vadd.f32 %v9496, %v9811
      %v9865 = vadd.f32 %v9497, %v9813
      %v9866 = vadd.f32 %v9498, %v9816
      %v9867 = vadd.f32 %v9499, %v9818
      %v9868 = vadd.f32 %v9500, %v9821
      %v9869 = vadd.f32 %v9501, %v9823
      %v9870 = vadd.f32 %v9502, %v9826
      %v9871 = vadd.f32 %v9503, %v9828
      %v9872 = vadd.f32 %v9504, %v9831
      %v9873 = vadd.f32 %v9505, %v9833
      %v9874 = vadd.f32 %v9506, %v9836
      %v9875 = vadd.f32 %v9507, %v9838
      %v9876 = vld [vmem:[#allocation3 + $0x8] sm:$0xc]
      %s9877 = scalar_lea.vmem %s5, 20
      %v9878 = vld [vmem:[%s9877] sm:$0xf]
      %v9880 = vunpack.c.l.b16 %v9876
      %v9881 = vpack.c.b16 %v9224, %v9880
      %v9882 = vrot.slane %v9881, 2
      %v9883 = vrot.slane %v9261, 2
      %v9884 = vsel %vm3157, %v9882, %v9883
      %v9885 = vrot.slane %v9262, 2
      %v9886 = vsel %vm3157, %v9883, %v9885
      %v9887 = vrot.slane %v9263, 2
      %v9888 = vsel %vm3157, %v9885, %v9887
      %v9889 = vrot.slane %v9264, 2
      %v9890 = vsel %vm3157, %v9887, %v9889
      %v9891 = vrot.slane %v9265, 2
      %v9892 = vsel %vm3157, %v9889, %v9891
      %v9893 = vrot.slane %v9266, 2
      %v9894 = vsel %vm3157, %v9891, %v9893
      %v9895 = vrot.slane %v9267, 2
      %v9896 = vsel %vm3157, %v9893, %v9895
      %v9897 = vrot.slane %v9268, 2
      %v9898 = vsel %vm3157, %v9895, %v9897
      %v9899 = vrot.slane %v9269, 2
      %v9900 = vsel %vm3157, %v9897, %v9899
      %v9901 = vrot.slane %v9270, 2
      %v9902 = vsel %vm3157, %v9899, %v9901
      %v9903 = vrot.slane %v9271, 2
      %v9904 = vsel %vm3157, %v9901, %v9903
      %v9905 = vrot.slane %v9272, 2
      %v9906 = vsel %vm3157, %v9903, %v9905
      %v9907 = vrot.slane %v9273, 2
      %v9908 = vsel %vm3157, %v9905, %v9907
      %v9909 = vrot.slane %v9274, 2
      %v9910 = vsel %vm3157, %v9907, %v9909
      %v9911 = vrot.slane %v9275, 2
      %v9912 = vsel %vm3157, %v9909, %v9911
      %v9913 = vrot.slane %v9276, 2
      %v9914 = vsel %vm3157, %v9911, %v9913
      %v9915 = vrot.slane %v9277, 2
      %v9916 = vsel %vm3157, %v9913, %v9915
      %v9917 = vrot.slane %v9513, 2
      %v9918 = vsel %vm3157, %v9915, %v9917
      %v9920 = vsel %vm5293, %v9884, 0
      %v9923 = vsel %vm5293, %v9886, 0
      %v9926 = vsel %vm5293, %v9888, 0
      %v9929 = vsel %vm5293, %v9890, 0
      %v9932 = vsel %vm5293, %v9892, 0
      %v9935 = vsel %vm5293, %v9894, 0
      %v9938 = vsel %vm5293, %v9896, 0
      %v9941 = vsel %vm5293, %v9898, 0
      %v9944 = vsel %vm5293, %v9900, 0
      %v9947 = vsel %vm5293, %v9902, 0
      %v9950 = vsel %vm5293, %v9904, 0
      %v9953 = vsel %vm5293, %v9906, 0
      %v9956 = vsel %vm5293, %v9908, 0
      %v9959 = vsel %vm5293, %v9910, 0
      %v9962 = vsel %vm5293, %v9912, 0
      %v9965 = vsel %vm5293, %v9914, 0
      %v9968 = vsel %vm5293, %v9916, 0
      %v9971 = vsel %vm5293, %v9918, 0
      %v9974 = vsel %vm5348, %v9878, 0
      %9976 = vmatpush.bf16.msra.mxu0 0
      %9977 = vmatpush.bf16.msra.mxu0 0
      %9978 = vmatpush.bf16.msra.mxu0 0
      %9979 = vmatpush.bf16.msra.mxu0 0
      %9980 = vmatpush.bf16.msra.mxu0 0
      %9981 = vmatpush.bf16.msra.mxu0 0
      %9982 = vmatpush.bf16.msra.mxu0 0
      %9983 = vmatpush.bf16.msra.mxu0 %v9974
      %9984 = vmatmul.bf16.gmra.mxu0 %v9920
      %v9985 = vpop.f32.mrf.mxu0
      %v9986 = vadd.f32 0.0, %v9985
      %v9987 = vpop.f32.mrf.mxu0
      %v9988 = vadd.f32 0.0, %v9987
      %9989 = vmatmul.bf16.gmra.mxu0 %v9923
      %v9990 = vpop.f32.mrf.mxu0
      %v9991 = vadd.f32 0.0, %v9990
      %v9992 = vpop.f32.mrf.mxu0
      %v9993 = vadd.f32 0.0, %v9992
      %9994 = vmatmul.bf16.gmra.mxu0 %v9926
      %v9995 = vpop.f32.mrf.mxu0
      %v9996 = vadd.f32 0.0, %v9995
      %v9997 = vpop.f32.mrf.mxu0
      %v9998 = vadd.f32 0.0, %v9997
      %9999 = vmatmul.bf16.gmra.mxu0 %v9929
      %v10000 = vpop.f32.mrf.mxu0
      %v10001 = vadd.f32 0.0, %v10000
      %v10002 = vpop.f32.mrf.mxu0
      %v10003 = vadd.f32 0.0, %v10002
      %10004 = vmatmul.bf16.gmra.mxu0 %v9932
      %v10005 = vpop.f32.mrf.mxu0
      %v10006 = vadd.f32 0.0, %v10005
      %v10007 = vpop.f32.mrf.mxu0
      %v10008 = vadd.f32 0.0, %v10007
      %10009 = vmatmul.bf16.gmra.mxu0 %v9935
      %v10010 = vpop.f32.mrf.mxu0
      %v10011 = vadd.f32 0.0, %v10010
      %v10012 = vpop.f32.mrf.mxu0
      %v10013 = vadd.f32 0.0, %v10012
      %10014 = vmatmul.bf16.gmra.mxu0 %v9938
      %v10015 = vpop.f32.mrf.mxu0
      %v10016 = vadd.f32 0.0, %v10015
      %v10017 = vpop.f32.mrf.mxu0
      %v10018 = vadd.f32 0.0, %v10017
      %10019 = vmatmul.bf16.gmra.mxu0 %v9941
      %v10020 = vpop.f32.mrf.mxu0
      %v10021 = vadd.f32 0.0, %v10020
      %v10022 = vpop.f32.mrf.mxu0
      %v10023 = vadd.f32 0.0, %v10022
      %10024 = vmatmul.bf16.gmra.mxu0 %v9944
      %v10025 = vpop.f32.mrf.mxu0
      %v10026 = vadd.f32 0.0, %v10025
      %v10027 = vpop.f32.mrf.mxu0
      %v10028 = vadd.f32 0.0, %v10027
      %10029 = vmatmul.bf16.gmra.mxu0 %v9947
      %v10030 = vpop.f32.mrf.mxu0
      %v10031 = vadd.f32 0.0, %v10030
      %v10032 = vpop.f32.mrf.mxu0
      %v10033 = vadd.f32 0.0, %v10032
      %10034 = vmatmul.bf16.gmra.mxu0 %v9950
      %v10035 = vpop.f32.mrf.mxu0
      %v10036 = vadd.f32 0.0, %v10035
      %v10037 = vpop.f32.mrf.mxu0
      %v10038 = vadd.f32 0.0, %v10037
      %10039 = vmatmul.bf16.gmra.mxu0 %v9953
      %v10040 = vpop.f32.mrf.mxu0
      %v10041 = vadd.f32 0.0, %v10040
      %v10042 = vpop.f32.mrf.mxu0
      %v10043 = vadd.f32 0.0, %v10042
      %10044 = vmatmul.bf16.gmra.mxu0 %v9956
      %v10045 = vpop.f32.mrf.mxu0
      %v10046 = vadd.f32 0.0, %v10045
      %v10047 = vpop.f32.mrf.mxu0
      %v10048 = vadd.f32 0.0, %v10047
      %10049 = vmatmul.bf16.gmra.mxu0 %v9959
      %v10050 = vpop.f32.mrf.mxu0
      %v10051 = vadd.f32 0.0, %v10050
      %v10052 = vpop.f32.mrf.mxu0
      %v10053 = vadd.f32 0.0, %v10052
      %10054 = vmatmul.bf16.gmra.mxu0 %v9962
      %v10055 = vpop.f32.mrf.mxu0
      %v10056 = vadd.f32 0.0, %v10055
      %v10057 = vpop.f32.mrf.mxu0
      %v10058 = vadd.f32 0.0, %v10057
      %10059 = vmatmul.bf16.gmra.mxu0 %v9965
      %v10060 = vpop.f32.mrf.mxu0
      %v10061 = vadd.f32 0.0, %v10060
      %v10062 = vpop.f32.mrf.mxu0
      %v10063 = vadd.f32 0.0, %v10062
      %10064 = vmatmul.bf16.gmra.mxu0 %v9968
      %v10065 = vpop.f32.mrf.mxu0
      %v10066 = vadd.f32 0.0, %v10065
      %v10067 = vpop.f32.mrf.mxu0
      %v10068 = vadd.f32 0.0, %v10067
      %10069 = vmatmul.bf16.gmra.mxu0 %v9971
      %v10070 = vpop.f32.mrf.mxu0
      %v10071 = vadd.f32 0.0, %v10070
      %v10072 = vpop.f32.mrf.mxu0
      %v10073 = vadd.f32 0.0, %v10072
      %10074 = vdwg.mxu0
      %v10075 = vadd.f32 %v9840, %v9986
      %v10076 = vadd.f32 %v9841, %v9988
      %v10077 = vadd.f32 %v9842, %v9991
      %v10078 = vadd.f32 %v9843, %v9993
      %v10079 = vadd.f32 %v9844, %v9996
      %v10080 = vadd.f32 %v9845, %v9998
      %v10081 = vadd.f32 %v9846, %v10001
      %v10082 = vadd.f32 %v9847, %v10003
      %v10083 = vadd.f32 %v9848, %v10006
      %v10084 = vadd.f32 %v9849, %v10008
      %v10085 = vadd.f32 %v9850, %v10011
      %v10086 = vadd.f32 %v9851, %v10013
      %v10087 = vadd.f32 %v9852, %v10016
      %v10088 = vadd.f32 %v9853, %v10018
      %v10089 = vadd.f32 %v9854, %v10021
      %v10090 = vadd.f32 %v9855, %v10023
      %v10091 = vadd.f32 %v9856, %v10026
      %v10092 = vadd.f32 %v9857, %v10028
      %v10093 = vadd.f32 %v9858, %v10031
      %v10094 = vadd.f32 %v9859, %v10033
      %v10095 = vadd.f32 %v9860, %v10036
      %v10096 = vadd.f32 %v9861, %v10038
      %v10097 = vadd.f32 %v9862, %v10041
      %v10098 = vadd.f32 %v9863, %v10043
      %v10099 = vadd.f32 %v9864, %v10046
      %v10100 = vadd.f32 %v9865, %v10048
      %v10101 = vadd.f32 %v9866, %v10051
      %v10102 = vadd.f32 %v9867, %v10053
      %v10103 = vadd.f32 %v9868, %v10056
      %v10104 = vadd.f32 %v9869, %v10058
      %v10105 = vadd.f32 %v9870, %v10061
      %v10106 = vadd.f32 %v9871, %v10063
      %v10107 = vadd.f32 %v9872, %v10066
      %v10108 = vadd.f32 %v9873, %v10068
      %v10109 = vadd.f32 %v9874, %v10071
      %v10110 = vadd.f32 %v9875, %v10073
      %v10111 = vld [vmem:[#allocation3 + $0x10] sm:$0xc]
      %v10112 = vld [vmem:[#allocation3 + $0x14] sm:$0xf]
      %v10113 = vld [vmem:[#allocation3 + $0x18] sm:$0xf]
      %v10114 = vld [vmem:[#allocation3 + $0x1c] sm:$0xf]
      %v10115 = vld [vmem:[#allocation3 + $0x20] sm:$0xf]
      %v10116 = vld [vmem:[#allocation3 + $0x24] sm:$0xf]
      %v10117 = vld [vmem:[#allocation3 + $0x28] sm:$0xf]
      %v10118 = vld [vmem:[#allocation3 + $0x2c] sm:$0xf]
      %v10119 = vld [vmem:[#allocation3 + $0x30] sm:$0xf]
      %v10120 = vld [vmem:[#allocation3 + $0x34] sm:$0xf]
      %v10121 = vld [vmem:[#allocation3 + $0x38] sm:$0xf]
      %v10122 = vld [vmem:[#allocation3 + $0x3c] sm:$0xf]
      %v10123 = vld [vmem:[#allocation3 + $0x40] sm:$0xf]
      %v10124 = vld [vmem:[#allocation3 + $0x44] sm:$0xf]
      %v10125 = vld [vmem:[#allocation3 + $0x48] sm:$0xf]
      %v10126 = vld [vmem:[#allocation3 + $0x4c] sm:$0xf]
      %v10127 = vld [vmem:[#allocation3 + $0x50] sm:$0xf]
      %v10128 = vld [vmem:[#allocation3 + $0x54] sm:$0xf]
      %v10129 = vld [vmem:[#allocation3 + $0x58] sm:$0xf]
      %v10130 = vld [vmem:[#allocation3 + $0x5c] sm:$0xf]
      %v10131 = vld [vmem:[#allocation3 + $0x60] sm:$0xf]
      %v10132 = vld [vmem:[#allocation3 + $0x64] sm:$0xf]
      %v10133 = vld [vmem:[#allocation3 + $0x68] sm:$0xf]
      %v10134 = vld [vmem:[#allocation3 + $0x6c] sm:$0xf]
      %v10135 = vld [vmem:[#allocation3 + $0x70] sm:$0xf]
      %v10136 = vld [vmem:[#allocation3 + $0x74] sm:$0xf]
      %v10137 = vld [vmem:[#allocation3 + $0x78] sm:$0xf]
      %v10138 = vld [vmem:[#allocation3 + $0x7c] sm:$0xf]
      %v10139 = vld [vmem:[#allocation3 + $0x80] sm:$0xf]
      %v10140 = vld [vmem:[#allocation3 + $0x84] sm:$0xf]
      %v10141 = vld [vmem:[#allocation3 + $0x88] sm:$0xf]
      %v10142 = vld [vmem:[#allocation3 + $0x8c] sm:$0xf]
      %v10143 = vld [vmem:[#allocation3 + $0x90] sm:$0xf]
      %v10144 = vld [vmem:[#allocation3 + $0x94] sm:$0xf]
      %v10145 = vld [vmem:[#allocation3 + $0x98] sm:$0xf]
      %v10146 = vld [vmem:[#allocation3 + $0x9c] sm:$0xf]
      %v10147 = vld [vmem:[#allocation3 + $0xa0] sm:$0x3]
      %s10148 = scalar_lea.vmem %s5, 24
      %v10149 = vld [vmem:[%s10148] sm:$0xf]
      %v10187 = vunpack.c.l.b16 %v10111
      %v10188 = vunpack.c.l.b16 %v10112
      %v10189 = vunpack.c.l.b16 %v10113
      %v10190 = vunpack.c.l.b16 %v10114
      %v10191 = vunpack.c.l.b16 %v10115
      %v10192 = vunpack.c.l.b16 %v10116
      %v10193 = vunpack.c.l.b16 %v10117
      %v10194 = vunpack.c.l.b16 %v10118
      %v10195 = vunpack.c.l.b16 %v10119
      %v10196 = vunpack.c.l.b16 %v10120
      %v10197 = vunpack.c.l.b16 %v10121
      %v10198 = vunpack.c.l.b16 %v10122
      %v10199 = vunpack.c.l.b16 %v10123
      %v10200 = vunpack.c.l.b16 %v10124
      %v10201 = vunpack.c.l.b16 %v10125
      %v10202 = vunpack.c.l.b16 %v10126
      %v10203 = vunpack.c.l.b16 %v10127
      %v10204 = vunpack.c.l.b16 %v10128
      %v10205 = vunpack.c.l.b16 %v10129
      %v10206 = vunpack.c.l.b16 %v10130
      %v10207 = vunpack.c.l.b16 %v10131
      %v10208 = vunpack.c.l.b16 %v10132
      %v10209 = vunpack.c.l.b16 %v10133
      %v10210 = vunpack.c.l.b16 %v10134
      %v10211 = vunpack.c.l.b16 %v10135
      %v10212 = vunpack.c.l.b16 %v10136
      %v10213 = vunpack.c.l.b16 %v10137
      %v10214 = vunpack.c.l.b16 %v10138
      %v10215 = vunpack.c.l.b16 %v10139
      %v10216 = vunpack.c.l.b16 %v10140
      %v10217 = vunpack.c.l.b16 %v10141
      %v10218 = vunpack.c.l.b16 %v10142
      %v10219 = vunpack.c.l.b16 %v10143
      %v10220 = vunpack.c.l.b16 %v10144
      %v10221 = vunpack.c.l.b16 %v10145
      %v10222 = vunpack.c.l.b16 %v10146
      %v10223 = vunpack.c.l.b16 %v10147
      %v10224 = vpack.c.b16 %v10188, %v10187
      %v10225 = vpack.c.b16 %v10190, %v10189
      %v10226 = vpack.c.b16 %v10192, %v10191
      %v10227 = vpack.c.b16 %v10194, %v10193
      %v10228 = vpack.c.b16 %v10196, %v10195
      %v10229 = vpack.c.b16 %v10198, %v10197
      %v10230 = vpack.c.b16 %v10200, %v10199
      %v10231 = vpack.c.b16 %v10202, %v10201
      %v10232 = vpack.c.b16 %v10204, %v10203
      %v10233 = vpack.c.b16 %v10206, %v10205
      %v10234 = vpack.c.b16 %v10208, %v10207
      %v10235 = vpack.c.b16 %v10210, %v10209
      %v10236 = vpack.c.b16 %v10212, %v10211
      %v10237 = vpack.c.b16 %v10214, %v10213
      %v10238 = vpack.c.b16 %v10216, %v10215
      %v10239 = vpack.c.b16 %v10218, %v10217
      %v10240 = vpack.c.b16 %v10220, %v10219
      %v10241 = vpack.c.b16 %v10222, %v10221
      %v10242 = vpack.c.b16 %v10223, %v10223
      %v10243 = vrot.slane %v10224, 2
      %v10244 = vrot.slane %v10225, 2
      %v10245 = vsel %vm3157, %v10243, %v10244
      %v10246 = vrot.slane %v10226, 2
      %v10247 = vsel %vm3157, %v10244, %v10246
      %v10248 = vrot.slane %v10227, 2
      %v10249 = vsel %vm3157, %v10246, %v10248
      %v10250 = vrot.slane %v10228, 2
      %v10251 = vsel %vm3157, %v10248, %v10250
      %v10252 = vrot.slane %v10229, 2
      %v10253 = vsel %vm3157, %v10250, %v10252
      %v10254 = vrot.slane %v10230, 2
      %v10255 = vsel %vm3157, %v10252, %v10254
      %v10256 = vrot.slane %v10231, 2
      %v10257 = vsel %vm3157, %v10254, %v10256
      %v10258 = vrot.slane %v10232, 2
      %v10259 = vsel %vm3157, %v10256, %v10258
      %v10260 = vrot.slane %v10233, 2
      %v10261 = vsel %vm3157, %v10258, %v10260
      %v10262 = vrot.slane %v10234, 2
      %v10263 = vsel %vm3157, %v10260, %v10262
      %v10264 = vrot.slane %v10235, 2
      %v10265 = vsel %vm3157, %v10262, %v10264
      %v10266 = vrot.slane %v10236, 2
      %v10267 = vsel %vm3157, %v10264, %v10266
      %v10268 = vrot.slane %v10237, 2
      %v10269 = vsel %vm3157, %v10266, %v10268
      %v10270 = vrot.slane %v10238, 2
      %v10271 = vsel %vm3157, %v10268, %v10270
      %v10272 = vrot.slane %v10239, 2
      %v10273 = vsel %vm3157, %v10270, %v10272
      %v10274 = vrot.slane %v10240, 2
      %v10275 = vsel %vm3157, %v10272, %v10274
      %v10276 = vrot.slane %v10241, 2
      %v10277 = vsel %vm3157, %v10274, %v10276
      %v10278 = vrot.slane %v10242, 2
      %v10279 = vsel %vm3157, %v10276, %v10278
      %v10281 = vsel %vm5293, %v10245, 0
      %v10284 = vsel %vm5293, %v10247, 0
      %v10287 = vsel %vm5293, %v10249, 0
      %v10290 = vsel %vm5293, %v10251, 0
      %v10293 = vsel %vm5293, %v10253, 0
      %v10296 = vsel %vm5293, %v10255, 0
      %v10299 = vsel %vm5293, %v10257, 0
      %v10302 = vsel %vm5293, %v10259, 0
      %v10305 = vsel %vm5293, %v10261, 0
      %v10308 = vsel %vm5293, %v10263, 0
      %v10311 = vsel %vm5293, %v10265, 0
      %v10314 = vsel %vm5293, %v10267, 0
      %v10317 = vsel %vm5293, %v10269, 0
      %v10320 = vsel %vm5293, %v10271, 0
      %v10323 = vsel %vm5293, %v10273, 0
      %v10326 = vsel %vm5293, %v10275, 0
      %v10329 = vsel %vm5293, %v10277, 0
      %v10332 = vsel %vm5293, %v10279, 0
      %v10335 = vsel %vm5348, %v10149, 0
      %10337 = vmatpush.bf16.msra.mxu0 0
      %10338 = vmatpush.bf16.msra.mxu0 0
      %10339 = vmatpush.bf16.msra.mxu0 0
      %10340 = vmatpush.bf16.msra.mxu0 0
      %10341 = vmatpush.bf16.msra.mxu0 0
      %10342 = vmatpush.bf16.msra.mxu0 0
      %10343 = vmatpush.bf16.msra.mxu0 0
      %10344 = vmatpush.bf16.msra.mxu0 %v10335
      %10345 = vmatmul.bf16.gmra.mxu0 %v10281
      %v10346 = vpop.f32.mrf.mxu0
      %v10347 = vadd.f32 0.0, %v10346
      %v10348 = vpop.f32.mrf.mxu0
      %v10349 = vadd.f32 0.0, %v10348
      %10350 = vmatmul.bf16.gmra.mxu0 %v10284
      %v10351 = vpop.f32.mrf.mxu0
      %v10352 = vadd.f32 0.0, %v10351
      %v10353 = vpop.f32.mrf.mxu0
      %v10354 = vadd.f32 0.0, %v10353
      %10355 = vmatmul.bf16.gmra.mxu0 %v10287
      %v10356 = vpop.f32.mrf.mxu0
      %v10357 = vadd.f32 0.0, %v10356
      %v10358 = vpop.f32.mrf.mxu0
      %v10359 = vadd.f32 0.0, %v10358
      %10360 = vmatmul.bf16.gmra.mxu0 %v10290
      %v10361 = vpop.f32.mrf.mxu0
      %v10362 = vadd.f32 0.0, %v10361
      %v10363 = vpop.f32.mrf.mxu0
      %v10364 = vadd.f32 0.0, %v10363
      %10365 = vmatmul.bf16.gmra.mxu0 %v10293
      %v10366 = vpop.f32.mrf.mxu0
      %v10367 = vadd.f32 0.0, %v10366
      %v10368 = vpop.f32.mrf.mxu0
      %v10369 = vadd.f32 0.0, %v10368
      %10370 = vmatmul.bf16.gmra.mxu0 %v10296
      %v10371 = vpop.f32.mrf.mxu0
      %v10372 = vadd.f32 0.0, %v10371
      %v10373 = vpop.f32.mrf.mxu0
      %v10374 = vadd.f32 0.0, %v10373
      %10375 = vmatmul.bf16.gmra.mxu0 %v10299
      %v10376 = vpop.f32.mrf.mxu0
      %v10377 = vadd.f32 0.0, %v10376
      %v10378 = vpop.f32.mrf.mxu0
      %v10379 = vadd.f32 0.0, %v10378
      %10380 = vmatmul.bf16.gmra.mxu0 %v10302
      %v10381 = vpop.f32.mrf.mxu0
      %v10382 = vadd.f32 0.0, %v10381
      %v10383 = vpop.f32.mrf.mxu0
      %v10384 = vadd.f32 0.0, %v10383
      %10385 = vmatmul.bf16.gmra.mxu0 %v10305
      %v10386 = vpop.f32.mrf.mxu0
      %v10387 = vadd.f32 0.0, %v10386
      %v10388 = vpop.f32.mrf.mxu0
      %v10389 = vadd.f32 0.0, %v10388
      %10390 = vmatmul.bf16.gmra.mxu0 %v10308
      %v10391 = vpop.f32.mrf.mxu0
      %v10392 = vadd.f32 0.0, %v10391
      %v10393 = vpop.f32.mrf.mxu0
      %v10394 = vadd.f32 0.0, %v10393
      %10395 = vmatmul.bf16.gmra.mxu0 %v10311
      %v10396 = vpop.f32.mrf.mxu0
      %v10397 = vadd.f32 0.0, %v10396
      %v10398 = vpop.f32.mrf.mxu0
      %v10399 = vadd.f32 0.0, %v10398
      %10400 = vmatmul.bf16.gmra.mxu0 %v10314
      %v10401 = vpop.f32.mrf.mxu0
      %v10402 = vadd.f32 0.0, %v10401
      %v10403 = vpop.f32.mrf.mxu0
      %v10404 = vadd.f32 0.0, %v10403
      %10405 = vmatmul.bf16.gmra.mxu0 %v10317
      %v10406 = vpop.f32.mrf.mxu0
      %v10407 = vadd.f32 0.0, %v10406
      %v10408 = vpop.f32.mrf.mxu0
      %v10409 = vadd.f32 0.0, %v10408
      %10410 = vmatmul.bf16.gmra.mxu0 %v10320
      %v10411 = vpop.f32.mrf.mxu0
      %v10412 = vadd.f32 0.0, %v10411
      %v10413 = vpop.f32.mrf.mxu0
      %v10414 = vadd.f32 0.0, %v10413
      %10415 = vmatmul.bf16.gmra.mxu0 %v10323
      %v10416 = vpop.f32.mrf.mxu0
      %v10417 = vadd.f32 0.0, %v10416
      %v10418 = vpop.f32.mrf.mxu0
      %v10419 = vadd.f32 0.0, %v10418
      %10420 = vmatmul.bf16.gmra.mxu0 %v10326
      %v10421 = vpop.f32.mrf.mxu0
      %v10422 = vadd.f32 0.0, %v10421
      %v10423 = vpop.f32.mrf.mxu0
      %v10424 = vadd.f32 0.0, %v10423
      %10425 = vmatmul.bf16.gmra.mxu0 %v10329
      %v10426 = vpop.f32.mrf.mxu0
      %v10427 = vadd.f32 0.0, %v10426
      %v10428 = vpop.f32.mrf.mxu0
      %v10429 = vadd.f32 0.0, %v10428
      %10430 = vmatmul.bf16.gmra.mxu0 %v10332
      %v10431 = vpop.f32.mrf.mxu0
      %v10432 = vadd.f32 0.0, %v10431
      %v10433 = vpop.f32.mrf.mxu0
      %v10434 = vadd.f32 0.0, %v10433
      %10435 = vdwg.mxu0
      %v10436 = vadd.f32 %v10075, %v10347
      %v10437 = vadd.f32 %v10076, %v10349
      %v10438 = vadd.f32 %v10077, %v10352
      %v10439 = vadd.f32 %v10078, %v10354
      %v10440 = vadd.f32 %v10079, %v10357
      %v10441 = vadd.f32 %v10080, %v10359
      %v10442 = vadd.f32 %v10081, %v10362
      %v10443 = vadd.f32 %v10082, %v10364
      %v10444 = vadd.f32 %v10083, %v10367
      %v10445 = vadd.f32 %v10084, %v10369
      %v10446 = vadd.f32 %v10085, %v10372
      %v10447 = vadd.f32 %v10086, %v10374
      %v10448 = vadd.f32 %v10087, %v10377
      %v10449 = vadd.f32 %v10088, %v10379
      %v10450 = vadd.f32 %v10089, %v10382
      %v10451 = vadd.f32 %v10090, %v10384
      %v10452 = vadd.f32 %v10091, %v10387
      %v10453 = vadd.f32 %v10092, %v10389
      %v10454 = vadd.f32 %v10093, %v10392
      %v10455 = vadd.f32 %v10094, %v10394
      %v10456 = vadd.f32 %v10095, %v10397
      %v10457 = vadd.f32 %v10096, %v10399
      %v10458 = vadd.f32 %v10097, %v10402
      %v10459 = vadd.f32 %v10098, %v10404
      %v10460 = vadd.f32 %v10099, %v10407
      %v10461 = vadd.f32 %v10100, %v10409
      %v10462 = vadd.f32 %v10101, %v10412
      %v10463 = vadd.f32 %v10102, %v10414
      %v10464 = vadd.f32 %v10103, %v10417
      %v10465 = vadd.f32 %v10104, %v10419
      %v10466 = vadd.f32 %v10105, %v10422
      %v10467 = vadd.f32 %v10106, %v10424
      %v10468 = vadd.f32 %v10107, %v10427
      %v10469 = vadd.f32 %v10108, %v10429
      %v10470 = vadd.f32 %v10109, %v10432
      %v10471 = vadd.f32 %v10110, %v10434
      %v10472 = vld [vmem:[#allocation3 + $0xa0] sm:$0x7]
      %s10473 = scalar_lea.vmem %s5, 28
      %v10474 = vld [vmem:[%s10473] sm:$0xf]
      %v10476 = vunpack.c.l.b16 %v10472
      %v10477 = vpack.c.b16 %v10476, %v10476
      %v10479 = vshrl.u32 %v10224, 16
      %v10481 = vrot.slane %v10479, 2
      %v10482 = vshll.u32 %v10224, 16
      %v10484 = vrot.slane %v10482, 3
      %v10485 = vor.u32 %v10481, %v10484
      %v10487 = vshrl.u32 %v10225, 16
      %v10489 = vrot.slane %v10487, 2
      %v10490 = vshll.u32 %v10225, 16
      %v10492 = vrot.slane %v10490, 3
      %v10493 = vor.u32 %v10489, %v10492
      %v10494 = vsel %vm3754, %v10485, %v10493
      %v10496 = vshrl.u32 %v10226, 16
      %v10498 = vrot.slane %v10496, 2
      %v10499 = vshll.u32 %v10226, 16
      %v10501 = vrot.slane %v10499, 3
      %v10502 = vor.u32 %v10498, %v10501
      %v10503 = vsel %vm3754, %v10493, %v10502
      %v10505 = vshrl.u32 %v10227, 16
      %v10507 = vrot.slane %v10505, 2
      %v10508 = vshll.u32 %v10227, 16
      %v10510 = vrot.slane %v10508, 3
      %v10511 = vor.u32 %v10507, %v10510
      %v10512 = vsel %vm3754, %v10502, %v10511
      %v10514 = vshrl.u32 %v10228, 16
      %v10516 = vrot.slane %v10514, 2
      %v10517 = vshll.u32 %v10228, 16
      %v10519 = vrot.slane %v10517, 3
      %v10520 = vor.u32 %v10516, %v10519
      %v10521 = vsel %vm3754, %v10511, %v10520
      %v10523 = vshrl.u32 %v10229, 16
      %v10525 = vrot.slane %v10523, 2
      %v10526 = vshll.u32 %v10229, 16
      %v10528 = vrot.slane %v10526, 3
      %v10529 = vor.u32 %v10525, %v10528
      %v10530 = vsel %vm3754, %v10520, %v10529
      %v10532 = vshrl.u32 %v10230, 16
      %v10534 = vrot.slane %v10532, 2
      %v10535 = vshll.u32 %v10230, 16
      %v10537 = vrot.slane %v10535, 3
      %v10538 = vor.u32 %v10534, %v10537
      %v10539 = vsel %vm3754, %v10529, %v10538
      %v10541 = vshrl.u32 %v10231, 16
      %v10543 = vrot.slane %v10541, 2
      %v10544 = vshll.u32 %v10231, 16
      %v10546 = vrot.slane %v10544, 3
      %v10547 = vor.u32 %v10543, %v10546
      %v10548 = vsel %vm3754, %v10538, %v10547
      %v10550 = vshrl.u32 %v10232, 16
      %v10552 = vrot.slane %v10550, 2
      %v10553 = vshll.u32 %v10232, 16
      %v10555 = vrot.slane %v10553, 3
      %v10556 = vor.u32 %v10552, %v10555
      %v10557 = vsel %vm3754, %v10547, %v10556
      %v10559 = vshrl.u32 %v10233, 16
      %v10561 = vrot.slane %v10559, 2
      %v10562 = vshll.u32 %v10233, 16
      %v10564 = vrot.slane %v10562, 3
      %v10565 = vor.u32 %v10561, %v10564
      %v10566 = vsel %vm3754, %v10556, %v10565
      %v10568 = vshrl.u32 %v10234, 16
      %v10570 = vrot.slane %v10568, 2
      %v10571 = vshll.u32 %v10234, 16
      %v10573 = vrot.slane %v10571, 3
      %v10574 = vor.u32 %v10570, %v10573
      %v10575 = vsel %vm3754, %v10565, %v10574
      %v10577 = vshrl.u32 %v10235, 16
      %v10579 = vrot.slane %v10577, 2
      %v10580 = vshll.u32 %v10235, 16
      %v10582 = vrot.slane %v10580, 3
      %v10583 = vor.u32 %v10579, %v10582
      %v10584 = vsel %vm3754, %v10574, %v10583
      %v10586 = vshrl.u32 %v10236, 16
      %v10588 = vrot.slane %v10586, 2
      %v10589 = vshll.u32 %v10236, 16
      %v10591 = vrot.slane %v10589, 3
      %v10592 = vor.u32 %v10588, %v10591
      %v10593 = vsel %vm3754, %v10583, %v10592
      %v10595 = vshrl.u32 %v10237, 16
      %v10597 = vrot.slane %v10595, 2
      %v10598 = vshll.u32 %v10237, 16
      %v10600 = vrot.slane %v10598, 3
      %v10601 = vor.u32 %v10597, %v10600
      %v10602 = vsel %vm3754, %v10592, %v10601
      %v10604 = vshrl.u32 %v10238, 16
      %v10606 = vrot.slane %v10604, 2
      %v10607 = vshll.u32 %v10238, 16
      %v10609 = vrot.slane %v10607, 3
      %v10610 = vor.u32 %v10606, %v10609
      %v10611 = vsel %vm3754, %v10601, %v10610
      %v10613 = vshrl.u32 %v10239, 16
      %v10615 = vrot.slane %v10613, 2
      %v10616 = vshll.u32 %v10239, 16
      %v10618 = vrot.slane %v10616, 3
      %v10619 = vor.u32 %v10615, %v10618
      %v10620 = vsel %vm3754, %v10610, %v10619
      %v10622 = vshrl.u32 %v10240, 16
      %v10624 = vrot.slane %v10622, 2
      %v10625 = vshll.u32 %v10240, 16
      %v10627 = vrot.slane %v10625, 3
      %v10628 = vor.u32 %v10624, %v10627
      %v10629 = vsel %vm3754, %v10619, %v10628
      %v10631 = vshrl.u32 %v10241, 16
      %v10633 = vrot.slane %v10631, 2
      %v10634 = vshll.u32 %v10241, 16
      %v10636 = vrot.slane %v10634, 3
      %v10637 = vor.u32 %v10633, %v10636
      %v10638 = vsel %vm3754, %v10628, %v10637
      %v10640 = vshrl.u32 %v10477, 16
      %v10642 = vrot.slane %v10640, 2
      %v10643 = vshll.u32 %v10477, 16
      %v10645 = vrot.slane %v10643, 3
      %v10646 = vor.u32 %v10642, %v10645
      %v10647 = vsel %vm3754, %v10637, %v10646
      %v10649 = vsel %vm5293, %v10494, 0
      %v10652 = vsel %vm5293, %v10503, 0
      %v10655 = vsel %vm5293, %v10512, 0
      %v10658 = vsel %vm5293, %v10521, 0
      %v10661 = vsel %vm5293, %v10530, 0
      %v10664 = vsel %vm5293, %v10539, 0
      %v10667 = vsel %vm5293, %v10548, 0
      %v10670 = vsel %vm5293, %v10557, 0
      %v10673 = vsel %vm5293, %v10566, 0
      %v10676 = vsel %vm5293, %v10575, 0
      %v10679 = vsel %vm5293, %v10584, 0
      %v10682 = vsel %vm5293, %v10593, 0
      %v10685 = vsel %vm5293, %v10602, 0
      %v10688 = vsel %vm5293, %v10611, 0
      %v10691 = vsel %vm5293, %v10620, 0
      %v10694 = vsel %vm5293, %v10629, 0
      %v10697 = vsel %vm5293, %v10638, 0
      %v10700 = vsel %vm5293, %v10647, 0
      %v10703 = vsel %vm5348, %v10474, 0
      %10705 = vmatpush.bf16.msra.mxu0 0
      %10706 = vmatpush.bf16.msra.mxu0 0
      %10707 = vmatpush.bf16.msra.mxu0 0
      %10708 = vmatpush.bf16.msra.mxu0 0
      %10709 = vmatpush.bf16.msra.mxu0 0
      %10710 = vmatpush.bf16.msra.mxu0 0
      %10711 = vmatpush.bf16.msra.mxu0 0
      %10712 = vmatpush.bf16.msra.mxu0 %v10703
      %10713 = vmatmul.bf16.gmra.mxu0 %v10649
      %v10714 = vpop.f32.mrf.mxu0
      %v10715 = vadd.f32 0.0, %v10714
      %v10716 = vpop.f32.mrf.mxu0
      %v10717 = vadd.f32 0.0, %v10716
      %10718 = vmatmul.bf16.gmra.mxu0 %v10652
      %v10719 = vpop.f32.mrf.mxu0
      %v10720 = vadd.f32 0.0, %v10719
      %v10721 = vpop.f32.mrf.mxu0
      %v10722 = vadd.f32 0.0, %v10721
      %10723 = vmatmul.bf16.gmra.mxu0 %v10655
      %v10724 = vpop.f32.mrf.mxu0
      %v10725 = vadd.f32 0.0, %v10724
      %v10726 = vpop.f32.mrf.mxu0
      %v10727 = vadd.f32 0.0, %v10726
      %10728 = vmatmul.bf16.gmra.mxu0 %v10658
      %v10729 = vpop.f32.mrf.mxu0
      %v10730 = vadd.f32 0.0, %v10729
      %v10731 = vpop.f32.mrf.mxu0
      %v10732 = vadd.f32 0.0, %v10731
      %10733 = vmatmul.bf16.gmra.mxu0 %v10661
      %v10734 = vpop.f32.mrf.mxu0
      %v10735 = vadd.f32 0.0, %v10734
      %v10736 = vpop.f32.mrf.mxu0
      %v10737 = vadd.f32 0.0, %v10736
      %10738 = vmatmul.bf16.gmra.mxu0 %v10664
      %v10739 = vpop.f32.mrf.mxu0
      %v10740 = vadd.f32 0.0, %v10739
      %v10741 = vpop.f32.mrf.mxu0
      %v10742 = vadd.f32 0.0, %v10741
      %10743 = vmatmul.bf16.gmra.mxu0 %v10667
      %v10744 = vpop.f32.mrf.mxu0
      %v10745 = vadd.f32 0.0, %v10744
      %v10746 = vpop.f32.mrf.mxu0
      %v10747 = vadd.f32 0.0, %v10746
      %10748 = vmatmul.bf16.gmra.mxu0 %v10670
      %v10749 = vpop.f32.mrf.mxu0
      %v10750 = vadd.f32 0.0, %v10749
      %v10751 = vpop.f32.mrf.mxu0
      %v10752 = vadd.f32 0.0, %v10751
      %10753 = vmatmul.bf16.gmra.mxu0 %v10673
      %v10754 = vpop.f32.mrf.mxu0
      %v10755 = vadd.f32 0.0, %v10754
      %v10756 = vpop.f32.mrf.mxu0
      %v10757 = vadd.f32 0.0, %v10756
      %10758 = vmatmul.bf16.gmra.mxu0 %v10676
      %v10759 = vpop.f32.mrf.mxu0
      %v10760 = vadd.f32 0.0, %v10759
      %v10761 = vpop.f32.mrf.mxu0
      %v10762 = vadd.f32 0.0, %v10761
      %10763 = vmatmul.bf16.gmra.mxu0 %v10679
      %v10764 = vpop.f32.mrf.mxu0
      %v10765 = vadd.f32 0.0, %v10764
      %v10766 = vpop.f32.mrf.mxu0
      %v10767 = vadd.f32 0.0, %v10766
      %10768 = vmatmul.bf16.gmra.mxu0 %v10682
      %v10769 = vpop.f32.mrf.mxu0
      %v10770 = vadd.f32 0.0, %v10769
      %v10771 = vpop.f32.mrf.mxu0
      %v10772 = vadd.f32 0.0, %v10771
      %10773 = vmatmul.bf16.gmra.mxu0 %v10685
      %v10774 = vpop.f32.mrf.mxu0
      %v10775 = vadd.f32 0.0, %v10774
      %v10776 = vpop.f32.mrf.mxu0
      %v10777 = vadd.f32 0.0, %v10776
      %10778 = vmatmul.bf16.gmra.mxu0 %v10688
      %v10779 = vpop.f32.mrf.mxu0
      %v10780 = vadd.f32 0.0, %v10779
      %v10781 = vpop.f32.mrf.mxu0
      %v10782 = vadd.f32 0.0, %v10781
      %10783 = vmatmul.bf16.gmra.mxu0 %v10691
      %v10784 = vpop.f32.mrf.mxu0
      %v10785 = vadd.f32 0.0, %v10784
      %v10786 = vpop.f32.mrf.mxu0
      %v10787 = vadd.f32 0.0, %v10786
      %10788 = vmatmul.bf16.gmra.mxu0 %v10694
      %v10789 = vpop.f32.mrf.mxu0
      %v10790 = vadd.f32 0.0, %v10789
      %v10791 = vpop.f32.mrf.mxu0
      %v10792 = vadd.f32 0.0, %v10791
      %10793 = vmatmul.bf16.gmra.mxu0 %v10697
      %v10794 = vpop.f32.mrf.mxu0
      %v10795 = vadd.f32 0.0, %v10794
      %v10796 = vpop.f32.mrf.mxu0
      %v10797 = vadd.f32 0.0, %v10796
      %10798 = vmatmul.bf16.gmra.mxu0 %v10700
      %v10799 = vpop.f32.mrf.mxu0
      %v10800 = vadd.f32 0.0, %v10799
      %v10801 = vpop.f32.mrf.mxu0
      %v10802 = vadd.f32 0.0, %v10801
      %10803 = vdwg.mxu0
      %v10804 = vadd.f32 %v10436, %v10715
      %v10805 = vadd.f32 %v10437, %v10717
      %v10806 = vadd.f32 %v10438, %v10720
      %v10807 = vadd.f32 %v10439, %v10722
      %v10808 = vadd.f32 %v10440, %v10725
      %v10809 = vadd.f32 %v10441, %v10727
      %v10810 = vadd.f32 %v10442, %v10730
      %v10811 = vadd.f32 %v10443, %v10732
      %v10812 = vadd.f32 %v10444, %v10735
      %v10813 = vadd.f32 %v10445, %v10737
      %v10814 = vadd.f32 %v10446, %v10740
      %v10815 = vadd.f32 %v10447, %v10742
      %v10816 = vadd.f32 %v10448, %v10745
      %v10817 = vadd.f32 %v10449, %v10747
      %v10818 = vadd.f32 %v10450, %v10750
      %v10819 = vadd.f32 %v10451, %v10752
      %v10820 = vadd.f32 %v10452, %v10755
      %v10821 = vadd.f32 %v10453, %v10757
      %v10822 = vadd.f32 %v10454, %v10760
      %v10823 = vadd.f32 %v10455, %v10762
      %v10824 = vadd.f32 %v10456, %v10765
      %v10825 = vadd.f32 %v10457, %v10767
      %v10826 = vadd.f32 %v10458, %v10770
      %v10827 = vadd.f32 %v10459, %v10772
      %v10828 = vadd.f32 %v10460, %v10775
      %v10829 = vadd.f32 %v10461, %v10777
      %v10830 = vadd.f32 %v10462, %v10780
      %v10831 = vadd.f32 %v10463, %v10782
      %v10832 = vadd.f32 %v10464, %v10785
      %v10833 = vadd.f32 %v10465, %v10787
      %v10834 = vadd.f32 %v10466, %v10790
      %v10835 = vadd.f32 %v10467, %v10792
      %v10836 = vadd.f32 %v10468, %v10795
      %v10837 = vadd.f32 %v10469, %v10797
      %v10838 = vadd.f32 %v10470, %v10800
      %v10839 = vadd.f32 %v10471, %v10802
      %v10840 = vld [vmem:[#allocation3 + $0x10] sm:$0x8]
      %s10841 = scalar_lea.vmem %s5, 32
      %v10842 = vld [vmem:[%s10841] sm:$0xf]
      %v10844 = vunpack.c.l.b16 %v10840
      %v10845 = vpack.c.b16 %v10188, %v10844
      %v10846 = vrot.slane %v10845, 3
      %v10847 = vrot.slane %v10225, 3
      %v10848 = vsel %vm4123, %v10846, %v10847
      %v10849 = vrot.slane %v10226, 3
      %v10850 = vsel %vm4123, %v10847, %v10849
      %v10851 = vrot.slane %v10227, 3
      %v10852 = vsel %vm4123, %v10849, %v10851
      %v10853 = vrot.slane %v10228, 3
      %v10854 = vsel %vm4123, %v10851, %v10853
      %v10855 = vrot.slane %v10229, 3
      %v10856 = vsel %vm4123, %v10853, %v10855
      %v10857 = vrot.slane %v10230, 3
      %v10858 = vsel %vm4123, %v10855, %v10857
      %v10859 = vrot.slane %v10231, 3
      %v10860 = vsel %vm4123, %v10857, %v10859
      %v10861 = vrot.slane %v10232, 3
      %v10862 = vsel %vm4123, %v10859, %v10861
      %v10863 = vrot.slane %v10233, 3
      %v10864 = vsel %vm4123, %v10861, %v10863
      %v10865 = vrot.slane %v10234, 3
      %v10866 = vsel %vm4123, %v10863, %v10865
      %v10867 = vrot.slane %v10235, 3
      %v10868 = vsel %vm4123, %v10865, %v10867
      %v10869 = vrot.slane %v10236, 3
      %v10870 = vsel %vm4123, %v10867, %v10869
      %v10871 = vrot.slane %v10237, 3
      %v10872 = vsel %vm4123, %v10869, %v10871
      %v10873 = vrot.slane %v10238, 3
      %v10874 = vsel %vm4123, %v10871, %v10873
      %v10875 = vrot.slane %v10239, 3
      %v10876 = vsel %vm4123, %v10873, %v10875
      %v10877 = vrot.slane %v10240, 3
      %v10878 = vsel %vm4123, %v10875, %v10877
      %v10879 = vrot.slane %v10241, 3
      %v10880 = vsel %vm4123, %v10877, %v10879
      %v10881 = vrot.slane %v10477, 3
      %v10882 = vsel %vm4123, %v10879, %v10881
      %v10884 = vsel %vm5293, %v10848, 0
      %v10887 = vsel %vm5293, %v10850, 0
      %v10890 = vsel %vm5293, %v10852, 0
      %v10893 = vsel %vm5293, %v10854, 0
      %v10896 = vsel %vm5293, %v10856, 0
      %v10899 = vsel %vm5293, %v10858, 0
      %v10902 = vsel %vm5293, %v10860, 0
      %v10905 = vsel %vm5293, %v10862, 0
      %v10908 = vsel %vm5293, %v10864, 0
      %v10911 = vsel %vm5293, %v10866, 0
      %v10914 = vsel %vm5293, %v10868, 0
      %v10917 = vsel %vm5293, %v10870, 0
      %v10920 = vsel %vm5293, %v10872, 0
      %v10923 = vsel %vm5293, %v10874, 0
      %v10926 = vsel %vm5293, %v10876, 0
      %v10929 = vsel %vm5293, %v10878, 0
      %v10932 = vsel %vm5293, %v10880, 0
      %v10935 = vsel %vm5293, %v10882, 0
      %v10938 = vsel %vm5348, %v10842, 0
      %10940 = vmatpush.bf16.msra.mxu0 0
      %10941 = vmatpush.bf16.msra.mxu0 0
      %10942 = vmatpush.bf16.msra.mxu0 0
      %10943 = vmatpush.bf16.msra.mxu0 0
      %10944 = vmatpush.bf16.msra.mxu0 0
      %10945 = vmatpush.bf16.msra.mxu0 0
      %10946 = vmatpush.bf16.msra.mxu0 0
      %10947 = vmatpush.bf16.msra.mxu0 %v10938
      %10948 = vmatmul.bf16.gmra.mxu0 %v10884
      %v10949 = vpop.f32.mrf.mxu0
      %v10950 = vadd.f32 0.0, %v10949
      %v10951 = vpop.f32.mrf.mxu0
      %v10952 = vadd.f32 0.0, %v10951
      %10953 = vmatmul.bf16.gmra.mxu0 %v10887
      %v10954 = vpop.f32.mrf.mxu0
      %v10955 = vadd.f32 0.0, %v10954
      %v10956 = vpop.f32.mrf.mxu0
      %v10957 = vadd.f32 0.0, %v10956
      %10958 = vmatmul.bf16.gmra.mxu0 %v10890
      %v10959 = vpop.f32.mrf.mxu0
      %v10960 = vadd.f32 0.0, %v10959
      %v10961 = vpop.f32.mrf.mxu0
      %v10962 = vadd.f32 0.0, %v10961
      %10963 = vmatmul.bf16.gmra.mxu0 %v10893
      %v10964 = vpop.f32.mrf.mxu0
      %v10965 = vadd.f32 0.0, %v10964
      %v10966 = vpop.f32.mrf.mxu0
      %v10967 = vadd.f32 0.0, %v10966
      %10968 = vmatmul.bf16.gmra.mxu0 %v10896
      %v10969 = vpop.f32.mrf.mxu0
      %v10970 = vadd.f32 0.0, %v10969
      %v10971 = vpop.f32.mrf.mxu0
      %v10972 = vadd.f32 0.0, %v10971
      %10973 = vmatmul.bf16.gmra.mxu0 %v10899
      %v10974 = vpop.f32.mrf.mxu0
      %v10975 = vadd.f32 0.0, %v10974
      %v10976 = vpop.f32.mrf.mxu0
      %v10977 = vadd.f32 0.0, %v10976
      %10978 = vmatmul.bf16.gmra.mxu0 %v10902
      %v10979 = vpop.f32.mrf.mxu0
      %v10980 = vadd.f32 0.0, %v10979
      %v10981 = vpop.f32.mrf.mxu0
      %v10982 = vadd.f32 0.0, %v10981
      %10983 = vmatmul.bf16.gmra.mxu0 %v10905
      %v10984 = vpop.f32.mrf.mxu0
      %v10985 = vadd.f32 0.0, %v10984
      %v10986 = vpop.f32.mrf.mxu0
      %v10987 = vadd.f32 0.0, %v10986
      %10988 = vmatmul.bf16.gmra.mxu0 %v10908
      %v10989 = vpop.f32.mrf.mxu0
      %v10990 = vadd.f32 0.0, %v10989
      %v10991 = vpop.f32.mrf.mxu0
      %v10992 = vadd.f32 0.0, %v10991
      %10993 = vmatmul.bf16.gmra.mxu0 %v10911
      %v10994 = vpop.f32.mrf.mxu0
      %v10995 = vadd.f32 0.0, %v10994
      %v10996 = vpop.f32.mrf.mxu0
      %v10997 = vadd.f32 0.0, %v10996
      %10998 = vmatmul.bf16.gmra.mxu0 %v10914
      %v10999 = vpop.f32.mrf.mxu0
      %v11000 = vadd.f32 0.0, %v10999
      %v11001 = vpop.f32.mrf.mxu0
      %v11002 = vadd.f32 0.0, %v11001
      %11003 = vmatmul.bf16.gmra.mxu0 %v10917
      %v11004 = vpop.f32.mrf.mxu0
      %v11005 = vadd.f32 0.0, %v11004
      %v11006 = vpop.f32.mrf.mxu0
      %v11007 = vadd.f32 0.0, %v11006
      %11008 = vmatmul.bf16.gmra.mxu0 %v10920
      %v11009 = vpop.f32.mrf.mxu0
      %v11010 = vadd.f32 0.0, %v11009
      %v11011 = vpop.f32.mrf.mxu0
      %v11012 = vadd.f32 0.0, %v11011
      %11013 = vmatmul.bf16.gmra.mxu0 %v10923
      %v11014 = vpop.f32.mrf.mxu0
      %v11015 = vadd.f32 0.0, %v11014
      %v11016 = vpop.f32.mrf.mxu0
      %v11017 = vadd.f32 0.0, %v11016
      %11018 = vmatmul.bf16.gmra.mxu0 %v10926
      %v11019 = vpop.f32.mrf.mxu0
      %v11020 = vadd.f32 0.0, %v11019
      %v11021 = vpop.f32.mrf.mxu0
      %v11022 = vadd.f32 0.0, %v11021
      %11023 = vmatmul.bf16.gmra.mxu0 %v10929
      %v11024 = vpop.f32.mrf.mxu0
      %v11025 = vadd.f32 0.0, %v11024
      %v11026 = vpop.f32.mrf.mxu0
      %v11027 = vadd.f32 0.0, %v11026
      %11028 = vmatmul.bf16.gmra.mxu0 %v10932
      %v11029 = vpop.f32.mrf.mxu0
      %v11030 = vadd.f32 0.0, %v11029
      %v11031 = vpop.f32.mrf.mxu0
      %v11032 = vadd.f32 0.0, %v11031
      %11033 = vmatmul.bf16.gmra.mxu0 %v10935
      %v11034 = vpop.f32.mrf.mxu0
      %v11035 = vadd.f32 0.0, %v11034
      %v11036 = vpop.f32.mrf.mxu0
      %v11037 = vadd.f32 0.0, %v11036
      %11038 = vdwg.mxu0
      %v11039 = vadd.f32 %v10804, %v10950
      %v11040 = vadd.f32 %v10805, %v10952
      %v11041 = vadd.f32 %v10806, %v10955
      %v11042 = vadd.f32 %v10807, %v10957
      %v11043 = vadd.f32 %v10808, %v10960
      %v11044 = vadd.f32 %v10809, %v10962
      %v11045 = vadd.f32 %v10810, %v10965
      %v11046 = vadd.f32 %v10811, %v10967
      %v11047 = vadd.f32 %v10812, %v10970
      %v11048 = vadd.f32 %v10813, %v10972
      %v11049 = vadd.f32 %v10814, %v10975
      %v11050 = vadd.f32 %v10815, %v10977
      %v11051 = vadd.f32 %v10816, %v10980
      %v11052 = vadd.f32 %v10817, %v10982
      %v11053 = vadd.f32 %v10818, %v10985
      %v11054 = vadd.f32 %v10819, %v10987
      %v11055 = vadd.f32 %v10820, %v10990
      %v11056 = vadd.f32 %v10821, %v10992
      %v11057 = vadd.f32 %v10822, %v10995
      %v11058 = vadd.f32 %v10823, %v10997
      %v11059 = vadd.f32 %v10824, %v11000
      %v11060 = vadd.f32 %v10825, %v11002
      %v11061 = vadd.f32 %v10826, %v11005
      %v11062 = vadd.f32 %v10827, %v11007
      %v11063 = vadd.f32 %v10828, %v11010
      %v11064 = vadd.f32 %v10829, %v11012
      %v11065 = vadd.f32 %v10830, %v11015
      %v11066 = vadd.f32 %v10831, %v11017
      %v11067 = vadd.f32 %v10832, %v11020
      %v11068 = vadd.f32 %v10833, %v11022
      %v11069 = vadd.f32 %v10834, %v11025
      %v11070 = vadd.f32 %v10835, %v11027
      %v11071 = vadd.f32 %v10836, %v11030
      %v11072 = vadd.f32 %v10837, %v11032
      %v11073 = vadd.f32 %v10838, %v11035
      %v11074 = vadd.f32 %v10839, %v11037
      %v11111 = vrot.slane %v11039, 2
      %v11112 = vrot.slane %v11039, 4
      %v11113 = vrot.slane %v11039, 6
      %v11114 = vrot.slane %v11040, 2
      %v11115 = vrot.slane %v11040, 4
      %v11116 = vrot.slane %v11040, 6
      %v11117 = vrot.slane %v11041, 2
      %v11118 = vrot.slane %v11041, 4
      %v11119 = vrot.slane %v11041, 6
      %v11120 = vrot.slane %v11042, 2
      %v11121 = vrot.slane %v11042, 4
      %v11122 = vrot.slane %v11042, 6
      %v11123 = vrot.slane %v11043, 4
      %v11124 = vrot.slane %v11043, 6
      %v11125 = vrot.slane %v11044, 2
      %v11126 = vrot.slane %v11044, 4
      %v11127 = vrot.slane %v11044, 6
      %v11128 = vrot.slane %v11045, 2
      %v11129 = vrot.slane %v11045, 6
      %v11130 = vrot.slane %v11046, 2
      %v11131 = vrot.slane %v11046, 4
      %v11132 = vrot.slane %v11046, 6
      %v11133 = vrot.slane %v11047, 2
      %v11134 = vrot.slane %v11047, 4
      %v11135 = vrot.slane %v11048, 2
      %v11136 = vrot.slane %v11048, 4
      %v11137 = vrot.slane %v11048, 6
      %v11138 = vrot.slane %v11049, 2
      %v11139 = vrot.slane %v11049, 4
      %v11140 = vrot.slane %v11049, 6
      %v11141 = vrot.slane %v11050, 2
      %v11142 = vrot.slane %v11050, 4
      %v11143 = vrot.slane %v11050, 6
      %v11144 = vrot.slane %v11051, 2
      %v11145 = vrot.slane %v11051, 4
      %v11146 = vrot.slane %v11051, 6
      %v11147 = vrot.slane %v11052, 4
      %v11148 = vrot.slane %v11052, 6
      %v11149 = vrot.slane %v11053, 2
      %v11150 = vrot.slane %v11053, 4
      %v11151 = vrot.slane %v11053, 6
      %v11152 = vrot.slane %v11054, 2
      %v11153 = vrot.slane %v11054, 6
      %v11154 = vrot.slane %v11055, 2
      %v11155 = vrot.slane %v11055, 4
      %v11156 = vrot.slane %v11055, 6
      %v11157 = vrot.slane %v11056, 2
      %v11158 = vrot.slane %v11056, 4
      %v11159 = vrot.slane %v11057, 2
      %v11160 = vrot.slane %v11057, 4
      %v11161 = vrot.slane %v11057, 6
      %v11162 = vrot.slane %v11058, 2
      %v11163 = vrot.slane %v11058, 4
      %v11164 = vrot.slane %v11058, 6
      %v11165 = vrot.slane %v11059, 2
      %v11166 = vrot.slane %v11059, 4
      %v11167 = vrot.slane %v11059, 6
      %v11168 = vrot.slane %v11060, 2
      %v11169 = vrot.slane %v11060, 4
      %v11170 = vrot.slane %v11060, 6
      %v11171 = vrot.slane %v11061, 4
      %v11172 = vrot.slane %v11061, 6
      %v11173 = vrot.slane %v11062, 2
      %v11174 = vrot.slane %v11062, 4
      %v11175 = vrot.slane %v11062, 6
      %v11176 = vrot.slane %v11063, 2
      %v11177 = vrot.slane %v11063, 6
      %v11178 = vrot.slane %v11064, 2
      %v11179 = vrot.slane %v11064, 4
      %v11180 = vrot.slane %v11064, 6
      %v11181 = vrot.slane %v11065, 2
      %v11182 = vrot.slane %v11065, 4
      %v11183 = vrot.slane %v11066, 2
      %v11184 = vrot.slane %v11066, 4
      %v11185 = vrot.slane %v11066, 6
      %v11186 = vrot.slane %v11067, 2
      %v11187 = vrot.slane %v11067, 4
      %v11188 = vrot.slane %v11067, 6
      %v11189 = vrot.slane %v11068, 2
      %v11190 = vrot.slane %v11068, 4
      %v11191 = vrot.slane %v11068, 6
      %v11192 = vrot.slane %v11069, 2
      %v11193 = vrot.slane %v11069, 4
      %v11194 = vrot.slane %v11069, 6
      %v11195 = vrot.slane %v11070, 4
      %v11196 = vrot.slane %v11070, 6
      %v11197 = vrot.slane %v11071, 2
      %v11198 = vrot.slane %v11071, 4
      %v11199 = vrot.slane %v11071, 6
      %v11200 = vrot.slane %v11072, 2
      %v11201 = vrot.slane %v11072, 6
      %v11202 = vrot.slane %v11073, 2
      %v11203 = vrot.slane %v11073, 4
      %v11204 = vrot.slane %v11073, 6
      %v11205 = vrot.slane %v11074, 2
      %v11206 = vrot.slane %v11074, 4
      %vm11303 = vcmask 58368
      %v11304 = vsel %vm11303, %v11039, -inf
      %v11305 = vrot.slane %v11304, 4
      %v11306 = vmax.f32 %v11304, %v11305
      %v11307 = vrot.slane %v11306, 2
      %v11308 = vmax.f32 %v11306, %v11307
      %v11309 = vrot.slane %v11308, 1
      %v11310 = vmax.f32 %v11308, %v11309
      %v11311 = vsel %vm11303, %v11111, -inf
      %v11312 = vrot.slane %v11311, 4
      %v11313 = vmax.f32 %v11311, %v11312
      %v11314 = vrot.slane %v11313, 2
      %v11315 = vmax.f32 %v11313, %v11314
      %v11316 = vrot.slane %v11315, 1
      %v11317 = vmax.f32 %v11315, %v11316
      %v11318 = vsel %vm11303, %v11112, -inf
      %v11319 = vrot.slane %v11318, 4
      %v11320 = vmax.f32 %v11318, %v11319
      %v11321 = vrot.slane %v11320, 2
      %v11322 = vmax.f32 %v11320, %v11321
      %v11323 = vrot.slane %v11322, 1
      %v11324 = vmax.f32 %v11322, %v11323
      %v11325 = vsel %vm11303, %v11113, -inf
      %v11326 = vrot.slane %v11325, 4
      %v11327 = vmax.f32 %v11325, %v11326
      %v11328 = vrot.slane %v11327, 2
      %v11329 = vmax.f32 %v11327, %v11328
      %v11330 = vrot.slane %v11329, 1
      %v11331 = vmax.f32 %v11329, %v11330
      %v11332 = vsel %vm11303, %v11040, -inf
      %v11333 = vrot.slane %v11332, 4
      %v11334 = vmax.f32 %v11332, %v11333
      %v11335 = vrot.slane %v11334, 2
      %v11336 = vmax.f32 %v11334, %v11335
      %v11337 = vrot.slane %v11336, 1
      %v11338 = vmax.f32 %v11336, %v11337
      %v11339 = vsel %vm11303, %v11114, -inf
      %v11340 = vrot.slane %v11339, 4
      %v11341 = vmax.f32 %v11339, %v11340
      %v11342 = vrot.slane %v11341, 2
      %v11343 = vmax.f32 %v11341, %v11342
      %v11344 = vrot.slane %v11343, 1
      %v11345 = vmax.f32 %v11343, %v11344
      %v11346 = vsel %vm11303, %v11115, -inf
      %v11347 = vrot.slane %v11346, 4
      %v11348 = vmax.f32 %v11346, %v11347
      %v11349 = vrot.slane %v11348, 2
      %v11350 = vmax.f32 %v11348, %v11349
      %v11351 = vrot.slane %v11350, 1
      %v11352 = vmax.f32 %v11350, %v11351
      %v11353 = vsel %vm11303, %v11116, -inf
      %v11354 = vrot.slane %v11353, 4
      %v11355 = vmax.f32 %v11353, %v11354
      %v11356 = vrot.slane %v11355, 2
      %v11357 = vmax.f32 %v11355, %v11356
      %v11358 = vrot.slane %v11357, 1
      %v11359 = vmax.f32 %v11357, %v11358
      %v11360 = vsel %vm11303, %v11117, -inf
      %v11361 = vrot.slane %v11360, 4
      %v11362 = vmax.f32 %v11360, %v11361
      %v11363 = vrot.slane %v11362, 2
      %v11364 = vmax.f32 %v11362, %v11363
      %v11365 = vrot.slane %v11364, 1
      %v11366 = vmax.f32 %v11364, %v11365
      %v11367 = vsel %vm11303, %v11118, -inf
      %v11368 = vrot.slane %v11367, 4
      %v11369 = vmax.f32 %v11367, %v11368
      %v11370 = vrot.slane %v11369, 2
      %v11371 = vmax.f32 %v11369, %v11370
      %v11372 = vrot.slane %v11371, 1
      %v11373 = vmax.f32 %v11371, %v11372
      %v11374 = vsel %vm11303, %v11119, -inf
      %v11375 = vrot.slane %v11374, 4
      %v11376 = vmax.f32 %v11374, %v11375
      %v11377 = vrot.slane %v11376, 2
      %v11378 = vmax.f32 %v11376, %v11377
      %v11379 = vrot.slane %v11378, 1
      %v11380 = vmax.f32 %v11378, %v11379
      %v11381 = vsel %vm11303, %v11042, -inf
      %v11382 = vrot.slane %v11381, 4
      %v11383 = vmax.f32 %v11381, %v11382
      %v11384 = vrot.slane %v11383, 2
      %v11385 = vmax.f32 %v11383, %v11384
      %v11386 = vrot.slane %v11385, 1
      %v11387 = vmax.f32 %v11385, %v11386
      %v11388 = vsel %vm11303, %v11120, -inf
      %v11389 = vrot.slane %v11388, 4
      %v11390 = vmax.f32 %v11388, %v11389
      %v11391 = vrot.slane %v11390, 2
      %v11392 = vmax.f32 %v11390, %v11391
      %v11393 = vrot.slane %v11392, 1
      %v11394 = vmax.f32 %v11392, %v11393
      %v11395 = vsel %vm11303, %v11121, -inf
      %v11396 = vrot.slane %v11395, 4
      %v11397 = vmax.f32 %v11395, %v11396
      %v11398 = vrot.slane %v11397, 2
      %v11399 = vmax.f32 %v11397, %v11398
      %v11400 = vrot.slane %v11399, 1
      %v11401 = vmax.f32 %v11399, %v11400
      %v11402 = vsel %vm11303, %v11122, -inf
      %v11403 = vrot.slane %v11402, 4
      %v11404 = vmax.f32 %v11402, %v11403
      %v11405 = vrot.slane %v11404, 2
      %v11406 = vmax.f32 %v11404, %v11405
      %v11407 = vrot.slane %v11406, 1
      %v11408 = vmax.f32 %v11406, %v11407
      %v11409 = vsel %vm11303, %v11043, -inf
      %v11410 = vrot.slane %v11409, 4
      %v11411 = vmax.f32 %v11409, %v11410
      %v11412 = vrot.slane %v11411, 2
      %v11413 = vmax.f32 %v11411, %v11412
      %v11414 = vrot.slane %v11413, 1
      %v11415 = vmax.f32 %v11413, %v11414
      %v11416 = vsel %vm11303, %v11123, -inf
      %v11417 = vrot.slane %v11416, 4
      %v11418 = vmax.f32 %v11416, %v11417
      %v11419 = vrot.slane %v11418, 2
      %v11420 = vmax.f32 %v11418, %v11419
      %v11421 = vrot.slane %v11420, 1
      %v11422 = vmax.f32 %v11420, %v11421
      %v11423 = vsel %vm11303, %v11124, -inf
      %v11424 = vrot.slane %v11423, 4
      %v11425 = vmax.f32 %v11423, %v11424
      %v11426 = vrot.slane %v11425, 2
      %v11427 = vmax.f32 %v11425, %v11426
      %v11428 = vrot.slane %v11427, 1
      %v11429 = vmax.f32 %v11427, %v11428
      %v11430 = vsel %vm11303, %v11044, -inf
      %v11431 = vrot.slane %v11430, 4
      %v11432 = vmax.f32 %v11430, %v11431
      %v11433 = vrot.slane %v11432, 2
      %v11434 = vmax.f32 %v11432, %v11433
      %v11435 = vrot.slane %v11434, 1
      %v11436 = vmax.f32 %v11434, %v11435
      %v11437 = vsel %vm11303, %v11125, -inf
      %v11438 = vrot.slane %v11437, 4
      %v11439 = vmax.f32 %v11437, %v11438
      %v11440 = vrot.slane %v11439, 2
      %v11441 = vmax.f32 %v11439, %v11440
      %v11442 = vrot.slane %v11441, 1
      %v11443 = vmax.f32 %v11441, %v11442
      %v11444 = vsel %vm11303, %v11126, -inf
      %v11445 = vrot.slane %v11444, 4
      %v11446 = vmax.f32 %v11444, %v11445
      %v11447 = vrot.slane %v11446, 2
      %v11448 = vmax.f32 %v11446, %v11447
      %v11449 = vrot.slane %v11448, 1
      %v11450 = vmax.f32 %v11448, %v11449
      %v11451 = vsel %vm11303, %v11127, -inf
      %v11452 = vrot.slane %v11451, 4
      %v11453 = vmax.f32 %v11451, %v11452
      %v11454 = vrot.slane %v11453, 2
      %v11455 = vmax.f32 %v11453, %v11454
      %v11456 = vrot.slane %v11455, 1
      %v11457 = vmax.f32 %v11455, %v11456
      %v11458 = vsel %vm11303, %v11045, -inf
      %v11459 = vrot.slane %v11458, 4
      %v11460 = vmax.f32 %v11458, %v11459
      %v11461 = vrot.slane %v11460, 2
      %v11462 = vmax.f32 %v11460, %v11461
      %v11463 = vrot.slane %v11462, 1
      %v11464 = vmax.f32 %v11462, %v11463
      %v11465 = vsel %vm11303, %v11128, -inf
      %v11466 = vrot.slane %v11465, 4
      %v11467 = vmax.f32 %v11465, %v11466
      %v11468 = vrot.slane %v11467, 2
      %v11469 = vmax.f32 %v11467, %v11468
      %v11470 = vrot.slane %v11469, 1
      %v11471 = vmax.f32 %v11469, %v11470
      %v11472 = vsel %vm11303, %v11129, -inf
      %v11473 = vrot.slane %v11472, 4
      %v11474 = vmax.f32 %v11472, %v11473
      %v11475 = vrot.slane %v11474, 2
      %v11476 = vmax.f32 %v11474, %v11475
      %v11477 = vrot.slane %v11476, 1
      %v11478 = vmax.f32 %v11476, %v11477
      %v11479 = vsel %vm11303, %v11046, -inf
      %v11480 = vrot.slane %v11479, 4
      %v11481 = vmax.f32 %v11479, %v11480
      %v11482 = vrot.slane %v11481, 2
      %v11483 = vmax.f32 %v11481, %v11482
      %v11484 = vrot.slane %v11483, 1
      %v11485 = vmax.f32 %v11483, %v11484
      %v11486 = vsel %vm11303, %v11130, -inf
      %v11487 = vrot.slane %v11486, 4
      %v11488 = vmax.f32 %v11486, %v11487
      %v11489 = vrot.slane %v11488, 2
      %v11490 = vmax.f32 %v11488, %v11489
      %v11491 = vrot.slane %v11490, 1
      %v11492 = vmax.f32 %v11490, %v11491
      %v11493 = vsel %vm11303, %v11131, -inf
      %v11494 = vrot.slane %v11493, 4
      %v11495 = vmax.f32 %v11493, %v11494
      %v11496 = vrot.slane %v11495, 2
      %v11497 = vmax.f32 %v11495, %v11496
      %v11498 = vrot.slane %v11497, 1
      %v11499 = vmax.f32 %v11497, %v11498
      %v11500 = vsel %vm11303, %v11132, -inf
      %v11501 = vrot.slane %v11500, 4
      %v11502 = vmax.f32 %v11500, %v11501
      %v11503 = vrot.slane %v11502, 2
      %v11504 = vmax.f32 %v11502, %v11503
      %v11505 = vrot.slane %v11504, 1
      %v11506 = vmax.f32 %v11504, %v11505
      %v11507 = vsel %vm11303, %v11047, -inf
      %v11508 = vrot.slane %v11507, 4
      %v11509 = vmax.f32 %v11507, %v11508
      %v11510 = vrot.slane %v11509, 2
      %v11511 = vmax.f32 %v11509, %v11510
      %v11512 = vrot.slane %v11511, 1
      %v11513 = vmax.f32 %v11511, %v11512
      %v11514 = vsel %vm11303, %v11133, -inf
      %v11515 = vrot.slane %v11514, 4
      %v11516 = vmax.f32 %v11514, %v11515
      %v11517 = vrot.slane %v11516, 2
      %v11518 = vmax.f32 %v11516, %v11517
      %v11519 = vrot.slane %v11518, 1
      %v11520 = vmax.f32 %v11518, %v11519
      %v11521 = vsel %vm11303, %v11134, -inf
      %v11522 = vrot.slane %v11521, 4
      %v11523 = vmax.f32 %v11521, %v11522
      %v11524 = vrot.slane %v11523, 2
      %v11525 = vmax.f32 %v11523, %v11524
      %v11526 = vrot.slane %v11525, 1
      %v11527 = vmax.f32 %v11525, %v11526
      %v11528 = vsel %vm11303, %v11048, -inf
      %v11529 = vrot.slane %v11528, 4
      %v11530 = vmax.f32 %v11528, %v11529
      %v11531 = vrot.slane %v11530, 2
      %v11532 = vmax.f32 %v11530, %v11531
      %v11533 = vrot.slane %v11532, 1
      %v11534 = vmax.f32 %v11532, %v11533
      %v11535 = vsel %vm11303, %v11135, -inf
      %v11536 = vrot.slane %v11535, 4
      %v11537 = vmax.f32 %v11535, %v11536
      %v11538 = vrot.slane %v11537, 2
      %v11539 = vmax.f32 %v11537, %v11538
      %v11540 = vrot.slane %v11539, 1
      %v11541 = vmax.f32 %v11539, %v11540
      %v11542 = vsel %vm11303, %v11136, -inf
      %v11543 = vrot.slane %v11542, 4
      %v11544 = vmax.f32 %v11542, %v11543
      %v11545 = vrot.slane %v11544, 2
      %v11546 = vmax.f32 %v11544, %v11545
      %v11547 = vrot.slane %v11546, 1
      %v11548 = vmax.f32 %v11546, %v11547
      %v11549 = vsel %vm11303, %v11137, -inf
      %v11550 = vrot.slane %v11549, 4
      %v11551 = vmax.f32 %v11549, %v11550
      %v11552 = vrot.slane %v11551, 2
      %v11553 = vmax.f32 %v11551, %v11552
      %v11554 = vrot.slane %v11553, 1
      %v11555 = vmax.f32 %v11553, %v11554
      %v11556 = vsel %vm11303, %v11049, -inf
      %v11557 = vrot.slane %v11556, 4
      %v11558 = vmax.f32 %v11556, %v11557
      %v11559 = vrot.slane %v11558, 2
      %v11560 = vmax.f32 %v11558, %v11559
      %v11561 = vrot.slane %v11560, 1
      %v11562 = vmax.f32 %v11560, %v11561
      %v11563 = vsel %vm11303, %v11138, -inf
      %v11564 = vrot.slane %v11563, 4
      %v11565 = vmax.f32 %v11563, %v11564
      %v11566 = vrot.slane %v11565, 2
      %v11567 = vmax.f32 %v11565, %v11566
      %v11568 = vrot.slane %v11567, 1
      %v11569 = vmax.f32 %v11567, %v11568
      %v11570 = vsel %vm11303, %v11139, -inf
      %v11571 = vrot.slane %v11570, 4
      %v11572 = vmax.f32 %v11570, %v11571
      %v11573 = vrot.slane %v11572, 2
      %v11574 = vmax.f32 %v11572, %v11573
      %v11575 = vrot.slane %v11574, 1
      %v11576 = vmax.f32 %v11574, %v11575
      %v11577 = vsel %vm11303, %v11140, -inf
      %v11578 = vrot.slane %v11577, 4
      %v11579 = vmax.f32 %v11577, %v11578
      %v11580 = vrot.slane %v11579, 2
      %v11581 = vmax.f32 %v11579, %v11580
      %v11582 = vrot.slane %v11581, 1
      %v11583 = vmax.f32 %v11581, %v11582
      %v11584 = vsel %vm11303, %v11141, -inf
      %v11585 = vrot.slane %v11584, 4
      %v11586 = vmax.f32 %v11584, %v11585
      %v11587 = vrot.slane %v11586, 2
      %v11588 = vmax.f32 %v11586, %v11587
      %v11589 = vrot.slane %v11588, 1
      %v11590 = vmax.f32 %v11588, %v11589
      %v11591 = vsel %vm11303, %v11142, -inf
      %v11592 = vrot.slane %v11591, 4
      %v11593 = vmax.f32 %v11591, %v11592
      %v11594 = vrot.slane %v11593, 2
      %v11595 = vmax.f32 %v11593, %v11594
      %v11596 = vrot.slane %v11595, 1
      %v11597 = vmax.f32 %v11595, %v11596
      %v11598 = vsel %vm11303, %v11143, -inf
      %v11599 = vrot.slane %v11598, 4
      %v11600 = vmax.f32 %v11598, %v11599
      %v11601 = vrot.slane %v11600, 2
      %v11602 = vmax.f32 %v11600, %v11601
      %v11603 = vrot.slane %v11602, 1
      %v11604 = vmax.f32 %v11602, %v11603
      %v11605 = vsel %vm11303, %v11051, -inf
      %v11606 = vrot.slane %v11605, 4
      %v11607 = vmax.f32 %v11605, %v11606
      %v11608 = vrot.slane %v11607, 2
      %v11609 = vmax.f32 %v11607, %v11608
      %v11610 = vrot.slane %v11609, 1
      %v11611 = vmax.f32 %v11609, %v11610
      %v11612 = vsel %vm11303, %v11144, -inf
      %v11613 = vrot.slane %v11612, 4
      %v11614 = vmax.f32 %v11612, %v11613
      %v11615 = vrot.slane %v11614, 2
      %v11616 = vmax.f32 %v11614, %v11615
      %v11617 = vrot.slane %v11616, 1
      %v11618 = vmax.f32 %v11616, %v11617
      %v11619 = vsel %vm11303, %v11145, -inf
      %v11620 = vrot.slane %v11619, 4
      %v11621 = vmax.f32 %v11619, %v11620
      %v11622 = vrot.slane %v11621, 2
      %v11623 = vmax.f32 %v11621, %v11622
      %v11624 = vrot.slane %v11623, 1
      %v11625 = vmax.f32 %v11623, %v11624
      %v11626 = vsel %vm11303, %v11146, -inf
      %v11627 = vrot.slane %v11626, 4
      %v11628 = vmax.f32 %v11626, %v11627
      %v11629 = vrot.slane %v11628, 2
      %v11630 = vmax.f32 %v11628, %v11629
      %v11631 = vrot.slane %v11630, 1
      %v11632 = vmax.f32 %v11630, %v11631
      %v11633 = vsel %vm11303, %v11052, -inf
      %v11634 = vrot.slane %v11633, 4
      %v11635 = vmax.f32 %v11633, %v11634
      %v11636 = vrot.slane %v11635, 2
      %v11637 = vmax.f32 %v11635, %v11636
      %v11638 = vrot.slane %v11637, 1
      %v11639 = vmax.f32 %v11637, %v11638
      %v11640 = vsel %vm11303, %v11147, -inf
      %v11641 = vrot.slane %v11640, 4
      %v11642 = vmax.f32 %v11640, %v11641
      %v11643 = vrot.slane %v11642, 2
      %v11644 = vmax.f32 %v11642, %v11643
      %v11645 = vrot.slane %v11644, 1
      %v11646 = vmax.f32 %v11644, %v11645
      %v11647 = vsel %vm11303, %v11148, -inf
      %v11648 = vrot.slane %v11647, 4
      %v11649 = vmax.f32 %v11647, %v11648
      %v11650 = vrot.slane %v11649, 2
      %v11651 = vmax.f32 %v11649, %v11650
      %v11652 = vrot.slane %v11651, 1
      %v11653 = vmax.f32 %v11651, %v11652
      %v11654 = vsel %vm11303, %v11053, -inf
      %v11655 = vrot.slane %v11654, 4
      %v11656 = vmax.f32 %v11654, %v11655
      %v11657 = vrot.slane %v11656, 2
      %v11658 = vmax.f32 %v11656, %v11657
      %v11659 = vrot.slane %v11658, 1
      %v11660 = vmax.f32 %v11658, %v11659
      %v11661 = vsel %vm11303, %v11149, -inf
      %v11662 = vrot.slane %v11661, 4
      %v11663 = vmax.f32 %v11661, %v11662
      %v11664 = vrot.slane %v11663, 2
      %v11665 = vmax.f32 %v11663, %v11664
      %v11666 = vrot.slane %v11665, 1
      %v11667 = vmax.f32 %v11665, %v11666
      %v11668 = vsel %vm11303, %v11150, -inf
      %v11669 = vrot.slane %v11668, 4
      %v11670 = vmax.f32 %v11668, %v11669
      %v11671 = vrot.slane %v11670, 2
      %v11672 = vmax.f32 %v11670, %v11671
      %v11673 = vrot.slane %v11672, 1
      %v11674 = vmax.f32 %v11672, %v11673
      %v11675 = vsel %vm11303, %v11151, -inf
      %v11676 = vrot.slane %v11675, 4
      %v11677 = vmax.f32 %v11675, %v11676
      %v11678 = vrot.slane %v11677, 2
      %v11679 = vmax.f32 %v11677, %v11678
      %v11680 = vrot.slane %v11679, 1
      %v11681 = vmax.f32 %v11679, %v11680
      %v11682 = vsel %vm11303, %v11054, -inf
      %v11683 = vrot.slane %v11682, 4
      %v11684 = vmax.f32 %v11682, %v11683
      %v11685 = vrot.slane %v11684, 2
      %v11686 = vmax.f32 %v11684, %v11685
      %v11687 = vrot.slane %v11686, 1
      %v11688 = vmax.f32 %v11686, %v11687
      %v11689 = vsel %vm11303, %v11152, -inf
      %v11690 = vrot.slane %v11689, 4
      %v11691 = vmax.f32 %v11689, %v11690
      %v11692 = vrot.slane %v11691, 2
      %v11693 = vmax.f32 %v11691, %v11692
      %v11694 = vrot.slane %v11693, 1
      %v11695 = vmax.f32 %v11693, %v11694
      %v11696 = vsel %vm11303, %v11153, -inf
      %v11697 = vrot.slane %v11696, 4
      %v11698 = vmax.f32 %v11696, %v11697
      %v11699 = vrot.slane %v11698, 2
      %v11700 = vmax.f32 %v11698, %v11699
      %v11701 = vrot.slane %v11700, 1
      %v11702 = vmax.f32 %v11700, %v11701
      %v11703 = vsel %vm11303, %v11055, -inf
      %v11704 = vrot.slane %v11703, 4
      %v11705 = vmax.f32 %v11703, %v11704
      %v11706 = vrot.slane %v11705, 2
      %v11707 = vmax.f32 %v11705, %v11706
      %v11708 = vrot.slane %v11707, 1
      %v11709 = vmax.f32 %v11707, %v11708
      %v11710 = vsel %vm11303, %v11154, -inf
      %v11711 = vrot.slane %v11710, 4
      %v11712 = vmax.f32 %v11710, %v11711
      %v11713 = vrot.slane %v11712, 2
      %v11714 = vmax.f32 %v11712, %v11713
      %v11715 = vrot.slane %v11714, 1
      %v11716 = vmax.f32 %v11714, %v11715
      %v11717 = vsel %vm11303, %v11155, -inf
      %v11718 = vrot.slane %v11717, 4
      %v11719 = vmax.f32 %v11717, %v11718
      %v11720 = vrot.slane %v11719, 2
      %v11721 = vmax.f32 %v11719, %v11720
      %v11722 = vrot.slane %v11721, 1
      %v11723 = vmax.f32 %v11721, %v11722
      %v11724 = vsel %vm11303, %v11156, -inf
      %v11725 = vrot.slane %v11724, 4
      %v11726 = vmax.f32 %v11724, %v11725
      %v11727 = vrot.slane %v11726, 2
      %v11728 = vmax.f32 %v11726, %v11727
      %v11729 = vrot.slane %v11728, 1
      %v11730 = vmax.f32 %v11728, %v11729
      %v11731 = vsel %vm11303, %v11056, -inf
      %v11732 = vrot.slane %v11731, 4
      %v11733 = vmax.f32 %v11731, %v11732
      %v11734 = vrot.slane %v11733, 2
      %v11735 = vmax.f32 %v11733, %v11734
      %v11736 = vrot.slane %v11735, 1
      %v11737 = vmax.f32 %v11735, %v11736
      %v11738 = vsel %vm11303, %v11157, -inf
      %v11739 = vrot.slane %v11738, 4
      %v11740 = vmax.f32 %v11738, %v11739
      %v11741 = vrot.slane %v11740, 2
      %v11742 = vmax.f32 %v11740, %v11741
      %v11743 = vrot.slane %v11742, 1
      %v11744 = vmax.f32 %v11742, %v11743
      %v11745 = vsel %vm11303, %v11158, -inf
      %v11746 = vrot.slane %v11745, 4
      %v11747 = vmax.f32 %v11745, %v11746
      %v11748 = vrot.slane %v11747, 2
      %v11749 = vmax.f32 %v11747, %v11748
      %v11750 = vrot.slane %v11749, 1
      %v11751 = vmax.f32 %v11749, %v11750
      %v11752 = vsel %vm11303, %v11057, -inf
      %v11753 = vrot.slane %v11752, 4
      %v11754 = vmax.f32 %v11752, %v11753
      %v11755 = vrot.slane %v11754, 2
      %v11756 = vmax.f32 %v11754, %v11755
      %v11757 = vrot.slane %v11756, 1
      %v11758 = vmax.f32 %v11756, %v11757
      %v11759 = vsel %vm11303, %v11159, -inf
      %v11760 = vrot.slane %v11759, 4
      %v11761 = vmax.f32 %v11759, %v11760
      %v11762 = vrot.slane %v11761, 2
      %v11763 = vmax.f32 %v11761, %v11762
      %v11764 = vrot.slane %v11763, 1
      %v11765 = vmax.f32 %v11763, %v11764
      %v11766 = vsel %vm11303, %v11160, -inf
      %v11767 = vrot.slane %v11766, 4
      %v11768 = vmax.f32 %v11766, %v11767
      %v11769 = vrot.slane %v11768, 2
      %v11770 = vmax.f32 %v11768, %v11769
      %v11771 = vrot.slane %v11770, 1
      %v11772 = vmax.f32 %v11770, %v11771
      %v11773 = vsel %vm11303, %v11161, -inf
      %v11774 = vrot.slane %v11773, 4
      %v11775 = vmax.f32 %v11773, %v11774
      %v11776 = vrot.slane %v11775, 2
      %v11777 = vmax.f32 %v11775, %v11776
      %v11778 = vrot.slane %v11777, 1
      %v11779 = vmax.f32 %v11777, %v11778
      %v11780 = vsel %vm11303, %v11058, -inf
      %v11781 = vrot.slane %v11780, 4
      %v11782 = vmax.f32 %v11780, %v11781
      %v11783 = vrot.slane %v11782, 2
      %v11784 = vmax.f32 %v11782, %v11783
      %v11785 = vrot.slane %v11784, 1
      %v11786 = vmax.f32 %v11784, %v11785
      %v11787 = vsel %vm11303, %v11162, -inf
      %v11788 = vrot.slane %v11787, 4
      %v11789 = vmax.f32 %v11787, %v11788
      %v11790 = vrot.slane %v11789, 2
      %v11791 = vmax.f32 %v11789, %v11790
      %v11792 = vrot.slane %v11791, 1
      %v11793 = vmax.f32 %v11791, %v11792
      %v11794 = vsel %vm11303, %v11163, -inf
      %v11795 = vrot.slane %v11794, 4
      %v11796 = vmax.f32 %v11794, %v11795
      %v11797 = vrot.slane %v11796, 2
      %v11798 = vmax.f32 %v11796, %v11797
      %v11799 = vrot.slane %v11798, 1
      %v11800 = vmax.f32 %v11798, %v11799
      %v11801 = vsel %vm11303, %v11164, -inf
      %v11802 = vrot.slane %v11801, 4
      %v11803 = vmax.f32 %v11801, %v11802
      %v11804 = vrot.slane %v11803, 2
      %v11805 = vmax.f32 %v11803, %v11804
      %v11806 = vrot.slane %v11805, 1
      %v11807 = vmax.f32 %v11805, %v11806
      %v11808 = vsel %vm11303, %v11165, -inf
      %v11809 = vrot.slane %v11808, 4
      %v11810 = vmax.f32 %v11808, %v11809
      %v11811 = vrot.slane %v11810, 2
      %v11812 = vmax.f32 %v11810, %v11811
      %v11813 = vrot.slane %v11812, 1
      %v11814 = vmax.f32 %v11812, %v11813
      %v11815 = vsel %vm11303, %v11166, -inf
      %v11816 = vrot.slane %v11815, 4
      %v11817 = vmax.f32 %v11815, %v11816
      %v11818 = vrot.slane %v11817, 2
      %v11819 = vmax.f32 %v11817, %v11818
      %v11820 = vrot.slane %v11819, 1
      %v11821 = vmax.f32 %v11819, %v11820
      %v11822 = vsel %vm11303, %v11167, -inf
      %v11823 = vrot.slane %v11822, 4
      %v11824 = vmax.f32 %v11822, %v11823
      %v11825 = vrot.slane %v11824, 2
      %v11826 = vmax.f32 %v11824, %v11825
      %v11827 = vrot.slane %v11826, 1
      %v11828 = vmax.f32 %v11826, %v11827
      %v11829 = vsel %vm11303, %v11060, -inf
      %v11830 = vrot.slane %v11829, 4
      %v11831 = vmax.f32 %v11829, %v11830
      %v11832 = vrot.slane %v11831, 2
      %v11833 = vmax.f32 %v11831, %v11832
      %v11834 = vrot.slane %v11833, 1
      %v11835 = vmax.f32 %v11833, %v11834
      %v11836 = vsel %vm11303, %v11168, -inf
      %v11837 = vrot.slane %v11836, 4
      %v11838 = vmax.f32 %v11836, %v11837
      %v11839 = vrot.slane %v11838, 2
      %v11840 = vmax.f32 %v11838, %v11839
      %v11841 = vrot.slane %v11840, 1
      %v11842 = vmax.f32 %v11840, %v11841
      %v11843 = vsel %vm11303, %v11169, -inf
      %v11844 = vrot.slane %v11843, 4
      %v11845 = vmax.f32 %v11843, %v11844
      %v11846 = vrot.slane %v11845, 2
      %v11847 = vmax.f32 %v11845, %v11846
      %v11848 = vrot.slane %v11847, 1
      %v11849 = vmax.f32 %v11847, %v11848
      %v11850 = vsel %vm11303, %v11170, -inf
      %v11851 = vrot.slane %v11850, 4
      %v11852 = vmax.f32 %v11850, %v11851
      %v11853 = vrot.slane %v11852, 2
      %v11854 = vmax.f32 %v11852, %v11853
      %v11855 = vrot.slane %v11854, 1
      %v11856 = vmax.f32 %v11854, %v11855
      %v11857 = vsel %vm11303, %v11061, -inf
      %v11858 = vrot.slane %v11857, 4
      %v11859 = vmax.f32 %v11857, %v11858
      %v11860 = vrot.slane %v11859, 2
      %v11861 = vmax.f32 %v11859, %v11860
      %v11862 = vrot.slane %v11861, 1
      %v11863 = vmax.f32 %v11861, %v11862
      %v11864 = vsel %vm11303, %v11171, -inf
      %v11865 = vrot.slane %v11864, 4
      %v11866 = vmax.f32 %v11864, %v11865
      %v11867 = vrot.slane %v11866, 2
      %v11868 = vmax.f32 %v11866, %v11867
      %v11869 = vrot.slane %v11868, 1
      %v11870 = vmax.f32 %v11868, %v11869
      %v11871 = vsel %vm11303, %v11172, -inf
      %v11872 = vrot.slane %v11871, 4
      %v11873 = vmax.f32 %v11871, %v11872
      %v11874 = vrot.slane %v11873, 2
      %v11875 = vmax.f32 %v11873, %v11874
      %v11876 = vrot.slane %v11875, 1
      %v11877 = vmax.f32 %v11875, %v11876
      %v11878 = vsel %vm11303, %v11062, -inf
      %v11879 = vrot.slane %v11878, 4
      %v11880 = vmax.f32 %v11878, %v11879
      %v11881 = vrot.slane %v11880, 2
      %v11882 = vmax.f32 %v11880, %v11881
      %v11883 = vrot.slane %v11882, 1
      %v11884 = vmax.f32 %v11882, %v11883
      %v11885 = vsel %vm11303, %v11173, -inf
      %v11886 = vrot.slane %v11885, 4
      %v11887 = vmax.f32 %v11885, %v11886
      %v11888 = vrot.slane %v11887, 2
      %v11889 = vmax.f32 %v11887, %v11888
      %v11890 = vrot.slane %v11889, 1
      %v11891 = vmax.f32 %v11889, %v11890
      %v11892 = vsel %vm11303, %v11174, -inf
      %v11893 = vrot.slane %v11892, 4
      %v11894 = vmax.f32 %v11892, %v11893
      %v11895 = vrot.slane %v11894, 2
      %v11896 = vmax.f32 %v11894, %v11895
      %v11897 = vrot.slane %v11896, 1
      %v11898 = vmax.f32 %v11896, %v11897
      %v11899 = vsel %vm11303, %v11175, -inf
      %v11900 = vrot.slane %v11899, 4
      %v11901 = vmax.f32 %v11899, %v11900
      %v11902 = vrot.slane %v11901, 2
      %v11903 = vmax.f32 %v11901, %v11902
      %v11904 = vrot.slane %v11903, 1
      %v11905 = vmax.f32 %v11903, %v11904
      %v11906 = vsel %vm11303, %v11063, -inf
      %v11907 = vrot.slane %v11906, 4
      %v11908 = vmax.f32 %v11906, %v11907
      %v11909 = vrot.slane %v11908, 2
      %v11910 = vmax.f32 %v11908, %v11909
      %v11911 = vrot.slane %v11910, 1
      %v11912 = vmax.f32 %v11910, %v11911
      %v11913 = vsel %vm11303, %v11176, -inf
      %v11914 = vrot.slane %v11913, 4
      %v11915 = vmax.f32 %v11913, %v11914
      %v11916 = vrot.slane %v11915, 2
      %v11917 = vmax.f32 %v11915, %v11916
      %v11918 = vrot.slane %v11917, 1
      %v11919 = vmax.f32 %v11917, %v11918
      %v11920 = vsel %vm11303, %v11177, -inf
      %v11921 = vrot.slane %v11920, 4
      %v11922 = vmax.f32 %v11920, %v11921
      %v11923 = vrot.slane %v11922, 2
      %v11924 = vmax.f32 %v11922, %v11923
      %v11925 = vrot.slane %v11924, 1
      %v11926 = vmax.f32 %v11924, %v11925
      %v11927 = vsel %vm11303, %v11064, -inf
      %v11928 = vrot.slane %v11927, 4
      %v11929 = vmax.f32 %v11927, %v11928
      %v11930 = vrot.slane %v11929, 2
      %v11931 = vmax.f32 %v11929, %v11930
      %v11932 = vrot.slane %v11931, 1
      %v11933 = vmax.f32 %v11931, %v11932
      %v11934 = vsel %vm11303, %v11178, -inf
      %v11935 = vrot.slane %v11934, 4
      %v11936 = vmax.f32 %v11934, %v11935
      %v11937 = vrot.slane %v11936, 2
      %v11938 = vmax.f32 %v11936, %v11937
      %v11939 = vrot.slane %v11938, 1
      %v11940 = vmax.f32 %v11938, %v11939
      %v11941 = vsel %vm11303, %v11179, -inf
      %v11942 = vrot.slane %v11941, 4
      %v11943 = vmax.f32 %v11941, %v11942
      %v11944 = vrot.slane %v11943, 2
      %v11945 = vmax.f32 %v11943, %v11944
      %v11946 = vrot.slane %v11945, 1
      %v11947 = vmax.f32 %v11945, %v11946
      %v11948 = vsel %vm11303, %v11180, -inf
      %v11949 = vrot.slane %v11948, 4
      %v11950 = vmax.f32 %v11948, %v11949
      %v11951 = vrot.slane %v11950, 2
      %v11952 = vmax.f32 %v11950, %v11951
      %v11953 = vrot.slane %v11952, 1
      %v11954 = vmax.f32 %v11952, %v11953
      %v11955 = vsel %vm11303, %v11065, -inf
      %v11956 = vrot.slane %v11955, 4
      %v11957 = vmax.f32 %v11955, %v11956
      %v11958 = vrot.slane %v11957, 2
      %v11959 = vmax.f32 %v11957, %v11958
      %v11960 = vrot.slane %v11959, 1
      %v11961 = vmax.f32 %v11959, %v11960
      %v11962 = vsel %vm11303, %v11181, -inf
      %v11963 = vrot.slane %v11962, 4
      %v11964 = vmax.f32 %v11962, %v11963
      %v11965 = vrot.slane %v11964, 2
      %v11966 = vmax.f32 %v11964, %v11965
      %v11967 = vrot.slane %v11966, 1
      %v11968 = vmax.f32 %v11966, %v11967
      %v11969 = vsel %vm11303, %v11182, -inf
      %v11970 = vrot.slane %v11969, 4
      %v11971 = vmax.f32 %v11969, %v11970
      %v11972 = vrot.slane %v11971, 2
      %v11973 = vmax.f32 %v11971, %v11972
      %v11974 = vrot.slane %v11973, 1
      %v11975 = vmax.f32 %v11973, %v11974
      %v11976 = vsel %vm11303, %v11066, -inf
      %v11977 = vrot.slane %v11976, 4
      %v11978 = vmax.f32 %v11976, %v11977
      %v11979 = vrot.slane %v11978, 2
      %v11980 = vmax.f32 %v11978, %v11979
      %v11981 = vrot.slane %v11980, 1
      %v11982 = vmax.f32 %v11980, %v11981
      %v11983 = vsel %vm11303, %v11183, -inf
      %v11984 = vrot.slane %v11983, 4
      %v11985 = vmax.f32 %v11983, %v11984
      %v11986 = vrot.slane %v11985, 2
      %v11987 = vmax.f32 %v11985, %v11986
      %v11988 = vrot.slane %v11987, 1
      %v11989 = vmax.f32 %v11987, %v11988
      %v11990 = vsel %vm11303, %v11184, -inf
      %v11991 = vrot.slane %v11990, 4
      %v11992 = vmax.f32 %v11990, %v11991
      %v11993 = vrot.slane %v11992, 2
      %v11994 = vmax.f32 %v11992, %v11993
      %v11995 = vrot.slane %v11994, 1
      %v11996 = vmax.f32 %v11994, %v11995
      %v11997 = vsel %vm11303, %v11185, -inf
      %v11998 = vrot.slane %v11997, 4
      %v11999 = vmax.f32 %v11997, %v11998
      %v12000 = vrot.slane %v11999, 2
      %v12001 = vmax.f32 %v11999, %v12000
      %v12002 = vrot.slane %v12001, 1
      %v12003 = vmax.f32 %v12001, %v12002
      %v12004 = vsel %vm11303, %v11067, -inf
      %v12005 = vrot.slane %v12004, 4
      %v12006 = vmax.f32 %v12004, %v12005
      %v12007 = vrot.slane %v12006, 2
      %v12008 = vmax.f32 %v12006, %v12007
      %v12009 = vrot.slane %v12008, 1
      %v12010 = vmax.f32 %v12008, %v12009
      %v12011 = vsel %vm11303, %v11186, -inf
      %v12012 = vrot.slane %v12011, 4
      %v12013 = vmax.f32 %v12011, %v12012
      %v12014 = vrot.slane %v12013, 2
      %v12015 = vmax.f32 %v12013, %v12014
      %v12016 = vrot.slane %v12015, 1
      %v12017 = vmax.f32 %v12015, %v12016
      %v12018 = vsel %vm11303, %v11187, -inf
      %v12019 = vrot.slane %v12018, 4
      %v12020 = vmax.f32 %v12018, %v12019
      %v12021 = vrot.slane %v12020, 2
      %v12022 = vmax.f32 %v12020, %v12021
      %v12023 = vrot.slane %v12022, 1
      %v12024 = vmax.f32 %v12022, %v12023
      %v12025 = vsel %vm11303, %v11188, -inf
      %v12026 = vrot.slane %v12025, 4
      %v12027 = vmax.f32 %v12025, %v12026
      %v12028 = vrot.slane %v12027, 2
      %v12029 = vmax.f32 %v12027, %v12028
      %v12030 = vrot.slane %v12029, 1
      %v12031 = vmax.f32 %v12029, %v12030
      %v12032 = vsel %vm11303, %v11189, -inf
      %v12033 = vrot.slane %v12032, 4
      %v12034 = vmax.f32 %v12032, %v12033
      %v12035 = vrot.slane %v12034, 2
      %v12036 = vmax.f32 %v12034, %v12035
      %v12037 = vrot.slane %v12036, 1
      %v12038 = vmax.f32 %v12036, %v12037
      %v12039 = vsel %vm11303, %v11190, -inf
      %v12040 = vrot.slane %v12039, 4
      %v12041 = vmax.f32 %v12039, %v12040
      %v12042 = vrot.slane %v12041, 2
      %v12043 = vmax.f32 %v12041, %v12042
      %v12044 = vrot.slane %v12043, 1
      %v12045 = vmax.f32 %v12043, %v12044
      %v12046 = vsel %vm11303, %v11191, -inf
      %v12047 = vrot.slane %v12046, 4
      %v12048 = vmax.f32 %v12046, %v12047
      %v12049 = vrot.slane %v12048, 2
      %v12050 = vmax.f32 %v12048, %v12049
      %v12051 = vrot.slane %v12050, 1
      %v12052 = vmax.f32 %v12050, %v12051
      %v12053 = vsel %vm11303, %v11069, -inf
      %v12054 = vrot.slane %v12053, 4
      %v12055 = vmax.f32 %v12053, %v12054
      %v12056 = vrot.slane %v12055, 2
      %v12057 = vmax.f32 %v12055, %v12056
      %v12058 = vrot.slane %v12057, 1
      %v12059 = vmax.f32 %v12057, %v12058
      %v12060 = vsel %vm11303, %v11192, -inf
      %v12061 = vrot.slane %v12060, 4
      %v12062 = vmax.f32 %v12060, %v12061
      %v12063 = vrot.slane %v12062, 2
      %v12064 = vmax.f32 %v12062, %v12063
      %v12065 = vrot.slane %v12064, 1
      %v12066 = vmax.f32 %v12064, %v12065
      %v12067 = vsel %vm11303, %v11193, -inf
      %v12068 = vrot.slane %v12067, 4
      %v12069 = vmax.f32 %v12067, %v12068
      %v12070 = vrot.slane %v12069, 2
      %v12071 = vmax.f32 %v12069, %v12070
      %v12072 = vrot.slane %v12071, 1
      %v12073 = vmax.f32 %v12071, %v12072
      %v12074 = vsel %vm11303, %v11194, -inf
      %v12075 = vrot.slane %v12074, 4
      %v12076 = vmax.f32 %v12074, %v12075
      %v12077 = vrot.slane %v12076, 2
      %v12078 = vmax.f32 %v12076, %v12077
      %v12079 = vrot.slane %v12078, 1
      %v12080 = vmax.f32 %v12078, %v12079
      %v12081 = vsel %vm11303, %v11070, -inf
      %v12082 = vrot.slane %v12081, 4
      %v12083 = vmax.f32 %v12081, %v12082
      %v12084 = vrot.slane %v12083, 2
      %v12085 = vmax.f32 %v12083, %v12084
      %v12086 = vrot.slane %v12085, 1
      %v12087 = vmax.f32 %v12085, %v12086
      %v12088 = vsel %vm11303, %v11195, -inf
      %v12089 = vrot.slane %v12088, 4
      %v12090 = vmax.f32 %v12088, %v12089
      %v12091 = vrot.slane %v12090, 2
      %v12092 = vmax.f32 %v12090, %v12091
      %v12093 = vrot.slane %v12092, 1
      %v12094 = vmax.f32 %v12092, %v12093
      %v12095 = vsel %vm11303, %v11196, -inf
      %v12096 = vrot.slane %v12095, 4
      %v12097 = vmax.f32 %v12095, %v12096
      %v12098 = vrot.slane %v12097, 2
      %v12099 = vmax.f32 %v12097, %v12098
      %v12100 = vrot.slane %v12099, 1
      %v12101 = vmax.f32 %v12099, %v12100
      %v12102 = vsel %vm11303, %v11071, -inf
      %v12103 = vrot.slane %v12102, 4
      %v12104 = vmax.f32 %v12102, %v12103
      %v12105 = vrot.slane %v12104, 2
      %v12106 = vmax.f32 %v12104, %v12105
      %v12107 = vrot.slane %v12106, 1
      %v12108 = vmax.f32 %v12106, %v12107
      %v12109 = vsel %vm11303, %v11197, -inf
      %v12110 = vrot.slane %v12109, 4
      %v12111 = vmax.f32 %v12109, %v12110
      %v12112 = vrot.slane %v12111, 2
      %v12113 = vmax.f32 %v12111, %v12112
      %v12114 = vrot.slane %v12113, 1
      %v12115 = vmax.f32 %v12113, %v12114
      %v12116 = vsel %vm11303, %v11198, -inf
      %v12117 = vrot.slane %v12116, 4
      %v12118 = vmax.f32 %v12116, %v12117
      %v12119 = vrot.slane %v12118, 2
      %v12120 = vmax.f32 %v12118, %v12119
      %v12121 = vrot.slane %v12120, 1
      %v12122 = vmax.f32 %v12120, %v12121
      %v12123 = vsel %vm11303, %v11199, -inf
      %v12124 = vrot.slane %v12123, 4
      %v12125 = vmax.f32 %v12123, %v12124
      %v12126 = vrot.slane %v12125, 2
      %v12127 = vmax.f32 %v12125, %v12126
      %v12128 = vrot.slane %v12127, 1
      %v12129 = vmax.f32 %v12127, %v12128
      %v12130 = vsel %vm11303, %v11072, -inf
      %v12131 = vrot.slane %v12130, 4
      %v12132 = vmax.f32 %v12130, %v12131
      %v12133 = vrot.slane %v12132, 2
      %v12134 = vmax.f32 %v12132, %v12133
      %v12135 = vrot.slane %v12134, 1
      %v12136 = vmax.f32 %v12134, %v12135
      %v12137 = vsel %vm11303, %v11200, -inf
      %v12138 = vrot.slane %v12137, 4
      %v12139 = vmax.f32 %v12137, %v12138
      %v12140 = vrot.slane %v12139, 2
      %v12141 = vmax.f32 %v12139, %v12140
      %v12142 = vrot.slane %v12141, 1
      %v12143 = vmax.f32 %v12141, %v12142
      %v12144 = vsel %vm11303, %v11201, -inf
      %v12145 = vrot.slane %v12144, 4
      %v12146 = vmax.f32 %v12144, %v12145
      %v12147 = vrot.slane %v12146, 2
      %v12148 = vmax.f32 %v12146, %v12147
      %v12149 = vrot.slane %v12148, 1
      %v12150 = vmax.f32 %v12148, %v12149
      %v12151 = vsel %vm11303, %v11073, -inf
      %v12152 = vrot.slane %v12151, 4
      %v12153 = vmax.f32 %v12151, %v12152
      %v12154 = vrot.slane %v12153, 2
      %v12155 = vmax.f32 %v12153, %v12154
      %v12156 = vrot.slane %v12155, 1
      %v12157 = vmax.f32 %v12155, %v12156
      %v12158 = vsel %vm11303, %v11202, -inf
      %v12159 = vrot.slane %v12158, 4
      %v12160 = vmax.f32 %v12158, %v12159
      %v12161 = vrot.slane %v12160, 2
      %v12162 = vmax.f32 %v12160, %v12161
      %v12163 = vrot.slane %v12162, 1
      %v12164 = vmax.f32 %v12162, %v12163
      %v12165 = vsel %vm11303, %v11203, -inf
      %v12166 = vrot.slane %v12165, 4
      %v12167 = vmax.f32 %v12165, %v12166
      %v12168 = vrot.slane %v12167, 2
      %v12169 = vmax.f32 %v12167, %v12168
      %v12170 = vrot.slane %v12169, 1
      %v12171 = vmax.f32 %v12169, %v12170
      %v12172 = vsel %vm11303, %v11204, -inf
      %v12173 = vrot.slane %v12172, 4
      %v12174 = vmax.f32 %v12172, %v12173
      %v12175 = vrot.slane %v12174, 2
      %v12176 = vmax.f32 %v12174, %v12175
      %v12177 = vrot.slane %v12176, 1
      %v12178 = vmax.f32 %v12176, %v12177
      %v12179 = vsel %vm11303, %v11074, -inf
      %v12180 = vrot.slane %v12179, 4
      %v12181 = vmax.f32 %v12179, %v12180
      %v12182 = vrot.slane %v12181, 2
      %v12183 = vmax.f32 %v12181, %v12182
      %v12184 = vrot.slane %v12183, 1
      %v12185 = vmax.f32 %v12183, %v12184
      %v12186 = vsel %vm11303, %v11205, -inf
      %v12187 = vrot.slane %v12186, 4
      %v12188 = vmax.f32 %v12186, %v12187
      %v12189 = vrot.slane %v12188, 2
      %v12190 = vmax.f32 %v12188, %v12189
      %v12191 = vrot.slane %v12190, 1
      %v12192 = vmax.f32 %v12190, %v12191
      %v12193 = vsel %vm11303, %v11206, -inf
      %v12194 = vrot.slane %v12193, 4
      %v12195 = vmax.f32 %v12193, %v12194
      %v12196 = vrot.slane %v12195, 2
      %v12197 = vmax.f32 %v12195, %v12196
      %v12198 = vrot.slane %v12197, 1
      %v12199 = vmax.f32 %v12197, %v12198
      %v12200 = vsel %vm5293, %v11310, -inf
      %v12201 = vsel %vm5293, %v11366, -inf
      %v12202 = vmax.f32 %v12200, %v12201
      %v12203 = vsel %vm5293, %v11317, -inf
      %v12204 = vsel %vm5293, %v11373, -inf
      %v12205 = vmax.f32 %v12203, %v12204
      %v12206 = vsel %vm5293, %v11324, -inf
      %v12207 = vsel %vm5293, %v11380, -inf
      %v12208 = vmax.f32 %v12206, %v12207
      %v12209 = vsel %vm5293, %v11331, -inf
      %v12210 = vsel %vm5293, %v11387, -inf
      %v12211 = vmax.f32 %v12209, %v12210
      %v12212 = vsel %vm5293, %v11338, -inf
      %v12213 = vsel %vm5293, %v11394, -inf
      %v12214 = vmax.f32 %v12212, %v12213
      %v12215 = vsel %vm5293, %v11345, -inf
      %v12216 = vsel %vm5293, %v11401, -inf
      %v12217 = vmax.f32 %v12215, %v12216
      %v12218 = vsel %vm5293, %v11352, -inf
      %v12219 = vsel %vm5293, %v11408, -inf
      %v12220 = vmax.f32 %v12218, %v12219
      %v12221 = vsel %vm5293, %v11359, -inf
      %v12222 = vsel %vm5293, %v11415, -inf
      %v12223 = vmax.f32 %v12221, %v12222
      %v12224 = vsel %vm5293, %v11422, -inf
      %v12225 = vsel %vm5293, %v11478, -inf
      %v12226 = vmax.f32 %v12224, %v12225
      %v12227 = vsel %vm5293, %v11429, -inf
      %v12228 = vsel %vm5293, %v11485, -inf
      %v12229 = vmax.f32 %v12227, %v12228
      %v12230 = vsel %vm5293, %v11436, -inf
      %v12231 = vsel %vm5293, %v11492, -inf
      %v12232 = vmax.f32 %v12230, %v12231
      %v12233 = vsel %vm5293, %v11443, -inf
      %v12234 = vsel %vm5293, %v11499, -inf
      %v12235 = vmax.f32 %v12233, %v12234
      %v12236 = vsel %vm5293, %v11450, -inf
      %v12237 = vsel %vm5293, %v11506, -inf
      %v12238 = vmax.f32 %v12236, %v12237
      %v12239 = vsel %vm5293, %v11457, -inf
      %v12240 = vsel %vm5293, %v11513, -inf
      %v12241 = vmax.f32 %v12239, %v12240
      %v12242 = vsel %vm5293, %v11464, -inf
      %v12243 = vsel %vm5293, %v11520, -inf
      %v12244 = vmax.f32 %v12242, %v12243
      %v12245 = vsel %vm5293, %v11471, -inf
      %v12246 = vsel %vm5293, %v11527, -inf
      %v12247 = vmax.f32 %v12245, %v12246
      %v12248 = vsel %vm5293, %v11534, -inf
      %v12249 = vsel %vm5293, %v11590, -inf
      %v12250 = vmax.f32 %v12248, %v12249
      %v12251 = vsel %vm5293, %v11541, -inf
      %v12252 = vsel %vm5293, %v11597, -inf
      %v12253 = vmax.f32 %v12251, %v12252
      %v12254 = vsel %vm5293, %v11548, -inf
      %v12255 = vsel %vm5293, %v11604, -inf
      %v12256 = vmax.f32 %v12254, %v12255
      %v12257 = vsel %vm5293, %v11555, -inf
      %v12258 = vsel %vm5293, %v11611, -inf
      %v12259 = vmax.f32 %v12257, %v12258
      %v12260 = vsel %vm5293, %v11562, -inf
      %v12261 = vsel %vm5293, %v11618, -inf
      %v12262 = vmax.f32 %v12260, %v12261
      %v12263 = vsel %vm5293, %v11569, -inf
      %v12264 = vsel %vm5293, %v11625, -inf
      %v12265 = vmax.f32 %v12263, %v12264
      %v12266 = vsel %vm5293, %v11576, -inf
      %v12267 = vsel %vm5293, %v11632, -inf
      %v12268 = vmax.f32 %v12266, %v12267
      %v12269 = vsel %vm5293, %v11583, -inf
      %v12270 = vsel %vm5293, %v11639, -inf
      %v12271 = vmax.f32 %v12269, %v12270
      %v12272 = vsel %vm5293, %v11646, -inf
      %v12273 = vsel %vm5293, %v11702, -inf
      %v12274 = vmax.f32 %v12272, %v12273
      %v12275 = vsel %vm5293, %v11653, -inf
      %v12276 = vsel %vm5293, %v11709, -inf
      %v12277 = vmax.f32 %v12275, %v12276
      %v12278 = vsel %vm5293, %v11660, -inf
      %v12279 = vsel %vm5293, %v11716, -inf
      %v12280 = vmax.f32 %v12278, %v12279
      %v12281 = vsel %vm5293, %v11667, -inf
      %v12282 = vsel %vm5293, %v11723, -inf
      %v12283 = vmax.f32 %v12281, %v12282
      %v12284 = vsel %vm5293, %v11674, -inf
      %v12285 = vsel %vm5293, %v11730, -inf
      %v12286 = vmax.f32 %v12284, %v12285
      %v12287 = vsel %vm5293, %v11681, -inf
      %v12288 = vsel %vm5293, %v11737, -inf
      %v12289 = vmax.f32 %v12287, %v12288
      %v12290 = vsel %vm5293, %v11688, -inf
      %v12291 = vsel %vm5293, %v11744, -inf
      %v12292 = vmax.f32 %v12290, %v12291
      %v12293 = vsel %vm5293, %v11695, -inf
      %v12294 = vsel %vm5293, %v11751, -inf
      %v12295 = vmax.f32 %v12293, %v12294
      %v12296 = vsel %vm5293, %v11758, -inf
      %v12297 = vsel %vm5293, %v11814, -inf
      %v12298 = vmax.f32 %v12296, %v12297
      %v12299 = vsel %vm5293, %v11765, -inf
      %v12300 = vsel %vm5293, %v11821, -inf
      %v12301 = vmax.f32 %v12299, %v12300
      %v12302 = vsel %vm5293, %v11772, -inf
      %v12303 = vsel %vm5293, %v11828, -inf
      %v12304 = vmax.f32 %v12302, %v12303
      %v12305 = vsel %vm5293, %v11779, -inf
      %v12306 = vsel %vm5293, %v11835, -inf
      %v12307 = vmax.f32 %v12305, %v12306
      %v12308 = vsel %vm5293, %v11786, -inf
      %v12309 = vsel %vm5293, %v11842, -inf
      %v12310 = vmax.f32 %v12308, %v12309
      %v12311 = vsel %vm5293, %v11793, -inf
      %v12312 = vsel %vm5293, %v11849, -inf
      %v12313 = vmax.f32 %v12311, %v12312
      %v12314 = vsel %vm5293, %v11800, -inf
      %v12315 = vsel %vm5293, %v11856, -inf
      %v12316 = vmax.f32 %v12314, %v12315
      %v12317 = vsel %vm5293, %v11807, -inf
      %v12318 = vsel %vm5293, %v11863, -inf
      %v12319 = vmax.f32 %v12317, %v12318
      %v12320 = vsel %vm5293, %v11870, -inf
      %v12321 = vsel %vm5293, %v11926, -inf
      %v12322 = vmax.f32 %v12320, %v12321
      %v12323 = vsel %vm5293, %v11877, -inf
      %v12324 = vsel %vm5293, %v11933, -inf
      %v12325 = vmax.f32 %v12323, %v12324
      %v12326 = vsel %vm5293, %v11884, -inf
      %v12327 = vsel %vm5293, %v11940, -inf
      %v12328 = vmax.f32 %v12326, %v12327
      %v12329 = vsel %vm5293, %v11891, -inf
      %v12330 = vsel %vm5293, %v11947, -inf
      %v12331 = vmax.f32 %v12329, %v12330
      %v12332 = vsel %vm5293, %v11898, -inf
      %v12333 = vsel %vm5293, %v11954, -inf
      %v12334 = vmax.f32 %v12332, %v12333
      %v12335 = vsel %vm5293, %v11905, -inf
      %v12336 = vsel %vm5293, %v11961, -inf
      %v12337 = vmax.f32 %v12335, %v12336
      %v12338 = vsel %vm5293, %v11912, -inf
      %v12339 = vsel %vm5293, %v11968, -inf
      %v12340 = vmax.f32 %v12338, %v12339
      %v12341 = vsel %vm5293, %v11919, -inf
      %v12342 = vsel %vm5293, %v11975, -inf
      %v12343 = vmax.f32 %v12341, %v12342
      %v12344 = vsel %vm5293, %v11982, -inf
      %v12345 = vsel %vm5293, %v12038, -inf
      %v12346 = vmax.f32 %v12344, %v12345
      %v12347 = vsel %vm5293, %v11989, -inf
      %v12348 = vsel %vm5293, %v12045, -inf
      %v12349 = vmax.f32 %v12347, %v12348
      %v12350 = vsel %vm5293, %v11996, -inf
      %v12351 = vsel %vm5293, %v12052, -inf
      %v12352 = vmax.f32 %v12350, %v12351
      %v12353 = vsel %vm5293, %v12003, -inf
      %v12354 = vsel %vm5293, %v12059, -inf
      %v12355 = vmax.f32 %v12353, %v12354
      %v12356 = vsel %vm5293, %v12010, -inf
      %v12357 = vsel %vm5293, %v12066, -inf
      %v12358 = vmax.f32 %v12356, %v12357
      %v12359 = vsel %vm5293, %v12017, -inf
      %v12360 = vsel %vm5293, %v12073, -inf
      %v12361 = vmax.f32 %v12359, %v12360
      %v12362 = vsel %vm5293, %v12024, -inf
      %v12363 = vsel %vm5293, %v12080, -inf
      %v12364 = vmax.f32 %v12362, %v12363
      %v12365 = vsel %vm5293, %v12031, -inf
      %v12366 = vsel %vm5293, %v12087, -inf
      %v12367 = vmax.f32 %v12365, %v12366
      %v12368 = vsel %vm5293, %v12094, -inf
      %v12369 = vsel %vm5293, %v12150, -inf
      %v12370 = vmax.f32 %v12368, %v12369
      %v12371 = vsel %vm5293, %v12101, -inf
      %v12372 = vsel %vm5293, %v12157, -inf
      %v12373 = vmax.f32 %v12371, %v12372
      %v12374 = vsel %vm5293, %v12108, -inf
      %v12375 = vsel %vm5293, %v12164, -inf
      %v12376 = vmax.f32 %v12374, %v12375
      %v12377 = vsel %vm5293, %v12115, -inf
      %v12378 = vsel %vm5293, %v12171, -inf
      %v12379 = vmax.f32 %v12377, %v12378
      %v12380 = vsel %vm5293, %v12122, -inf
      %v12381 = vsel %vm5293, %v12178, -inf
      %v12382 = vmax.f32 %v12380, %v12381
      %v12383 = vsel %vm5293, %v12129, -inf
      %v12384 = vsel %vm5293, %v12185, -inf
      %v12385 = vmax.f32 %v12383, %v12384
      %v12386 = vsel %vm5293, %v12136, -inf
      %v12387 = vsel %vm5293, %v12192, -inf
      %v12388 = vmax.f32 %v12386, %v12387
      %v12389 = vsel %vm5293, %v12143, -inf
      %v12390 = vsel %vm5293, %v12199, -inf
      %v12391 = vmax.f32 %v12389, %v12390
      %v12392 = vld [vmem:[%s6] sm:$0x1]
      %v12394 = vperm.slane %v12392, 0
      %v12396 = vadd.f32 %v12202, %v12394
      %v12397 = vadd.f32 %v12205, %v12394
      %v12398 = vadd.f32 %v12208, %v12394
      %v12399 = vadd.f32 %v12211, %v12394
      %v12400 = vadd.f32 %v12214, %v12394
      %v12401 = vadd.f32 %v12217, %v12394
      %v12402 = vadd.f32 %v12220, %v12394
      %v12403 = vadd.f32 %v12223, %v12394
      %v12404 = vadd.f32 %v12226, %v12394
      %v12405 = vadd.f32 %v12229, %v12394
      %v12406 = vadd.f32 %v12232, %v12394
      %v12407 = vadd.f32 %v12235, %v12394
      %v12408 = vadd.f32 %v12238, %v12394
      %v12409 = vadd.f32 %v12241, %v12394
      %v12410 = vadd.f32 %v12244, %v12394
      %v12411 = vadd.f32 %v12247, %v12394
      %v12412 = vadd.f32 %v12250, %v12394
      %v12413 = vadd.f32 %v12253, %v12394
      %v12414 = vadd.f32 %v12256, %v12394
      %v12415 = vadd.f32 %v12259, %v12394
      %v12416 = vadd.f32 %v12262, %v12394
      %v12417 = vadd.f32 %v12265, %v12394
      %v12418 = vadd.f32 %v12268, %v12394
      %v12419 = vadd.f32 %v12271, %v12394
      %v12420 = vadd.f32 %v12274, %v12394
      %v12421 = vadd.f32 %v12277, %v12394
      %v12422 = vadd.f32 %v12280, %v12394
      %v12423 = vadd.f32 %v12283, %v12394
      %v12424 = vadd.f32 %v12286, %v12394
      %v12425 = vadd.f32 %v12289, %v12394
      %v12426 = vadd.f32 %v12292, %v12394
      %v12427 = vadd.f32 %v12295, %v12394
      %v12428 = vadd.f32 %v12298, %v12394
      %v12429 = vadd.f32 %v12301, %v12394
      %v12430 = vadd.f32 %v12304, %v12394
      %v12431 = vadd.f32 %v12307, %v12394
      %v12432 = vadd.f32 %v12310, %v12394
      %v12433 = vadd.f32 %v12313, %v12394
      %v12434 = vadd.f32 %v12316, %v12394
      %v12435 = vadd.f32 %v12319, %v12394
      %v12436 = vadd.f32 %v12322, %v12394
      %v12437 = vadd.f32 %v12325, %v12394
      %v12438 = vadd.f32 %v12328, %v12394
      %v12439 = vadd.f32 %v12331, %v12394
      %v12440 = vadd.f32 %v12334, %v12394
      %v12441 = vadd.f32 %v12337, %v12394
      %v12442 = vadd.f32 %v12340, %v12394
      %v12443 = vadd.f32 %v12343, %v12394
      %v12444 = vadd.f32 %v12346, %v12394
      %v12445 = vadd.f32 %v12349, %v12394
      %v12446 = vadd.f32 %v12352, %v12394
      %v12447 = vadd.f32 %v12355, %v12394
      %v12448 = vadd.f32 %v12358, %v12394
      %v12449 = vadd.f32 %v12361, %v12394
      %v12450 = vadd.f32 %v12364, %v12394
      %v12451 = vadd.f32 %v12367, %v12394
      %v12452 = vadd.f32 %v12370, %v12394
      %v12453 = vadd.f32 %v12373, %v12394
      %v12454 = vadd.f32 %v12376, %v12394
      %v12455 = vadd.f32 %v12379, %v12394
      %v12456 = vadd.f32 %v12382, %v12394
      %v12457 = vadd.f32 %v12385, %v12394
      %v12458 = vadd.f32 %v12388, %v12394
      %v12459 = vadd.f32 %v12391, %v12394
      %v12460 = vmax.f32 %v12396, 0.0
      %v12461 = vmax.f32 %v12397, 0.0
      %v12462 = vmax.f32 %v12398, 0.0
      %v12463 = vmax.f32 %v12399, 0.0
      %v12464 = vmax.f32 %v12400, 0.0
      %v12465 = vmax.f32 %v12401, 0.0
      %v12466 = vmax.f32 %v12402, 0.0
      %v12467 = vmax.f32 %v12403, 0.0
      %v12468 = vmax.f32 %v12404, 0.0
      %v12469 = vmax.f32 %v12405, 0.0
      %v12470 = vmax.f32 %v12406, 0.0
      %v12471 = vmax.f32 %v12407, 0.0
      %v12472 = vmax.f32 %v12408, 0.0
      %v12473 = vmax.f32 %v12409, 0.0
      %v12474 = vmax.f32 %v12410, 0.0
      %v12475 = vmax.f32 %v12411, 0.0
      %v12476 = vmax.f32 %v12412, 0.0
      %v12477 = vmax.f32 %v12413, 0.0
      %v12478 = vmax.f32 %v12414, 0.0
      %v12479 = vmax.f32 %v12415, 0.0
      %v12480 = vmax.f32 %v12416, 0.0
      %v12481 = vmax.f32 %v12417, 0.0
      %v12482 = vmax.f32 %v12418, 0.0
      %v12483 = vmax.f32 %v12419, 0.0
      %v12484 = vmax.f32 %v12420, 0.0
      %v12485 = vmax.f32 %v12421, 0.0
      %v12486 = vmax.f32 %v12422, 0.0
      %v12487 = vmax.f32 %v12423, 0.0
      %v12488 = vmax.f32 %v12424, 0.0
      %v12489 = vmax.f32 %v12425, 0.0
      %v12490 = vmax.f32 %v12426, 0.0
      %v12491 = vmax.f32 %v12427, 0.0
      %v12492 = vmax.f32 %v12428, 0.0
      %v12493 = vmax.f32 %v12429, 0.0
      %v12494 = vmax.f32 %v12430, 0.0
      %v12495 = vmax.f32 %v12431, 0.0
      %v12496 = vmax.f32 %v12432, 0.0
      %v12497 = vmax.f32 %v12433, 0.0
      %v12498 = vmax.f32 %v12434, 0.0
      %v12499 = vmax.f32 %v12435, 0.0
      %v12500 = vmax.f32 %v12436, 0.0
      %v12501 = vmax.f32 %v12437, 0.0
      %v12502 = vmax.f32 %v12438, 0.0
      %v12503 = vmax.f32 %v12439, 0.0
      %v12504 = vmax.f32 %v12440, 0.0
      %v12505 = vmax.f32 %v12441, 0.0
      %v12506 = vmax.f32 %v12442, 0.0
      %v12507 = vmax.f32 %v12443, 0.0
      %v12508 = vmax.f32 %v12444, 0.0
      %v12509 = vmax.f32 %v12445, 0.0
      %v12510 = vmax.f32 %v12446, 0.0
      %v12511 = vmax.f32 %v12447, 0.0
      %v12512 = vmax.f32 %v12448, 0.0
      %v12513 = vmax.f32 %v12449, 0.0
      %v12514 = vmax.f32 %v12450, 0.0
      %v12515 = vmax.f32 %v12451, 0.0
      %v12516 = vmax.f32 %v12452, 0.0
      %v12517 = vmax.f32 %v12453, 0.0
      %v12518 = vmax.f32 %v12454, 0.0
      %v12519 = vmax.f32 %v12455, 0.0
      %v12520 = vmax.f32 %v12456, 0.0
      %v12521 = vmax.f32 %v12457, 0.0
      %v12522 = vmax.f32 %v12458, 0.0
      %v12523 = vmax.f32 %v12459, 0.0
      %v12588 = vrot.slane %v12461, 7
      %vm12589 = vcmask 1041409
      %v12590 = vsel %vm12589, %v12588, %v12460
      %v12591 = vrot.slane %v12462, 6
      %vm12592 = vcmask 1042434
      %v12593 = vsel %vm12592, %v12591, %v12590
      %v12594 = vrot.slane %v12463, 5
      %vm12595 = vcmask 1043459
      %v12596 = vsel %vm12595, %v12594, %v12593
      %v12597 = vrot.slane %v12464, 4
      %vm12598 = vcmask 1044484
      %v12599 = vsel %vm12598, %v12597, %v12596
      %v12600 = vrot.slane %v12465, 3
      %vm12601 = vcmask 1045509
      %v12602 = vsel %vm12601, %v12600, %v12599
      %v12603 = vrot.slane %v12466, 2
      %vm12604 = vcmask 1046534
      %v12605 = vsel %vm12604, %v12603, %v12602
      %v12606 = vrot.slane %v12467, 1
      %vm12607 = vcmask 1047559
      %v12608 = vsel %vm12607, %v12606, %v12605
      %v12609 = vrot.slane %v12469, 7
      %v12610 = vsel %vm12589, %v12609, %v12468
      %v12611 = vrot.slane %v12470, 6
      %v12612 = vsel %vm12592, %v12611, %v12610
      %v12613 = vrot.slane %v12471, 5
      %v12614 = vsel %vm12595, %v12613, %v12612
      %v12615 = vrot.slane %v12472, 4
      %v12616 = vsel %vm12598, %v12615, %v12614
      %v12617 = vrot.slane %v12473, 3
      %v12618 = vsel %vm12601, %v12617, %v12616
      %v12619 = vrot.slane %v12474, 2
      %v12620 = vsel %vm12604, %v12619, %v12618
      %v12621 = vrot.slane %v12475, 1
      %v12622 = vsel %vm12607, %v12621, %v12620
      %v12623 = vrot.slane %v12477, 7
      %v12624 = vsel %vm12589, %v12623, %v12476
      %v12625 = vrot.slane %v12478, 6
      %v12626 = vsel %vm12592, %v12625, %v12624
      %v12627 = vrot.slane %v12479, 5
      %v12628 = vsel %vm12595, %v12627, %v12626
      %v12629 = vrot.slane %v12480, 4
      %v12630 = vsel %vm12598, %v12629, %v12628
      %v12631 = vrot.slane %v12481, 3
      %v12632 = vsel %vm12601, %v12631, %v12630
      %v12633 = vrot.slane %v12482, 2
      %v12634 = vsel %vm12604, %v12633, %v12632
      %v12635 = vrot.slane %v12483, 1
      %v12636 = vsel %vm12607, %v12635, %v12634
      %v12637 = vrot.slane %v12485, 7
      %v12638 = vsel %vm12589, %v12637, %v12484
      %v12639 = vrot.slane %v12486, 6
      %v12640 = vsel %vm12592, %v12639, %v12638
      %v12641 = vrot.slane %v12487, 5
      %v12642 = vsel %vm12595, %v12641, %v12640
      %v12643 = vrot.slane %v12488, 4
      %v12644 = vsel %vm12598, %v12643, %v12642
      %v12645 = vrot.slane %v12489, 3
      %v12646 = vsel %vm12601, %v12645, %v12644
      %v12647 = vrot.slane %v12490, 2
      %v12648 = vsel %vm12604, %v12647, %v12646
      %v12649 = vrot.slane %v12491, 1
      %v12650 = vsel %vm12607, %v12649, %v12648
      %v12651 = vrot.slane %v12493, 7
      %v12652 = vsel %vm12589, %v12651, %v12492
      %v12653 = vrot.slane %v12494, 6
      %v12654 = vsel %vm12592, %v12653, %v12652
      %v12655 = vrot.slane %v12495, 5
      %v12656 = vsel %vm12595, %v12655, %v12654
      %v12657 = vrot.slane %v12496, 4
      %v12658 = vsel %vm12598, %v12657, %v12656
      %v12659 = vrot.slane %v12497, 3
      %v12660 = vsel %vm12601, %v12659, %v12658
      %v12661 = vrot.slane %v12498, 2
      %v12662 = vsel %vm12604, %v12661, %v12660
      %v12663 = vrot.slane %v12499, 1
      %v12664 = vsel %vm12607, %v12663, %v12662
      %v12665 = vrot.slane %v12501, 7
      %v12666 = vsel %vm12589, %v12665, %v12500
      %v12667 = vrot.slane %v12502, 6
      %v12668 = vsel %vm12592, %v12667, %v12666
      %v12669 = vrot.slane %v12503, 5
      %v12670 = vsel %vm12595, %v12669, %v12668
      %v12671 = vrot.slane %v12504, 4
      %v12672 = vsel %vm12598, %v12671, %v12670
      %v12673 = vrot.slane %v12505, 3
      %v12674 = vsel %vm12601, %v12673, %v12672
      %v12675 = vrot.slane %v12506, 2
      %v12676 = vsel %vm12604, %v12675, %v12674
      %v12677 = vrot.slane %v12507, 1
      %v12678 = vsel %vm12607, %v12677, %v12676
      %v12679 = vrot.slane %v12509, 7
      %v12680 = vsel %vm12589, %v12679, %v12508
      %v12681 = vrot.slane %v12510, 6
      %v12682 = vsel %vm12592, %v12681, %v12680
      %v12683 = vrot.slane %v12511, 5
      %v12684 = vsel %vm12595, %v12683, %v12682
      %v12685 = vrot.slane %v12512, 4
      %v12686 = vsel %vm12598, %v12685, %v12684
      %v12687 = vrot.slane %v12513, 3
      %v12688 = vsel %vm12601, %v12687, %v12686
      %v12689 = vrot.slane %v12514, 2
      %v12690 = vsel %vm12604, %v12689, %v12688
      %v12691 = vrot.slane %v12515, 1
      %v12692 = vsel %vm12607, %v12691, %v12690
      %v12693 = vrot.slane %v12517, 7
      %v12694 = vsel %vm12589, %v12693, %v12516
      %v12695 = vrot.slane %v12518, 6
      %v12696 = vsel %vm12592, %v12695, %v12694
      %v12697 = vrot.slane %v12519, 5
      %v12698 = vsel %vm12595, %v12697, %v12696
      %v12699 = vrot.slane %v12520, 4
      %v12700 = vsel %vm12598, %v12699, %v12698
      %v12701 = vrot.slane %v12521, 3
      %v12702 = vsel %vm12601, %v12701, %v12700
      %v12703 = vrot.slane %v12522, 2
      %v12704 = vsel %vm12604, %v12703, %v12702
      %v12705 = vrot.slane %v12523, 1
      %v12706 = vsel %vm12607, %v12705, %v12704
      %v12715 = vrot.slane %v12636, 4
      %vm12716 = vcmask 1047556
      %v12717 = vsel %vm12716, %v12715, %v12608
      %v12718 = vrot.slane %v12608, 4
      %v12719 = vsel %vm12716, %v12636, %v12718
      %v12721 = vunpack.c.l.s4 1983009808
      %v12722 = vunpack.c.0.s8 %v12721
      %v12723 = vperm.slane %v12717, %v12722
      %v12725 = vunpack.c.l.s4 1983009808
      %v12726 = vunpack.c.0.s8 %v12725
      %v12727 = vperm.slane %v12719, %v12726
      %v12728 = vrot.slane %v12650, 4
      %v12729 = vsel %vm12716, %v12728, %v12622
      %v12730 = vrot.slane %v12622, 4
      %v12731 = vsel %vm12716, %v12650, %v12730
      %v12733 = vunpack.c.l.s4 1983009808
      %v12734 = vunpack.c.0.s8 %v12733
      %v12735 = vperm.slane %v12729, %v12734
      %v12737 = vunpack.c.l.s4 1983009808
      %v12738 = vunpack.c.0.s8 %v12737
      %v12739 = vperm.slane %v12731, %v12738
      %v12740 = vrot.slane %v12692, 4
      %v12741 = vsel %vm12716, %v12740, %v12664
      %v12742 = vrot.slane %v12664, 4
      %v12743 = vsel %vm12716, %v12692, %v12742
      %v12745 = vunpack.c.l.s4 1983009808
      %v12746 = vunpack.c.0.s8 %v12745
      %v12747 = vperm.slane %v12741, %v12746
      %v12749 = vunpack.c.l.s4 1983009808
      %v12750 = vunpack.c.0.s8 %v12749
      %v12751 = vperm.slane %v12743, %v12750
      %v12752 = vrot.slane %v12706, 4
      %v12753 = vsel %vm12716, %v12752, %v12678
      %v12754 = vrot.slane %v12678, 4
      %v12755 = vsel %vm12716, %v12706, %v12754
      %v12757 = vunpack.c.l.s4 1983009808
      %v12758 = vunpack.c.0.s8 %v12757
      %v12759 = vperm.slane %v12753, %v12758
      %v12761 = vunpack.c.l.s4 1983009808
      %v12762 = vunpack.c.0.s8 %v12761
      %v12763 = vperm.slane %v12755, %v12762
      %v12764 = vrot.slane %v12735, 4
      %v12765 = vsel %vm12716, %v12764, %v12723
      %v12766 = vrot.slane %v12723, 4
      %v12767 = vsel %vm12716, %v12735, %v12766
      %v12769 = vunpack.c.l.s4 1934713408
      %v12770 = vunpack.c.0.s8 %v12769
      %v12771 = vperm.slane %v12765, %v12770
      %v12773 = vunpack.c.l.s4 1934713408
      %v12774 = vunpack.c.0.s8 %v12773
      %v12775 = vperm.slane %v12767, %v12774
      %v12776 = vrot.slane %v12739, 4
      %v12777 = vsel %vm12716, %v12776, %v12727
      %v12778 = vrot.slane %v12727, 4
      %v12779 = vsel %vm12716, %v12739, %v12778
      %v12781 = vunpack.c.l.s4 1934713408
      %v12782 = vunpack.c.0.s8 %v12781
      %v12783 = vperm.slane %v12777, %v12782
      %v12785 = vunpack.c.l.s4 1934713408
      %v12786 = vunpack.c.0.s8 %v12785
      %v12787 = vperm.slane %v12779, %v12786
      %v12788 = vrot.slane %v12759, 4
      %v12789 = vsel %vm12716, %v12788, %v12747
      %v12790 = vrot.slane %v12747, 4
      %v12791 = vsel %vm12716, %v12759, %v12790
      %v12793 = vunpack.c.l.s4 1934713408
      %v12794 = vunpack.c.0.s8 %v12793
      %v12795 = vperm.slane %v12789, %v12794
      %v12797 = vunpack.c.l.s4 1934713408
      %v12798 = vunpack.c.0.s8 %v12797
      %v12799 = vperm.slane %v12791, %v12798
      %v12800 = vrot.slane %v12763, 4
      %v12801 = vsel %vm12716, %v12800, %v12751
      %v12802 = vrot.slane %v12751, 4
      %v12803 = vsel %vm12716, %v12763, %v12802
      %v12805 = vunpack.c.l.s4 1934713408
      %v12806 = vunpack.c.0.s8 %v12805
      %v12807 = vperm.slane %v12801, %v12806
      %v12809 = vunpack.c.l.s4 1934713408
      %v12810 = vunpack.c.0.s8 %v12809
      %v12811 = vperm.slane %v12803, %v12810
      %v12812 = vrot.slane %v12795, 4
      %v12813 = vsel %vm12716, %v12812, %v12771
      %v12814 = vrot.slane %v12771, 4
      %v12815 = vsel %vm12716, %v12795, %v12814
      %v12816 = vrot.slane %v12799, 4
      %v12817 = vsel %vm12716, %v12816, %v12775
      %v12818 = vrot.slane %v12775, 4
      %v12819 = vsel %vm12716, %v12799, %v12818
      %v12820 = vrot.slane %v12807, 4
      %v12821 = vsel %vm12716, %v12820, %v12783
      %v12822 = vrot.slane %v12783, 4
      %v12823 = vsel %vm12716, %v12807, %v12822
      %v12824 = vrot.slane %v12811, 4
      %v12825 = vsel %vm12716, %v12824, %v12787
      %v12826 = vrot.slane %v12787, 4
      %v12827 = vsel %vm12716, %v12811, %v12826
      %12829 = vrot.lane.b32.xlu0 %v12815, 8
      %v12830 = vpop.permute.xlu0 %12829
      %12833 = vrot.lane.b32.xlu0 %v12817, 16
      %v12834 = vpop.permute.xlu0 %12833
      %12837 = vrot.lane.b32.xlu0 %v12819, 24
      %v12838 = vpop.permute.xlu0 %12837
      %12841 = vrot.lane.b32.xlu0 %v12821, 32
      %v12842 = vpop.permute.xlu0 %12841
      %12845 = vrot.lane.b32.xlu0 %v12823, 40
      %v12846 = vpop.permute.xlu0 %12845
      %12849 = vrot.lane.b32.xlu0 %v12825, 48
      %v12850 = vpop.permute.xlu0 %12849
      %12853 = vrot.lane.b32.xlu0 %v12827, 56
      %v12854 = vpop.permute.xlu0 %12853
      %v12856 = vsel %vm5293, %v12813, %v12830
      %vm12857 = vcmask 130048
      %v12858 = vsel %vm12857, %v12856, %v12834
      %vm12859 = vcmask 195584
      %v12860 = vsel %vm12859, %v12858, %v12838
      %vm12861 = vcmask 261120
      %v12862 = vsel %vm12861, %v12860, %v12842
      %vm12863 = vcmask 326656
      %v12864 = vsel %vm12863, %v12862, %v12846
      %vm12865 = vcmask 392192
      %v12866 = vsel %vm12865, %v12864, %v12850
      %vm12867 = vcmask 457728
      %v12868 = vsel %vm12867, %v12866, %v12854
      %vm12869 = vcmask 523264
      %12870 = vst.msk [vmem:[%s276] sm:$0xff] %vm12869, %v12868
      %p12871 = scmp.lt.s32.totalorder %s18, 1
      %s12872 = scalar_select %p12871, %s18, 1
      %s12873 = smul.addr %s12872, 8
      %s12874 = scalar_lea.vmem %s7, %s12873
      // Predicated region
      $region49: #{second_block_forward.1} parent=47 // pred_check
        %p12875 = pneg %p188
      $region50: #{second_block_forward.1} parent=47 // pred_check_branch
        %12877 = sbr.rel (%p12875) target = $region52
      $region51: #{second_block_forward.1} parent=47 // pred_region
        _
      $region52: #{second_block_forward.1} parent=47 // pred_fallthru
        _
    $region48: #{second_block_forward.1} parent=5 // pred_fallthru
      _
    %p12878 = scmp.le.s32.totalorder 2, %s13
    // Predicated region
    $region53: #{second_block_forward.1} parent=5 // pred_check
      %p12879 = pneg %p12878
    $region54: #{second_block_forward.1} parent=5 // pred_check_branch
      %12881 = sbr.rel (%p12879) target = $region56
    $region55: #{second_block_forward.1} parent=5 // pred_region
      %s12882 = ssub.s32 %s13, 2
      // Predicated region
      $region57: #{second_block_forward.1} parent=55 // pred_check
        %p12883 = pneg %p194
      $region58: #{second_block_forward.1} parent=55 // pred_check_branch
        %12885 = sbr.rel (%p12883) target = $region60
      $region59: #{second_block_forward.1} parent=55 // pred_region
        %p12886 = scmp.lt.s32.totalorder %s19, 1
        %s12887 = scalar_select %p12886, %s19, 1
        %s12888 = smul.addr %s12887, 8
        %s12889 = scalar_lea.vmem %s7, %s12888
      $region60: #{second_block_forward.1} parent=55 // pred_fallthru
        _
    $region56: #{second_block_forward.1} parent=5 // pred_fallthru
      _
  $region6: #{second_block_forward.1} parent=0 // loop_footer
    %s17 = sadd.s32 1, %s13
  $region7: #{second_block_forward.1} parent=0 // loop_footer_branch
    %12 = sbr.rel target = $region3
  $region8: #{second_block_forward.1} parent=0 // loop_exit
    _

</llo_original>
